<compile_context>
chip_gen: v6e
topology: v6e:2x2x1
jax: 0.10.0
libtpu: 0.0.40
codegen_flags: <defaults>
</compile_context>

<pallas_src>
import jax
import jax.numpy as jnp
import numpy as np
from jax import lax
from jax.experimental import pallas as pl
from jax.experimental.pallas import tpu as pltpu

H, W = 12, 30
EPS = 1e-5

# slab row layout (f32, (26, 384)):
#   rows  0..11 : replication matrix R[h, c*12+h] = 1
#   rows 12..21 : conv1 taps (BN folded), w1[k, c*12+h]
#   row     22  : conv1 bias (BN folded), broadcast over h
#   row     23  : conv2 bias (BN folded), lanes 0..31
#   row     24  : fc1 bias,               lanes 0..31
#   row     25  : fc2 bias,               lanes 0..3


# ------------------------------ fused Pallas kernel --------------------------------

def fused_cnn_kernel(x_ref, w2_ref, fcw_ref, slab_ref, o_ref):
    f32 = jnp.float32
    F = x_ref.shape[0]          # B * 32 rows (32 padded-W positions per sample)
    B = F // 32

    # ---- layer1: Conv(1->32,(1,10),padW=1) + BN + ReLU ---------------------------
    # Lay the 12 H values out 32x along lanes (lane = c*12 + h) with one tiny 0/1
    # matmul, then do the 10-tap W correlation as rolled VPU FMAs (the XLU does the
    # sublane shifts and is otherwise idle next to the conv2 MXU work).
    xtb = jnp.dot(x_ref[...], slab_ref[0:12, :], preferred_element_type=f32)   # (F,384)
    w1 = slab_ref[12:22, :]
    acc1 = xtb * w1[0:1, :]
    for k in range(1, 10):                         # roll(x, F-k)[r] == x[(r+k) % F]
        acc1 = acc1 + pltpu.roll(xtb, F - k, 0) * w1[k:k + 1, :]
    # Rows q=0..22 of each 32-row sample block are the 23 conv1 outputs; rows 23..31
    # are zeroed so they double as conv2's W zero padding (each block's left pad is
    # the previous block's zeroed tail, cyclically).
    q = lax.broadcasted_iota(jnp.int32, (F, 384), 0)
    keep = ((q & 31) <= 22).astype(f32)
    a1 = jnp.maximum(acc1 + slab_ref[22:23, :], 0.0) * keep                    # (F,384)

    # ---- layer2: Conv(32->32,(12,5),padW=1) + BN as 5 shifted MXU matmuls --------
    # y2[r] = sum_kw a1[r+kw-1] @ W2[kw]; bf16 operands, f32 accumulation, M = F.
    y2 = jnp.zeros((F, 32), f32)
    for kw in range(5):
        shift = (1 - kw) % F
        lhs = a1 if shift == 0 else pltpu.roll(a1, shift, 0)
        y2 = y2 + jnp.dot(lhs.astype(jnp.bfloat16),
                          w2_ref[kw * 384:(kw + 1) * 384, :],
                          preferred_element_type=f32)                          # (F,32)

    # ---- MaxPool(1,3)/(1,3) + bias + ReLU ----------------------------------------
    # relu(max_j(y_j) + b) == max_j(relu(y_j + b)) since the bias is shared across
    # the pool window; the pooled value for the window starting at row r lands in r.
    y2p = jnp.maximum(y2, jnp.maximum(pltpu.roll(y2, F - 1, 0),
                                      pltpu.roll(y2, F - 2, 0)))
    pooled = jnp.maximum(y2p + slab_ref[23:24, 0:32], 0.0)                     # (F,32)

    # Gather the 7 pool outputs per sample (rows 3*wg) into a lane-dense (B, 224);
    # column order wg*32+c matches the flatten permutation folded into fc1's weight.
    pooled3 = pooled.reshape(B, 32, 32)
    flat = jnp.concatenate([pooled3[:, 3 * wg] for wg in range(7)], axis=1)    # (B,224)

    # ---- Linear(224,32) + ReLU + Linear(32,4): one matmul each -------------------
    h1 = jnp.maximum(jnp.dot(flat, fcw_ref[0:224, :], preferred_element_type=f32)
                     + slab_ref[24:25, 0:32], 0.0)                             # (B,32)
    o_ref[...] = (jnp.dot(h1, fcw_ref[224:256, 0:4], preferred_element_type=f32)
                  + slab_ref[25:26, 0:4])                                      # (B,4)


# ------------------------------ parameter folding ----------------------------------

def _fold_params(p):
    """Weight-only folds (hoistable out of the hot path in a real deployment)."""
    (W1, b1, g1, be1, W2, b2, g2, be2, W3, b3, W4, b4) = p
    s1 = g1 / jnp.sqrt(1.0 + EPS)   # BN1 eval fold (running mean=0, var=1)
    s2 = g2 / jnp.sqrt(1.0 + EPS)   # BN2 eval fold
    # TODO(synk): general eval-mode BN (arbitrary running stats) / train-mode batch
    # statistics are not modeled; init-state eval mode only.

    W1f = W1[:, 0, 0, :] * s1[:, None]                                     # (32, 10)
    w1r = jnp.broadcast_to(W1f.T[:, :, None], (10, 32, 12)).reshape(10, 384)
    b1r = jnp.broadcast_to((b1 * s1 + be1)[:, None], (32, 12)).reshape(384)
    rmat = jnp.tile(jnp.eye(12, dtype=jnp.float32), (1, 32))               # (12, 384)

    # conv2 weight rows ordered kw*384 + cin*12 + h (matches the a1 lane layout).
    W2bf = ((W2 * s2[:, None, None, None]).transpose(3, 1, 2, 0)
            .reshape(1920, 32).astype(jnp.bfloat16))
    b2f = b2 * s2 + be2

    # Fold the torch flatten order (index c*7 + wg) into fc1: rows become wg*32 + c.
    W3m = W3.reshape(32, 32, 7).transpose(2, 1, 0).reshape(224, 32)
    fcw = jnp.zeros((256, 32), jnp.float32)
    fcw = fcw.at[0:224, :].set(W3m)
    fcw = fcw.at[224:256, 0:4].set(W4.T)

    slab = jnp.zeros((26, 384), jnp.float32)
    slab = slab.at[0:12, :].set(rmat)
    slab = slab.at[12:22, :].set(w1r)
    slab = slab.at[22, :].set(b1r)
    slab = slab.at[23, 0:32].set(b2f)
    slab = slab.at[24, 0:32].set(b3)
    slab = slab.at[25, 0:4].set(b4)
    return W2bf, fcw, slab


# ------------------------------- forward (wrapper) ---------------------------------

def cnn_forward(x, params, block_b=8):
    """x: (n, 1, 12, 30) float32, NCHW -> (n, 4)."""
    n = x.shape[0]
    # B samples per grid step; keep >= 2 programs when n >= 2 so both v7x cores work.
    B = max(1, min(block_b, n // 2))
    g = -(-n // B)
    n_pad = g * B

    w2_bf, fcw, slab = _fold_params(params)

    # Input: NCHW -> per-sample (W_pad = 32 rows, H = 12 lanes), conv1 W-pad folded in.
    xt = jnp.pad(jnp.swapaxes(x[:, 0], 1, 2), ((0, 0), (1, 1), (0, 0)))    # (n, 32, 12)
    if n_pad != n:
        xt = jnp.concatenate([xt, jnp.zeros((n_pad - n, 32, 12), xt.dtype)], axis=0)
    x_flat = xt.reshape(n_pad * 32, 12)

    out = pl.pallas_call(
        fused_cnn_kernel,
        out_shape=jax.ShapeDtypeStruct((g, B, 4), jnp.float32),
        grid=(g,),
        in_specs=[
            pl.BlockSpec((B * 32, 12), lambda i: (i, 0)),    # B samples per program
            pl.BlockSpec((1920, 32), lambda i: (0, 0)),      # conv2 weight (bf16, BN folded)
            pl.BlockSpec((256, 32), lambda i: (0, 0)),       # fc1 + fc2 weights
            pl.BlockSpec((26, 384), lambda i: (0, 0)),       # packed small constants
        ],
        out_specs=pl.BlockSpec((None, B, 4), lambda i: (i, 0, 0)),
        compiler_params=pltpu.CompilerParams(dimension_semantics=("parallel",)),
    )(x_flat, w2_bf, fcw, slab)
    return out.reshape(n_pad, 4)[:n]


# ------------------------- deterministic parameter init ----------------------------

def init_params(key):
    ks = jax.random.split(key, 12)
    W1 = 0.1 * jax.random.normal(ks[0], (32, 1, 1, 10), jnp.float32)
    b1 = 0.1 * jax.random.normal(ks[1], (32,), jnp.float32)
    g1 = 1.0 + 0.1 * jax.random.normal(ks[2], (32,), jnp.float32)
    be1 = 0.1 * jax.random.normal(ks[3], (32,), jnp.float32)
    W2 = 0.05 * jax.random.normal(ks[4], (32, 32, 12, 5), jnp.float32)
    b2 = 0.1 * jax.random.normal(ks[5], (32,), jnp.float32)
    g2 = 1.0 + 0.1 * jax.random.normal(ks[6], (32,), jnp.float32)
    be2 = 0.1 * jax.random.normal(ks[7], (32,), jnp.float32)
    W3 = 0.05 * jax.random.normal(ks[8], (32, 224), jnp.float32)
    b3 = 0.1 * jax.random.normal(ks[9], (32,), jnp.float32)
    W4 = 0.1 * jax.random.normal(ks[10], (4, 32), jnp.float32)
    b4 = 0.1 * jax.random.normal(ks[11], (4,), jnp.float32)
    return (W1, b1, g1, be1, W2, b2, g2, be2, W3, b3, W4, b4)


# ------------------------- pure-JAX reference (for checking) -----------------------

def reference_forward(x, p):
    (W1, b1, g1, be1, W2, b2, g2, be2, W3, b3, W4, b4) = p
    s1 = g1 / jnp.sqrt(1.0 + EPS)
    s2 = g2 / jnp.sqrt(1.0 + EPS)
    dn = ('NCHW', 'OIHW', 'NCHW')
    y = lax.conv_general_dilated(x, W1, (1, 1), ((0, 0), (1, 1)), dimension_numbers=dn)
    y = (y + b1[None, :, None, None]) * s1[None, :, None, None] + be1[None, :, None, None]
    y = jnp.maximum(y, 0.0)
    y = lax.conv_general_dilated(y, W2, (1, 1), ((0, 0), (1, 1)), dimension_numbers=dn)
    y = (y + b2[None, :, None, None]) * s2[None, :, None, None] + be2[None, :, None, None]
    y = jnp.maximum(y, 0.0)                          # (n, 32, 1, 21)
    n = x.shape[0]
    y = y.reshape(n, 32, 1, 7, 3).max(axis=-1)       # (n, 32, 1, 7)
    flat = y.reshape(n, -1)                          # (n, 224)
    h = jnp.maximum(flat @ W3.T + b3, 0.0)
    return h @ W4.T + b4


if __name__ == "__main__":
    key = jax.random.PRNGKey(0)
    kx, kp = jax.random.split(key)
    params = init_params(kp)
    n = 16                                    # -> B=8 samples per program, grid=(2,)
    x = jax.random.normal(kx, (n, 1, H, W), dtype=jnp.float32)

    out = jax.jit(cnn_forward)(x, params)
    out = jax.block_until_ready(out)
    assert out.shape == (n, 4)

    ref = reference_forward(x, params)
    # bf16 MXU operands with f32 accumulation; 1e-2 comfortably covers the rounding.
    np.testing.assert_allclose(np.asarray(out), np.asarray(ref), rtol=1e-2, atol=1e-2)

    print("KERNEL_OK")
</pallas_src>

<mosaic_0001>
module attributes {stable_mosaic.version = 11 : i64} {
  func.func @fused_cnn_kernel(%arg0: i32, %arg1: memref<256x12xf32, #tpu.memory_space<vmem>>, %arg2: memref<1920x32xbf16, #tpu.memory_space<vmem>>, %arg3: memref<256x32xf32, #tpu.memory_space<vmem>>, %arg4: memref<26x384xf32, #tpu.memory_space<vmem>>, %arg5: memref<1x8x4xf32, #tpu.memory_space<vmem>>) attributes {dimension_semantics = [#tpu.dimension_semantics<parallel>], iteration_bounds = array<i64: 2>, scalar_prefetch = 0 : i64, scratch_operands = 0 : i64, tpu.core_type = #tpu.core_type<tc>, window_params = [{transform_indices = @transform_0, window_bounds = array<i64: 256, 12>}, {pipeline_mode = #tpu.pipeline_mode<synchronous>, transform_indices = @transform_1, window_bounds = array<i64: 1920, 32>}, {pipeline_mode = #tpu.pipeline_mode<synchronous>, transform_indices = @transform_2, window_bounds = array<i64: 256, 32>}, {pipeline_mode = #tpu.pipeline_mode<synchronous>, transform_indices = @transform_3, window_bounds = array<i64: 26, 384>}, {transform_indices = @transform_4, window_bounds = array<i64: 1, 8, 4>}]} {
    %c0 = arith.constant 0 : index
    %c0_0 = arith.constant 0 : index
    %0 = vector.load %arg1[%c0, %c0_0] : memref<256x12xf32, #tpu.memory_space<vmem>>, vector<256x12xf32>
    %c0_1 = arith.constant 0 : index
    %c0_2 = arith.constant 0 : index
    %1 = vector.load %arg4[%c0_1, %c0_2] : memref<26x384xf32, #tpu.memory_space<vmem>>, vector<12x384xf32>
    %cst = arith.constant dense<0.000000e+00> : vector<256x384xf32>
    %2 = tpu.matmul %0, %1, %cst {dimension_numbers = #tpu.dot_dimension_numbers<[1], [0], [0], [1], [0, 0, 1, 1], [], []>} : vector<256x12xf32>, vector<12x384xf32>, vector<256x384xf32> -> vector<256x384xf32>
    %c12 = arith.constant 12 : index
    %c0_3 = arith.constant 0 : index
    %3 = vector.load %arg4[%c12, %c0_3] : memref<26x384xf32, #tpu.memory_space<vmem>>, vector<10x384xf32>
    %4 = vector.extract_strided_slice %3 {offsets = [0, 0], sizes = [1, 384], strides = [1, 1]} : vector<10x384xf32> to vector<1x384xf32>
    %5 = vector.broadcast %4 : vector<1x384xf32> to vector<256x384xf32>
    %6 = arith.mulf %2, %5 : vector<256x384xf32>
    %c255_i32 = arith.constant 255 : i32
    %7 = tpu.dynamic_rotate %2 by %c255_i32 dim 0 : vector<256x384xf32>, i32 -> vector<256x384xf32>
    %8 = vector.extract_strided_slice %3 {offsets = [1, 0], sizes = [1, 384], strides = [1, 1]} : vector<10x384xf32> to vector<1x384xf32>
    %9 = vector.broadcast %8 : vector<1x384xf32> to vector<256x384xf32>
    %10 = arith.mulf %7, %9 : vector<256x384xf32>
    %11 = arith.addf %6, %10 : vector<256x384xf32>
    %c254_i32 = arith.constant 254 : i32
    %12 = tpu.dynamic_rotate %2 by %c254_i32 dim 0 : vector<256x384xf32>, i32 -> vector<256x384xf32>
    %13 = vector.extract_strided_slice %3 {offsets = [2, 0], sizes = [1, 384], strides = [1, 1]} : vector<10x384xf32> to vector<1x384xf32>
    %14 = vector.broadcast %13 : vector<1x384xf32> to vector<256x384xf32>
    %15 = arith.mulf %12, %14 : vector<256x384xf32>
    %16 = arith.addf %11, %15 : vector<256x384xf32>
    %c253_i32 = arith.constant 253 : i32
    %17 = tpu.dynamic_rotate %2 by %c253_i32 dim 0 : vector<256x384xf32>, i32 -> vector<256x384xf32>
    %18 = vector.extract_strided_slice %3 {offsets = [3, 0], sizes = [1, 384], strides = [1, 1]} : vector<10x384xf32> to vector<1x384xf32>
    %19 = vector.broadcast %18 : vector<1x384xf32> to vector<256x384xf32>
    %20 = arith.mulf %17, %19 : vector<256x384xf32>
    %21 = arith.addf %16, %20 : vector<256x384xf32>
    %c252_i32 = arith.constant 252 : i32
    %22 = tpu.dynamic_rotate %2 by %c252_i32 dim 0 : vector<256x384xf32>, i32 -> vector<256x384xf32>
    %23 = vector.extract_strided_slice %3 {offsets = [4, 0], sizes = [1, 384], strides = [1, 1]} : vector<10x384xf32> to vector<1x384xf32>
    %24 = vector.broadcast %23 : vector<1x384xf32> to vector<256x384xf32>
    %25 = arith.mulf %22, %24 : vector<256x384xf32>
    %26 = arith.addf %21, %25 : vector<256x384xf32>
    %c251_i32 = arith.constant 251 : i32
    %27 = tpu.dynamic_rotate %2 by %c251_i32 dim 0 : vector<256x384xf32>, i32 -> vector<256x384xf32>
    %28 = vector.extract_strided_slice %3 {offsets = [5, 0], sizes = [1, 384], strides = [1, 1]} : vector<10x384xf32> to vector<1x384xf32>
    %29 = vector.broadcast %28 : vector<1x384xf32> to vector<256x384xf32>
    %30 = arith.mulf %27, %29 : vector<256x384xf32>
    %31 = arith.addf %26, %30 : vector<256x384xf32>
    %c250_i32 = arith.constant 250 : i32
    %32 = tpu.dynamic_rotate %2 by %c250_i32 dim 0 : vector<256x384xf32>, i32 -> vector<256x384xf32>
    %33 = vector.extract_strided_slice %3 {offsets = [6, 0], sizes = [1, 384], strides = [1, 1]} : vector<10x384xf32> to vector<1x384xf32>
    %34 = vector.broadcast %33 : vector<1x384xf32> to vector<256x384xf32>
    %35 = arith.mulf %32, %34 : vector<256x384xf32>
    %36 = arith.addf %31, %35 : vector<256x384xf32>
    %c249_i32 = arith.constant 249 : i32
    %37 = tpu.dynamic_rotate %2 by %c249_i32 dim 0 : vector<256x384xf32>, i32 -> vector<256x384xf32>
    %38 = vector.extract_strided_slice %3 {offsets = [7, 0], sizes = [1, 384], strides = [1, 1]} : vector<10x384xf32> to vector<1x384xf32>
    %39 = vector.broadcast %38 : vector<1x384xf32> to vector<256x384xf32>
    %40 = arith.mulf %37, %39 : vector<256x384xf32>
    %41 = arith.addf %36, %40 : vector<256x384xf32>
    %c248_i32 = arith.constant 248 : i32
    %42 = tpu.dynamic_rotate %2 by %c248_i32 dim 0 : vector<256x384xf32>, i32 -> vector<256x384xf32>
    %43 = vector.extract_strided_slice %3 {offsets = [8, 0], sizes = [1, 384], strides = [1, 1]} : vector<10x384xf32> to vector<1x384xf32>
    %44 = vector.broadcast %43 : vector<1x384xf32> to vector<256x384xf32>
    %45 = arith.mulf %42, %44 : vector<256x384xf32>
    %46 = arith.addf %41, %45 : vector<256x384xf32>
    %c247_i32 = arith.constant 247 : i32
    %47 = tpu.dynamic_rotate %2 by %c247_i32 dim 0 : vector<256x384xf32>, i32 -> vector<256x384xf32>
    %48 = vector.extract_strided_slice %3 {offsets = [9, 0], sizes = [1, 384], strides = [1, 1]} : vector<10x384xf32> to vector<1x384xf32>
    %49 = vector.broadcast %48 : vector<1x384xf32> to vector<256x384xf32>
    %50 = arith.mulf %47, %49 : vector<256x384xf32>
    %51 = arith.addf %46, %50 : vector<256x384xf32>
    %52 = tpu.iota {dimensions = array<i32: 0>} : vector<256x384xi32>
    %c31_i32 = arith.constant 31 : i32
    %53 = vector.broadcast %c31_i32 : i32 to vector<256x384xi32>
    %54 = arith.andi %52, %53 : vector<256x384xi32>
    %c22_i32 = arith.constant 22 : i32
    %55 = vector.broadcast %c22_i32 : i32 to vector<256x384xi32>
    %56 = arith.cmpi sle, %54, %55 : vector<256x384xi32>
    %57 = arith.extui %56 : vector<256x384xi1> to vector<256x384xi32>
    %58 = arith.sitofp %57 : vector<256x384xi32> to vector<256x384xf32>
    %c22 = arith.constant 22 : index
    %c0_4 = arith.constant 0 : index
    %59 = vector.load %arg4[%c22, %c0_4] : memref<26x384xf32, #tpu.memory_space<vmem>>, vector<1x384xf32>
    %60 = vector.broadcast %59 : vector<1x384xf32> to vector<256x384xf32>
    %61 = arith.addf %51, %60 : vector<256x384xf32>
    %cst_5 = arith.constant 0.000000e+00 : f32
    %62 = vector.broadcast %cst_5 : f32 to vector<256x384xf32>
    %63 = arith.maximumf %61, %62 : vector<256x384xf32>
    %64 = arith.mulf %63, %58 : vector<256x384xf32>
    %cst_6 = arith.constant 0.000000e+00 : f32
    %65 = vector.broadcast %cst_6 : f32 to vector<256x32xf32>
    %c1_i32 = arith.constant 1 : i32
    %66 = tpu.dynamic_rotate %64 by %c1_i32 dim 0 : vector<256x384xf32>, i32 -> vector<256x384xf32>
    %67 = arith.truncf %66 : vector<256x384xf32> to vector<256x384xbf16>
    %c0_7 = arith.constant 0 : index
    %c0_8 = arith.constant 0 : index
    %68 = vector.load %arg2[%c0_7, %c0_8] : memref<1920x32xbf16, #tpu.memory_space<vmem>>, vector<384x32xbf16>
    %cst_9 = arith.constant dense<0.000000e+00> : vector<256x32xf32>
    %69 = tpu.matmul %67, %68, %cst_9 {dimension_numbers = #tpu.dot_dimension_numbers<[1], [0], [0], [1], [0, 0, 1, 1], [], []>} : vector<256x384xbf16>, vector<384x32xbf16>, vector<256x32xf32> -> vector<256x32xf32>
    %70 = arith.addf %65, %69 : vector<256x32xf32>
    %71 = arith.truncf %64 : vector<256x384xf32> to vector<256x384xbf16>
    %c384 = arith.constant 384 : index
    %c0_10 = arith.constant 0 : index
    %72 = vector.load %arg2[%c384, %c0_10] : memref<1920x32xbf16, #tpu.memory_space<vmem>>, vector<384x32xbf16>
    %cst_11 = arith.constant dense<0.000000e+00> : vector<256x32xf32>
    %73 = tpu.matmul %71, %72, %cst_11 {dimension_numbers = #tpu.dot_dimension_numbers<[1], [0], [0], [1], [0, 0, 1, 1], [], []>} : vector<256x384xbf16>, vector<384x32xbf16>, vector<256x32xf32> -> vector<256x32xf32>
    %74 = arith.addf %70, %73 : vector<256x32xf32>
    %c255_i32_12 = arith.constant 255 : i32
    %75 = tpu.dynamic_rotate %64 by %c255_i32_12 dim 0 : vector<256x384xf32>, i32 -> vector<256x384xf32>
    %76 = arith.truncf %75 : vector<256x384xf32> to vector<256x384xbf16>
    %c768 = arith.constant 768 : index
    %c0_13 = arith.constant 0 : index
    %77 = vector.load %arg2[%c768, %c0_13] : memref<1920x32xbf16, #tpu.memory_space<vmem>>, vector<384x32xbf16>
    %cst_14 = arith.constant dense<0.000000e+00> : vector<256x32xf32>
    %78 = tpu.matmul %76, %77, %cst_14 {dimension_numbers = #tpu.dot_dimension_numbers<[1], [0], [0], [1], [0, 0, 1, 1], [], []>} : vector<256x384xbf16>, vector<384x32xbf16>, vector<256x32xf32> -> vector<256x32xf32>
    %79 = arith.addf %74, %78 : vector<256x32xf32>
    %c254_i32_15 = arith.constant 254 : i32
    %80 = tpu.dynamic_rotate %64 by %c254_i32_15 dim 0 : vector<256x384xf32>, i32 -> vector<256x384xf32>
    %81 = arith.truncf %80 : vector<256x384xf32> to vector<256x384xbf16>
    %c1152 = arith.constant 1152 : index
    %c0_16 = arith.constant 0 : index
    %82 = vector.load %arg2[%c1152, %c0_16] : memref<1920x32xbf16, #tpu.memory_space<vmem>>, vector<384x32xbf16>
    %cst_17 = arith.constant dense<0.000000e+00> : vector<256x32xf32>
    %83 = tpu.matmul %81, %82, %cst_17 {dimension_numbers = #tpu.dot_dimension_numbers<[1], [0], [0], [1], [0, 0, 1, 1], [], []>} : vector<256x384xbf16>, vector<384x32xbf16>, vector<256x32xf32> -> vector<256x32xf32>
    %84 = arith.addf %79, %83 : vector<256x32xf32>
    %c253_i32_18 = arith.constant 253 : i32
    %85 = tpu.dynamic_rotate %64 by %c253_i32_18 dim 0 : vector<256x384xf32>, i32 -> vector<256x384xf32>
    %86 = arith.truncf %85 : vector<256x384xf32> to vector<256x384xbf16>
    %c1536 = arith.constant 1536 : index
    %c0_19 = arith.constant 0 : index
    %87 = vector.load %arg2[%c1536, %c0_19] : memref<1920x32xbf16, #tpu.memory_space<vmem>>, vector<384x32xbf16>
    %cst_20 = arith.constant dense<0.000000e+00> : vector<256x32xf32>
    %88 = tpu.matmul %86, %87, %cst_20 {dimension_numbers = #tpu.dot_dimension_numbers<[1], [0], [0], [1], [0, 0, 1, 1], [], []>} : vector<256x384xbf16>, vector<384x32xbf16>, vector<256x32xf32> -> vector<256x32xf32>
    %89 = arith.addf %84, %88 : vector<256x32xf32>
    %c255_i32_21 = arith.constant 255 : i32
    %90 = tpu.dynamic_rotate %89 by %c255_i32_21 dim 0 : vector<256x32xf32>, i32 -> vector<256x32xf32>
    %c254_i32_22 = arith.constant 254 : i32
    %91 = tpu.dynamic_rotate %89 by %c254_i32_22 dim 0 : vector<256x32xf32>, i32 -> vector<256x32xf32>
    %92 = arith.maximumf %90, %91 : vector<256x32xf32>
    %93 = arith.maximumf %89, %92 : vector<256x32xf32>
    %c23 = arith.constant 23 : index
    %c0_23 = arith.constant 0 : index
    %94 = vector.load %arg4[%c23, %c0_23] : memref<26x384xf32, #tpu.memory_space<vmem>>, vector<1x32xf32>
    %95 = vector.broadcast %94 : vector<1x32xf32> to vector<256x32xf32>
    %96 = arith.addf %93, %95 : vector<256x32xf32>
    %cst_24 = arith.constant 0.000000e+00 : f32
    %97 = vector.broadcast %cst_24 : f32 to vector<256x32xf32>
    %98 = arith.maximumf %96, %97 : vector<256x32xf32>
    %99 = vector.shape_cast %98 : vector<256x32xf32> to vector<8x32x32xf32>
    %100 = vector.extract_strided_slice %99 {offsets = [0, 0, 0], sizes = [8, 1, 32], strides = [1, 1, 1]} : vector<8x32x32xf32> to vector<8x1x32xf32>
    %101 = vector.shape_cast %100 : vector<8x1x32xf32> to vector<8x32xf32>
    %102 = vector.extract_strided_slice %99 {offsets = [0, 3, 0], sizes = [8, 1, 32], strides = [1, 1, 1]} : vector<8x32x32xf32> to vector<8x1x32xf32>
    %103 = vector.shape_cast %102 : vector<8x1x32xf32> to vector<8x32xf32>
    %104 = vector.extract_strided_slice %99 {offsets = [0, 6, 0], sizes = [8, 1, 32], strides = [1, 1, 1]} : vector<8x32x32xf32> to vector<8x1x32xf32>
    %105 = vector.shape_cast %104 : vector<8x1x32xf32> to vector<8x32xf32>
    %106 = vector.extract_strided_slice %99 {offsets = [0, 9, 0], sizes = [8, 1, 32], strides = [1, 1, 1]} : vector<8x32x32xf32> to vector<8x1x32xf32>
    %107 = vector.shape_cast %106 : vector<8x1x32xf32> to vector<8x32xf32>
    %108 = vector.extract_strided_slice %99 {offsets = [0, 12, 0], sizes = [8, 1, 32], strides = [1, 1, 1]} : vector<8x32x32xf32> to vector<8x1x32xf32>
    %109 = vector.shape_cast %108 : vector<8x1x32xf32> to vector<8x32xf32>
    %110 = vector.extract_strided_slice %99 {offsets = [0, 15, 0], sizes = [8, 1, 32], strides = [1, 1, 1]} : vector<8x32x32xf32> to vector<8x1x32xf32>
    %111 = vector.shape_cast %110 : vector<8x1x32xf32> to vector<8x32xf32>
    %112 = vector.extract_strided_slice %99 {offsets = [0, 18, 0], sizes = [8, 1, 32], strides = [1, 1, 1]} : vector<8x32x32xf32> to vector<8x1x32xf32>
    %113 = vector.shape_cast %112 : vector<8x1x32xf32> to vector<8x32xf32>
    %114 = tpu.concatenate %101, %103, %105, %107, %109, %111, %113 in 1 : vector<8x32xf32>, vector<8x32xf32>, vector<8x32xf32>, vector<8x32xf32>, vector<8x32xf32>, vector<8x32xf32>, vector<8x32xf32> -> vector<8x224xf32>
    %c0_25 = arith.constant 0 : index
    %c0_26 = arith.constant 0 : index
    %115 = vector.load %arg3[%c0_25, %c0_26] : memref<256x32xf32, #tpu.memory_space<vmem>>, vector<224x32xf32>
    %cst_27 = arith.constant dense<0.000000e+00> : vector<8x32xf32>
    %116 = tpu.matmul %114, %115, %cst_27 {dimension_numbers = #tpu.dot_dimension_numbers<[1], [0], [0], [1], [0, 0, 1, 1], [], []>} : vector<8x224xf32>, vector<224x32xf32>, vector<8x32xf32> -> vector<8x32xf32>
    %c24 = arith.constant 24 : index
    %c0_28 = arith.constant 0 : index
    %117 = vector.load %arg4[%c24, %c0_28] : memref<26x384xf32, #tpu.memory_space<vmem>>, vector<1x32xf32>
    %118 = vector.broadcast %117 : vector<1x32xf32> to vector<8x32xf32>
    %119 = arith.addf %116, %118 : vector<8x32xf32>
    %cst_29 = arith.constant 0.000000e+00 : f32
    %120 = vector.broadcast %cst_29 : f32 to vector<8x32xf32>
    %121 = arith.maximumf %119, %120 : vector<8x32xf32>
    %c224 = arith.constant 224 : index
    %c0_30 = arith.constant 0 : index
    %122 = vector.load %arg3[%c224, %c0_30] : memref<256x32xf32, #tpu.memory_space<vmem>>, vector<32x4xf32>
    %cst_31 = arith.constant dense<0.000000e+00> : vector<8x4xf32>
    %123 = tpu.matmul %121, %122, %cst_31 {dimension_numbers = #tpu.dot_dimension_numbers<[1], [0], [0], [1], [0, 0, 1, 1], [], []>} : vector<8x32xf32>, vector<32x4xf32>, vector<8x4xf32> -> vector<8x4xf32>
    %c25 = arith.constant 25 : index
    %c0_32 = arith.constant 0 : index
    %124 = vector.load %arg4[%c25, %c0_32] : memref<26x384xf32, #tpu.memory_space<vmem>>, vector<1x4xf32>
    %125 = vector.broadcast %124 : vector<1x4xf32> to vector<8x4xf32>
    %126 = arith.addf %123, %125 : vector<8x4xf32>
    %c0_33 = arith.constant 0 : index
    %c0_34 = arith.constant 0 : index
    %c0_35 = arith.constant 0 : index
    %127 = vector.load %arg5[%c0_33, %c0_34, %c0_35] : memref<1x8x4xf32, #tpu.memory_space<vmem>>, vector<1x8x4xf32>
    %128 = vector.shape_cast %127 : vector<1x8x4xf32> to vector<8x4xf32>
    %129 = vector.shape_cast %126 : vector<8x4xf32> to vector<1x8x4xf32>
    tpu.vector_store %arg5[%c0_33, %c0_34, %c0_35], %129 {strides = array<i32>} : memref<1x8x4xf32, #tpu.memory_space<vmem>>, vector<1x8x4xf32>,
    return
  }
  func.func @transform_0(%arg0: i32) -> (i32, i32) {
    %c0_i32 = arith.constant 0 : i32
    %c0_i32_0 = arith.constant 0 : i32
    return %arg0, %c0_i32 : i32, i32
  }
  func.func @transform_1(%arg0: i32) -> (i32, i32) {
    %c0_i32 = arith.constant 0 : i32
    %c0_i32_0 = arith.constant 0 : i32
    %c0_i32_1 = arith.constant 0 : i32
    return %c0_i32, %c0_i32_0 : i32, i32
  }
  func.func @transform_2(%arg0: i32) -> (i32, i32) {
    %c0_i32 = arith.constant 0 : i32
    %c0_i32_0 = arith.constant 0 : i32
    %c0_i32_1 = arith.constant 0 : i32
    return %c0_i32, %c0_i32_0 : i32, i32
  }
  func.func @transform_3(%arg0: i32) -> (i32, i32) {
    %c0_i32 = arith.constant 0 : i32
    %c0_i32_0 = arith.constant 0 : i32
    %c0_i32_1 = arith.constant 0 : i32
    return %c0_i32, %c0_i32_0 : i32, i32
  }
  func.func @transform_4(%arg0: i32) -> (i32, i32, i32) {
    %c0_i32 = arith.constant 0 : i32
    %c0_i32_0 = arith.constant 0 : i32
    %c0_i32_1 = arith.constant 0 : i32
    return %arg0, %c0_i32, %c0_i32_0 : i32, i32, i32
  }
}

</mosaic_0001>

<llo_original>
// kernel: cnn_forward.1
$region0: #{cnn_forward.1}
  #allocation0 [shape = 'u32[]', space=smem, size = 0x4, offset = 0x4, fixed_abs, tag = 'smem constant byte address 0x4 - core index']
  #allocation1 [shape = 'u32[144,128]{1,0:T(1,128)}', space=vmem, size = 0x12000, scoped, tag = 'internal scratch']
  %s0 = inlined_call_operand.vmem [shape: f32[512,12], index: 0, kind: input, shape index: {}]
  %s1 = inlined_call_operand.vmem [shape: bf16[1920,32], index: 1, kind: input, shape index: {}]
  %s2 = inlined_call_operand.vmem [shape: f32[256,32], index: 2, kind: input, shape index: {}]
  %s3 = inlined_call_operand.vmem [shape: f32[26,384], index: 3, kind: input, shape index: {}]
  %s4 = inlined_call_operand.vmem [shape: f32[2,8,4], index: 4, kind: output, shape index: {}]
  %s5 = sld [smem:[#allocation0]]
  $region49: #{cnn_forward.1} parent=0
    _
  %s7 = ssub.s32 1, %s5
  %s8 = scalar_select 0, %s7, %s5
  loop: start=0, step=1, limit=4
  $region2: #{cnn_forward.1} parent=0 // loop_pre_header
    _
  $region3: #{cnn_forward.1} parent=0 // loop_header
    %s10 = sphi 0, %s14
    %p11 = scmp.ge.s32.totalorder %s10, 4
    %s20 = sphi 0, %s22
    %s23 = sphi 0, %s20
    %s24 = sphi 0, %s23
    %s40 = sphi 0, %s24
    %s44 = sphi 0, %s44
    %s46 = sphi 0, %s44
    %s47 = sphi 0, %s46
    %s61 = sphi 0, %s47
    %s65 = sphi 0, %s65
    %s67 = sphi 0, %s65
    %s68 = sphi 0, %s67
    %s82 = sphi 0, %s68
    %s86 = sphi 0, %s86
    %s88 = sphi 0, %s86
    %s89 = sphi 0, %s88
    %s103 = sphi 0, %s89
    %s109 = sphi 0, %s111
    %s112 = sphi 0, %s109
    %s113 = sphi 0, %s112
    %s129 = sphi 0, %s113
  $region4: #{cnn_forward.1} parent=0 // loop_header_branch
    %13 = sbr.rel (%p11) target = $region8
  $region5: #{cnn_forward.1} parent=0 // loop_body
    %s15 = ssub.s32 %s10, 1
    %s16 = ssub.s32 %s10, 2
    %s17 = sadd.s32 %s10, 1
    %s18 = ssub.s32 %s10, %s17
    %p19 = scmp.eq.s32.totalorder %s18, 0
    %s21 = sadd.s32 %s20, 1
    %s22 = scalar_select %p19, %s20, %s21
    %p25 = pneg %p19
    %p26 = scmp.eq.s32.totalorder %s10, 1
    %p27 = por %p25, %p26
    %p28 = scmp.ne.s32.totalorder %s20, %s23
    %p29 = scmp.eq.s32.totalorder %s10, 0
    %p30 = por %p28, %p29
    %p31 = scmp.ne.s32.totalorder %s20, %s23
    %p32 = scmp.eq.s32.totalorder %s15, 1
    %p33 = por %p31, %p32
    %p34 = scmp.ne.s32.totalorder %s23, %s24
    %p35 = scmp.eq.s32.totalorder %s15, 0
    %p36 = por %p34, %p35
    %p37 = scmp.ne.s32.totalorder %s23, %s24
    %p38 = scmp.eq.s32.totalorder %s16, 1
    %p39 = por %p37, %p38
    %p41 = scmp.ne.s32.totalorder %s24, %s40
    %p42 = scmp.eq.s32.totalorder %s16, 0
    %p43 = por %p41, %p42
    %s45 = sadd.s32 %s44, 1
    %p48 = scmp.eq.s32.totalorder %s10, 1
    %p49 = scmp.ne.s32.totalorder %s44, %s46
    %p50 = scmp.eq.s32.totalorder %s10, 0
    %p51 = por %p49, %p50
    %p52 = scmp.ne.s32.totalorder %s44, %s46
    %p53 = scmp.eq.s32.totalorder %s15, 1
    %p54 = por %p52, %p53
    %p55 = scmp.ne.s32.totalorder %s46, %s47
    %p56 = scmp.eq.s32.totalorder %s15, 0
    %p57 = por %p55, %p56
    %p58 = scmp.ne.s32.totalorder %s46, %s47
    %p59 = scmp.eq.s32.totalorder %s16, 1
    %p60 = por %p58, %p59
    %p62 = scmp.ne.s32.totalorder %s47, %s61
    %p63 = scmp.eq.s32.totalorder %s16, 0
    %p64 = por %p62, %p63
    %s66 = sadd.s32 %s65, 1
    %p69 = scmp.eq.s32.totalorder %s10, 1
    %p70 = scmp.ne.s32.totalorder %s65, %s67
    %p71 = scmp.eq.s32.totalorder %s10, 0
    %p72 = por %p70, %p71
    %p73 = scmp.ne.s32.totalorder %s65, %s67
    %p74 = scmp.eq.s32.totalorder %s15, 1
    %p75 = por %p73, %p74
    %p76 = scmp.ne.s32.totalorder %s67, %s68
    %p77 = scmp.eq.s32.totalorder %s15, 0
    %p78 = por %p76, %p77
    %p79 = scmp.ne.s32.totalorder %s67, %s68
    %p80 = scmp.eq.s32.totalorder %s16, 1
    %p81 = por %p79, %p80
    %p83 = scmp.ne.s32.totalorder %s68, %s82
    %p84 = scmp.eq.s32.totalorder %s16, 0
    %p85 = por %p83, %p84
    %s87 = sadd.s32 %s86, 1
    %p90 = scmp.eq.s32.totalorder %s10, 1
    %p91 = scmp.ne.s32.totalorder %s86, %s88
    %p92 = scmp.eq.s32.totalorder %s10, 0
    %p93 = por %p91, %p92
    %p94 = scmp.ne.s32.totalorder %s86, %s88
    %p95 = scmp.eq.s32.totalorder %s15, 1
    %p96 = por %p94, %p95
    %p97 = scmp.ne.s32.totalorder %s88, %s89
    %p98 = scmp.eq.s32.totalorder %s15, 0
    %p99 = por %p97, %p98
    %p100 = scmp.ne.s32.totalorder %s88, %s89
    %p101 = scmp.eq.s32.totalorder %s16, 1
    %p102 = por %p100, %p101
    %p104 = scmp.ne.s32.totalorder %s89, %s103
    %p105 = scmp.eq.s32.totalorder %s16, 0
    %p106 = por %p104, %p105
    %s107 = ssub.s32 %s10, %s17
    %p108 = scmp.eq.s32.totalorder %s107, 0
    %s110 = sadd.s32 %s109, 1
    %s111 = scalar_select %p108, %s109, %s110
    %p114 = pneg %p108
    %p115 = scmp.eq.s32.totalorder %s10, 1
    %p116 = por %p114, %p115
    %p117 = scmp.ne.s32.totalorder %s109, %s112
    %p118 = scmp.eq.s32.totalorder %s10, 0
    %p119 = por %p117, %p118
    %p120 = scmp.ne.s32.totalorder %s109, %s112
    %p121 = scmp.eq.s32.totalorder %s15, 1
    %p122 = por %p120, %p121
    %p123 = scmp.ne.s32.totalorder %s112, %s113
    %p124 = scmp.eq.s32.totalorder %s15, 0
    %p125 = por %p123, %p124
    %p126 = scmp.ne.s32.totalorder %s112, %s113
    %p127 = scmp.eq.s32.totalorder %s16, 1
    %p128 = por %p126, %p127
    %p130 = scmp.ne.s32.totalorder %s113, %s129
    %p131 = scmp.eq.s32.totalorder %s16, 0
    %p132 = por %p130, %p131
    %p133 = scmp.le.s32.totalorder 1, %s10
    %p134 = scmp.lt.s32.totalorder %s10, 3
    %p135 = pnand %p133, %p134
    %p136 = pneg %p135
    // Predicated region
    $region9: #{cnn_forward.1} parent=5 // pred_check
      _
    $region10: #{cnn_forward.1} parent=5 // pred_check_branch
      %138 = sbr.rel (%p135) target = $region12
    $region11: #{cnn_forward.1} parent=5 // pred_region
      %s139 = ssub.s32 %s10, 1
      // Predicated region
      $region13: #{cnn_forward.1} parent=11 // pred_check
        %p140 = pneg %p57
      $region14: #{cnn_forward.1} parent=11 // pred_check_branch
        %142 = sbr.rel (%p140) target = $region16
      $region15: #{cnn_forward.1} parent=11 // pred_region
        _
      $region16: #{cnn_forward.1} parent=11 // pred_fallthru
        _
      // Predicated region
      $region17: #{cnn_forward.1} parent=11 // pred_check
        %p143 = pneg %p78
      $region18: #{cnn_forward.1} parent=11 // pred_check_branch
        %145 = sbr.rel (%p143) target = $region20
      $region19: #{cnn_forward.1} parent=11 // pred_region
        _
      $region20: #{cnn_forward.1} parent=11 // pred_fallthru
        _
      // Predicated region
      $region21: #{cnn_forward.1} parent=11 // pred_check
        %p146 = pneg %p99
      $region22: #{cnn_forward.1} parent=11 // pred_check_branch
        %148 = sbr.rel (%p146) target = $region24
      $region23: #{cnn_forward.1} parent=11 // pred_region
        _
      $region24: #{cnn_forward.1} parent=11 // pred_fallthru
        _
    $region12: #{cnn_forward.1} parent=5 // pred_fallthru
      _
    %p149 = scmp.lt.s32.totalorder %s10, 2
    // Predicated region
    $region25: #{cnn_forward.1} parent=5 // pred_check
      %p150 = pneg %p149
    $region26: #{cnn_forward.1} parent=5 // pred_check_branch
      %152 = sbr.rel (%p150) target = $region28
    $region27: #{cnn_forward.1} parent=5 // pred_region
      // Predicated region
      $region29: #{cnn_forward.1} parent=27 // pred_check
        %p153 = pneg %p30
      $region30: #{cnn_forward.1} parent=27 // pred_check_branch
        %155 = sbr.rel (%p153) target = $region32
      $region31: #{cnn_forward.1} parent=27 // pred_region
        %s156 = smul.u32 32, %s10
        %p157 = scmp.lt.s32.totalorder %s156, 63
        %s158 = scalar_select %p157, %s156, 63
        %s159 = smul.addr %s158, 8
        %s160 = scalar_lea.vmem %s0, %s159
        %s161 = smul.u32 32, %s10
      $region32: #{cnn_forward.1} parent=27 // pred_fallthru
        _
    $region28: #{cnn_forward.1} parent=5 // pred_fallthru
      _
    %p162 = scmp.le.s32.totalorder 1, %s10
    %p163 = scmp.lt.s32.totalorder %s10, 3
    %p164 = pnand %p162, %p163
    %p165 = pneg %p164
    // Predicated region
    $region33: #{cnn_forward.1} parent=5 // pred_check
      _
    $region34: #{cnn_forward.1} parent=5 // pred_check_branch
      %167 = sbr.rel (%p164) target = $region36
    $region35: #{cnn_forward.1} parent=5 // pred_region
      %s168 = ssub.s32 %s10, 1
      %s169 = smul.u32 32, %s15
      %p170 = scmp.lt.s32.totalorder %s169, 63
      %s171 = scalar_select %p170, %s169, 63
      %s172 = smul.addr %s171, 8
      %s173 = scalar_lea.vmem %s0, %s172
      %p174 = pneg %p36
      %p175 = pneg %p33
      %p176 = pneg %p57
      %p177 = pneg %p54
      %p178 = pneg %p78
      %p179 = pneg %p75
      %p180 = pneg %p99
      %p181 = pneg %p96
      %p182 = pneg %p125
      %p183 = pneg %p122
      %p184 = scmp.lt.s32.totalorder %s15, 1
      %s185 = scalar_select %p184, %s15, 1
      %s186 = smul.addr %s185, 8
      %s187 = scalar_lea.vmem %s4, %s186
      %s188 = smul.u32 32, %s15
      %p189 = scmp.lt.s32.totalorder %s188, 63
      %s190 = scalar_select %p189, %s188, 63
      %s191 = smul.addr %s190, 8
      %s192 = scalar_lea.vmem %s0, %s191
      %s193 = smul.u32 32, %s15
      %p194 = scmp.lt.s32.totalorder %s15, 1
      %s195 = scalar_select %p194, %s15, 1
      %s196 = smul.addr %s195, 8
      %s197 = scalar_lea.vmem %s4, %s196
      %v199 = vld [vmem:[%s192] sm:$0xff]
      %v200 = vld [vmem:[%s192 + $0x8] sm:$0xff]
      %v201 = vld [vmem:[%s192 + $0x10] sm:$0xff]
      %v202 = vld [vmem:[%s192 + $0x18] sm:$0xff]
      %v203 = vld [vmem:[%s192 + $0x20] sm:$0xff]
      %v204 = vld [vmem:[%s192 + $0x28] sm:$0xff]
      %v205 = vld [vmem:[%s192 + $0x30] sm:$0xff]
      %v206 = vld [vmem:[%s192 + $0x38] sm:$0xff]
      %v207 = vld [vmem:[%s192 + $0x40] sm:$0xff]
      %v208 = vld [vmem:[%s192 + $0x48] sm:$0xff]
      %v209 = vld [vmem:[%s192 + $0x50] sm:$0xff]
      %v210 = vld [vmem:[%s192 + $0x58] sm:$0xff]
      %v211 = vld [vmem:[%s192 + $0x60] sm:$0xff]
      %v212 = vld [vmem:[%s192 + $0x68] sm:$0xff]
      %v213 = vld [vmem:[%s192 + $0x70] sm:$0xff]
      %v214 = vld [vmem:[%s192 + $0x78] sm:$0xff]
      %v215 = vld [vmem:[%s192 + $0x80] sm:$0xff]
      %v216 = vld [vmem:[%s192 + $0x88] sm:$0xff]
      %v217 = vld [vmem:[%s192 + $0x90] sm:$0xff]
      %v218 = vld [vmem:[%s192 + $0x98] sm:$0xff]
      %v219 = vld [vmem:[%s192 + $0xa0] sm:$0xff]
      %v220 = vld [vmem:[%s192 + $0xa8] sm:$0xff]
      %v221 = vld [vmem:[%s192 + $0xb0] sm:$0xff]
      %v222 = vld [vmem:[%s192 + $0xb8] sm:$0xff]
      %v223 = vld [vmem:[%s192 + $0xc0] sm:$0xff]
      %v224 = vld [vmem:[%s192 + $0xc8] sm:$0xff]
      %v225 = vld [vmem:[%s192 + $0xd0] sm:$0xff]
      %v226 = vld [vmem:[%s192 + $0xd8] sm:$0xff]
      %v227 = vld [vmem:[%s192 + $0xe0] sm:$0xff]
      %v228 = vld [vmem:[%s192 + $0xe8] sm:$0xff]
      %v229 = vld [vmem:[%s192 + $0xf0] sm:$0xff]
      %v230 = vld [vmem:[%s192 + $0xf8] sm:$0xff]
      %v231 = vld [vmem:[%s3] sm:$0xff]
      %v232 = vld [vmem:[%s3 + $0x8] sm:$0xff]
      %v233 = vld [vmem:[%s3 + $0x10] sm:$0xff]
      %v234 = vld [vmem:[%s3 + $0x18] sm:$0xf]
      %v235 = vld [vmem:[%s3 + $0x20] sm:$0xf]
      %v236 = vld [vmem:[%s3 + $0x28] sm:$0xf]
      %vm237 = vcmask 97280
      %v239 = vsel %vm237, %v199, 0
      %v242 = vsel %vm237, %v200, 0
      %v245 = vsel %vm237, %v201, 0
      %v248 = vsel %vm237, %v202, 0
      %v251 = vsel %vm237, %v203, 0
      %v254 = vsel %vm237, %v204, 0
      %v257 = vsel %vm237, %v205, 0
      %v260 = vsel %vm237, %v206, 0
      %v263 = vsel %vm237, %v207, 0
      %v266 = vsel %vm237, %v208, 0
      %v269 = vsel %vm237, %v209, 0
      %v272 = vsel %vm237, %v210, 0
      %v275 = vsel %vm237, %v211, 0
      %v278 = vsel %vm237, %v212, 0
      %v281 = vsel %vm237, %v213, 0
      %v284 = vsel %vm237, %v214, 0
      %v287 = vsel %vm237, %v215, 0
      %v290 = vsel %vm237, %v216, 0
      %v293 = vsel %vm237, %v217, 0
      %v296 = vsel %vm237, %v218, 0
      %v299 = vsel %vm237, %v219, 0
      %v302 = vsel %vm237, %v220, 0
      %v305 = vsel %vm237, %v221, 0
      %v308 = vsel %vm237, %v222, 0
      %v311 = vsel %vm237, %v223, 0
      %v314 = vsel %vm237, %v224, 0
      %v317 = vsel %vm237, %v225, 0
      %v320 = vsel %vm237, %v226, 0
      %v323 = vsel %vm237, %v227, 0
      %v326 = vsel %vm237, %v228, 0
      %v329 = vsel %vm237, %v229, 0
      %v332 = vsel %vm237, %v230, 0
      %vm334 = vcmask 1043456
      %v336 = vsel %vm334, %v234, 0
      %v339 = vsel %vm334, %v235, 0
      %v342 = vsel %vm334, %v236, 0
      %344 = vmatprep.subr.mxu0 0.0
      %345 = vmatpush1.msra.mxu0 0.0
      %346 = vmatprep.subr.mxu0 0.0
      %347 = vmatpush1.msra.mxu0 0.0
      %348 = vmatprep.subr.mxu0 0.0
      %349 = vmatpush1.msra.mxu0 0.0
      %350 = vmatprep.subr.mxu0 0.0
      %351 = vmatpush1.msra.mxu0 0.0
      %352 = vmatprep.subr.mxu0 0.0
      %353 = vmatpush1.msra.mxu0 0.0
      %354 = vmatprep.subr.mxu0 0.0
      %355 = vmatpush1.msra.mxu0 0.0
      %356 = vmatprep.subr.mxu0 0.0
      %357 = vmatpush1.msra.mxu0 0.0
      %358 = vmatprep.subr.mxu0 0.0
      %359 = vmatpush1.msra.mxu0 0.0
      %360 = vmatprep.subr.mxu0 0.0
      %361 = vmatpush1.msra.mxu0 0.0
      %362 = vmatprep.subr.mxu0 0.0
      %363 = vmatpush1.msra.mxu0 0.0
      %364 = vmatprep.subr.mxu0 0.0
      %365 = vmatpush1.msra.mxu0 0.0
      %366 = vmatprep.subr.mxu0 0.0
      %367 = vmatpush1.msra.mxu0 0.0
      %368 = vmatprep.subr.mxu0 0.0
      %369 = vmatpush1.msra.mxu0 0.0
      %370 = vmatprep.subr.mxu0 0.0
      %371 = vmatpush1.msra.mxu0 0.0
      %372 = vmatprep.subr.mxu0 %v339
      %373 = vmatpush1.msra.mxu0 %v336
      %374 = vmatprep.subr.mxu0 %v232
      %375 = vmatpush1.msra.mxu0 %v231
      %376 = vmatprep.subr.mxu0 0.0
      %377 = vmatpush2.msra.mxu0 0.0
      %378 = vmatprep.subr.mxu0 0.0
      %379 = vmatpush2.msra.mxu0 0.0
      %380 = vmatprep.subr.mxu0 0.0
      %381 = vmatpush2.msra.mxu0 0.0
      %382 = vmatprep.subr.mxu0 0.0
      %383 = vmatpush2.msra.mxu0 0.0
      %384 = vmatprep.subr.mxu0 0.0
      %385 = vmatpush2.msra.mxu0 0.0
      %386 = vmatprep.subr.mxu0 0.0
      %387 = vmatpush2.msra.mxu0 0.0
      %388 = vmatprep.subr.mxu0 0.0
      %389 = vmatpush2.msra.mxu0 0.0
      %390 = vmatprep.subr.mxu0 0.0
      %391 = vmatpush2.msra.mxu0 0.0
      %392 = vmatprep.subr.mxu0 0.0
      %393 = vmatpush2.msra.mxu0 0.0
      %394 = vmatprep.subr.mxu0 0.0
      %395 = vmatpush2.msra.mxu0 0.0
      %396 = vmatprep.subr.mxu0 0.0
      %397 = vmatpush2.msra.mxu0 0.0
      %398 = vmatprep.subr.mxu0 0.0
      %399 = vmatpush2.msra.mxu0 0.0
      %400 = vmatprep.subr.mxu0 0.0
      %401 = vmatpush2.msra.mxu0 0.0
      %402 = vmatprep.subr.mxu0 0.0
      %403 = vmatpush2.msra.mxu0 0.0
      %404 = vmatprep.subr.mxu0 0.0
      %405 = vmatpush2.msra.mxu0 0.0
      %406 = vmatprep.subr.mxu0 0.0
      %407 = vmatpush2.msra.mxu0 0.0
      %408 = vmatprep.mubr.f32.mxu0 0.0
      %409 = vmatmul.mubr.f32.gmra.mxu0 %v239
      %v410 = vpop.f32.mrf.mxu0
      %v411 = vadd.f32 0.0, %v410
      %v412 = vpop.f32.mrf.mxu0
      %v413 = vadd.f32 0.0, %v412
      %414 = vmatprep.mubr.f32.mxu0 0.0
      %415 = vmatmul.mubr.f32.gmra.mxu0 %v242
      %v416 = vpop.f32.mrf.mxu0
      %v417 = vadd.f32 0.0, %v416
      %v418 = vpop.f32.mrf.mxu0
      %v419 = vadd.f32 0.0, %v418
      %420 = vmatprep.mubr.f32.mxu0 0.0
      %421 = vmatmul.mubr.f32.gmra.mxu0 %v245
      %v422 = vpop.f32.mrf.mxu0
      %v423 = vadd.f32 0.0, %v422
      %v424 = vpop.f32.mrf.mxu0
      %v425 = vadd.f32 0.0, %v424
      %426 = vmatprep.mubr.f32.mxu0 0.0
      %427 = vmatmul.mubr.f32.gmra.mxu0 %v248
      %v428 = vpop.f32.mrf.mxu0
      %v429 = vadd.f32 0.0, %v428
      %v430 = vpop.f32.mrf.mxu0
      %v431 = vadd.f32 0.0, %v430
      %432 = vmatprep.mubr.f32.mxu0 0.0
      %433 = vmatmul.mubr.f32.gmra.mxu0 %v251
      %v434 = vpop.f32.mrf.mxu0
      %v435 = vadd.f32 0.0, %v434
      %v436 = vpop.f32.mrf.mxu0
      %v437 = vadd.f32 0.0, %v436
      %438 = vmatprep.mubr.f32.mxu0 0.0
      %439 = vmatmul.mubr.f32.gmra.mxu0 %v254
      %v440 = vpop.f32.mrf.mxu0
      %v441 = vadd.f32 0.0, %v440
      %v442 = vpop.f32.mrf.mxu0
      %v443 = vadd.f32 0.0, %v442
      %444 = vmatprep.mubr.f32.mxu0 0.0
      %445 = vmatmul.mubr.f32.gmra.mxu0 %v257
      %v446 = vpop.f32.mrf.mxu0
      %v447 = vadd.f32 0.0, %v446
      %v448 = vpop.f32.mrf.mxu0
      %v449 = vadd.f32 0.0, %v448
      %450 = vmatprep.mubr.f32.mxu0 0.0
      %451 = vmatmul.mubr.f32.gmra.mxu0 %v260
      %v452 = vpop.f32.mrf.mxu0
      %v453 = vadd.f32 0.0, %v452
      %v454 = vpop.f32.mrf.mxu0
      %v455 = vadd.f32 0.0, %v454
      %456 = vmatprep.mubr.f32.mxu0 0.0
      %457 = vmatmul.mubr.f32.gmra.mxu0 %v263
      %v458 = vpop.f32.mrf.mxu0
      %v459 = vadd.f32 0.0, %v458
      %v460 = vpop.f32.mrf.mxu0
      %v461 = vadd.f32 0.0, %v460
      %462 = vmatprep.mubr.f32.mxu0 0.0
      %463 = vmatmul.mubr.f32.gmra.mxu0 %v266
      %v464 = vpop.f32.mrf.mxu0
      %v465 = vadd.f32 0.0, %v464
      %v466 = vpop.f32.mrf.mxu0
      %v467 = vadd.f32 0.0, %v466
      %468 = vmatprep.mubr.f32.mxu0 0.0
      %469 = vmatmul.mubr.f32.gmra.mxu0 %v269
      %v470 = vpop.f32.mrf.mxu0
      %v471 = vadd.f32 0.0, %v470
      %v472 = vpop.f32.mrf.mxu0
      %v473 = vadd.f32 0.0, %v472
      %474 = vmatprep.mubr.f32.mxu0 0.0
      %475 = vmatmul.mubr.f32.gmra.mxu0 %v272
      %v476 = vpop.f32.mrf.mxu0
      %v477 = vadd.f32 0.0, %v476
      %v478 = vpop.f32.mrf.mxu0
      %v479 = vadd.f32 0.0, %v478
      %480 = vmatprep.mubr.f32.mxu0 0.0
      %481 = vmatmul.mubr.f32.gmra.mxu0 %v275
      %v482 = vpop.f32.mrf.mxu0
      %v483 = vadd.f32 0.0, %v482
      %v484 = vpop.f32.mrf.mxu0
      %v485 = vadd.f32 0.0, %v484
      %486 = vmatprep.mubr.f32.mxu0 0.0
      %487 = vmatmul.mubr.f32.gmra.mxu0 %v278
      %v488 = vpop.f32.mrf.mxu0
      %v489 = vadd.f32 0.0, %v488
      %v490 = vpop.f32.mrf.mxu0
      %v491 = vadd.f32 0.0, %v490
      %492 = vmatprep.mubr.f32.mxu0 0.0
      %493 = vmatmul.mubr.f32.gmra.mxu0 %v281
      %v494 = vpop.f32.mrf.mxu0
      %v495 = vadd.f32 0.0, %v494
      %v496 = vpop.f32.mrf.mxu0
      %v497 = vadd.f32 0.0, %v496
      %498 = vmatprep.mubr.f32.mxu0 0.0
      %499 = vmatmul.mubr.f32.gmra.mxu0 %v284
      %v500 = vpop.f32.mrf.mxu0
      %v501 = vadd.f32 0.0, %v500
      %v502 = vpop.f32.mrf.mxu0
      %v503 = vadd.f32 0.0, %v502
      %504 = vmatprep.mubr.f32.mxu0 0.0
      %505 = vmatmul.mubr.f32.gmra.mxu0 %v287
      %v506 = vpop.f32.mrf.mxu0
      %v507 = vadd.f32 0.0, %v506
      %v508 = vpop.f32.mrf.mxu0
      %v509 = vadd.f32 0.0, %v508
      %510 = vmatprep.mubr.f32.mxu0 0.0
      %511 = vmatmul.mubr.f32.gmra.mxu0 %v290
      %v512 = vpop.f32.mrf.mxu0
      %v513 = vadd.f32 0.0, %v512
      %v514 = vpop.f32.mrf.mxu0
      %v515 = vadd.f32 0.0, %v514
      %516 = vmatprep.mubr.f32.mxu0 0.0
      %517 = vmatmul.mubr.f32.gmra.mxu0 %v293
      %v518 = vpop.f32.mrf.mxu0
      %v519 = vadd.f32 0.0, %v518
      %v520 = vpop.f32.mrf.mxu0
      %v521 = vadd.f32 0.0, %v520
      %522 = vmatprep.mubr.f32.mxu0 0.0
      %523 = vmatmul.mubr.f32.gmra.mxu0 %v296
      %v524 = vpop.f32.mrf.mxu0
      %v525 = vadd.f32 0.0, %v524
      %v526 = vpop.f32.mrf.mxu0
      %v527 = vadd.f32 0.0, %v526
      %528 = vmatprep.mubr.f32.mxu0 0.0
      %529 = vmatmul.mubr.f32.gmra.mxu0 %v299
      %v530 = vpop.f32.mrf.mxu0
      %v531 = vadd.f32 0.0, %v530
      %v532 = vpop.f32.mrf.mxu0
      %v533 = vadd.f32 0.0, %v532
      %534 = vmatprep.mubr.f32.mxu0 0.0
      %535 = vmatmul.mubr.f32.gmra.mxu0 %v302
      %v536 = vpop.f32.mrf.mxu0
      %v537 = vadd.f32 0.0, %v536
      %v538 = vpop.f32.mrf.mxu0
      %v539 = vadd.f32 0.0, %v538
      %540 = vmatprep.mubr.f32.mxu0 0.0
      %541 = vmatmul.mubr.f32.gmra.mxu0 %v305
      %v542 = vpop.f32.mrf.mxu0
      %v543 = vadd.f32 0.0, %v542
      %v544 = vpop.f32.mrf.mxu0
      %v545 = vadd.f32 0.0, %v544
      %546 = vmatprep.mubr.f32.mxu0 0.0
      %547 = vmatmul.mubr.f32.gmra.mxu0 %v308
      %v548 = vpop.f32.mrf.mxu0
      %v549 = vadd.f32 0.0, %v548
      %v550 = vpop.f32.mrf.mxu0
      %v551 = vadd.f32 0.0, %v550
      %552 = vmatprep.mubr.f32.mxu0 0.0
      %553 = vmatmul.mubr.f32.gmra.mxu0 %v311
      %v554 = vpop.f32.mrf.mxu0
      %v555 = vadd.f32 0.0, %v554
      %v556 = vpop.f32.mrf.mxu0
      %v557 = vadd.f32 0.0, %v556
      %558 = vmatprep.mubr.f32.mxu0 0.0
      %559 = vmatmul.mubr.f32.gmra.mxu0 %v314
      %v560 = vpop.f32.mrf.mxu0
      %v561 = vadd.f32 0.0, %v560
      %v562 = vpop.f32.mrf.mxu0
      %v563 = vadd.f32 0.0, %v562
      %564 = vmatprep.mubr.f32.mxu0 0.0
      %565 = vmatmul.mubr.f32.gmra.mxu0 %v317
      %v566 = vpop.f32.mrf.mxu0
      %v567 = vadd.f32 0.0, %v566
      %v568 = vpop.f32.mrf.mxu0
      %v569 = vadd.f32 0.0, %v568
      %570 = vmatprep.mubr.f32.mxu0 0.0
      %571 = vmatmul.mubr.f32.gmra.mxu0 %v320
      %v572 = vpop.f32.mrf.mxu0
      %v573 = vadd.f32 0.0, %v572
      %v574 = vpop.f32.mrf.mxu0
      %v575 = vadd.f32 0.0, %v574
      %576 = vmatprep.mubr.f32.mxu0 0.0
      %577 = vmatmul.mubr.f32.gmra.mxu0 %v323
      %v578 = vpop.f32.mrf.mxu0
      %v579 = vadd.f32 0.0, %v578
      %v580 = vpop.f32.mrf.mxu0
      %v581 = vadd.f32 0.0, %v580
      %582 = vmatprep.mubr.f32.mxu0 0.0
      %583 = vmatmul.mubr.f32.gmra.mxu0 %v326
      %v584 = vpop.f32.mrf.mxu0
      %v585 = vadd.f32 0.0, %v584
      %v586 = vpop.f32.mrf.mxu0
      %v587 = vadd.f32 0.0, %v586
      %588 = vmatprep.mubr.f32.mxu0 0.0
      %589 = vmatmul.mubr.f32.gmra.mxu0 %v329
      %v590 = vpop.f32.mrf.mxu0
      %v591 = vadd.f32 0.0, %v590
      %v592 = vpop.f32.mrf.mxu0
      %v593 = vadd.f32 0.0, %v592
      %594 = vmatprep.mubr.f32.mxu0 0.0
      %595 = vmatmul.mubr.f32.gmra.mxu0 %v332
      %v596 = vpop.f32.mrf.mxu0
      %v597 = vadd.f32 0.0, %v596
      %v598 = vpop.f32.mrf.mxu0
      %v599 = vadd.f32 0.0, %v598
      %600 = vdwg.mxu0
      %601 = vmatprep.subr.mxu0 0.0
      %602 = vmatpush1.msra.mxu0 0.0
      %603 = vmatprep.subr.mxu0 0.0
      %604 = vmatpush1.msra.mxu0 0.0
      %605 = vmatprep.subr.mxu0 0.0
      %606 = vmatpush1.msra.mxu0 0.0
      %607 = vmatprep.subr.mxu0 0.0
      %608 = vmatpush1.msra.mxu0 0.0
      %609 = vmatprep.subr.mxu0 0.0
      %610 = vmatpush1.msra.mxu0 0.0
      %611 = vmatprep.subr.mxu0 0.0
      %612 = vmatpush1.msra.mxu0 0.0
      %613 = vmatprep.subr.mxu0 0.0
      %614 = vmatpush1.msra.mxu0 0.0
      %615 = vmatprep.subr.mxu0 0.0
      %616 = vmatpush1.msra.mxu0 0.0
      %617 = vmatprep.subr.mxu0 0.0
      %618 = vmatpush1.msra.mxu0 0.0
      %619 = vmatprep.subr.mxu0 0.0
      %620 = vmatpush1.msra.mxu0 0.0
      %621 = vmatprep.subr.mxu0 0.0
      %622 = vmatpush1.msra.mxu0 0.0
      %623 = vmatprep.subr.mxu0 0.0
      %624 = vmatpush1.msra.mxu0 0.0
      %625 = vmatprep.subr.mxu0 0.0
      %626 = vmatpush1.msra.mxu0 0.0
      %627 = vmatprep.subr.mxu0 0.0
      %628 = vmatpush1.msra.mxu0 0.0
      %629 = vmatprep.subr.mxu0 0.0
      %630 = vmatpush1.msra.mxu0 %v342
      %631 = vmatprep.subr.mxu0 0.0
      %632 = vmatpush1.msra.mxu0 %v233
      %633 = vmatprep.subr.mxu0 0.0
      %634 = vmatpush2.msra.mxu0 0.0
      %635 = vmatprep.subr.mxu0 0.0
      %636 = vmatpush2.msra.mxu0 0.0
      %637 = vmatprep.subr.mxu0 0.0
      %638 = vmatpush2.msra.mxu0 0.0
      %639 = vmatprep.subr.mxu0 0.0
      %640 = vmatpush2.msra.mxu0 0.0
      %641 = vmatprep.subr.mxu0 0.0
      %642 = vmatpush2.msra.mxu0 0.0
      %643 = vmatprep.subr.mxu0 0.0
      %644 = vmatpush2.msra.mxu0 0.0
      %645 = vmatprep.subr.mxu0 0.0
      %646 = vmatpush2.msra.mxu0 0.0
      %647 = vmatprep.subr.mxu0 0.0
      %648 = vmatpush2.msra.mxu0 0.0
      %649 = vmatprep.subr.mxu0 0.0
      %650 = vmatpush2.msra.mxu0 0.0
      %651 = vmatprep.subr.mxu0 0.0
      %652 = vmatpush2.msra.mxu0 0.0
      %653 = vmatprep.subr.mxu0 0.0
      %654 = vmatpush2.msra.mxu0 0.0
      %655 = vmatprep.subr.mxu0 0.0
      %656 = vmatpush2.msra.mxu0 0.0
      %657 = vmatprep.subr.mxu0 0.0
      %658 = vmatpush2.msra.mxu0 0.0
      %659 = vmatprep.subr.mxu0 0.0
      %660 = vmatpush2.msra.mxu0 0.0
      %661 = vmatprep.subr.mxu0 0.0
      %662 = vmatpush2.msra.mxu0 0.0
      %663 = vmatprep.subr.mxu0 0.0
      %664 = vmatpush2.msra.mxu0 0.0
      %665 = vmatprep.mubr.f32.mxu0 0.0
      %666 = vmatmul.mubr.f32.gmra.mxu0 %v239
      %v667 = vpop.f32.mrf.mxu0
      %v668 = vadd.f32 0.0, %v667
      %v669 = vpop.f32.mrf.mxu0
      %670 = vmatprep.mubr.f32.mxu0 0.0
      %671 = vmatmul.mubr.f32.gmra.mxu0 %v242
      %v672 = vpop.f32.mrf.mxu0
      %v673 = vadd.f32 0.0, %v672
      %v674 = vpop.f32.mrf.mxu0
      %675 = vmatprep.mubr.f32.mxu0 0.0
      %676 = vmatmul.mubr.f32.gmra.mxu0 %v245
      %v677 = vpop.f32.mrf.mxu0
      %v678 = vadd.f32 0.0, %v677
      %v679 = vpop.f32.mrf.mxu0
      %680 = vmatprep.mubr.f32.mxu0 0.0
      %681 = vmatmul.mubr.f32.gmra.mxu0 %v248
      %v682 = vpop.f32.mrf.mxu0
      %v683 = vadd.f32 0.0, %v682
      %v684 = vpop.f32.mrf.mxu0
      %685 = vmatprep.mubr.f32.mxu0 0.0
      %686 = vmatmul.mubr.f32.gmra.mxu0 %v251
      %v687 = vpop.f32.mrf.mxu0
      %v688 = vadd.f32 0.0, %v687
      %v689 = vpop.f32.mrf.mxu0
      %690 = vmatprep.mubr.f32.mxu0 0.0
      %691 = vmatmul.mubr.f32.gmra.mxu0 %v254
      %v692 = vpop.f32.mrf.mxu0
      %v693 = vadd.f32 0.0, %v692
      %v694 = vpop.f32.mrf.mxu0
      %695 = vmatprep.mubr.f32.mxu0 0.0
      %696 = vmatmul.mubr.f32.gmra.mxu0 %v257
      %v697 = vpop.f32.mrf.mxu0
      %v698 = vadd.f32 0.0, %v697
      %v699 = vpop.f32.mrf.mxu0
      %700 = vmatprep.mubr.f32.mxu0 0.0
      %701 = vmatmul.mubr.f32.gmra.mxu0 %v260
      %v702 = vpop.f32.mrf.mxu0
      %v703 = vadd.f32 0.0, %v702
      %v704 = vpop.f32.mrf.mxu0
      %705 = vmatprep.mubr.f32.mxu0 0.0
      %706 = vmatmul.mubr.f32.gmra.mxu0 %v263
      %v707 = vpop.f32.mrf.mxu0
      %v708 = vadd.f32 0.0, %v707
      %v709 = vpop.f32.mrf.mxu0
      %710 = vmatprep.mubr.f32.mxu0 0.0
      %711 = vmatmul.mubr.f32.gmra.mxu0 %v266
      %v712 = vpop.f32.mrf.mxu0
      %v713 = vadd.f32 0.0, %v712
      %v714 = vpop.f32.mrf.mxu0
      %715 = vmatprep.mubr.f32.mxu0 0.0
      %716 = vmatmul.mubr.f32.gmra.mxu0 %v269
      %v717 = vpop.f32.mrf.mxu0
      %v718 = vadd.f32 0.0, %v717
      %v719 = vpop.f32.mrf.mxu0
      %720 = vmatprep.mubr.f32.mxu0 0.0
      %721 = vmatmul.mubr.f32.gmra.mxu0 %v272
      %v722 = vpop.f32.mrf.mxu0
      %v723 = vadd.f32 0.0, %v722
      %v724 = vpop.f32.mrf.mxu0
      %725 = vmatprep.mubr.f32.mxu0 0.0
      %726 = vmatmul.mubr.f32.gmra.mxu0 %v275
      %v727 = vpop.f32.mrf.mxu0
      %v728 = vadd.f32 0.0, %v727
      %v729 = vpop.f32.mrf.mxu0
      %730 = vmatprep.mubr.f32.mxu0 0.0
      %731 = vmatmul.mubr.f32.gmra.mxu0 %v278
      %v732 = vpop.f32.mrf.mxu0
      %v733 = vadd.f32 0.0, %v732
      %v734 = vpop.f32.mrf.mxu0
      %735 = vmatprep.mubr.f32.mxu0 0.0
      %736 = vmatmul.mubr.f32.gmra.mxu0 %v281
      %v737 = vpop.f32.mrf.mxu0
      %v738 = vadd.f32 0.0, %v737
      %v739 = vpop.f32.mrf.mxu0
      %740 = vmatprep.mubr.f32.mxu0 0.0
      %741 = vmatmul.mubr.f32.gmra.mxu0 %v284
      %v742 = vpop.f32.mrf.mxu0
      %v743 = vadd.f32 0.0, %v742
      %v744 = vpop.f32.mrf.mxu0
      %745 = vmatprep.mubr.f32.mxu0 0.0
      %746 = vmatmul.mubr.f32.gmra.mxu0 %v287
      %v747 = vpop.f32.mrf.mxu0
      %v748 = vadd.f32 0.0, %v747
      %v749 = vpop.f32.mrf.mxu0
      %750 = vmatprep.mubr.f32.mxu0 0.0
      %751 = vmatmul.mubr.f32.gmra.mxu0 %v290
      %v752 = vpop.f32.mrf.mxu0
      %v753 = vadd.f32 0.0, %v752
      %v754 = vpop.f32.mrf.mxu0
      %755 = vmatprep.mubr.f32.mxu0 0.0
      %756 = vmatmul.mubr.f32.gmra.mxu0 %v293
      %v757 = vpop.f32.mrf.mxu0
      %v758 = vadd.f32 0.0, %v757
      %v759 = vpop.f32.mrf.mxu0
      %760 = vmatprep.mubr.f32.mxu0 0.0
      %761 = vmatmul.mubr.f32.gmra.mxu0 %v296
      %v762 = vpop.f32.mrf.mxu0
      %v763 = vadd.f32 0.0, %v762
      %v764 = vpop.f32.mrf.mxu0
      %765 = vmatprep.mubr.f32.mxu0 0.0
      %766 = vmatmul.mubr.f32.gmra.mxu0 %v299
      %v767 = vpop.f32.mrf.mxu0
      %v768 = vadd.f32 0.0, %v767
      %v769 = vpop.f32.mrf.mxu0
      %770 = vmatprep.mubr.f32.mxu0 0.0
      %771 = vmatmul.mubr.f32.gmra.mxu0 %v302
      %v772 = vpop.f32.mrf.mxu0
      %v773 = vadd.f32 0.0, %v772
      %v774 = vpop.f32.mrf.mxu0
      %775 = vmatprep.mubr.f32.mxu0 0.0
      %776 = vmatmul.mubr.f32.gmra.mxu0 %v305
      %v777 = vpop.f32.mrf.mxu0
      %v778 = vadd.f32 0.0, %v777
      %v779 = vpop.f32.mrf.mxu0
      %780 = vmatprep.mubr.f32.mxu0 0.0
      %781 = vmatmul.mubr.f32.gmra.mxu0 %v308
      %v782 = vpop.f32.mrf.mxu0
      %v783 = vadd.f32 0.0, %v782
      %v784 = vpop.f32.mrf.mxu0
      %785 = vmatprep.mubr.f32.mxu0 0.0
      %786 = vmatmul.mubr.f32.gmra.mxu0 %v311
      %v787 = vpop.f32.mrf.mxu0
      %v788 = vadd.f32 0.0, %v787
      %v789 = vpop.f32.mrf.mxu0
      %790 = vmatprep.mubr.f32.mxu0 0.0
      %791 = vmatmul.mubr.f32.gmra.mxu0 %v314
      %v792 = vpop.f32.mrf.mxu0
      %v793 = vadd.f32 0.0, %v792
      %v794 = vpop.f32.mrf.mxu0
      %795 = vmatprep.mubr.f32.mxu0 0.0
      %796 = vmatmul.mubr.f32.gmra.mxu0 %v317
      %v797 = vpop.f32.mrf.mxu0
      %v798 = vadd.f32 0.0, %v797
      %v799 = vpop.f32.mrf.mxu0
      %800 = vmatprep.mubr.f32.mxu0 0.0
      %801 = vmatmul.mubr.f32.gmra.mxu0 %v320
      %v802 = vpop.f32.mrf.mxu0
      %v803 = vadd.f32 0.0, %v802
      %v804 = vpop.f32.mrf.mxu0
      %805 = vmatprep.mubr.f32.mxu0 0.0
      %806 = vmatmul.mubr.f32.gmra.mxu0 %v323
      %v807 = vpop.f32.mrf.mxu0
      %v808 = vadd.f32 0.0, %v807
      %v809 = vpop.f32.mrf.mxu0
      %810 = vmatprep.mubr.f32.mxu0 0.0
      %811 = vmatmul.mubr.f32.gmra.mxu0 %v326
      %v812 = vpop.f32.mrf.mxu0
      %v813 = vadd.f32 0.0, %v812
      %v814 = vpop.f32.mrf.mxu0
      %815 = vmatprep.mubr.f32.mxu0 0.0
      %816 = vmatmul.mubr.f32.gmra.mxu0 %v329
      %v817 = vpop.f32.mrf.mxu0
      %v818 = vadd.f32 0.0, %v817
      %v819 = vpop.f32.mrf.mxu0
      %820 = vmatprep.mubr.f32.mxu0 0.0
      %821 = vmatmul.mubr.f32.gmra.mxu0 %v332
      %v822 = vpop.f32.mrf.mxu0
      %v823 = vadd.f32 0.0, %v822
      %v824 = vpop.f32.mrf.mxu0
      %825 = vdwg.mxu0
      %v826 = vld [vmem:[%s3 + $0x18] sm:$0xf0]
      %v827 = vld [vmem:[%s3 + $0x20] sm:$0xf0]
      %v828 = vld [vmem:[%s3 + $0x28] sm:$0xf0]
      %v829 = vld [vmem:[%s3 + $0x30] sm:$0x3f]
      %v830 = vld [vmem:[%s3 + $0x38] sm:$0x3f]
      %v831 = vld [vmem:[%s3 + $0x40] sm:$0x3f]
      %v832 = vlaneseq
      %v833 = vshrl.u32 %v832, 7
      %v834 = vsub.s32 4, %v833
      %v835 = vrot.slane %v826, %v834
      %v836 = vlaneseq
      %v837 = vshrl.u32 %v836, 7
      %v838 = vsub.s32 4, %v837
      %v839 = vrot.slane %v827, %v838
      %v840 = vlaneseq
      %v841 = vshrl.u32 %v840, 7
      %v842 = vsub.s32 4, %v841
      %v843 = vrot.slane %v828, %v842
      %v844 = vmul.f32 %v411, %v835
      %v845 = vmul.f32 %v413, %v839
      %v846 = vmul.f32 %v668, %v843
      %v847 = vmul.f32 %v417, %v835
      %v848 = vmul.f32 %v419, %v839
      %v849 = vmul.f32 %v673, %v843
      %v850 = vmul.f32 %v423, %v835
      %v851 = vmul.f32 %v425, %v839
      %v852 = vmul.f32 %v678, %v843
      %v853 = vmul.f32 %v429, %v835
      %v854 = vmul.f32 %v431, %v839
      %v855 = vmul.f32 %v683, %v843
      %v856 = vmul.f32 %v435, %v835
      %v857 = vmul.f32 %v437, %v839
      %v858 = vmul.f32 %v688, %v843
      %v859 = vmul.f32 %v441, %v835
      %v860 = vmul.f32 %v443, %v839
      %v861 = vmul.f32 %v693, %v843
      %v862 = vmul.f32 %v447, %v835
      %v863 = vmul.f32 %v449, %v839
      %v864 = vmul.f32 %v698, %v843
      %v865 = vmul.f32 %v453, %v835
      %v866 = vmul.f32 %v455, %v839
      %v867 = vmul.f32 %v703, %v843
      %v868 = vmul.f32 %v459, %v835
      %v869 = vmul.f32 %v461, %v839
      %v870 = vmul.f32 %v708, %v843
      %v871 = vmul.f32 %v465, %v835
      %v872 = vmul.f32 %v467, %v839
      %v873 = vmul.f32 %v713, %v843
      %v874 = vmul.f32 %v471, %v835
      %v875 = vmul.f32 %v473, %v839
      %v876 = vmul.f32 %v718, %v843
      %v877 = vmul.f32 %v477, %v835
      %v878 = vmul.f32 %v479, %v839
      %v879 = vmul.f32 %v723, %v843
      %v880 = vmul.f32 %v483, %v835
      %v881 = vmul.f32 %v485, %v839
      %v882 = vmul.f32 %v728, %v843
      %v883 = vmul.f32 %v489, %v835
      %v884 = vmul.f32 %v491, %v839
      %v885 = vmul.f32 %v733, %v843
      %v886 = vmul.f32 %v495, %v835
      %v887 = vmul.f32 %v497, %v839
      %v888 = vmul.f32 %v738, %v843
      %v889 = vmul.f32 %v501, %v835
      %v890 = vmul.f32 %v503, %v839
      %v891 = vmul.f32 %v743, %v843
      %v892 = vmul.f32 %v507, %v835
      %v893 = vmul.f32 %v509, %v839
      %v894 = vmul.f32 %v748, %v843
      %v895 = vmul.f32 %v513, %v835
      %v896 = vmul.f32 %v515, %v839
      %v897 = vmul.f32 %v753, %v843
      %v898 = vmul.f32 %v519, %v835
      %v899 = vmul.f32 %v521, %v839
      %v900 = vmul.f32 %v758, %v843
      %v901 = vmul.f32 %v525, %v835
      %v902 = vmul.f32 %v527, %v839
      %v903 = vmul.f32 %v763, %v843
      %v904 = vmul.f32 %v531, %v835
      %v905 = vmul.f32 %v533, %v839
      %v906 = vmul.f32 %v768, %v843
      %v907 = vmul.f32 %v537, %v835
      %v908 = vmul.f32 %v539, %v839
      %v909 = vmul.f32 %v773, %v843
      %v910 = vmul.f32 %v543, %v835
      %v911 = vmul.f32 %v545, %v839
      %v912 = vmul.f32 %v778, %v843
      %v913 = vmul.f32 %v549, %v835
      %v914 = vmul.f32 %v551, %v839
      %v915 = vmul.f32 %v783, %v843
      %v916 = vmul.f32 %v555, %v835
      %v917 = vmul.f32 %v557, %v839
      %v918 = vmul.f32 %v788, %v843
      %v919 = vmul.f32 %v561, %v835
      %v920 = vmul.f32 %v563, %v839
      %v921 = vmul.f32 %v793, %v843
      %v922 = vmul.f32 %v567, %v835
      %v923 = vmul.f32 %v569, %v839
      %v924 = vmul.f32 %v798, %v843
      %v925 = vmul.f32 %v573, %v835
      %v926 = vmul.f32 %v575, %v839
      %v927 = vmul.f32 %v803, %v843
      %v928 = vmul.f32 %v579, %v835
      %v929 = vmul.f32 %v581, %v839
      %v930 = vmul.f32 %v808, %v843
      %v931 = vmul.f32 %v585, %v835
      %v932 = vmul.f32 %v587, %v839
      %v933 = vmul.f32 %v813, %v843
      %v934 = vmul.f32 %v591, %v835
      %v935 = vmul.f32 %v593, %v839
      %v936 = vmul.f32 %v818, %v843
      %v937 = vmul.f32 %v597, %v835
      %v938 = vmul.f32 %v599, %v839
      %v939 = vmul.f32 %v823, %v843
      %v940 = vrot.slane %v411, 1
      %v941 = vrot.slane %v413, 1
      %v942 = vrot.slane %v668, 1
      %v943 = vrot.slane %v417, 1
      %v944 = vrot.slane %v419, 1
      %v945 = vrot.slane %v673, 1
      %v946 = vrot.slane %v423, 1
      %v947 = vrot.slane %v425, 1
      %v948 = vrot.slane %v678, 1
      %v949 = vrot.slane %v429, 1
      %v950 = vrot.slane %v431, 1
      %v951 = vrot.slane %v683, 1
      %v952 = vrot.slane %v435, 1
      %v953 = vrot.slane %v437, 1
      %v954 = vrot.slane %v688, 1
      %v955 = vrot.slane %v441, 1
      %v956 = vrot.slane %v443, 1
      %v957 = vrot.slane %v693, 1
      %v958 = vrot.slane %v447, 1
      %v959 = vrot.slane %v449, 1
      %v960 = vrot.slane %v698, 1
      %v961 = vrot.slane %v453, 1
      %v962 = vrot.slane %v455, 1
      %v963 = vrot.slane %v703, 1
      %v964 = vrot.slane %v459, 1
      %v965 = vrot.slane %v461, 1
      %v966 = vrot.slane %v708, 1
      %v967 = vrot.slane %v465, 1
      %v968 = vrot.slane %v467, 1
      %v969 = vrot.slane %v713, 1
      %v970 = vrot.slane %v471, 1
      %v971 = vrot.slane %v473, 1
      %v972 = vrot.slane %v718, 1
      %v973 = vrot.slane %v477, 1
      %v974 = vrot.slane %v479, 1
      %v975 = vrot.slane %v723, 1
      %v976 = vrot.slane %v483, 1
      %v977 = vrot.slane %v485, 1
      %v978 = vrot.slane %v728, 1
      %v979 = vrot.slane %v489, 1
      %v980 = vrot.slane %v491, 1
      %v981 = vrot.slane %v733, 1
      %v982 = vrot.slane %v495, 1
      %v983 = vrot.slane %v497, 1
      %v984 = vrot.slane %v738, 1
      %v985 = vrot.slane %v501, 1
      %v986 = vrot.slane %v503, 1
      %v987 = vrot.slane %v743, 1
      %v988 = vrot.slane %v507, 1
      %v989 = vrot.slane %v509, 1
      %v990 = vrot.slane %v748, 1
      %v991 = vrot.slane %v513, 1
      %v992 = vrot.slane %v515, 1
      %v993 = vrot.slane %v753, 1
      %v994 = vrot.slane %v519, 1
      %v995 = vrot.slane %v521, 1
      %v996 = vrot.slane %v758, 1
      %v997 = vrot.slane %v525, 1
      %v998 = vrot.slane %v527, 1
      %v999 = vrot.slane %v763, 1
      %v1000 = vrot.slane %v531, 1
      %v1001 = vrot.slane %v533, 1
      %v1002 = vrot.slane %v768, 1
      %v1003 = vrot.slane %v537, 1
      %v1004 = vrot.slane %v539, 1
      %v1005 = vrot.slane %v773, 1
      %v1006 = vrot.slane %v543, 1
      %v1007 = vrot.slane %v545, 1
      %v1008 = vrot.slane %v778, 1
      %v1009 = vrot.slane %v549, 1
      %v1010 = vrot.slane %v551, 1
      %v1011 = vrot.slane %v783, 1
      %v1012 = vrot.slane %v555, 1
      %v1013 = vrot.slane %v557, 1
      %v1014 = vrot.slane %v788, 1
      %v1015 = vrot.slane %v561, 1
      %v1016 = vrot.slane %v563, 1
      %v1017 = vrot.slane %v793, 1
      %v1018 = vrot.slane %v567, 1
      %v1019 = vrot.slane %v569, 1
      %v1020 = vrot.slane %v798, 1
      %v1021 = vrot.slane %v573, 1
      %v1022 = vrot.slane %v575, 1
      %v1023 = vrot.slane %v803, 1
      %v1024 = vrot.slane %v579, 1
      %v1025 = vrot.slane %v581, 1
      %v1026 = vrot.slane %v808, 1
      %v1027 = vrot.slane %v585, 1
      %v1028 = vrot.slane %v587, 1
      %v1029 = vrot.slane %v813, 1
      %v1030 = vrot.slane %v591, 1
      %v1031 = vrot.slane %v593, 1
      %v1032 = vrot.slane %v818, 1
      %v1033 = vrot.slane %v597, 1
      %v1034 = vrot.slane %v599, 1
      %v1035 = vrot.slane %v823, 1
      %v1036 = vlaneseq
      %v1037 = vshrl.u32 %v1036, 7
      %vm1038 = vcmp.lt.s32.totalorder %v1037, 7
      %v1039 = vsel %vm1038, %v1030, %v1033
      %v1040 = vsel %vm1038, %v1031, %v1034
      %v1041 = vsel %vm1038, %v1032, %v1035
      %v1042 = vsel %vm1038, %v1027, %v1030
      %v1043 = vsel %vm1038, %v1028, %v1031
      %v1044 = vsel %vm1038, %v1029, %v1032
      %v1045 = vsel %vm1038, %v1024, %v1027
      %v1046 = vsel %vm1038, %v1025, %v1028
      %v1047 = vsel %vm1038, %v1026, %v1029
      %v1048 = vsel %vm1038, %v1021, %v1024
      %v1049 = vsel %vm1038, %v1022, %v1025
      %v1050 = vsel %vm1038, %v1023, %v1026
      %v1051 = vsel %vm1038, %v1018, %v1021
      %v1052 = vsel %vm1038, %v1019, %v1022
      %v1053 = vsel %vm1038, %v1020, %v1023
      %v1054 = vsel %vm1038, %v1015, %v1018
      %v1055 = vsel %vm1038, %v1016, %v1019
      %v1056 = vsel %vm1038, %v1017, %v1020
      %v1057 = vsel %vm1038, %v1012, %v1015
      %v1058 = vsel %vm1038, %v1013, %v1016
      %v1059 = vsel %vm1038, %v1014, %v1017
      %v1060 = vsel %vm1038, %v1009, %v1012
      %v1061 = vsel %vm1038, %v1010, %v1013
      %v1062 = vsel %vm1038, %v1011, %v1014
      %v1063 = vsel %vm1038, %v1006, %v1009
      %v1064 = vsel %vm1038, %v1007, %v1010
      %v1065 = vsel %vm1038, %v1008, %v1011
      %v1066 = vsel %vm1038, %v1003, %v1006
      %v1067 = vsel %vm1038, %v1004, %v1007
      %v1068 = vsel %vm1038, %v1005, %v1008
      %v1069 = vsel %vm1038, %v1000, %v1003
      %v1070 = vsel %vm1038, %v1001, %v1004
      %v1071 = vsel %vm1038, %v1002, %v1005
      %v1072 = vsel %vm1038, %v997, %v1000
      %v1073 = vsel %vm1038, %v998, %v1001
      %v1074 = vsel %vm1038, %v999, %v1002
      %v1075 = vsel %vm1038, %v994, %v997
      %v1076 = vsel %vm1038, %v995, %v998
      %v1077 = vsel %vm1038, %v996, %v999
      %v1078 = vsel %vm1038, %v991, %v994
      %v1079 = vsel %vm1038, %v992, %v995
      %v1080 = vsel %vm1038, %v993, %v996
      %v1081 = vsel %vm1038, %v988, %v991
      %v1082 = vsel %vm1038, %v989, %v992
      %v1083 = vsel %vm1038, %v990, %v993
      %v1084 = vsel %vm1038, %v985, %v988
      %v1085 = vsel %vm1038, %v986, %v989
      %v1086 = vsel %vm1038, %v987, %v990
      %v1087 = vsel %vm1038, %v982, %v985
      %v1088 = vsel %vm1038, %v983, %v986
      %v1089 = vsel %vm1038, %v984, %v987
      %v1090 = vsel %vm1038, %v979, %v982
      %v1091 = vsel %vm1038, %v980, %v983
      %v1092 = vsel %vm1038, %v981, %v984
      %v1093 = vsel %vm1038, %v976, %v979
      %v1094 = vsel %vm1038, %v977, %v980
      %v1095 = vsel %vm1038, %v978, %v981
      %v1096 = vsel %vm1038, %v973, %v976
      %v1097 = vsel %vm1038, %v974, %v977
      %v1098 = vsel %vm1038, %v975, %v978
      %v1099 = vsel %vm1038, %v970, %v973
      %v1100 = vsel %vm1038, %v971, %v974
      %v1101 = vsel %vm1038, %v972, %v975
      %v1102 = vsel %vm1038, %v967, %v970
      %v1103 = vsel %vm1038, %v968, %v971
      %v1104 = vsel %vm1038, %v969, %v972
      %v1105 = vsel %vm1038, %v964, %v967
      %v1106 = vsel %vm1038, %v965, %v968
      %v1107 = vsel %vm1038, %v966, %v969
      %v1108 = vsel %vm1038, %v961, %v964
      %v1109 = vsel %vm1038, %v962, %v965
      %v1110 = vsel %vm1038, %v963, %v966
      %v1111 = vsel %vm1038, %v958, %v961
      %v1112 = vsel %vm1038, %v959, %v962
      %v1113 = vsel %vm1038, %v960, %v963
      %v1114 = vsel %vm1038, %v955, %v958
      %v1115 = vsel %vm1038, %v956, %v959
      %v1116 = vsel %vm1038, %v957, %v960
      %v1117 = vsel %vm1038, %v952, %v955
      %v1118 = vsel %vm1038, %v953, %v956
      %v1119 = vsel %vm1038, %v954, %v957
      %v1120 = vsel %vm1038, %v949, %v952
      %v1121 = vsel %vm1038, %v950, %v953
      %v1122 = vsel %vm1038, %v951, %v954
      %v1123 = vsel %vm1038, %v946, %v949
      %v1124 = vsel %vm1038, %v947, %v950
      %v1125 = vsel %vm1038, %v948, %v951
      %v1126 = vsel %vm1038, %v943, %v946
      %v1127 = vsel %vm1038, %v944, %v947
      %v1128 = vsel %vm1038, %v945, %v948
      %v1129 = vsel %vm1038, %v940, %v943
      %v1130 = vsel %vm1038, %v941, %v944
      %v1131 = vsel %vm1038, %v942, %v945
      %v1132 = vsel %vm1038, %v1033, %v940
      %v1133 = vsel %vm1038, %v1034, %v941
      %v1134 = vsel %vm1038, %v1035, %v942
      %v1135 = vlaneseq
      %v1136 = vshrl.u32 %v1135, 7
      %v1137 = vsub.s32 5, %v1136
      %v1138 = vrot.slane %v826, %v1137
      %v1139 = vlaneseq
      %v1140 = vshrl.u32 %v1139, 7
      %v1141 = vsub.s32 5, %v1140
      %v1142 = vrot.slane %v827, %v1141
      %v1143 = vlaneseq
      %v1144 = vshrl.u32 %v1143, 7
      %v1145 = vsub.s32 5, %v1144
      %v1146 = vrot.slane %v828, %v1145
      %v1147 = vmul.f32 %v1129, %v1138
      %v1148 = vmul.f32 %v1130, %v1142
      %v1149 = vmul.f32 %v1131, %v1146
      %v1150 = vmul.f32 %v1126, %v1138
      %v1151 = vmul.f32 %v1127, %v1142
      %v1152 = vmul.f32 %v1128, %v1146
      %v1153 = vmul.f32 %v1123, %v1138
      %v1154 = vmul.f32 %v1124, %v1142
      %v1155 = vmul.f32 %v1125, %v1146
      %v1156 = vmul.f32 %v1120, %v1138
      %v1157 = vmul.f32 %v1121, %v1142
      %v1158 = vmul.f32 %v1122, %v1146
      %v1159 = vmul.f32 %v1117, %v1138
      %v1160 = vmul.f32 %v1118, %v1142
      %v1161 = vmul.f32 %v1119, %v1146
      %v1162 = vmul.f32 %v1114, %v1138
      %v1163 = vmul.f32 %v1115, %v1142
      %v1164 = vmul.f32 %v1116, %v1146
      %v1165 = vmul.f32 %v1111, %v1138
      %v1166 = vmul.f32 %v1112, %v1142
      %v1167 = vmul.f32 %v1113, %v1146
      %v1168 = vmul.f32 %v1108, %v1138
      %v1169 = vmul.f32 %v1109, %v1142
      %v1170 = vmul.f32 %v1110, %v1146
      %v1171 = vmul.f32 %v1105, %v1138
      %v1172 = vmul.f32 %v1106, %v1142
      %v1173 = vmul.f32 %v1107, %v1146
      %v1174 = vmul.f32 %v1102, %v1138
      %v1175 = vmul.f32 %v1103, %v1142
      %v1176 = vmul.f32 %v1104, %v1146
      %v1177 = vmul.f32 %v1099, %v1138
      %v1178 = vmul.f32 %v1100, %v1142
      %v1179 = vmul.f32 %v1101, %v1146
      %v1180 = vmul.f32 %v1096, %v1138
      %v1181 = vmul.f32 %v1097, %v1142
      %v1182 = vmul.f32 %v1098, %v1146
      %v1183 = vmul.f32 %v1093, %v1138
      %v1184 = vmul.f32 %v1094, %v1142
      %v1185 = vmul.f32 %v1095, %v1146
      %v1186 = vmul.f32 %v1090, %v1138
      %v1187 = vmul.f32 %v1091, %v1142
      %v1188 = vmul.f32 %v1092, %v1146
      %v1189 = vmul.f32 %v1087, %v1138
      %v1190 = vmul.f32 %v1088, %v1142
      %v1191 = vmul.f32 %v1089, %v1146
      %v1192 = vmul.f32 %v1084, %v1138
      %v1193 = vmul.f32 %v1085, %v1142
      %v1194 = vmul.f32 %v1086, %v1146
      %v1195 = vmul.f32 %v1081, %v1138
      %v1196 = vmul.f32 %v1082, %v1142
      %v1197 = vmul.f32 %v1083, %v1146
      %v1198 = vmul.f32 %v1078, %v1138
      %v1199 = vmul.f32 %v1079, %v1142
      %v1200 = vmul.f32 %v1080, %v1146
      %v1201 = vmul.f32 %v1075, %v1138
      %v1202 = vmul.f32 %v1076, %v1142
      %v1203 = vmul.f32 %v1077, %v1146
      %v1204 = vmul.f32 %v1072, %v1138
      %v1205 = vmul.f32 %v1073, %v1142
      %v1206 = vmul.f32 %v1074, %v1146
      %v1207 = vmul.f32 %v1069, %v1138
      %v1208 = vmul.f32 %v1070, %v1142
      %v1209 = vmul.f32 %v1071, %v1146
      %v1210 = vmul.f32 %v1066, %v1138
      %v1211 = vmul.f32 %v1067, %v1142
      %v1212 = vmul.f32 %v1068, %v1146
      %v1213 = vmul.f32 %v1063, %v1138
      %v1214 = vmul.f32 %v1064, %v1142
      %v1215 = vmul.f32 %v1065, %v1146
      %v1216 = vmul.f32 %v1060, %v1138
      %v1217 = vmul.f32 %v1061, %v1142
      %v1218 = vmul.f32 %v1062, %v1146
      %v1219 = vmul.f32 %v1057, %v1138
      %v1220 = vmul.f32 %v1058, %v1142
      %v1221 = vmul.f32 %v1059, %v1146
      %v1222 = vmul.f32 %v1054, %v1138
      %v1223 = vmul.f32 %v1055, %v1142
      %v1224 = vmul.f32 %v1056, %v1146
      %v1225 = vmul.f32 %v1051, %v1138
      %v1226 = vmul.f32 %v1052, %v1142
      %v1227 = vmul.f32 %v1053, %v1146
      %v1228 = vmul.f32 %v1048, %v1138
      %v1229 = vmul.f32 %v1049, %v1142
      %v1230 = vmul.f32 %v1050, %v1146
      %v1231 = vmul.f32 %v1045, %v1138
      %v1232 = vmul.f32 %v1046, %v1142
      %v1233 = vmul.f32 %v1047, %v1146
      %v1234 = vmul.f32 %v1042, %v1138
      %v1235 = vmul.f32 %v1043, %v1142
      %v1236 = vmul.f32 %v1044, %v1146
      %v1237 = vmul.f32 %v1039, %v1138
      %v1238 = vmul.f32 %v1040, %v1142
      %v1239 = vmul.f32 %v1041, %v1146
      %v1240 = vmul.f32 %v1132, %v1138
      %v1241 = vmul.f32 %v1133, %v1142
      %v1242 = vmul.f32 %v1134, %v1146
      %v1243 = vadd.f32 %v844, %v1147
      %v1244 = vadd.f32 %v845, %v1148
      %v1245 = vadd.f32 %v846, %v1149
      %v1246 = vadd.f32 %v847, %v1150
      %v1247 = vadd.f32 %v848, %v1151
      %v1248 = vadd.f32 %v849, %v1152
      %v1249 = vadd.f32 %v850, %v1153
      %v1250 = vadd.f32 %v851, %v1154
      %v1251 = vadd.f32 %v852, %v1155
      %v1252 = vadd.f32 %v853, %v1156
      %v1253 = vadd.f32 %v854, %v1157
      %v1254 = vadd.f32 %v855, %v1158
      %v1255 = vadd.f32 %v856, %v1159
      %v1256 = vadd.f32 %v857, %v1160
      %v1257 = vadd.f32 %v858, %v1161
      %v1258 = vadd.f32 %v859, %v1162
      %v1259 = vadd.f32 %v860, %v1163
      %v1260 = vadd.f32 %v861, %v1164
      %v1261 = vadd.f32 %v862, %v1165
      %v1262 = vadd.f32 %v863, %v1166
      %v1263 = vadd.f32 %v864, %v1167
      %v1264 = vadd.f32 %v865, %v1168
      %v1265 = vadd.f32 %v866, %v1169
      %v1266 = vadd.f32 %v867, %v1170
      %v1267 = vadd.f32 %v868, %v1171
      %v1268 = vadd.f32 %v869, %v1172
      %v1269 = vadd.f32 %v870, %v1173
      %v1270 = vadd.f32 %v871, %v1174
      %v1271 = vadd.f32 %v872, %v1175
      %v1272 = vadd.f32 %v873, %v1176
      %v1273 = vadd.f32 %v874, %v1177
      %v1274 = vadd.f32 %v875, %v1178
      %v1275 = vadd.f32 %v876, %v1179
      %v1276 = vadd.f32 %v877, %v1180
      %v1277 = vadd.f32 %v878, %v1181
      %v1278 = vadd.f32 %v879, %v1182
      %v1279 = vadd.f32 %v880, %v1183
      %v1280 = vadd.f32 %v881, %v1184
      %v1281 = vadd.f32 %v882, %v1185
      %v1282 = vadd.f32 %v883, %v1186
      %v1283 = vadd.f32 %v884, %v1187
      %v1284 = vadd.f32 %v885, %v1188
      %v1285 = vadd.f32 %v886, %v1189
      %v1286 = vadd.f32 %v887, %v1190
      %v1287 = vadd.f32 %v888, %v1191
      %v1288 = vadd.f32 %v889, %v1192
      %v1289 = vadd.f32 %v890, %v1193
      %v1290 = vadd.f32 %v891, %v1194
      %v1291 = vadd.f32 %v892, %v1195
      %v1292 = vadd.f32 %v893, %v1196
      %v1293 = vadd.f32 %v894, %v1197
      %v1294 = vadd.f32 %v895, %v1198
      %v1295 = vadd.f32 %v896, %v1199
      %v1296 = vadd.f32 %v897, %v1200
      %v1297 = vadd.f32 %v898, %v1201
      %v1298 = vadd.f32 %v899, %v1202
      %v1299 = vadd.f32 %v900, %v1203
      %v1300 = vadd.f32 %v901, %v1204
      %v1301 = vadd.f32 %v902, %v1205
      %v1302 = vadd.f32 %v903, %v1206
      %v1303 = vadd.f32 %v904, %v1207
      %v1304 = vadd.f32 %v905, %v1208
      %v1305 = vadd.f32 %v906, %v1209
      %v1306 = vadd.f32 %v907, %v1210
      %v1307 = vadd.f32 %v908, %v1211
      %v1308 = vadd.f32 %v909, %v1212
      %v1309 = vadd.f32 %v910, %v1213
      %v1310 = vadd.f32 %v911, %v1214
      %v1311 = vadd.f32 %v912, %v1215
      %v1312 = vadd.f32 %v913, %v1216
      %v1313 = vadd.f32 %v914, %v1217
      %v1314 = vadd.f32 %v915, %v1218
      %v1315 = vadd.f32 %v916, %v1219
      %v1316 = vadd.f32 %v917, %v1220
      %v1317 = vadd.f32 %v918, %v1221
      %v1318 = vadd.f32 %v919, %v1222
      %v1319 = vadd.f32 %v920, %v1223
      %v1320 = vadd.f32 %v921, %v1224
      %v1321 = vadd.f32 %v922, %v1225
      %v1322 = vadd.f32 %v923, %v1226
      %v1323 = vadd.f32 %v924, %v1227
      %v1324 = vadd.f32 %v925, %v1228
      %v1325 = vadd.f32 %v926, %v1229
      %v1326 = vadd.f32 %v927, %v1230
      %v1327 = vadd.f32 %v928, %v1231
      %v1328 = vadd.f32 %v929, %v1232
      %v1329 = vadd.f32 %v930, %v1233
      %v1330 = vadd.f32 %v931, %v1234
      %v1331 = vadd.f32 %v932, %v1235
      %v1332 = vadd.f32 %v933, %v1236
      %v1333 = vadd.f32 %v934, %v1237
      %v1334 = vadd.f32 %v935, %v1238
      %v1335 = vadd.f32 %v936, %v1239
      %v1336 = vadd.f32 %v937, %v1240
      %v1337 = vadd.f32 %v938, %v1241
      %v1338 = vadd.f32 %v939, %v1242
      %v1339 = vrot.slane %v411, 2
      %v1340 = vrot.slane %v413, 2
      %v1341 = vrot.slane %v668, 2
      %v1342 = vrot.slane %v417, 2
      %v1343 = vrot.slane %v419, 2
      %v1344 = vrot.slane %v673, 2
      %v1345 = vrot.slane %v423, 2
      %v1346 = vrot.slane %v425, 2
      %v1347 = vrot.slane %v678, 2
      %v1348 = vrot.slane %v429, 2
      %v1349 = vrot.slane %v431, 2
      %v1350 = vrot.slane %v683, 2
      %v1351 = vrot.slane %v435, 2
      %v1352 = vrot.slane %v437, 2
      %v1353 = vrot.slane %v688, 2
      %v1354 = vrot.slane %v441, 2
      %v1355 = vrot.slane %v443, 2
      %v1356 = vrot.slane %v693, 2
      %v1357 = vrot.slane %v447, 2
      %v1358 = vrot.slane %v449, 2
      %v1359 = vrot.slane %v698, 2
      %v1360 = vrot.slane %v453, 2
      %v1361 = vrot.slane %v455, 2
      %v1362 = vrot.slane %v703, 2
      %v1363 = vrot.slane %v459, 2
      %v1364 = vrot.slane %v461, 2
      %v1365 = vrot.slane %v708, 2
      %v1366 = vrot.slane %v465, 2
      %v1367 = vrot.slane %v467, 2
      %v1368 = vrot.slane %v713, 2
      %v1369 = vrot.slane %v471, 2
      %v1370 = vrot.slane %v473, 2
      %v1371 = vrot.slane %v718, 2
      %v1372 = vrot.slane %v477, 2
      %v1373 = vrot.slane %v479, 2
      %v1374 = vrot.slane %v723, 2
      %v1375 = vrot.slane %v483, 2
      %v1376 = vrot.slane %v485, 2
      %v1377 = vrot.slane %v728, 2
      %v1378 = vrot.slane %v489, 2
      %v1379 = vrot.slane %v491, 2
      %v1380 = vrot.slane %v733, 2
      %v1381 = vrot.slane %v495, 2
      %v1382 = vrot.slane %v497, 2
      %v1383 = vrot.slane %v738, 2
      %v1384 = vrot.slane %v501, 2
      %v1385 = vrot.slane %v503, 2
      %v1386 = vrot.slane %v743, 2
      %v1387 = vrot.slane %v507, 2
      %v1388 = vrot.slane %v509, 2
      %v1389 = vrot.slane %v748, 2
      %v1390 = vrot.slane %v513, 2
      %v1391 = vrot.slane %v515, 2
      %v1392 = vrot.slane %v753, 2
      %v1393 = vrot.slane %v519, 2
      %v1394 = vrot.slane %v521, 2
      %v1395 = vrot.slane %v758, 2
      %v1396 = vrot.slane %v525, 2
      %v1397 = vrot.slane %v527, 2
      %v1398 = vrot.slane %v763, 2
      %v1399 = vrot.slane %v531, 2
      %v1400 = vrot.slane %v533, 2
      %v1401 = vrot.slane %v768, 2
      %v1402 = vrot.slane %v537, 2
      %v1403 = vrot.slane %v539, 2
      %v1404 = vrot.slane %v773, 2
      %v1405 = vrot.slane %v543, 2
      %v1406 = vrot.slane %v545, 2
      %v1407 = vrot.slane %v778, 2
      %v1408 = vrot.slane %v549, 2
      %v1409 = vrot.slane %v551, 2
      %v1410 = vrot.slane %v783, 2
      %v1411 = vrot.slane %v555, 2
      %v1412 = vrot.slane %v557, 2
      %v1413 = vrot.slane %v788, 2
      %v1414 = vrot.slane %v561, 2
      %v1415 = vrot.slane %v563, 2
      %v1416 = vrot.slane %v793, 2
      %v1417 = vrot.slane %v567, 2
      %v1418 = vrot.slane %v569, 2
      %v1419 = vrot.slane %v798, 2
      %v1420 = vrot.slane %v573, 2
      %v1421 = vrot.slane %v575, 2
      %v1422 = vrot.slane %v803, 2
      %v1423 = vrot.slane %v579, 2
      %v1424 = vrot.slane %v581, 2
      %v1425 = vrot.slane %v808, 2
      %v1426 = vrot.slane %v585, 2
      %v1427 = vrot.slane %v587, 2
      %v1428 = vrot.slane %v813, 2
      %v1429 = vrot.slane %v591, 2
      %v1430 = vrot.slane %v593, 2
      %v1431 = vrot.slane %v818, 2
      %v1432 = vrot.slane %v597, 2
      %v1433 = vrot.slane %v599, 2
      %v1434 = vrot.slane %v823, 2
      %vm1435 = vcmp.lt.s32.totalorder %v1037, 6
      %v1436 = vsel %vm1435, %v1429, %v1432
      %v1437 = vsel %vm1435, %v1430, %v1433
      %v1438 = vsel %vm1435, %v1431, %v1434
      %v1439 = vsel %vm1435, %v1426, %v1429
      %v1440 = vsel %vm1435, %v1427, %v1430
      %v1441 = vsel %vm1435, %v1428, %v1431
      %v1442 = vsel %vm1435, %v1423, %v1426
      %v1443 = vsel %vm1435, %v1424, %v1427
      %v1444 = vsel %vm1435, %v1425, %v1428
      %v1445 = vsel %vm1435, %v1420, %v1423
      %v1446 = vsel %vm1435, %v1421, %v1424
      %v1447 = vsel %vm1435, %v1422, %v1425
      %v1448 = vsel %vm1435, %v1417, %v1420
      %v1449 = vsel %vm1435, %v1418, %v1421
      %v1450 = vsel %vm1435, %v1419, %v1422
      %v1451 = vsel %vm1435, %v1414, %v1417
      %v1452 = vsel %vm1435, %v1415, %v1418
      %v1453 = vsel %vm1435, %v1416, %v1419
      %v1454 = vsel %vm1435, %v1411, %v1414
      %v1455 = vsel %vm1435, %v1412, %v1415
      %v1456 = vsel %vm1435, %v1413, %v1416
      %v1457 = vsel %vm1435, %v1408, %v1411
      %v1458 = vsel %vm1435, %v1409, %v1412
      %v1459 = vsel %vm1435, %v1410, %v1413
      %v1460 = vsel %vm1435, %v1405, %v1408
      %v1461 = vsel %vm1435, %v1406, %v1409
      %v1462 = vsel %vm1435, %v1407, %v1410
      %v1463 = vsel %vm1435, %v1402, %v1405
      %v1464 = vsel %vm1435, %v1403, %v1406
      %v1465 = vsel %vm1435, %v1404, %v1407
      %v1466 = vsel %vm1435, %v1399, %v1402
      %v1467 = vsel %vm1435, %v1400, %v1403
      %v1468 = vsel %vm1435, %v1401, %v1404
      %v1469 = vsel %vm1435, %v1396, %v1399
      %v1470 = vsel %vm1435, %v1397, %v1400
      %v1471 = vsel %vm1435, %v1398, %v1401
      %v1472 = vsel %vm1435, %v1393, %v1396
      %v1473 = vsel %vm1435, %v1394, %v1397
      %v1474 = vsel %vm1435, %v1395, %v1398
      %v1475 = vsel %vm1435, %v1390, %v1393
      %v1476 = vsel %vm1435, %v1391, %v1394
      %v1477 = vsel %vm1435, %v1392, %v1395
      %v1478 = vsel %vm1435, %v1387, %v1390
      %v1479 = vsel %vm1435, %v1388, %v1391
      %v1480 = vsel %vm1435, %v1389, %v1392
      %v1481 = vsel %vm1435, %v1384, %v1387
      %v1482 = vsel %vm1435, %v1385, %v1388
      %v1483 = vsel %vm1435, %v1386, %v1389
      %v1484 = vsel %vm1435, %v1381, %v1384
      %v1485 = vsel %vm1435, %v1382, %v1385
      %v1486 = vsel %vm1435, %v1383, %v1386
      %v1487 = vsel %vm1435, %v1378, %v1381
      %v1488 = vsel %vm1435, %v1379, %v1382
      %v1489 = vsel %vm1435, %v1380, %v1383
      %v1490 = vsel %vm1435, %v1375, %v1378
      %v1491 = vsel %vm1435, %v1376, %v1379
      %v1492 = vsel %vm1435, %v1377, %v1380
      %v1493 = vsel %vm1435, %v1372, %v1375
      %v1494 = vsel %vm1435, %v1373, %v1376
      %v1495 = vsel %vm1435, %v1374, %v1377
      %v1496 = vsel %vm1435, %v1369, %v1372
      %v1497 = vsel %vm1435, %v1370, %v1373
      %v1498 = vsel %vm1435, %v1371, %v1374
      %v1499 = vsel %vm1435, %v1366, %v1369
      %v1500 = vsel %vm1435, %v1367, %v1370
      %v1501 = vsel %vm1435, %v1368, %v1371
      %v1502 = vsel %vm1435, %v1363, %v1366
      %v1503 = vsel %vm1435, %v1364, %v1367
      %v1504 = vsel %vm1435, %v1365, %v1368
      %v1505 = vsel %vm1435, %v1360, %v1363
      %v1506 = vsel %vm1435, %v1361, %v1364
      %v1507 = vsel %vm1435, %v1362, %v1365
      %v1508 = vsel %vm1435, %v1357, %v1360
      %v1509 = vsel %vm1435, %v1358, %v1361
      %v1510 = vsel %vm1435, %v1359, %v1362
      %v1511 = vsel %vm1435, %v1354, %v1357
      %v1512 = vsel %vm1435, %v1355, %v1358
      %v1513 = vsel %vm1435, %v1356, %v1359
      %v1514 = vsel %vm1435, %v1351, %v1354
      %v1515 = vsel %vm1435, %v1352, %v1355
      %v1516 = vsel %vm1435, %v1353, %v1356
      %v1517 = vsel %vm1435, %v1348, %v1351
      %v1518 = vsel %vm1435, %v1349, %v1352
      %v1519 = vsel %vm1435, %v1350, %v1353
      %v1520 = vsel %vm1435, %v1345, %v1348
      %v1521 = vsel %vm1435, %v1346, %v1349
      %v1522 = vsel %vm1435, %v1347, %v1350
      %v1523 = vsel %vm1435, %v1342, %v1345
      %v1524 = vsel %vm1435, %v1343, %v1346
      %v1525 = vsel %vm1435, %v1344, %v1347
      %v1526 = vsel %vm1435, %v1339, %v1342
      %v1527 = vsel %vm1435, %v1340, %v1343
      %v1528 = vsel %vm1435, %v1341, %v1344
      %v1529 = vsel %vm1435, %v1432, %v1339
      %v1530 = vsel %vm1435, %v1433, %v1340
      %v1531 = vsel %vm1435, %v1434, %v1341
      %v1532 = vlaneseq
      %v1533 = vshrl.u32 %v1532, 7
      %v1534 = vsub.s32 6, %v1533
      %v1535 = vrot.slane %v826, %v1534
      %v1536 = vlaneseq
      %v1537 = vshrl.u32 %v1536, 7
      %v1538 = vsub.s32 6, %v1537
      %v1539 = vrot.slane %v827, %v1538
      %v1540 = vlaneseq
      %v1541 = vshrl.u32 %v1540, 7
      %v1542 = vsub.s32 6, %v1541
      %v1543 = vrot.slane %v828, %v1542
      %v1544 = vmul.f32 %v1526, %v1535
      %v1545 = vmul.f32 %v1527, %v1539
      %v1546 = vmul.f32 %v1528, %v1543
      %v1547 = vmul.f32 %v1523, %v1535
      %v1548 = vmul.f32 %v1524, %v1539
      %v1549 = vmul.f32 %v1525, %v1543
      %v1550 = vmul.f32 %v1520, %v1535
      %v1551 = vmul.f32 %v1521, %v1539
      %v1552 = vmul.f32 %v1522, %v1543
      %v1553 = vmul.f32 %v1517, %v1535
      %v1554 = vmul.f32 %v1518, %v1539
      %v1555 = vmul.f32 %v1519, %v1543
      %v1556 = vmul.f32 %v1514, %v1535
      %v1557 = vmul.f32 %v1515, %v1539
      %v1558 = vmul.f32 %v1516, %v1543
      %v1559 = vmul.f32 %v1511, %v1535
      %v1560 = vmul.f32 %v1512, %v1539
      %v1561 = vmul.f32 %v1513, %v1543
      %v1562 = vmul.f32 %v1508, %v1535
      %v1563 = vmul.f32 %v1509, %v1539
      %v1564 = vmul.f32 %v1510, %v1543
      %v1565 = vmul.f32 %v1505, %v1535
      %v1566 = vmul.f32 %v1506, %v1539
      %v1567 = vmul.f32 %v1507, %v1543
      %v1568 = vmul.f32 %v1502, %v1535
      %v1569 = vmul.f32 %v1503, %v1539
      %v1570 = vmul.f32 %v1504, %v1543
      %v1571 = vmul.f32 %v1499, %v1535
      %v1572 = vmul.f32 %v1500, %v1539
      %v1573 = vmul.f32 %v1501, %v1543
      %v1574 = vmul.f32 %v1496, %v1535
      %v1575 = vmul.f32 %v1497, %v1539
      %v1576 = vmul.f32 %v1498, %v1543
      %v1577 = vmul.f32 %v1493, %v1535
      %v1578 = vmul.f32 %v1494, %v1539
      %v1579 = vmul.f32 %v1495, %v1543
      %v1580 = vmul.f32 %v1490, %v1535
      %v1581 = vmul.f32 %v1491, %v1539
      %v1582 = vmul.f32 %v1492, %v1543
      %v1583 = vmul.f32 %v1487, %v1535
      %v1584 = vmul.f32 %v1488, %v1539
      %v1585 = vmul.f32 %v1489, %v1543
      %v1586 = vmul.f32 %v1484, %v1535
      %v1587 = vmul.f32 %v1485, %v1539
      %v1588 = vmul.f32 %v1486, %v1543
      %v1589 = vmul.f32 %v1481, %v1535
      %v1590 = vmul.f32 %v1482, %v1539
      %v1591 = vmul.f32 %v1483, %v1543
      %v1592 = vmul.f32 %v1478, %v1535
      %v1593 = vmul.f32 %v1479, %v1539
      %v1594 = vmul.f32 %v1480, %v1543
      %v1595 = vmul.f32 %v1475, %v1535
      %v1596 = vmul.f32 %v1476, %v1539
      %v1597 = vmul.f32 %v1477, %v1543
      %v1598 = vmul.f32 %v1472, %v1535
      %v1599 = vmul.f32 %v1473, %v1539
      %v1600 = vmul.f32 %v1474, %v1543
      %v1601 = vmul.f32 %v1469, %v1535
      %v1602 = vmul.f32 %v1470, %v1539
      %v1603 = vmul.f32 %v1471, %v1543
      %v1604 = vmul.f32 %v1466, %v1535
      %v1605 = vmul.f32 %v1467, %v1539
      %v1606 = vmul.f32 %v1468, %v1543
      %v1607 = vmul.f32 %v1463, %v1535
      %v1608 = vmul.f32 %v1464, %v1539
      %v1609 = vmul.f32 %v1465, %v1543
      %v1610 = vmul.f32 %v1460, %v1535
      %v1611 = vmul.f32 %v1461, %v1539
      %v1612 = vmul.f32 %v1462, %v1543
      %v1613 = vmul.f32 %v1457, %v1535
      %v1614 = vmul.f32 %v1458, %v1539
      %v1615 = vmul.f32 %v1459, %v1543
      %v1616 = vmul.f32 %v1454, %v1535
      %v1617 = vmul.f32 %v1455, %v1539
      %v1618 = vmul.f32 %v1456, %v1543
      %v1619 = vmul.f32 %v1451, %v1535
      %v1620 = vmul.f32 %v1452, %v1539
      %v1621 = vmul.f32 %v1453, %v1543
      %v1622 = vmul.f32 %v1448, %v1535
      %v1623 = vmul.f32 %v1449, %v1539
      %v1624 = vmul.f32 %v1450, %v1543
      %v1625 = vmul.f32 %v1445, %v1535
      %v1626 = vmul.f32 %v1446, %v1539
      %v1627 = vmul.f32 %v1447, %v1543
      %v1628 = vmul.f32 %v1442, %v1535
      %v1629 = vmul.f32 %v1443, %v1539
      %v1630 = vmul.f32 %v1444, %v1543
      %v1631 = vmul.f32 %v1439, %v1535
      %v1632 = vmul.f32 %v1440, %v1539
      %v1633 = vmul.f32 %v1441, %v1543
      %v1634 = vmul.f32 %v1436, %v1535
      %v1635 = vmul.f32 %v1437, %v1539
      %v1636 = vmul.f32 %v1438, %v1543
      %v1637 = vmul.f32 %v1529, %v1535
      %v1638 = vmul.f32 %v1530, %v1539
      %v1639 = vmul.f32 %v1531, %v1543
      %v1640 = vadd.f32 %v1243, %v1544
      %v1641 = vadd.f32 %v1244, %v1545
      %v1642 = vadd.f32 %v1245, %v1546
      %v1643 = vadd.f32 %v1246, %v1547
      %v1644 = vadd.f32 %v1247, %v1548
      %v1645 = vadd.f32 %v1248, %v1549
      %v1646 = vadd.f32 %v1249, %v1550
      %v1647 = vadd.f32 %v1250, %v1551
      %v1648 = vadd.f32 %v1251, %v1552
      %v1649 = vadd.f32 %v1252, %v1553
      %v1650 = vadd.f32 %v1253, %v1554
      %v1651 = vadd.f32 %v1254, %v1555
      %v1652 = vadd.f32 %v1255, %v1556
      %v1653 = vadd.f32 %v1256, %v1557
      %v1654 = vadd.f32 %v1257, %v1558
      %v1655 = vadd.f32 %v1258, %v1559
      %v1656 = vadd.f32 %v1259, %v1560
      %v1657 = vadd.f32 %v1260, %v1561
      %v1658 = vadd.f32 %v1261, %v1562
      %v1659 = vadd.f32 %v1262, %v1563
      %v1660 = vadd.f32 %v1263, %v1564
      %v1661 = vadd.f32 %v1264, %v1565
      %v1662 = vadd.f32 %v1265, %v1566
      %v1663 = vadd.f32 %v1266, %v1567
      %v1664 = vadd.f32 %v1267, %v1568
      %v1665 = vadd.f32 %v1268, %v1569
      %v1666 = vadd.f32 %v1269, %v1570
      %v1667 = vadd.f32 %v1270, %v1571
      %v1668 = vadd.f32 %v1271, %v1572
      %v1669 = vadd.f32 %v1272, %v1573
      %v1670 = vadd.f32 %v1273, %v1574
      %v1671 = vadd.f32 %v1274, %v1575
      %v1672 = vadd.f32 %v1275, %v1576
      %v1673 = vadd.f32 %v1276, %v1577
      %v1674 = vadd.f32 %v1277, %v1578
      %v1675 = vadd.f32 %v1278, %v1579
      %v1676 = vadd.f32 %v1279, %v1580
      %v1677 = vadd.f32 %v1280, %v1581
      %v1678 = vadd.f32 %v1281, %v1582
      %v1679 = vadd.f32 %v1282, %v1583
      %v1680 = vadd.f32 %v1283, %v1584
      %v1681 = vadd.f32 %v1284, %v1585
      %v1682 = vadd.f32 %v1285, %v1586
      %v1683 = vadd.f32 %v1286, %v1587
      %v1684 = vadd.f32 %v1287, %v1588
      %v1685 = vadd.f32 %v1288, %v1589
      %v1686 = vadd.f32 %v1289, %v1590
      %v1687 = vadd.f32 %v1290, %v1591
      %v1688 = vadd.f32 %v1291, %v1592
      %v1689 = vadd.f32 %v1292, %v1593
      %v1690 = vadd.f32 %v1293, %v1594
      %v1691 = vadd.f32 %v1294, %v1595
      %v1692 = vadd.f32 %v1295, %v1596
      %v1693 = vadd.f32 %v1296, %v1597
      %v1694 = vadd.f32 %v1297, %v1598
      %v1695 = vadd.f32 %v1298, %v1599
      %v1696 = vadd.f32 %v1299, %v1600
      %v1697 = vadd.f32 %v1300, %v1601
      %v1698 = vadd.f32 %v1301, %v1602
      %v1699 = vadd.f32 %v1302, %v1603
      %v1700 = vadd.f32 %v1303, %v1604
      %v1701 = vadd.f32 %v1304, %v1605
      %v1702 = vadd.f32 %v1305, %v1606
      %v1703 = vadd.f32 %v1306, %v1607
      %v1704 = vadd.f32 %v1307, %v1608
      %v1705 = vadd.f32 %v1308, %v1609
      %v1706 = vadd.f32 %v1309, %v1610
      %v1707 = vadd.f32 %v1310, %v1611
      %v1708 = vadd.f32 %v1311, %v1612
      %v1709 = vadd.f32 %v1312, %v1613
      %v1710 = vadd.f32 %v1313, %v1614
      %v1711 = vadd.f32 %v1314, %v1615
      %v1712 = vadd.f32 %v1315, %v1616
      %v1713 = vadd.f32 %v1316, %v1617
      %v1714 = vadd.f32 %v1317, %v1618
      %v1715 = vadd.f32 %v1318, %v1619
      %v1716 = vadd.f32 %v1319, %v1620
      %v1717 = vadd.f32 %v1320, %v1621
      %v1718 = vadd.f32 %v1321, %v1622
      %v1719 = vadd.f32 %v1322, %v1623
      %v1720 = vadd.f32 %v1323, %v1624
      %v1721 = vadd.f32 %v1324, %v1625
      %v1722 = vadd.f32 %v1325, %v1626
      %v1723 = vadd.f32 %v1326, %v1627
      %v1724 = vadd.f32 %v1327, %v1628
      %v1725 = vadd.f32 %v1328, %v1629
      %v1726 = vadd.f32 %v1329, %v1630
      %v1727 = vadd.f32 %v1330, %v1631
      %v1728 = vadd.f32 %v1331, %v1632
      %v1729 = vadd.f32 %v1332, %v1633
      %v1730 = vadd.f32 %v1333, %v1634
      %v1731 = vadd.f32 %v1334, %v1635
      %v1732 = vadd.f32 %v1335, %v1636
      %v1733 = vadd.f32 %v1336, %v1637
      %v1734 = vadd.f32 %v1337, %v1638
      %v1735 = vadd.f32 %v1338, %v1639
      %v1736 = vrot.slane %v411, 3
      %v1737 = vrot.slane %v413, 3
      %v1738 = vrot.slane %v668, 3
      %v1739 = vrot.slane %v417, 3
      %v1740 = vrot.slane %v419, 3
      %v1741 = vrot.slane %v673, 3
      %v1742 = vrot.slane %v423, 3
      %v1743 = vrot.slane %v425, 3
      %v1744 = vrot.slane %v678, 3
      %v1745 = vrot.slane %v429, 3
      %v1746 = vrot.slane %v431, 3
      %v1747 = vrot.slane %v683, 3
      %v1748 = vrot.slane %v435, 3
      %v1749 = vrot.slane %v437, 3
      %v1750 = vrot.slane %v688, 3
      %v1751 = vrot.slane %v441, 3
      %v1752 = vrot.slane %v443, 3
      %v1753 = vrot.slane %v693, 3
      %v1754 = vrot.slane %v447, 3
      %v1755 = vrot.slane %v449, 3
      %v1756 = vrot.slane %v698, 3
      %v1757 = vrot.slane %v453, 3
      %v1758 = vrot.slane %v455, 3
      %v1759 = vrot.slane %v703, 3
      %v1760 = vrot.slane %v459, 3
      %v1761 = vrot.slane %v461, 3
      %v1762 = vrot.slane %v708, 3
      %v1763 = vrot.slane %v465, 3
      %v1764 = vrot.slane %v467, 3
      %v1765 = vrot.slane %v713, 3
      %v1766 = vrot.slane %v471, 3
      %v1767 = vrot.slane %v473, 3
      %v1768 = vrot.slane %v718, 3
      %v1769 = vrot.slane %v477, 3
      %v1770 = vrot.slane %v479, 3
      %v1771 = vrot.slane %v723, 3
      %v1772 = vrot.slane %v483, 3
      %v1773 = vrot.slane %v485, 3
      %v1774 = vrot.slane %v728, 3
      %v1775 = vrot.slane %v489, 3
      %v1776 = vrot.slane %v491, 3
      %v1777 = vrot.slane %v733, 3
      %v1778 = vrot.slane %v495, 3
      %v1779 = vrot.slane %v497, 3
      %v1780 = vrot.slane %v738, 3
      %v1781 = vrot.slane %v501, 3
      %v1782 = vrot.slane %v503, 3
      %v1783 = vrot.slane %v743, 3
      %v1784 = vrot.slane %v507, 3
      %v1785 = vrot.slane %v509, 3
      %v1786 = vrot.slane %v748, 3
      %v1787 = vrot.slane %v513, 3
      %v1788 = vrot.slane %v515, 3
      %v1789 = vrot.slane %v753, 3
      %v1790 = vrot.slane %v519, 3
      %v1791 = vrot.slane %v521, 3
      %v1792 = vrot.slane %v758, 3
      %v1793 = vrot.slane %v525, 3
      %v1794 = vrot.slane %v527, 3
      %v1795 = vrot.slane %v763, 3
      %v1796 = vrot.slane %v531, 3
      %v1797 = vrot.slane %v533, 3
      %v1798 = vrot.slane %v768, 3
      %v1799 = vrot.slane %v537, 3
      %v1800 = vrot.slane %v539, 3
      %v1801 = vrot.slane %v773, 3
      %v1802 = vrot.slane %v543, 3
      %v1803 = vrot.slane %v545, 3
      %v1804 = vrot.slane %v778, 3
      %v1805 = vrot.slane %v549, 3
      %v1806 = vrot.slane %v551, 3
      %v1807 = vrot.slane %v783, 3
      %v1808 = vrot.slane %v555, 3
      %v1809 = vrot.slane %v557, 3
      %v1810 = vrot.slane %v788, 3
      %v1811 = vrot.slane %v561, 3
      %v1812 = vrot.slane %v563, 3
      %v1813 = vrot.slane %v793, 3
      %v1814 = vrot.slane %v567, 3
      %v1815 = vrot.slane %v569, 3
      %v1816 = vrot.slane %v798, 3
      %v1817 = vrot.slane %v573, 3
      %v1818 = vrot.slane %v575, 3
      %v1819 = vrot.slane %v803, 3
      %v1820 = vrot.slane %v579, 3
      %v1821 = vrot.slane %v581, 3
      %v1822 = vrot.slane %v808, 3
      %v1823 = vrot.slane %v585, 3
      %v1824 = vrot.slane %v587, 3
      %v1825 = vrot.slane %v813, 3
      %v1826 = vrot.slane %v591, 3
      %v1827 = vrot.slane %v593, 3
      %v1828 = vrot.slane %v818, 3
      %v1829 = vrot.slane %v597, 3
      %v1830 = vrot.slane %v599, 3
      %v1831 = vrot.slane %v823, 3
      %vm1832 = vcmp.lt.s32.totalorder %v1037, 5
      %v1833 = vsel %vm1832, %v1826, %v1829
      %v1834 = vsel %vm1832, %v1827, %v1830
      %v1835 = vsel %vm1832, %v1828, %v1831
      %v1836 = vsel %vm1832, %v1823, %v1826
      %v1837 = vsel %vm1832, %v1824, %v1827
      %v1838 = vsel %vm1832, %v1825, %v1828
      %v1839 = vsel %vm1832, %v1820, %v1823
      %v1840 = vsel %vm1832, %v1821, %v1824
      %v1841 = vsel %vm1832, %v1822, %v1825
      %v1842 = vsel %vm1832, %v1817, %v1820
      %v1843 = vsel %vm1832, %v1818, %v1821
      %v1844 = vsel %vm1832, %v1819, %v1822
      %v1845 = vsel %vm1832, %v1814, %v1817
      %v1846 = vsel %vm1832, %v1815, %v1818
      %v1847 = vsel %vm1832, %v1816, %v1819
      %v1848 = vsel %vm1832, %v1811, %v1814
      %v1849 = vsel %vm1832, %v1812, %v1815
      %v1850 = vsel %vm1832, %v1813, %v1816
      %v1851 = vsel %vm1832, %v1808, %v1811
      %v1852 = vsel %vm1832, %v1809, %v1812
      %v1853 = vsel %vm1832, %v1810, %v1813
      %v1854 = vsel %vm1832, %v1805, %v1808
      %v1855 = vsel %vm1832, %v1806, %v1809
      %v1856 = vsel %vm1832, %v1807, %v1810
      %v1857 = vsel %vm1832, %v1802, %v1805
      %v1858 = vsel %vm1832, %v1803, %v1806
      %v1859 = vsel %vm1832, %v1804, %v1807
      %v1860 = vsel %vm1832, %v1799, %v1802
      %v1861 = vsel %vm1832, %v1800, %v1803
      %v1862 = vsel %vm1832, %v1801, %v1804
      %v1863 = vsel %vm1832, %v1796, %v1799
      %v1864 = vsel %vm1832, %v1797, %v1800
      %v1865 = vsel %vm1832, %v1798, %v1801
      %v1866 = vsel %vm1832, %v1793, %v1796
      %v1867 = vsel %vm1832, %v1794, %v1797
      %v1868 = vsel %vm1832, %v1795, %v1798
      %v1869 = vsel %vm1832, %v1790, %v1793
      %v1870 = vsel %vm1832, %v1791, %v1794
      %v1871 = vsel %vm1832, %v1792, %v1795
      %v1872 = vsel %vm1832, %v1787, %v1790
      %v1873 = vsel %vm1832, %v1788, %v1791
      %v1874 = vsel %vm1832, %v1789, %v1792
      %v1875 = vsel %vm1832, %v1784, %v1787
      %v1876 = vsel %vm1832, %v1785, %v1788
      %v1877 = vsel %vm1832, %v1786, %v1789
      %v1878 = vsel %vm1832, %v1781, %v1784
      %v1879 = vsel %vm1832, %v1782, %v1785
      %v1880 = vsel %vm1832, %v1783, %v1786
      %v1881 = vsel %vm1832, %v1778, %v1781
      %v1882 = vsel %vm1832, %v1779, %v1782
      %v1883 = vsel %vm1832, %v1780, %v1783
      %v1884 = vsel %vm1832, %v1775, %v1778
      %v1885 = vsel %vm1832, %v1776, %v1779
      %v1886 = vsel %vm1832, %v1777, %v1780
      %v1887 = vsel %vm1832, %v1772, %v1775
      %v1888 = vsel %vm1832, %v1773, %v1776
      %v1889 = vsel %vm1832, %v1774, %v1777
      %v1890 = vsel %vm1832, %v1769, %v1772
      %v1891 = vsel %vm1832, %v1770, %v1773
      %v1892 = vsel %vm1832, %v1771, %v1774
      %v1893 = vsel %vm1832, %v1766, %v1769
      %v1894 = vsel %vm1832, %v1767, %v1770
      %v1895 = vsel %vm1832, %v1768, %v1771
      %v1896 = vsel %vm1832, %v1763, %v1766
      %v1897 = vsel %vm1832, %v1764, %v1767
      %v1898 = vsel %vm1832, %v1765, %v1768
      %v1899 = vsel %vm1832, %v1760, %v1763
      %v1900 = vsel %vm1832, %v1761, %v1764
      %v1901 = vsel %vm1832, %v1762, %v1765
      %v1902 = vsel %vm1832, %v1757, %v1760
      %v1903 = vsel %vm1832, %v1758, %v1761
      %v1904 = vsel %vm1832, %v1759, %v1762
      %v1905 = vsel %vm1832, %v1754, %v1757
      %v1906 = vsel %vm1832, %v1755, %v1758
      %v1907 = vsel %vm1832, %v1756, %v1759
      %v1908 = vsel %vm1832, %v1751, %v1754
      %v1909 = vsel %vm1832, %v1752, %v1755
      %v1910 = vsel %vm1832, %v1753, %v1756
      %v1911 = vsel %vm1832, %v1748, %v1751
      %v1912 = vsel %vm1832, %v1749, %v1752
      %v1913 = vsel %vm1832, %v1750, %v1753
      %v1914 = vsel %vm1832, %v1745, %v1748
      %v1915 = vsel %vm1832, %v1746, %v1749
      %v1916 = vsel %vm1832, %v1747, %v1750
      %v1917 = vsel %vm1832, %v1742, %v1745
      %v1918 = vsel %vm1832, %v1743, %v1746
      %v1919 = vsel %vm1832, %v1744, %v1747
      %v1920 = vsel %vm1832, %v1739, %v1742
      %v1921 = vsel %vm1832, %v1740, %v1743
      %v1922 = vsel %vm1832, %v1741, %v1744
      %v1923 = vsel %vm1832, %v1736, %v1739
      %v1924 = vsel %vm1832, %v1737, %v1740
      %v1925 = vsel %vm1832, %v1738, %v1741
      %v1926 = vsel %vm1832, %v1829, %v1736
      %v1927 = vsel %vm1832, %v1830, %v1737
      %v1928 = vsel %vm1832, %v1831, %v1738
      %v1929 = vlaneseq
      %v1930 = vshrl.u32 %v1929, 7
      %v1931 = vsub.s32 7, %v1930
      %v1932 = vrot.slane %v826, %v1931
      %v1933 = vlaneseq
      %v1934 = vshrl.u32 %v1933, 7
      %v1935 = vsub.s32 7, %v1934
      %v1936 = vrot.slane %v827, %v1935
      %v1937 = vlaneseq
      %v1938 = vshrl.u32 %v1937, 7
      %v1939 = vsub.s32 7, %v1938
      %v1940 = vrot.slane %v828, %v1939
      %v1941 = vmul.f32 %v1923, %v1932
      %v1942 = vmul.f32 %v1924, %v1936
      %v1943 = vmul.f32 %v1925, %v1940
      %v1944 = vmul.f32 %v1920, %v1932
      %v1945 = vmul.f32 %v1921, %v1936
      %v1946 = vmul.f32 %v1922, %v1940
      %v1947 = vmul.f32 %v1917, %v1932
      %v1948 = vmul.f32 %v1918, %v1936
      %v1949 = vmul.f32 %v1919, %v1940
      %v1950 = vmul.f32 %v1914, %v1932
      %v1951 = vmul.f32 %v1915, %v1936
      %v1952 = vmul.f32 %v1916, %v1940
      %v1953 = vmul.f32 %v1911, %v1932
      %v1954 = vmul.f32 %v1912, %v1936
      %v1955 = vmul.f32 %v1913, %v1940
      %v1956 = vmul.f32 %v1908, %v1932
      %v1957 = vmul.f32 %v1909, %v1936
      %v1958 = vmul.f32 %v1910, %v1940
      %v1959 = vmul.f32 %v1905, %v1932
      %v1960 = vmul.f32 %v1906, %v1936
      %v1961 = vmul.f32 %v1907, %v1940
      %v1962 = vmul.f32 %v1902, %v1932
      %v1963 = vmul.f32 %v1903, %v1936
      %v1964 = vmul.f32 %v1904, %v1940
      %v1965 = vmul.f32 %v1899, %v1932
      %v1966 = vmul.f32 %v1900, %v1936
      %v1967 = vmul.f32 %v1901, %v1940
      %v1968 = vmul.f32 %v1896, %v1932
      %v1969 = vmul.f32 %v1897, %v1936
      %v1970 = vmul.f32 %v1898, %v1940
      %v1971 = vmul.f32 %v1893, %v1932
      %v1972 = vmul.f32 %v1894, %v1936
      %v1973 = vmul.f32 %v1895, %v1940
      %v1974 = vmul.f32 %v1890, %v1932
      %v1975 = vmul.f32 %v1891, %v1936
      %v1976 = vmul.f32 %v1892, %v1940
      %v1977 = vmul.f32 %v1887, %v1932
      %v1978 = vmul.f32 %v1888, %v1936
      %v1979 = vmul.f32 %v1889, %v1940
      %v1980 = vmul.f32 %v1884, %v1932
      %v1981 = vmul.f32 %v1885, %v1936
      %v1982 = vmul.f32 %v1886, %v1940
      %v1983 = vmul.f32 %v1881, %v1932
      %v1984 = vmul.f32 %v1882, %v1936
      %v1985 = vmul.f32 %v1883, %v1940
      %v1986 = vmul.f32 %v1878, %v1932
      %v1987 = vmul.f32 %v1879, %v1936
      %v1988 = vmul.f32 %v1880, %v1940
      %v1989 = vmul.f32 %v1875, %v1932
      %v1990 = vmul.f32 %v1876, %v1936
      %v1991 = vmul.f32 %v1877, %v1940
      %v1992 = vmul.f32 %v1872, %v1932
      %v1993 = vmul.f32 %v1873, %v1936
      %v1994 = vmul.f32 %v1874, %v1940
      %v1995 = vmul.f32 %v1869, %v1932
      %v1996 = vmul.f32 %v1870, %v1936
      %v1997 = vmul.f32 %v1871, %v1940
      %v1998 = vmul.f32 %v1866, %v1932
      %v1999 = vmul.f32 %v1867, %v1936
      %v2000 = vmul.f32 %v1868, %v1940
      %v2001 = vmul.f32 %v1863, %v1932
      %v2002 = vmul.f32 %v1864, %v1936
      %v2003 = vmul.f32 %v1865, %v1940
      %v2004 = vmul.f32 %v1860, %v1932
      %v2005 = vmul.f32 %v1861, %v1936
      %v2006 = vmul.f32 %v1862, %v1940
      %v2007 = vmul.f32 %v1857, %v1932
      %v2008 = vmul.f32 %v1858, %v1936
      %v2009 = vmul.f32 %v1859, %v1940
      %v2010 = vmul.f32 %v1854, %v1932
      %v2011 = vmul.f32 %v1855, %v1936
      %v2012 = vmul.f32 %v1856, %v1940
      %v2013 = vmul.f32 %v1851, %v1932
      %v2014 = vmul.f32 %v1852, %v1936
      %v2015 = vmul.f32 %v1853, %v1940
      %v2016 = vmul.f32 %v1848, %v1932
      %v2017 = vmul.f32 %v1849, %v1936
      %v2018 = vmul.f32 %v1850, %v1940
      %v2019 = vmul.f32 %v1845, %v1932
      %v2020 = vmul.f32 %v1846, %v1936
      %v2021 = vmul.f32 %v1847, %v1940
      %v2022 = vmul.f32 %v1842, %v1932
      %v2023 = vmul.f32 %v1843, %v1936
      %v2024 = vmul.f32 %v1844, %v1940
      %v2025 = vmul.f32 %v1839, %v1932
      %v2026 = vmul.f32 %v1840, %v1936
      %v2027 = vmul.f32 %v1841, %v1940
      %v2028 = vmul.f32 %v1836, %v1932
      %v2029 = vmul.f32 %v1837, %v1936
      %v2030 = vmul.f32 %v1838, %v1940
      %v2031 = vmul.f32 %v1833, %v1932
      %v2032 = vmul.f32 %v1834, %v1936
      %v2033 = vmul.f32 %v1835, %v1940
      %v2034 = vmul.f32 %v1926, %v1932
      %v2035 = vmul.f32 %v1927, %v1936
      %v2036 = vmul.f32 %v1928, %v1940
      %v2037 = vadd.f32 %v1640, %v1941
      %v2038 = vadd.f32 %v1641, %v1942
      %v2039 = vadd.f32 %v1642, %v1943
      %v2040 = vadd.f32 %v1643, %v1944
      %v2041 = vadd.f32 %v1644, %v1945
      %v2042 = vadd.f32 %v1645, %v1946
      %v2043 = vadd.f32 %v1646, %v1947
      %v2044 = vadd.f32 %v1647, %v1948
      %v2045 = vadd.f32 %v1648, %v1949
      %v2046 = vadd.f32 %v1649, %v1950
      %v2047 = vadd.f32 %v1650, %v1951
      %v2048 = vadd.f32 %v1651, %v1952
      %v2049 = vadd.f32 %v1652, %v1953
      %v2050 = vadd.f32 %v1653, %v1954
      %v2051 = vadd.f32 %v1654, %v1955
      %v2052 = vadd.f32 %v1655, %v1956
      %v2053 = vadd.f32 %v1656, %v1957
      %v2054 = vadd.f32 %v1657, %v1958
      %v2055 = vadd.f32 %v1658, %v1959
      %v2056 = vadd.f32 %v1659, %v1960
      %v2057 = vadd.f32 %v1660, %v1961
      %v2058 = vadd.f32 %v1661, %v1962
      %v2059 = vadd.f32 %v1662, %v1963
      %v2060 = vadd.f32 %v1663, %v1964
      %v2061 = vadd.f32 %v1664, %v1965
      %v2062 = vadd.f32 %v1665, %v1966
      %v2063 = vadd.f32 %v1666, %v1967
      %v2064 = vadd.f32 %v1667, %v1968
      %v2065 = vadd.f32 %v1668, %v1969
      %v2066 = vadd.f32 %v1669, %v1970
      %v2067 = vadd.f32 %v1670, %v1971
      %v2068 = vadd.f32 %v1671, %v1972
      %v2069 = vadd.f32 %v1672, %v1973
      %v2070 = vadd.f32 %v1673, %v1974
      %v2071 = vadd.f32 %v1674, %v1975
      %v2072 = vadd.f32 %v1675, %v1976
      %v2073 = vadd.f32 %v1676, %v1977
      %v2074 = vadd.f32 %v1677, %v1978
      %v2075 = vadd.f32 %v1678, %v1979
      %v2076 = vadd.f32 %v1679, %v1980
      %v2077 = vadd.f32 %v1680, %v1981
      %v2078 = vadd.f32 %v1681, %v1982
      %v2079 = vadd.f32 %v1682, %v1983
      %v2080 = vadd.f32 %v1683, %v1984
      %v2081 = vadd.f32 %v1684, %v1985
      %v2082 = vadd.f32 %v1685, %v1986
      %v2083 = vadd.f32 %v1686, %v1987
      %v2084 = vadd.f32 %v1687, %v1988
      %v2085 = vadd.f32 %v1688, %v1989
      %v2086 = vadd.f32 %v1689, %v1990
      %v2087 = vadd.f32 %v1690, %v1991
      %v2088 = vadd.f32 %v1691, %v1992
      %v2089 = vadd.f32 %v1692, %v1993
      %v2090 = vadd.f32 %v1693, %v1994
      %v2091 = vadd.f32 %v1694, %v1995
      %v2092 = vadd.f32 %v1695, %v1996
      %v2093 = vadd.f32 %v1696, %v1997
      %v2094 = vadd.f32 %v1697, %v1998
      %v2095 = vadd.f32 %v1698, %v1999
      %v2096 = vadd.f32 %v1699, %v2000
      %v2097 = vadd.f32 %v1700, %v2001
      %v2098 = vadd.f32 %v1701, %v2002
      %v2099 = vadd.f32 %v1702, %v2003
      %v2100 = vadd.f32 %v1703, %v2004
      %v2101 = vadd.f32 %v1704, %v2005
      %v2102 = vadd.f32 %v1705, %v2006
      %v2103 = vadd.f32 %v1706, %v2007
      %v2104 = vadd.f32 %v1707, %v2008
      %v2105 = vadd.f32 %v1708, %v2009
      %v2106 = vadd.f32 %v1709, %v2010
      %v2107 = vadd.f32 %v1710, %v2011
      %v2108 = vadd.f32 %v1711, %v2012
      %v2109 = vadd.f32 %v1712, %v2013
      %v2110 = vadd.f32 %v1713, %v2014
      %v2111 = vadd.f32 %v1714, %v2015
      %v2112 = vadd.f32 %v1715, %v2016
      %v2113 = vadd.f32 %v1716, %v2017
      %v2114 = vadd.f32 %v1717, %v2018
      %v2115 = vadd.f32 %v1718, %v2019
      %v2116 = vadd.f32 %v1719, %v2020
      %v2117 = vadd.f32 %v1720, %v2021
      %v2118 = vadd.f32 %v1721, %v2022
      %v2119 = vadd.f32 %v1722, %v2023
      %v2120 = vadd.f32 %v1723, %v2024
      %v2121 = vadd.f32 %v1724, %v2025
      %v2122 = vadd.f32 %v1725, %v2026
      %v2123 = vadd.f32 %v1726, %v2027
      %v2124 = vadd.f32 %v1727, %v2028
      %v2125 = vadd.f32 %v1728, %v2029
      %v2126 = vadd.f32 %v1729, %v2030
      %v2127 = vadd.f32 %v1730, %v2031
      %v2128 = vadd.f32 %v1731, %v2032
      %v2129 = vadd.f32 %v1732, %v2033
      %v2130 = vadd.f32 %v1733, %v2034
      %v2131 = vadd.f32 %v1734, %v2035
      %v2132 = vadd.f32 %v1735, %v2036
      %v2133 = vrot.slane %v411, 4
      %v2134 = vrot.slane %v413, 4
      %v2135 = vrot.slane %v668, 4
      %v2136 = vrot.slane %v417, 4
      %v2137 = vrot.slane %v419, 4
      %v2138 = vrot.slane %v673, 4
      %v2139 = vrot.slane %v423, 4
      %v2140 = vrot.slane %v425, 4
      %v2141 = vrot.slane %v678, 4
      %v2142 = vrot.slane %v429, 4
      %v2143 = vrot.slane %v431, 4
      %v2144 = vrot.slane %v683, 4
      %v2145 = vrot.slane %v435, 4
      %v2146 = vrot.slane %v437, 4
      %v2147 = vrot.slane %v688, 4
      %v2148 = vrot.slane %v441, 4
      %v2149 = vrot.slane %v443, 4
      %v2150 = vrot.slane %v693, 4
      %v2151 = vrot.slane %v447, 4
      %v2152 = vrot.slane %v449, 4
      %v2153 = vrot.slane %v698, 4
      %v2154 = vrot.slane %v453, 4
      %v2155 = vrot.slane %v455, 4
      %v2156 = vrot.slane %v703, 4
      %v2157 = vrot.slane %v459, 4
      %v2158 = vrot.slane %v461, 4
      %v2159 = vrot.slane %v708, 4
      %v2160 = vrot.slane %v465, 4
      %v2161 = vrot.slane %v467, 4
      %v2162 = vrot.slane %v713, 4
      %v2163 = vrot.slane %v471, 4
      %v2164 = vrot.slane %v473, 4
      %v2165 = vrot.slane %v718, 4
      %v2166 = vrot.slane %v477, 4
      %v2167 = vrot.slane %v479, 4
      %v2168 = vrot.slane %v723, 4
      %v2169 = vrot.slane %v483, 4
      %v2170 = vrot.slane %v485, 4
      %v2171 = vrot.slane %v728, 4
      %v2172 = vrot.slane %v489, 4
      %v2173 = vrot.slane %v491, 4
      %v2174 = vrot.slane %v733, 4
      %v2175 = vrot.slane %v495, 4
      %v2176 = vrot.slane %v497, 4
      %v2177 = vrot.slane %v738, 4
      %v2178 = vrot.slane %v501, 4
      %v2179 = vrot.slane %v503, 4
      %v2180 = vrot.slane %v743, 4
      %v2181 = vrot.slane %v507, 4
      %v2182 = vrot.slane %v509, 4
      %v2183 = vrot.slane %v748, 4
      %v2184 = vrot.slane %v513, 4
      %v2185 = vrot.slane %v515, 4
      %v2186 = vrot.slane %v753, 4
      %v2187 = vrot.slane %v519, 4
      %v2188 = vrot.slane %v521, 4
      %v2189 = vrot.slane %v758, 4
      %v2190 = vrot.slane %v525, 4
      %v2191 = vrot.slane %v527, 4
      %v2192 = vrot.slane %v763, 4
      %v2193 = vrot.slane %v531, 4
      %v2194 = vrot.slane %v533, 4
      %v2195 = vrot.slane %v768, 4
      %v2196 = vrot.slane %v537, 4
      %v2197 = vrot.slane %v539, 4
      %v2198 = vrot.slane %v773, 4
      %v2199 = vrot.slane %v543, 4
      %v2200 = vrot.slane %v545, 4
      %v2201 = vrot.slane %v778, 4
      %v2202 = vrot.slane %v549, 4
      %v2203 = vrot.slane %v551, 4
      %v2204 = vrot.slane %v783, 4
      %v2205 = vrot.slane %v555, 4
      %v2206 = vrot.slane %v557, 4
      %v2207 = vrot.slane %v788, 4
      %v2208 = vrot.slane %v561, 4
      %v2209 = vrot.slane %v563, 4
      %v2210 = vrot.slane %v793, 4
      %v2211 = vrot.slane %v567, 4
      %v2212 = vrot.slane %v569, 4
      %v2213 = vrot.slane %v798, 4
      %v2214 = vrot.slane %v573, 4
      %v2215 = vrot.slane %v575, 4
      %v2216 = vrot.slane %v803, 4
      %v2217 = vrot.slane %v579, 4
      %v2218 = vrot.slane %v581, 4
      %v2219 = vrot.slane %v808, 4
      %v2220 = vrot.slane %v585, 4
      %v2221 = vrot.slane %v587, 4
      %v2222 = vrot.slane %v813, 4
      %v2223 = vrot.slane %v591, 4
      %v2224 = vrot.slane %v593, 4
      %v2225 = vrot.slane %v818, 4
      %v2226 = vrot.slane %v597, 4
      %v2227 = vrot.slane %v599, 4
      %v2228 = vrot.slane %v823, 4
      %vm2229 = vcmp.lt.s32.totalorder %v1037, 4
      %v2230 = vsel %vm2229, %v2223, %v2226
      %v2231 = vsel %vm2229, %v2224, %v2227
      %v2232 = vsel %vm2229, %v2225, %v2228
      %v2233 = vsel %vm2229, %v2220, %v2223
      %v2234 = vsel %vm2229, %v2221, %v2224
      %v2235 = vsel %vm2229, %v2222, %v2225
      %v2236 = vsel %vm2229, %v2217, %v2220
      %v2237 = vsel %vm2229, %v2218, %v2221
      %v2238 = vsel %vm2229, %v2219, %v2222
      %v2239 = vsel %vm2229, %v2214, %v2217
      %v2240 = vsel %vm2229, %v2215, %v2218
      %v2241 = vsel %vm2229, %v2216, %v2219
      %v2242 = vsel %vm2229, %v2211, %v2214
      %v2243 = vsel %vm2229, %v2212, %v2215
      %v2244 = vsel %vm2229, %v2213, %v2216
      %v2245 = vsel %vm2229, %v2208, %v2211
      %v2246 = vsel %vm2229, %v2209, %v2212
      %v2247 = vsel %vm2229, %v2210, %v2213
      %v2248 = vsel %vm2229, %v2205, %v2208
      %v2249 = vsel %vm2229, %v2206, %v2209
      %v2250 = vsel %vm2229, %v2207, %v2210
      %v2251 = vsel %vm2229, %v2202, %v2205
      %v2252 = vsel %vm2229, %v2203, %v2206
      %v2253 = vsel %vm2229, %v2204, %v2207
      %v2254 = vsel %vm2229, %v2199, %v2202
      %v2255 = vsel %vm2229, %v2200, %v2203
      %v2256 = vsel %vm2229, %v2201, %v2204
      %v2257 = vsel %vm2229, %v2196, %v2199
      %v2258 = vsel %vm2229, %v2197, %v2200
      %v2259 = vsel %vm2229, %v2198, %v2201
      %v2260 = vsel %vm2229, %v2193, %v2196
      %v2261 = vsel %vm2229, %v2194, %v2197
      %v2262 = vsel %vm2229, %v2195, %v2198
      %v2263 = vsel %vm2229, %v2190, %v2193
      %v2264 = vsel %vm2229, %v2191, %v2194
      %v2265 = vsel %vm2229, %v2192, %v2195
      %v2266 = vsel %vm2229, %v2187, %v2190
      %v2267 = vsel %vm2229, %v2188, %v2191
      %v2268 = vsel %vm2229, %v2189, %v2192
      %v2269 = vsel %vm2229, %v2184, %v2187
      %v2270 = vsel %vm2229, %v2185, %v2188
      %v2271 = vsel %vm2229, %v2186, %v2189
      %v2272 = vsel %vm2229, %v2181, %v2184
      %v2273 = vsel %vm2229, %v2182, %v2185
      %v2274 = vsel %vm2229, %v2183, %v2186
      %v2275 = vsel %vm2229, %v2178, %v2181
      %v2276 = vsel %vm2229, %v2179, %v2182
      %v2277 = vsel %vm2229, %v2180, %v2183
      %v2278 = vsel %vm2229, %v2175, %v2178
      %v2279 = vsel %vm2229, %v2176, %v2179
      %v2280 = vsel %vm2229, %v2177, %v2180
      %v2281 = vsel %vm2229, %v2172, %v2175
      %v2282 = vsel %vm2229, %v2173, %v2176
      %v2283 = vsel %vm2229, %v2174, %v2177
      %v2284 = vsel %vm2229, %v2169, %v2172
      %v2285 = vsel %vm2229, %v2170, %v2173
      %v2286 = vsel %vm2229, %v2171, %v2174
      %v2287 = vsel %vm2229, %v2166, %v2169
      %v2288 = vsel %vm2229, %v2167, %v2170
      %v2289 = vsel %vm2229, %v2168, %v2171
      %v2290 = vsel %vm2229, %v2163, %v2166
      %v2291 = vsel %vm2229, %v2164, %v2167
      %v2292 = vsel %vm2229, %v2165, %v2168
      %v2293 = vsel %vm2229, %v2160, %v2163
      %v2294 = vsel %vm2229, %v2161, %v2164
      %v2295 = vsel %vm2229, %v2162, %v2165
      %v2296 = vsel %vm2229, %v2157, %v2160
      %v2297 = vsel %vm2229, %v2158, %v2161
      %v2298 = vsel %vm2229, %v2159, %v2162
      %v2299 = vsel %vm2229, %v2154, %v2157
      %v2300 = vsel %vm2229, %v2155, %v2158
      %v2301 = vsel %vm2229, %v2156, %v2159
      %v2302 = vsel %vm2229, %v2151, %v2154
      %v2303 = vsel %vm2229, %v2152, %v2155
      %v2304 = vsel %vm2229, %v2153, %v2156
      %v2305 = vsel %vm2229, %v2148, %v2151
      %v2306 = vsel %vm2229, %v2149, %v2152
      %v2307 = vsel %vm2229, %v2150, %v2153
      %v2308 = vsel %vm2229, %v2145, %v2148
      %v2309 = vsel %vm2229, %v2146, %v2149
      %v2310 = vsel %vm2229, %v2147, %v2150
      %v2311 = vsel %vm2229, %v2142, %v2145
      %v2312 = vsel %vm2229, %v2143, %v2146
      %v2313 = vsel %vm2229, %v2144, %v2147
      %v2314 = vsel %vm2229, %v2139, %v2142
      %v2315 = vsel %vm2229, %v2140, %v2143
      %v2316 = vsel %vm2229, %v2141, %v2144
      %v2317 = vsel %vm2229, %v2136, %v2139
      %v2318 = vsel %vm2229, %v2137, %v2140
      %v2319 = vsel %vm2229, %v2138, %v2141
      %v2320 = vsel %vm2229, %v2133, %v2136
      %v2321 = vsel %vm2229, %v2134, %v2137
      %v2322 = vsel %vm2229, %v2135, %v2138
      %v2323 = vsel %vm2229, %v2226, %v2133
      %v2324 = vsel %vm2229, %v2227, %v2134
      %v2325 = vsel %vm2229, %v2228, %v2135
      %v2326 = vlaneseq
      %v2327 = vshrl.u32 %v2326, 7
      %v2328 = vsub.s32 0, %v2327
      %v2329 = vrot.slane %v829, %v2328
      %v2330 = vlaneseq
      %v2331 = vshrl.u32 %v2330, 7
      %v2332 = vsub.s32 0, %v2331
      %v2333 = vrot.slane %v830, %v2332
      %v2334 = vlaneseq
      %v2335 = vshrl.u32 %v2334, 7
      %v2336 = vsub.s32 0, %v2335
      %v2337 = vrot.slane %v831, %v2336
      %v2338 = vmul.f32 %v2320, %v2329
      %v2339 = vmul.f32 %v2321, %v2333
      %v2340 = vmul.f32 %v2322, %v2337
      %v2341 = vmul.f32 %v2317, %v2329
      %v2342 = vmul.f32 %v2318, %v2333
      %v2343 = vmul.f32 %v2319, %v2337
      %v2344 = vmul.f32 %v2314, %v2329
      %v2345 = vmul.f32 %v2315, %v2333
      %v2346 = vmul.f32 %v2316, %v2337
      %v2347 = vmul.f32 %v2311, %v2329
      %v2348 = vmul.f32 %v2312, %v2333
      %v2349 = vmul.f32 %v2313, %v2337
      %v2350 = vmul.f32 %v2308, %v2329
      %v2351 = vmul.f32 %v2309, %v2333
      %v2352 = vmul.f32 %v2310, %v2337
      %v2353 = vmul.f32 %v2305, %v2329
      %v2354 = vmul.f32 %v2306, %v2333
      %v2355 = vmul.f32 %v2307, %v2337
      %v2356 = vmul.f32 %v2302, %v2329
      %v2357 = vmul.f32 %v2303, %v2333
      %v2358 = vmul.f32 %v2304, %v2337
      %v2359 = vmul.f32 %v2299, %v2329
      %v2360 = vmul.f32 %v2300, %v2333
      %v2361 = vmul.f32 %v2301, %v2337
      %v2362 = vmul.f32 %v2296, %v2329
      %v2363 = vmul.f32 %v2297, %v2333
      %v2364 = vmul.f32 %v2298, %v2337
      %v2365 = vmul.f32 %v2293, %v2329
      %v2366 = vmul.f32 %v2294, %v2333
      %v2367 = vmul.f32 %v2295, %v2337
      %v2368 = vmul.f32 %v2290, %v2329
      %v2369 = vmul.f32 %v2291, %v2333
      %v2370 = vmul.f32 %v2292, %v2337
      %v2371 = vmul.f32 %v2287, %v2329
      %v2372 = vmul.f32 %v2288, %v2333
      %v2373 = vmul.f32 %v2289, %v2337
      %v2374 = vmul.f32 %v2284, %v2329
      %v2375 = vmul.f32 %v2285, %v2333
      %v2376 = vmul.f32 %v2286, %v2337
      %v2377 = vmul.f32 %v2281, %v2329
      %v2378 = vmul.f32 %v2282, %v2333
      %v2379 = vmul.f32 %v2283, %v2337
      %v2380 = vmul.f32 %v2278, %v2329
      %v2381 = vmul.f32 %v2279, %v2333
      %v2382 = vmul.f32 %v2280, %v2337
      %v2383 = vmul.f32 %v2275, %v2329
      %v2384 = vmul.f32 %v2276, %v2333
      %v2385 = vmul.f32 %v2277, %v2337
      %v2386 = vmul.f32 %v2272, %v2329
      %v2387 = vmul.f32 %v2273, %v2333
      %v2388 = vmul.f32 %v2274, %v2337
      %v2389 = vmul.f32 %v2269, %v2329
      %v2390 = vmul.f32 %v2270, %v2333
      %v2391 = vmul.f32 %v2271, %v2337
      %v2392 = vmul.f32 %v2266, %v2329
      %v2393 = vmul.f32 %v2267, %v2333
      %v2394 = vmul.f32 %v2268, %v2337
      %v2395 = vmul.f32 %v2263, %v2329
      %v2396 = vmul.f32 %v2264, %v2333
      %v2397 = vmul.f32 %v2265, %v2337
      %v2398 = vmul.f32 %v2260, %v2329
      %v2399 = vmul.f32 %v2261, %v2333
      %v2400 = vmul.f32 %v2262, %v2337
      %v2401 = vmul.f32 %v2257, %v2329
      %v2402 = vmul.f32 %v2258, %v2333
      %v2403 = vmul.f32 %v2259, %v2337
      %v2404 = vmul.f32 %v2254, %v2329
      %v2405 = vmul.f32 %v2255, %v2333
      %v2406 = vmul.f32 %v2256, %v2337
      %v2407 = vmul.f32 %v2251, %v2329
      %v2408 = vmul.f32 %v2252, %v2333
      %v2409 = vmul.f32 %v2253, %v2337
      %v2410 = vmul.f32 %v2248, %v2329
      %v2411 = vmul.f32 %v2249, %v2333
      %v2412 = vmul.f32 %v2250, %v2337
      %v2413 = vmul.f32 %v2245, %v2329
      %v2414 = vmul.f32 %v2246, %v2333
      %v2415 = vmul.f32 %v2247, %v2337
      %v2416 = vmul.f32 %v2242, %v2329
      %v2417 = vmul.f32 %v2243, %v2333
      %v2418 = vmul.f32 %v2244, %v2337
      %v2419 = vmul.f32 %v2239, %v2329
      %v2420 = vmul.f32 %v2240, %v2333
      %v2421 = vmul.f32 %v2241, %v2337
      %v2422 = vmul.f32 %v2236, %v2329
      %v2423 = vmul.f32 %v2237, %v2333
      %v2424 = vmul.f32 %v2238, %v2337
      %v2425 = vmul.f32 %v2233, %v2329
      %v2426 = vmul.f32 %v2234, %v2333
      %v2427 = vmul.f32 %v2235, %v2337
      %v2428 = vmul.f32 %v2230, %v2329
      %v2429 = vmul.f32 %v2231, %v2333
      %v2430 = vmul.f32 %v2232, %v2337
      %v2431 = vmul.f32 %v2323, %v2329
      %v2432 = vmul.f32 %v2324, %v2333
      %v2433 = vmul.f32 %v2325, %v2337
      %v2434 = vadd.f32 %v2037, %v2338
      %v2435 = vadd.f32 %v2038, %v2339
      %v2436 = vadd.f32 %v2039, %v2340
      %v2437 = vadd.f32 %v2040, %v2341
      %v2438 = vadd.f32 %v2041, %v2342
      %v2439 = vadd.f32 %v2042, %v2343
      %v2440 = vadd.f32 %v2043, %v2344
      %v2441 = vadd.f32 %v2044, %v2345
      %v2442 = vadd.f32 %v2045, %v2346
      %v2443 = vadd.f32 %v2046, %v2347
      %v2444 = vadd.f32 %v2047, %v2348
      %v2445 = vadd.f32 %v2048, %v2349
      %v2446 = vadd.f32 %v2049, %v2350
      %v2447 = vadd.f32 %v2050, %v2351
      %v2448 = vadd.f32 %v2051, %v2352
      %v2449 = vadd.f32 %v2052, %v2353
      %v2450 = vadd.f32 %v2053, %v2354
      %v2451 = vadd.f32 %v2054, %v2355
      %v2452 = vadd.f32 %v2055, %v2356
      %v2453 = vadd.f32 %v2056, %v2357
      %v2454 = vadd.f32 %v2057, %v2358
      %v2455 = vadd.f32 %v2058, %v2359
      %v2456 = vadd.f32 %v2059, %v2360
      %v2457 = vadd.f32 %v2060, %v2361
      %v2458 = vadd.f32 %v2061, %v2362
      %v2459 = vadd.f32 %v2062, %v2363
      %v2460 = vadd.f32 %v2063, %v2364
      %v2461 = vadd.f32 %v2064, %v2365
      %v2462 = vadd.f32 %v2065, %v2366
      %v2463 = vadd.f32 %v2066, %v2367
      %v2464 = vadd.f32 %v2067, %v2368
      %v2465 = vadd.f32 %v2068, %v2369
      %v2466 = vadd.f32 %v2069, %v2370
      %v2467 = vadd.f32 %v2070, %v2371
      %v2468 = vadd.f32 %v2071, %v2372
      %v2469 = vadd.f32 %v2072, %v2373
      %v2470 = vadd.f32 %v2073, %v2374
      %v2471 = vadd.f32 %v2074, %v2375
      %v2472 = vadd.f32 %v2075, %v2376
      %v2473 = vadd.f32 %v2076, %v2377
      %v2474 = vadd.f32 %v2077, %v2378
      %v2475 = vadd.f32 %v2078, %v2379
      %v2476 = vadd.f32 %v2079, %v2380
      %v2477 = vadd.f32 %v2080, %v2381
      %v2478 = vadd.f32 %v2081, %v2382
      %v2479 = vadd.f32 %v2082, %v2383
      %v2480 = vadd.f32 %v2083, %v2384
      %v2481 = vadd.f32 %v2084, %v2385
      %v2482 = vadd.f32 %v2085, %v2386
      %v2483 = vadd.f32 %v2086, %v2387
      %v2484 = vadd.f32 %v2087, %v2388
      %v2485 = vadd.f32 %v2088, %v2389
      %v2486 = vadd.f32 %v2089, %v2390
      %v2487 = vadd.f32 %v2090, %v2391
      %v2488 = vadd.f32 %v2091, %v2392
      %v2489 = vadd.f32 %v2092, %v2393
      %v2490 = vadd.f32 %v2093, %v2394
      %v2491 = vadd.f32 %v2094, %v2395
      %v2492 = vadd.f32 %v2095, %v2396
      %v2493 = vadd.f32 %v2096, %v2397
      %v2494 = vadd.f32 %v2097, %v2398
      %v2495 = vadd.f32 %v2098, %v2399
      %v2496 = vadd.f32 %v2099, %v2400
      %v2497 = vadd.f32 %v2100, %v2401
      %v2498 = vadd.f32 %v2101, %v2402
      %v2499 = vadd.f32 %v2102, %v2403
      %v2500 = vadd.f32 %v2103, %v2404
      %v2501 = vadd.f32 %v2104, %v2405
      %v2502 = vadd.f32 %v2105, %v2406
      %v2503 = vadd.f32 %v2106, %v2407
      %v2504 = vadd.f32 %v2107, %v2408
      %v2505 = vadd.f32 %v2108, %v2409
      %v2506 = vadd.f32 %v2109, %v2410
      %v2507 = vadd.f32 %v2110, %v2411
      %v2508 = vadd.f32 %v2111, %v2412
      %v2509 = vadd.f32 %v2112, %v2413
      %v2510 = vadd.f32 %v2113, %v2414
      %v2511 = vadd.f32 %v2114, %v2415
      %v2512 = vadd.f32 %v2115, %v2416
      %v2513 = vadd.f32 %v2116, %v2417
      %v2514 = vadd.f32 %v2117, %v2418
      %v2515 = vadd.f32 %v2118, %v2419
      %v2516 = vadd.f32 %v2119, %v2420
      %v2517 = vadd.f32 %v2120, %v2421
      %v2518 = vadd.f32 %v2121, %v2422
      %v2519 = vadd.f32 %v2122, %v2423
      %v2520 = vadd.f32 %v2123, %v2424
      %v2521 = vadd.f32 %v2124, %v2425
      %v2522 = vadd.f32 %v2125, %v2426
      %v2523 = vadd.f32 %v2126, %v2427
      %v2524 = vadd.f32 %v2127, %v2428
      %v2525 = vadd.f32 %v2128, %v2429
      %v2526 = vadd.f32 %v2129, %v2430
      %v2527 = vadd.f32 %v2130, %v2431
      %v2528 = vadd.f32 %v2131, %v2432
      %v2529 = vadd.f32 %v2132, %v2433
      %v2530 = vrot.slane %v411, 5
      %v2531 = vrot.slane %v413, 5
      %v2532 = vrot.slane %v668, 5
      %v2533 = vrot.slane %v417, 5
      %v2534 = vrot.slane %v419, 5
      %v2535 = vrot.slane %v673, 5
      %v2536 = vrot.slane %v423, 5
      %v2537 = vrot.slane %v425, 5
      %v2538 = vrot.slane %v678, 5
      %v2539 = vrot.slane %v429, 5
      %v2540 = vrot.slane %v431, 5
      %v2541 = vrot.slane %v683, 5
      %v2542 = vrot.slane %v435, 5
      %v2543 = vrot.slane %v437, 5
      %v2544 = vrot.slane %v688, 5
      %v2545 = vrot.slane %v441, 5
      %v2546 = vrot.slane %v443, 5
      %v2547 = vrot.slane %v693, 5
      %v2548 = vrot.slane %v447, 5
      %v2549 = vrot.slane %v449, 5
      %v2550 = vrot.slane %v698, 5
      %v2551 = vrot.slane %v453, 5
      %v2552 = vrot.slane %v455, 5
      %v2553 = vrot.slane %v703, 5
      %v2554 = vrot.slane %v459, 5
      %v2555 = vrot.slane %v461, 5
      %v2556 = vrot.slane %v708, 5
      %v2557 = vrot.slane %v465, 5
      %v2558 = vrot.slane %v467, 5
      %v2559 = vrot.slane %v713, 5
      %v2560 = vrot.slane %v471, 5
      %v2561 = vrot.slane %v473, 5
      %v2562 = vrot.slane %v718, 5
      %v2563 = vrot.slane %v477, 5
      %v2564 = vrot.slane %v479, 5
      %v2565 = vrot.slane %v723, 5
      %v2566 = vrot.slane %v483, 5
      %v2567 = vrot.slane %v485, 5
      %v2568 = vrot.slane %v728, 5
      %v2569 = vrot.slane %v489, 5
      %v2570 = vrot.slane %v491, 5
      %v2571 = vrot.slane %v733, 5
      %v2572 = vrot.slane %v495, 5
      %v2573 = vrot.slane %v497, 5
      %v2574 = vrot.slane %v738, 5
      %v2575 = vrot.slane %v501, 5
      %v2576 = vrot.slane %v503, 5
      %v2577 = vrot.slane %v743, 5
      %v2578 = vrot.slane %v507, 5
      %v2579 = vrot.slane %v509, 5
      %v2580 = vrot.slane %v748, 5
      %v2581 = vrot.slane %v513, 5
      %v2582 = vrot.slane %v515, 5
      %v2583 = vrot.slane %v753, 5
      %v2584 = vrot.slane %v519, 5
      %v2585 = vrot.slane %v521, 5
      %v2586 = vrot.slane %v758, 5
      %v2587 = vrot.slane %v525, 5
      %v2588 = vrot.slane %v527, 5
      %v2589 = vrot.slane %v763, 5
      %v2590 = vrot.slane %v531, 5
      %v2591 = vrot.slane %v533, 5
      %v2592 = vrot.slane %v768, 5
      %v2593 = vrot.slane %v537, 5
      %v2594 = vrot.slane %v539, 5
      %v2595 = vrot.slane %v773, 5
      %v2596 = vrot.slane %v543, 5
      %v2597 = vrot.slane %v545, 5
      %v2598 = vrot.slane %v778, 5
      %v2599 = vrot.slane %v549, 5
      %v2600 = vrot.slane %v551, 5
      %v2601 = vrot.slane %v783, 5
      %v2602 = vrot.slane %v555, 5
      %v2603 = vrot.slane %v557, 5
      %v2604 = vrot.slane %v788, 5
      %v2605 = vrot.slane %v561, 5
      %v2606 = vrot.slane %v563, 5
      %v2607 = vrot.slane %v793, 5
      %v2608 = vrot.slane %v567, 5
      %v2609 = vrot.slane %v569, 5
      %v2610 = vrot.slane %v798, 5
      %v2611 = vrot.slane %v573, 5
      %v2612 = vrot.slane %v575, 5
      %v2613 = vrot.slane %v803, 5
      %v2614 = vrot.slane %v579, 5
      %v2615 = vrot.slane %v581, 5
      %v2616 = vrot.slane %v808, 5
      %v2617 = vrot.slane %v585, 5
      %v2618 = vrot.slane %v587, 5
      %v2619 = vrot.slane %v813, 5
      %v2620 = vrot.slane %v591, 5
      %v2621 = vrot.slane %v593, 5
      %v2622 = vrot.slane %v818, 5
      %v2623 = vrot.slane %v597, 5
      %v2624 = vrot.slane %v599, 5
      %v2625 = vrot.slane %v823, 5
      %vm2626 = vcmp.lt.s32.totalorder %v1037, 3
      %v2627 = vsel %vm2626, %v2620, %v2623
      %v2628 = vsel %vm2626, %v2621, %v2624
      %v2629 = vsel %vm2626, %v2622, %v2625
      %v2630 = vsel %vm2626, %v2617, %v2620
      %v2631 = vsel %vm2626, %v2618, %v2621
      %v2632 = vsel %vm2626, %v2619, %v2622
      %v2633 = vsel %vm2626, %v2614, %v2617
      %v2634 = vsel %vm2626, %v2615, %v2618
      %v2635 = vsel %vm2626, %v2616, %v2619
      %v2636 = vsel %vm2626, %v2611, %v2614
      %v2637 = vsel %vm2626, %v2612, %v2615
      %v2638 = vsel %vm2626, %v2613, %v2616
      %v2639 = vsel %vm2626, %v2608, %v2611
      %v2640 = vsel %vm2626, %v2609, %v2612
      %v2641 = vsel %vm2626, %v2610, %v2613
      %v2642 = vsel %vm2626, %v2605, %v2608
      %v2643 = vsel %vm2626, %v2606, %v2609
      %v2644 = vsel %vm2626, %v2607, %v2610
      %v2645 = vsel %vm2626, %v2602, %v2605
      %v2646 = vsel %vm2626, %v2603, %v2606
      %v2647 = vsel %vm2626, %v2604, %v2607
      %v2648 = vsel %vm2626, %v2599, %v2602
      %v2649 = vsel %vm2626, %v2600, %v2603
      %v2650 = vsel %vm2626, %v2601, %v2604
      %v2651 = vsel %vm2626, %v2596, %v2599
      %v2652 = vsel %vm2626, %v2597, %v2600
      %v2653 = vsel %vm2626, %v2598, %v2601
      %v2654 = vsel %vm2626, %v2593, %v2596
      %v2655 = vsel %vm2626, %v2594, %v2597
      %v2656 = vsel %vm2626, %v2595, %v2598
      %v2657 = vsel %vm2626, %v2590, %v2593
      %v2658 = vsel %vm2626, %v2591, %v2594
      %v2659 = vsel %vm2626, %v2592, %v2595
      %v2660 = vsel %vm2626, %v2587, %v2590
      %v2661 = vsel %vm2626, %v2588, %v2591
      %v2662 = vsel %vm2626, %v2589, %v2592
      %v2663 = vsel %vm2626, %v2584, %v2587
      %v2664 = vsel %vm2626, %v2585, %v2588
      %v2665 = vsel %vm2626, %v2586, %v2589
      %v2666 = vsel %vm2626, %v2581, %v2584
      %v2667 = vsel %vm2626, %v2582, %v2585
      %v2668 = vsel %vm2626, %v2583, %v2586
      %v2669 = vsel %vm2626, %v2578, %v2581
      %v2670 = vsel %vm2626, %v2579, %v2582
      %v2671 = vsel %vm2626, %v2580, %v2583
      %v2672 = vsel %vm2626, %v2575, %v2578
      %v2673 = vsel %vm2626, %v2576, %v2579
      %v2674 = vsel %vm2626, %v2577, %v2580
      %v2675 = vsel %vm2626, %v2572, %v2575
      %v2676 = vsel %vm2626, %v2573, %v2576
      %v2677 = vsel %vm2626, %v2574, %v2577
      %v2678 = vsel %vm2626, %v2569, %v2572
      %v2679 = vsel %vm2626, %v2570, %v2573
      %v2680 = vsel %vm2626, %v2571, %v2574
      %v2681 = vsel %vm2626, %v2566, %v2569
      %v2682 = vsel %vm2626, %v2567, %v2570
      %v2683 = vsel %vm2626, %v2568, %v2571
      %v2684 = vsel %vm2626, %v2563, %v2566
      %v2685 = vsel %vm2626, %v2564, %v2567
      %v2686 = vsel %vm2626, %v2565, %v2568
      %v2687 = vsel %vm2626, %v2560, %v2563
      %v2688 = vsel %vm2626, %v2561, %v2564
      %v2689 = vsel %vm2626, %v2562, %v2565
      %v2690 = vsel %vm2626, %v2557, %v2560
      %v2691 = vsel %vm2626, %v2558, %v2561
      %v2692 = vsel %vm2626, %v2559, %v2562
      %v2693 = vsel %vm2626, %v2554, %v2557
      %v2694 = vsel %vm2626, %v2555, %v2558
      %v2695 = vsel %vm2626, %v2556, %v2559
      %v2696 = vsel %vm2626, %v2551, %v2554
      %v2697 = vsel %vm2626, %v2552, %v2555
      %v2698 = vsel %vm2626, %v2553, %v2556
      %v2699 = vsel %vm2626, %v2548, %v2551
      %v2700 = vsel %vm2626, %v2549, %v2552
      %v2701 = vsel %vm2626, %v2550, %v2553
      %v2702 = vsel %vm2626, %v2545, %v2548
      %v2703 = vsel %vm2626, %v2546, %v2549
      %v2704 = vsel %vm2626, %v2547, %v2550
      %v2705 = vsel %vm2626, %v2542, %v2545
      %v2706 = vsel %vm2626, %v2543, %v2546
      %v2707 = vsel %vm2626, %v2544, %v2547
      %v2708 = vsel %vm2626, %v2539, %v2542
      %v2709 = vsel %vm2626, %v2540, %v2543
      %v2710 = vsel %vm2626, %v2541, %v2544
      %v2711 = vsel %vm2626, %v2536, %v2539
      %v2712 = vsel %vm2626, %v2537, %v2540
      %v2713 = vsel %vm2626, %v2538, %v2541
      %v2714 = vsel %vm2626, %v2533, %v2536
      %v2715 = vsel %vm2626, %v2534, %v2537
      %v2716 = vsel %vm2626, %v2535, %v2538
      %v2717 = vsel %vm2626, %v2530, %v2533
      %v2718 = vsel %vm2626, %v2531, %v2534
      %v2719 = vsel %vm2626, %v2532, %v2535
      %v2720 = vsel %vm2626, %v2623, %v2530
      %v2721 = vsel %vm2626, %v2624, %v2531
      %v2722 = vsel %vm2626, %v2625, %v2532
      %v2723 = vlaneseq
      %v2724 = vshrl.u32 %v2723, 7
      %v2725 = vsub.s32 1, %v2724
      %v2726 = vrot.slane %v829, %v2725
      %v2727 = vlaneseq
      %v2728 = vshrl.u32 %v2727, 7
      %v2729 = vsub.s32 1, %v2728
      %v2730 = vrot.slane %v830, %v2729
      %v2731 = vlaneseq
      %v2732 = vshrl.u32 %v2731, 7
      %v2733 = vsub.s32 1, %v2732
      %v2734 = vrot.slane %v831, %v2733
      %v2735 = vmul.f32 %v2717, %v2726
      %v2736 = vmul.f32 %v2718, %v2730
      %v2737 = vmul.f32 %v2719, %v2734
      %v2738 = vmul.f32 %v2714, %v2726
      %v2739 = vmul.f32 %v2715, %v2730
      %v2740 = vmul.f32 %v2716, %v2734
      %v2741 = vmul.f32 %v2711, %v2726
      %v2742 = vmul.f32 %v2712, %v2730
      %v2743 = vmul.f32 %v2713, %v2734
      %v2744 = vmul.f32 %v2708, %v2726
      %v2745 = vmul.f32 %v2709, %v2730
      %v2746 = vmul.f32 %v2710, %v2734
      %v2747 = vmul.f32 %v2705, %v2726
      %v2748 = vmul.f32 %v2706, %v2730
      %v2749 = vmul.f32 %v2707, %v2734
      %v2750 = vmul.f32 %v2702, %v2726
      %v2751 = vmul.f32 %v2703, %v2730
      %v2752 = vmul.f32 %v2704, %v2734
      %v2753 = vmul.f32 %v2699, %v2726
      %v2754 = vmul.f32 %v2700, %v2730
      %v2755 = vmul.f32 %v2701, %v2734
      %v2756 = vmul.f32 %v2696, %v2726
      %v2757 = vmul.f32 %v2697, %v2730
      %v2758 = vmul.f32 %v2698, %v2734
      %v2759 = vmul.f32 %v2693, %v2726
      %v2760 = vmul.f32 %v2694, %v2730
      %v2761 = vmul.f32 %v2695, %v2734
      %v2762 = vmul.f32 %v2690, %v2726
      %v2763 = vmul.f32 %v2691, %v2730
      %v2764 = vmul.f32 %v2692, %v2734
      %v2765 = vmul.f32 %v2687, %v2726
      %v2766 = vmul.f32 %v2688, %v2730
      %v2767 = vmul.f32 %v2689, %v2734
      %v2768 = vmul.f32 %v2684, %v2726
      %v2769 = vmul.f32 %v2685, %v2730
      %v2770 = vmul.f32 %v2686, %v2734
      %v2771 = vmul.f32 %v2681, %v2726
      %v2772 = vmul.f32 %v2682, %v2730
      %v2773 = vmul.f32 %v2683, %v2734
      %v2774 = vmul.f32 %v2678, %v2726
      %v2775 = vmul.f32 %v2679, %v2730
      %v2776 = vmul.f32 %v2680, %v2734
      %v2777 = vmul.f32 %v2675, %v2726
      %v2778 = vmul.f32 %v2676, %v2730
      %v2779 = vmul.f32 %v2677, %v2734
      %v2780 = vmul.f32 %v2672, %v2726
      %v2781 = vmul.f32 %v2673, %v2730
      %v2782 = vmul.f32 %v2674, %v2734
      %v2783 = vmul.f32 %v2669, %v2726
      %v2784 = vmul.f32 %v2670, %v2730
      %v2785 = vmul.f32 %v2671, %v2734
      %v2786 = vmul.f32 %v2666, %v2726
      %v2787 = vmul.f32 %v2667, %v2730
      %v2788 = vmul.f32 %v2668, %v2734
      %v2789 = vmul.f32 %v2663, %v2726
      %v2790 = vmul.f32 %v2664, %v2730
      %v2791 = vmul.f32 %v2665, %v2734
      %v2792 = vmul.f32 %v2660, %v2726
      %v2793 = vmul.f32 %v2661, %v2730
      %v2794 = vmul.f32 %v2662, %v2734
      %v2795 = vmul.f32 %v2657, %v2726
      %v2796 = vmul.f32 %v2658, %v2730
      %v2797 = vmul.f32 %v2659, %v2734
      %v2798 = vmul.f32 %v2654, %v2726
      %v2799 = vmul.f32 %v2655, %v2730
      %v2800 = vmul.f32 %v2656, %v2734
      %v2801 = vmul.f32 %v2651, %v2726
      %v2802 = vmul.f32 %v2652, %v2730
      %v2803 = vmul.f32 %v2653, %v2734
      %v2804 = vmul.f32 %v2648, %v2726
      %v2805 = vmul.f32 %v2649, %v2730
      %v2806 = vmul.f32 %v2650, %v2734
      %v2807 = vmul.f32 %v2645, %v2726
      %v2808 = vmul.f32 %v2646, %v2730
      %v2809 = vmul.f32 %v2647, %v2734
      %v2810 = vmul.f32 %v2642, %v2726
      %v2811 = vmul.f32 %v2643, %v2730
      %v2812 = vmul.f32 %v2644, %v2734
      %v2813 = vmul.f32 %v2639, %v2726
      %v2814 = vmul.f32 %v2640, %v2730
      %v2815 = vmul.f32 %v2641, %v2734
      %v2816 = vmul.f32 %v2636, %v2726
      %v2817 = vmul.f32 %v2637, %v2730
      %v2818 = vmul.f32 %v2638, %v2734
      %v2819 = vmul.f32 %v2633, %v2726
      %v2820 = vmul.f32 %v2634, %v2730
      %v2821 = vmul.f32 %v2635, %v2734
      %v2822 = vmul.f32 %v2630, %v2726
      %v2823 = vmul.f32 %v2631, %v2730
      %v2824 = vmul.f32 %v2632, %v2734
      %v2825 = vmul.f32 %v2627, %v2726
      %v2826 = vmul.f32 %v2628, %v2730
      %v2827 = vmul.f32 %v2629, %v2734
      %v2828 = vmul.f32 %v2720, %v2726
      %v2829 = vmul.f32 %v2721, %v2730
      %v2830 = vmul.f32 %v2722, %v2734
      %v2831 = vadd.f32 %v2434, %v2735
      %v2832 = vadd.f32 %v2435, %v2736
      %v2833 = vadd.f32 %v2436, %v2737
      %v2834 = vadd.f32 %v2437, %v2738
      %v2835 = vadd.f32 %v2438, %v2739
      %v2836 = vadd.f32 %v2439, %v2740
      %v2837 = vadd.f32 %v2440, %v2741
      %v2838 = vadd.f32 %v2441, %v2742
      %v2839 = vadd.f32 %v2442, %v2743
      %v2840 = vadd.f32 %v2443, %v2744
      %v2841 = vadd.f32 %v2444, %v2745
      %v2842 = vadd.f32 %v2445, %v2746
      %v2843 = vadd.f32 %v2446, %v2747
      %v2844 = vadd.f32 %v2447, %v2748
      %v2845 = vadd.f32 %v2448, %v2749
      %v2846 = vadd.f32 %v2449, %v2750
      %v2847 = vadd.f32 %v2450, %v2751
      %v2848 = vadd.f32 %v2451, %v2752
      %v2849 = vadd.f32 %v2452, %v2753
      %v2850 = vadd.f32 %v2453, %v2754
      %v2851 = vadd.f32 %v2454, %v2755
      %v2852 = vadd.f32 %v2455, %v2756
      %v2853 = vadd.f32 %v2456, %v2757
      %v2854 = vadd.f32 %v2457, %v2758
      %v2855 = vadd.f32 %v2458, %v2759
      %v2856 = vadd.f32 %v2459, %v2760
      %v2857 = vadd.f32 %v2460, %v2761
      %v2858 = vadd.f32 %v2461, %v2762
      %v2859 = vadd.f32 %v2462, %v2763
      %v2860 = vadd.f32 %v2463, %v2764
      %v2861 = vadd.f32 %v2464, %v2765
      %v2862 = vadd.f32 %v2465, %v2766
      %v2863 = vadd.f32 %v2466, %v2767
      %v2864 = vadd.f32 %v2467, %v2768
      %v2865 = vadd.f32 %v2468, %v2769
      %v2866 = vadd.f32 %v2469, %v2770
      %v2867 = vadd.f32 %v2470, %v2771
      %v2868 = vadd.f32 %v2471, %v2772
      %v2869 = vadd.f32 %v2472, %v2773
      %v2870 = vadd.f32 %v2473, %v2774
      %v2871 = vadd.f32 %v2474, %v2775
      %v2872 = vadd.f32 %v2475, %v2776
      %v2873 = vadd.f32 %v2476, %v2777
      %v2874 = vadd.f32 %v2477, %v2778
      %v2875 = vadd.f32 %v2478, %v2779
      %v2876 = vadd.f32 %v2479, %v2780
      %v2877 = vadd.f32 %v2480, %v2781
      %v2878 = vadd.f32 %v2481, %v2782
      %v2879 = vadd.f32 %v2482, %v2783
      %v2880 = vadd.f32 %v2483, %v2784
      %v2881 = vadd.f32 %v2484, %v2785
      %v2882 = vadd.f32 %v2485, %v2786
      %v2883 = vadd.f32 %v2486, %v2787
      %v2884 = vadd.f32 %v2487, %v2788
      %v2885 = vadd.f32 %v2488, %v2789
      %v2886 = vadd.f32 %v2489, %v2790
      %v2887 = vadd.f32 %v2490, %v2791
      %v2888 = vadd.f32 %v2491, %v2792
      %v2889 = vadd.f32 %v2492, %v2793
      %v2890 = vadd.f32 %v2493, %v2794
      %v2891 = vadd.f32 %v2494, %v2795
      %v2892 = vadd.f32 %v2495, %v2796
      %v2893 = vadd.f32 %v2496, %v2797
      %v2894 = vadd.f32 %v2497, %v2798
      %v2895 = vadd.f32 %v2498, %v2799
      %v2896 = vadd.f32 %v2499, %v2800
      %v2897 = vadd.f32 %v2500, %v2801
      %v2898 = vadd.f32 %v2501, %v2802
      %v2899 = vadd.f32 %v2502, %v2803
      %v2900 = vadd.f32 %v2503, %v2804
      %v2901 = vadd.f32 %v2504, %v2805
      %v2902 = vadd.f32 %v2505, %v2806
      %v2903 = vadd.f32 %v2506, %v2807
      %v2904 = vadd.f32 %v2507, %v2808
      %v2905 = vadd.f32 %v2508, %v2809
      %v2906 = vadd.f32 %v2509, %v2810
      %v2907 = vadd.f32 %v2510, %v2811
      %v2908 = vadd.f32 %v2511, %v2812
      %v2909 = vadd.f32 %v2512, %v2813
      %v2910 = vadd.f32 %v2513, %v2814
      %v2911 = vadd.f32 %v2514, %v2815
      %v2912 = vadd.f32 %v2515, %v2816
      %v2913 = vadd.f32 %v2516, %v2817
      %v2914 = vadd.f32 %v2517, %v2818
      %v2915 = vadd.f32 %v2518, %v2819
      %v2916 = vadd.f32 %v2519, %v2820
      %v2917 = vadd.f32 %v2520, %v2821
      %v2918 = vadd.f32 %v2521, %v2822
      %v2919 = vadd.f32 %v2522, %v2823
      %v2920 = vadd.f32 %v2523, %v2824
      %v2921 = vadd.f32 %v2524, %v2825
      %v2922 = vadd.f32 %v2525, %v2826
      %v2923 = vadd.f32 %v2526, %v2827
      %v2924 = vadd.f32 %v2527, %v2828
      %v2925 = vadd.f32 %v2528, %v2829
      %v2926 = vadd.f32 %v2529, %v2830
      %v2927 = vrot.slane %v411, 6
      %v2928 = vrot.slane %v413, 6
      %v2929 = vrot.slane %v668, 6
      %v2930 = vrot.slane %v417, 6
      %v2931 = vrot.slane %v419, 6
      %v2932 = vrot.slane %v673, 6
      %v2933 = vrot.slane %v423, 6
      %v2934 = vrot.slane %v425, 6
      %v2935 = vrot.slane %v678, 6
      %v2936 = vrot.slane %v429, 6
      %v2937 = vrot.slane %v431, 6
      %v2938 = vrot.slane %v683, 6
      %v2939 = vrot.slane %v435, 6
      %v2940 = vrot.slane %v437, 6
      %v2941 = vrot.slane %v688, 6
      %v2942 = vrot.slane %v441, 6
      %v2943 = vrot.slane %v443, 6
      %v2944 = vrot.slane %v693, 6
      %v2945 = vrot.slane %v447, 6
      %v2946 = vrot.slane %v449, 6
      %v2947 = vrot.slane %v698, 6
      %v2948 = vrot.slane %v453, 6
      %v2949 = vrot.slane %v455, 6
      %v2950 = vrot.slane %v703, 6
      %v2951 = vrot.slane %v459, 6
      %v2952 = vrot.slane %v461, 6
      %v2953 = vrot.slane %v708, 6
      %v2954 = vrot.slane %v465, 6
      %v2955 = vrot.slane %v467, 6
      %v2956 = vrot.slane %v713, 6
      %v2957 = vrot.slane %v471, 6
      %v2958 = vrot.slane %v473, 6
      %v2959 = vrot.slane %v718, 6
      %v2960 = vrot.slane %v477, 6
      %v2961 = vrot.slane %v479, 6
      %v2962 = vrot.slane %v723, 6
      %v2963 = vrot.slane %v483, 6
      %v2964 = vrot.slane %v485, 6
      %v2965 = vrot.slane %v728, 6
      %v2966 = vrot.slane %v489, 6
      %v2967 = vrot.slane %v491, 6
      %v2968 = vrot.slane %v733, 6
      %v2969 = vrot.slane %v495, 6
      %v2970 = vrot.slane %v497, 6
      %v2971 = vrot.slane %v738, 6
      %v2972 = vrot.slane %v501, 6
      %v2973 = vrot.slane %v503, 6
      %v2974 = vrot.slane %v743, 6
      %v2975 = vrot.slane %v507, 6
      %v2976 = vrot.slane %v509, 6
      %v2977 = vrot.slane %v748, 6
      %v2978 = vrot.slane %v513, 6
      %v2979 = vrot.slane %v515, 6
      %v2980 = vrot.slane %v753, 6
      %v2981 = vrot.slane %v519, 6
      %v2982 = vrot.slane %v521, 6
      %v2983 = vrot.slane %v758, 6
      %v2984 = vrot.slane %v525, 6
      %v2985 = vrot.slane %v527, 6
      %v2986 = vrot.slane %v763, 6
      %v2987 = vrot.slane %v531, 6
      %v2988 = vrot.slane %v533, 6
      %v2989 = vrot.slane %v768, 6
      %v2990 = vrot.slane %v537, 6
      %v2991 = vrot.slane %v539, 6
      %v2992 = vrot.slane %v773, 6
      %v2993 = vrot.slane %v543, 6
      %v2994 = vrot.slane %v545, 6
      %v2995 = vrot.slane %v778, 6
      %v2996 = vrot.slane %v549, 6
      %v2997 = vrot.slane %v551, 6
      %v2998 = vrot.slane %v783, 6
      %v2999 = vrot.slane %v555, 6
      %v3000 = vrot.slane %v557, 6
      %v3001 = vrot.slane %v788, 6
      %v3002 = vrot.slane %v561, 6
      %v3003 = vrot.slane %v563, 6
      %v3004 = vrot.slane %v793, 6
      %v3005 = vrot.slane %v567, 6
      %v3006 = vrot.slane %v569, 6
      %v3007 = vrot.slane %v798, 6
      %v3008 = vrot.slane %v573, 6
      %v3009 = vrot.slane %v575, 6
      %v3010 = vrot.slane %v803, 6
      %v3011 = vrot.slane %v579, 6
      %v3012 = vrot.slane %v581, 6
      %v3013 = vrot.slane %v808, 6
      %v3014 = vrot.slane %v585, 6
      %v3015 = vrot.slane %v587, 6
      %v3016 = vrot.slane %v813, 6
      %v3017 = vrot.slane %v591, 6
      %v3018 = vrot.slane %v593, 6
      %v3019 = vrot.slane %v818, 6
      %v3020 = vrot.slane %v597, 6
      %v3021 = vrot.slane %v599, 6
      %v3022 = vrot.slane %v823, 6
      %vm3023 = vcmp.lt.s32.totalorder %v1037, 2
      %v3024 = vsel %vm3023, %v3017, %v3020
      %v3025 = vsel %vm3023, %v3018, %v3021
      %v3026 = vsel %vm3023, %v3019, %v3022
      %v3027 = vsel %vm3023, %v3014, %v3017
      %v3028 = vsel %vm3023, %v3015, %v3018
      %v3029 = vsel %vm3023, %v3016, %v3019
      %v3030 = vsel %vm3023, %v3011, %v3014
      %v3031 = vsel %vm3023, %v3012, %v3015
      %v3032 = vsel %vm3023, %v3013, %v3016
      %v3033 = vsel %vm3023, %v3008, %v3011
      %v3034 = vsel %vm3023, %v3009, %v3012
      %v3035 = vsel %vm3023, %v3010, %v3013
      %v3036 = vsel %vm3023, %v3005, %v3008
      %v3037 = vsel %vm3023, %v3006, %v3009
      %v3038 = vsel %vm3023, %v3007, %v3010
      %v3039 = vsel %vm3023, %v3002, %v3005
      %v3040 = vsel %vm3023, %v3003, %v3006
      %v3041 = vsel %vm3023, %v3004, %v3007
      %v3042 = vsel %vm3023, %v2999, %v3002
      %v3043 = vsel %vm3023, %v3000, %v3003
      %v3044 = vsel %vm3023, %v3001, %v3004
      %v3045 = vsel %vm3023, %v2996, %v2999
      %v3046 = vsel %vm3023, %v2997, %v3000
      %v3047 = vsel %vm3023, %v2998, %v3001
      %v3048 = vsel %vm3023, %v2993, %v2996
      %v3049 = vsel %vm3023, %v2994, %v2997
      %v3050 = vsel %vm3023, %v2995, %v2998
      %v3051 = vsel %vm3023, %v2990, %v2993
      %v3052 = vsel %vm3023, %v2991, %v2994
      %v3053 = vsel %vm3023, %v2992, %v2995
      %v3054 = vsel %vm3023, %v2987, %v2990
      %v3055 = vsel %vm3023, %v2988, %v2991
      %v3056 = vsel %vm3023, %v2989, %v2992
      %v3057 = vsel %vm3023, %v2984, %v2987
      %v3058 = vsel %vm3023, %v2985, %v2988
      %v3059 = vsel %vm3023, %v2986, %v2989
      %v3060 = vsel %vm3023, %v2981, %v2984
      %v3061 = vsel %vm3023, %v2982, %v2985
      %v3062 = vsel %vm3023, %v2983, %v2986
      %v3063 = vsel %vm3023, %v2978, %v2981
      %v3064 = vsel %vm3023, %v2979, %v2982
      %v3065 = vsel %vm3023, %v2980, %v2983
      %v3066 = vsel %vm3023, %v2975, %v2978
      %v3067 = vsel %vm3023, %v2976, %v2979
      %v3068 = vsel %vm3023, %v2977, %v2980
      %v3069 = vsel %vm3023, %v2972, %v2975
      %v3070 = vsel %vm3023, %v2973, %v2976
      %v3071 = vsel %vm3023, %v2974, %v2977
      %v3072 = vsel %vm3023, %v2969, %v2972
      %v3073 = vsel %vm3023, %v2970, %v2973
      %v3074 = vsel %vm3023, %v2971, %v2974
      %v3075 = vsel %vm3023, %v2966, %v2969
      %v3076 = vsel %vm3023, %v2967, %v2970
      %v3077 = vsel %vm3023, %v2968, %v2971
      %v3078 = vsel %vm3023, %v2963, %v2966
      %v3079 = vsel %vm3023, %v2964, %v2967
      %v3080 = vsel %vm3023, %v2965, %v2968
      %v3081 = vsel %vm3023, %v2960, %v2963
      %v3082 = vsel %vm3023, %v2961, %v2964
      %v3083 = vsel %vm3023, %v2962, %v2965
      %v3084 = vsel %vm3023, %v2957, %v2960
      %v3085 = vsel %vm3023, %v2958, %v2961
      %v3086 = vsel %vm3023, %v2959, %v2962
      %v3087 = vsel %vm3023, %v2954, %v2957
      %v3088 = vsel %vm3023, %v2955, %v2958
      %v3089 = vsel %vm3023, %v2956, %v2959
      %v3090 = vsel %vm3023, %v2951, %v2954
      %v3091 = vsel %vm3023, %v2952, %v2955
      %v3092 = vsel %vm3023, %v2953, %v2956
      %v3093 = vsel %vm3023, %v2948, %v2951
      %v3094 = vsel %vm3023, %v2949, %v2952
      %v3095 = vsel %vm3023, %v2950, %v2953
      %v3096 = vsel %vm3023, %v2945, %v2948
      %v3097 = vsel %vm3023, %v2946, %v2949
      %v3098 = vsel %vm3023, %v2947, %v2950
      %v3099 = vsel %vm3023, %v2942, %v2945
      %v3100 = vsel %vm3023, %v2943, %v2946
      %v3101 = vsel %vm3023, %v2944, %v2947
      %v3102 = vsel %vm3023, %v2939, %v2942
      %v3103 = vsel %vm3023, %v2940, %v2943
      %v3104 = vsel %vm3023, %v2941, %v2944
      %v3105 = vsel %vm3023, %v2936, %v2939
      %v3106 = vsel %vm3023, %v2937, %v2940
      %v3107 = vsel %vm3023, %v2938, %v2941
      %v3108 = vsel %vm3023, %v2933, %v2936
      %v3109 = vsel %vm3023, %v2934, %v2937
      %v3110 = vsel %vm3023, %v2935, %v2938
      %v3111 = vsel %vm3023, %v2930, %v2933
      %v3112 = vsel %vm3023, %v2931, %v2934
      %v3113 = vsel %vm3023, %v2932, %v2935
      %v3114 = vsel %vm3023, %v2927, %v2930
      %v3115 = vsel %vm3023, %v2928, %v2931
      %v3116 = vsel %vm3023, %v2929, %v2932
      %v3117 = vsel %vm3023, %v3020, %v2927
      %v3118 = vsel %vm3023, %v3021, %v2928
      %v3119 = vsel %vm3023, %v3022, %v2929
      %v3120 = vlaneseq
      %v3121 = vshrl.u32 %v3120, 7
      %v3122 = vsub.s32 2, %v3121
      %v3123 = vrot.slane %v829, %v3122
      %v3124 = vlaneseq
      %v3125 = vshrl.u32 %v3124, 7
      %v3126 = vsub.s32 2, %v3125
      %v3127 = vrot.slane %v830, %v3126
      %v3128 = vlaneseq
      %v3129 = vshrl.u32 %v3128, 7
      %v3130 = vsub.s32 2, %v3129
      %v3131 = vrot.slane %v831, %v3130
      %v3132 = vmul.f32 %v3114, %v3123
      %v3133 = vmul.f32 %v3115, %v3127
      %v3134 = vmul.f32 %v3116, %v3131
      %v3135 = vmul.f32 %v3111, %v3123
      %v3136 = vmul.f32 %v3112, %v3127
      %v3137 = vmul.f32 %v3113, %v3131
      %v3138 = vmul.f32 %v3108, %v3123
      %v3139 = vmul.f32 %v3109, %v3127
      %v3140 = vmul.f32 %v3110, %v3131
      %v3141 = vmul.f32 %v3105, %v3123
      %v3142 = vmul.f32 %v3106, %v3127
      %v3143 = vmul.f32 %v3107, %v3131
      %v3144 = vmul.f32 %v3102, %v3123
      %v3145 = vmul.f32 %v3103, %v3127
      %v3146 = vmul.f32 %v3104, %v3131
      %v3147 = vmul.f32 %v3099, %v3123
      %v3148 = vmul.f32 %v3100, %v3127
      %v3149 = vmul.f32 %v3101, %v3131
      %v3150 = vmul.f32 %v3096, %v3123
      %v3151 = vmul.f32 %v3097, %v3127
      %v3152 = vmul.f32 %v3098, %v3131
      %v3153 = vmul.f32 %v3093, %v3123
      %v3154 = vmul.f32 %v3094, %v3127
      %v3155 = vmul.f32 %v3095, %v3131
      %v3156 = vmul.f32 %v3090, %v3123
      %v3157 = vmul.f32 %v3091, %v3127
      %v3158 = vmul.f32 %v3092, %v3131
      %v3159 = vmul.f32 %v3087, %v3123
      %v3160 = vmul.f32 %v3088, %v3127
      %v3161 = vmul.f32 %v3089, %v3131
      %v3162 = vmul.f32 %v3084, %v3123
      %v3163 = vmul.f32 %v3085, %v3127
      %v3164 = vmul.f32 %v3086, %v3131
      %v3165 = vmul.f32 %v3081, %v3123
      %v3166 = vmul.f32 %v3082, %v3127
      %v3167 = vmul.f32 %v3083, %v3131
      %v3168 = vmul.f32 %v3078, %v3123
      %v3169 = vmul.f32 %v3079, %v3127
      %v3170 = vmul.f32 %v3080, %v3131
      %v3171 = vmul.f32 %v3075, %v3123
      %v3172 = vmul.f32 %v3076, %v3127
      %v3173 = vmul.f32 %v3077, %v3131
      %v3174 = vmul.f32 %v3072, %v3123
      %v3175 = vmul.f32 %v3073, %v3127
      %v3176 = vmul.f32 %v3074, %v3131
      %v3177 = vmul.f32 %v3069, %v3123
      %v3178 = vmul.f32 %v3070, %v3127
      %v3179 = vmul.f32 %v3071, %v3131
      %v3180 = vmul.f32 %v3066, %v3123
      %v3181 = vmul.f32 %v3067, %v3127
      %v3182 = vmul.f32 %v3068, %v3131
      %v3183 = vmul.f32 %v3063, %v3123
      %v3184 = vmul.f32 %v3064, %v3127
      %v3185 = vmul.f32 %v3065, %v3131
      %v3186 = vmul.f32 %v3060, %v3123
      %v3187 = vmul.f32 %v3061, %v3127
      %v3188 = vmul.f32 %v3062, %v3131
      %v3189 = vmul.f32 %v3057, %v3123
      %v3190 = vmul.f32 %v3058, %v3127
      %v3191 = vmul.f32 %v3059, %v3131
      %v3192 = vmul.f32 %v3054, %v3123
      %v3193 = vmul.f32 %v3055, %v3127
      %v3194 = vmul.f32 %v3056, %v3131
      %v3195 = vmul.f32 %v3051, %v3123
      %v3196 = vmul.f32 %v3052, %v3127
      %v3197 = vmul.f32 %v3053, %v3131
      %v3198 = vmul.f32 %v3048, %v3123
      %v3199 = vmul.f32 %v3049, %v3127
      %v3200 = vmul.f32 %v3050, %v3131
      %v3201 = vmul.f32 %v3045, %v3123
      %v3202 = vmul.f32 %v3046, %v3127
      %v3203 = vmul.f32 %v3047, %v3131
      %v3204 = vmul.f32 %v3042, %v3123
      %v3205 = vmul.f32 %v3043, %v3127
      %v3206 = vmul.f32 %v3044, %v3131
      %v3207 = vmul.f32 %v3039, %v3123
      %v3208 = vmul.f32 %v3040, %v3127
      %v3209 = vmul.f32 %v3041, %v3131
      %v3210 = vmul.f32 %v3036, %v3123
      %v3211 = vmul.f32 %v3037, %v3127
      %v3212 = vmul.f32 %v3038, %v3131
      %v3213 = vmul.f32 %v3033, %v3123
      %v3214 = vmul.f32 %v3034, %v3127
      %v3215 = vmul.f32 %v3035, %v3131
      %v3216 = vmul.f32 %v3030, %v3123
      %v3217 = vmul.f32 %v3031, %v3127
      %v3218 = vmul.f32 %v3032, %v3131
      %v3219 = vmul.f32 %v3027, %v3123
      %v3220 = vmul.f32 %v3028, %v3127
      %v3221 = vmul.f32 %v3029, %v3131
      %v3222 = vmul.f32 %v3024, %v3123
      %v3223 = vmul.f32 %v3025, %v3127
      %v3224 = vmul.f32 %v3026, %v3131
      %v3225 = vmul.f32 %v3117, %v3123
      %v3226 = vmul.f32 %v3118, %v3127
      %v3227 = vmul.f32 %v3119, %v3131
      %v3228 = vadd.f32 %v2831, %v3132
      %v3229 = vadd.f32 %v2832, %v3133
      %v3230 = vadd.f32 %v2833, %v3134
      %v3231 = vadd.f32 %v2834, %v3135
      %v3232 = vadd.f32 %v2835, %v3136
      %v3233 = vadd.f32 %v2836, %v3137
      %v3234 = vadd.f32 %v2837, %v3138
      %v3235 = vadd.f32 %v2838, %v3139
      %v3236 = vadd.f32 %v2839, %v3140
      %v3237 = vadd.f32 %v2840, %v3141
      %v3238 = vadd.f32 %v2841, %v3142
      %v3239 = vadd.f32 %v2842, %v3143
      %v3240 = vadd.f32 %v2843, %v3144
      %v3241 = vadd.f32 %v2844, %v3145
      %v3242 = vadd.f32 %v2845, %v3146
      %v3243 = vadd.f32 %v2846, %v3147
      %v3244 = vadd.f32 %v2847, %v3148
      %v3245 = vadd.f32 %v2848, %v3149
      %v3246 = vadd.f32 %v2849, %v3150
      %v3247 = vadd.f32 %v2850, %v3151
      %v3248 = vadd.f32 %v2851, %v3152
      %v3249 = vadd.f32 %v2852, %v3153
      %v3250 = vadd.f32 %v2853, %v3154
      %v3251 = vadd.f32 %v2854, %v3155
      %v3252 = vadd.f32 %v2855, %v3156
      %v3253 = vadd.f32 %v2856, %v3157
      %v3254 = vadd.f32 %v2857, %v3158
      %v3255 = vadd.f32 %v2858, %v3159
      %v3256 = vadd.f32 %v2859, %v3160
      %v3257 = vadd.f32 %v2860, %v3161
      %v3258 = vadd.f32 %v2861, %v3162
      %v3259 = vadd.f32 %v2862, %v3163
      %v3260 = vadd.f32 %v2863, %v3164
      %v3261 = vadd.f32 %v2864, %v3165
      %v3262 = vadd.f32 %v2865, %v3166
      %v3263 = vadd.f32 %v2866, %v3167
      %v3264 = vadd.f32 %v2867, %v3168
      %v3265 = vadd.f32 %v2868, %v3169
      %v3266 = vadd.f32 %v2869, %v3170
      %v3267 = vadd.f32 %v2870, %v3171
      %v3268 = vadd.f32 %v2871, %v3172
      %v3269 = vadd.f32 %v2872, %v3173
      %v3270 = vadd.f32 %v2873, %v3174
      %v3271 = vadd.f32 %v2874, %v3175
      %v3272 = vadd.f32 %v2875, %v3176
      %v3273 = vadd.f32 %v2876, %v3177
      %v3274 = vadd.f32 %v2877, %v3178
      %v3275 = vadd.f32 %v2878, %v3179
      %v3276 = vadd.f32 %v2879, %v3180
      %v3277 = vadd.f32 %v2880, %v3181
      %v3278 = vadd.f32 %v2881, %v3182
      %v3279 = vadd.f32 %v2882, %v3183
      %v3280 = vadd.f32 %v2883, %v3184
      %v3281 = vadd.f32 %v2884, %v3185
      %v3282 = vadd.f32 %v2885, %v3186
      %v3283 = vadd.f32 %v2886, %v3187
      %v3284 = vadd.f32 %v2887, %v3188
      %v3285 = vadd.f32 %v2888, %v3189
      %v3286 = vadd.f32 %v2889, %v3190
      %v3287 = vadd.f32 %v2890, %v3191
      %v3288 = vadd.f32 %v2891, %v3192
      %v3289 = vadd.f32 %v2892, %v3193
      %v3290 = vadd.f32 %v2893, %v3194
      %v3291 = vadd.f32 %v2894, %v3195
      %v3292 = vadd.f32 %v2895, %v3196
      %v3293 = vadd.f32 %v2896, %v3197
      %v3294 = vadd.f32 %v2897, %v3198
      %v3295 = vadd.f32 %v2898, %v3199
      %v3296 = vadd.f32 %v2899, %v3200
      %v3297 = vadd.f32 %v2900, %v3201
      %v3298 = vadd.f32 %v2901, %v3202
      %v3299 = vadd.f32 %v2902, %v3203
      %v3300 = vadd.f32 %v2903, %v3204
      %v3301 = vadd.f32 %v2904, %v3205
      %v3302 = vadd.f32 %v2905, %v3206
      %v3303 = vadd.f32 %v2906, %v3207
      %v3304 = vadd.f32 %v2907, %v3208
      %v3305 = vadd.f32 %v2908, %v3209
      %v3306 = vadd.f32 %v2909, %v3210
      %v3307 = vadd.f32 %v2910, %v3211
      %v3308 = vadd.f32 %v2911, %v3212
      %v3309 = vadd.f32 %v2912, %v3213
      %v3310 = vadd.f32 %v2913, %v3214
      %v3311 = vadd.f32 %v2914, %v3215
      %v3312 = vadd.f32 %v2915, %v3216
      %v3313 = vadd.f32 %v2916, %v3217
      %v3314 = vadd.f32 %v2917, %v3218
      %v3315 = vadd.f32 %v2918, %v3219
      %v3316 = vadd.f32 %v2919, %v3220
      %v3317 = vadd.f32 %v2920, %v3221
      %v3318 = vadd.f32 %v2921, %v3222
      %v3319 = vadd.f32 %v2922, %v3223
      %v3320 = vadd.f32 %v2923, %v3224
      %v3321 = vadd.f32 %v2924, %v3225
      %v3322 = vadd.f32 %v2925, %v3226
      %v3323 = vadd.f32 %v2926, %v3227
      %v3324 = vrot.slane %v411, 7
      %v3325 = vrot.slane %v413, 7
      %v3326 = vrot.slane %v668, 7
      %v3327 = vrot.slane %v417, 7
      %v3328 = vrot.slane %v419, 7
      %v3329 = vrot.slane %v673, 7
      %v3330 = vrot.slane %v423, 7
      %v3331 = vrot.slane %v425, 7
      %v3332 = vrot.slane %v678, 7
      %v3333 = vrot.slane %v429, 7
      %v3334 = vrot.slane %v431, 7
      %v3335 = vrot.slane %v683, 7
      %v3336 = vrot.slane %v435, 7
      %v3337 = vrot.slane %v437, 7
      %v3338 = vrot.slane %v688, 7
      %v3339 = vrot.slane %v441, 7
      %v3340 = vrot.slane %v443, 7
      %v3341 = vrot.slane %v693, 7
      %v3342 = vrot.slane %v447, 7
      %v3343 = vrot.slane %v449, 7
      %v3344 = vrot.slane %v698, 7
      %v3345 = vrot.slane %v453, 7
      %v3346 = vrot.slane %v455, 7
      %v3347 = vrot.slane %v703, 7
      %v3348 = vrot.slane %v459, 7
      %v3349 = vrot.slane %v461, 7
      %v3350 = vrot.slane %v708, 7
      %v3351 = vrot.slane %v465, 7
      %v3352 = vrot.slane %v467, 7
      %v3353 = vrot.slane %v713, 7
      %v3354 = vrot.slane %v471, 7
      %v3355 = vrot.slane %v473, 7
      %v3356 = vrot.slane %v718, 7
      %v3357 = vrot.slane %v477, 7
      %v3358 = vrot.slane %v479, 7
      %v3359 = vrot.slane %v723, 7
      %v3360 = vrot.slane %v483, 7
      %v3361 = vrot.slane %v485, 7
      %v3362 = vrot.slane %v728, 7
      %v3363 = vrot.slane %v489, 7
      %v3364 = vrot.slane %v491, 7
      %v3365 = vrot.slane %v733, 7
      %v3366 = vrot.slane %v495, 7
      %v3367 = vrot.slane %v497, 7
      %v3368 = vrot.slane %v738, 7
      %v3369 = vrot.slane %v501, 7
      %v3370 = vrot.slane %v503, 7
      %v3371 = vrot.slane %v743, 7
      %v3372 = vrot.slane %v507, 7
      %v3373 = vrot.slane %v509, 7
      %v3374 = vrot.slane %v748, 7
      %v3375 = vrot.slane %v513, 7
      %v3376 = vrot.slane %v515, 7
      %v3377 = vrot.slane %v753, 7
      %v3378 = vrot.slane %v519, 7
      %v3379 = vrot.slane %v521, 7
      %v3380 = vrot.slane %v758, 7
      %v3381 = vrot.slane %v525, 7
      %v3382 = vrot.slane %v527, 7
      %v3383 = vrot.slane %v763, 7
      %v3384 = vrot.slane %v531, 7
      %v3385 = vrot.slane %v533, 7
      %v3386 = vrot.slane %v768, 7
      %v3387 = vrot.slane %v537, 7
      %v3388 = vrot.slane %v539, 7
      %v3389 = vrot.slane %v773, 7
      %v3390 = vrot.slane %v543, 7
      %v3391 = vrot.slane %v545, 7
      %v3392 = vrot.slane %v778, 7
      %v3393 = vrot.slane %v549, 7
      %v3394 = vrot.slane %v551, 7
      %v3395 = vrot.slane %v783, 7
      %v3396 = vrot.slane %v555, 7
      %v3397 = vrot.slane %v557, 7
      %v3398 = vrot.slane %v788, 7
      %v3399 = vrot.slane %v561, 7
      %v3400 = vrot.slane %v563, 7
      %v3401 = vrot.slane %v793, 7
      %v3402 = vrot.slane %v567, 7
      %v3403 = vrot.slane %v569, 7
      %v3404 = vrot.slane %v798, 7
      %v3405 = vrot.slane %v573, 7
      %v3406 = vrot.slane %v575, 7
      %v3407 = vrot.slane %v803, 7
      %v3408 = vrot.slane %v579, 7
      %v3409 = vrot.slane %v581, 7
      %v3410 = vrot.slane %v808, 7
      %v3411 = vrot.slane %v585, 7
      %v3412 = vrot.slane %v587, 7
      %v3413 = vrot.slane %v813, 7
      %v3414 = vrot.slane %v591, 7
      %v3415 = vrot.slane %v593, 7
      %v3416 = vrot.slane %v818, 7
      %v3417 = vrot.slane %v597, 7
      %v3418 = vrot.slane %v599, 7
      %v3419 = vrot.slane %v823, 7
      %vm3420 = vcmp.lt.s32.totalorder %v1037, 1
      %v3421 = vsel %vm3420, %v3414, %v3417
      %v3422 = vsel %vm3420, %v3415, %v3418
      %v3423 = vsel %vm3420, %v3416, %v3419
      %v3424 = vsel %vm3420, %v3411, %v3414
      %v3425 = vsel %vm3420, %v3412, %v3415
      %v3426 = vsel %vm3420, %v3413, %v3416
      %v3427 = vsel %vm3420, %v3408, %v3411
      %v3428 = vsel %vm3420, %v3409, %v3412
      %v3429 = vsel %vm3420, %v3410, %v3413
      %v3430 = vsel %vm3420, %v3405, %v3408
      %v3431 = vsel %vm3420, %v3406, %v3409
      %v3432 = vsel %vm3420, %v3407, %v3410
      %v3433 = vsel %vm3420, %v3402, %v3405
      %v3434 = vsel %vm3420, %v3403, %v3406
      %v3435 = vsel %vm3420, %v3404, %v3407
      %v3436 = vsel %vm3420, %v3399, %v3402
      %v3437 = vsel %vm3420, %v3400, %v3403
      %v3438 = vsel %vm3420, %v3401, %v3404
      %v3439 = vsel %vm3420, %v3396, %v3399
      %v3440 = vsel %vm3420, %v3397, %v3400
      %v3441 = vsel %vm3420, %v3398, %v3401
      %v3442 = vsel %vm3420, %v3393, %v3396
      %v3443 = vsel %vm3420, %v3394, %v3397
      %v3444 = vsel %vm3420, %v3395, %v3398
      %v3445 = vsel %vm3420, %v3390, %v3393
      %v3446 = vsel %vm3420, %v3391, %v3394
      %v3447 = vsel %vm3420, %v3392, %v3395
      %v3448 = vsel %vm3420, %v3387, %v3390
      %v3449 = vsel %vm3420, %v3388, %v3391
      %v3450 = vsel %vm3420, %v3389, %v3392
      %v3451 = vsel %vm3420, %v3384, %v3387
      %v3452 = vsel %vm3420, %v3385, %v3388
      %v3453 = vsel %vm3420, %v3386, %v3389
      %v3454 = vsel %vm3420, %v3381, %v3384
      %v3455 = vsel %vm3420, %v3382, %v3385
      %v3456 = vsel %vm3420, %v3383, %v3386
      %v3457 = vsel %vm3420, %v3378, %v3381
      %v3458 = vsel %vm3420, %v3379, %v3382
      %v3459 = vsel %vm3420, %v3380, %v3383
      %v3460 = vsel %vm3420, %v3375, %v3378
      %v3461 = vsel %vm3420, %v3376, %v3379
      %v3462 = vsel %vm3420, %v3377, %v3380
      %v3463 = vsel %vm3420, %v3372, %v3375
      %v3464 = vsel %vm3420, %v3373, %v3376
      %v3465 = vsel %vm3420, %v3374, %v3377
      %v3466 = vsel %vm3420, %v3369, %v3372
      %v3467 = vsel %vm3420, %v3370, %v3373
      %v3468 = vsel %vm3420, %v3371, %v3374
      %v3469 = vsel %vm3420, %v3366, %v3369
      %v3470 = vsel %vm3420, %v3367, %v3370
      %v3471 = vsel %vm3420, %v3368, %v3371
      %v3472 = vsel %vm3420, %v3363, %v3366
      %v3473 = vsel %vm3420, %v3364, %v3367
      %v3474 = vsel %vm3420, %v3365, %v3368
      %v3475 = vsel %vm3420, %v3360, %v3363
      %v3476 = vsel %vm3420, %v3361, %v3364
      %v3477 = vsel %vm3420, %v3362, %v3365
      %v3478 = vsel %vm3420, %v3357, %v3360
      %v3479 = vsel %vm3420, %v3358, %v3361
      %v3480 = vsel %vm3420, %v3359, %v3362
      %v3481 = vsel %vm3420, %v3354, %v3357
      %v3482 = vsel %vm3420, %v3355, %v3358
      %v3483 = vsel %vm3420, %v3356, %v3359
      %v3484 = vsel %vm3420, %v3351, %v3354
      %v3485 = vsel %vm3420, %v3352, %v3355
      %v3486 = vsel %vm3420, %v3353, %v3356
      %v3487 = vsel %vm3420, %v3348, %v3351
      %v3488 = vsel %vm3420, %v3349, %v3352
      %v3489 = vsel %vm3420, %v3350, %v3353
      %v3490 = vsel %vm3420, %v3345, %v3348
      %v3491 = vsel %vm3420, %v3346, %v3349
      %v3492 = vsel %vm3420, %v3347, %v3350
      %v3493 = vsel %vm3420, %v3342, %v3345
      %v3494 = vsel %vm3420, %v3343, %v3346
      %v3495 = vsel %vm3420, %v3344, %v3347
      %v3496 = vsel %vm3420, %v3339, %v3342
      %v3497 = vsel %vm3420, %v3340, %v3343
      %v3498 = vsel %vm3420, %v3341, %v3344
      %v3499 = vsel %vm3420, %v3336, %v3339
      %v3500 = vsel %vm3420, %v3337, %v3340
      %v3501 = vsel %vm3420, %v3338, %v3341
      %v3502 = vsel %vm3420, %v3333, %v3336
      %v3503 = vsel %vm3420, %v3334, %v3337
      %v3504 = vsel %vm3420, %v3335, %v3338
      %v3505 = vsel %vm3420, %v3330, %v3333
      %v3506 = vsel %vm3420, %v3331, %v3334
      %v3507 = vsel %vm3420, %v3332, %v3335
      %v3508 = vsel %vm3420, %v3327, %v3330
      %v3509 = vsel %vm3420, %v3328, %v3331
      %v3510 = vsel %vm3420, %v3329, %v3332
      %v3511 = vsel %vm3420, %v3324, %v3327
      %v3512 = vsel %vm3420, %v3325, %v3328
      %v3513 = vsel %vm3420, %v3326, %v3329
      %v3514 = vsel %vm3420, %v3417, %v3324
      %v3515 = vsel %vm3420, %v3418, %v3325
      %v3516 = vsel %vm3420, %v3419, %v3326
      %v3517 = vlaneseq
      %v3518 = vshrl.u32 %v3517, 7
      %v3519 = vsub.s32 3, %v3518
      %v3520 = vrot.slane %v829, %v3519
      %v3521 = vlaneseq
      %v3522 = vshrl.u32 %v3521, 7
      %v3523 = vsub.s32 3, %v3522
      %v3524 = vrot.slane %v830, %v3523
      %v3525 = vlaneseq
      %v3526 = vshrl.u32 %v3525, 7
      %v3527 = vsub.s32 3, %v3526
      %v3528 = vrot.slane %v831, %v3527
      %v3529 = vmul.f32 %v3511, %v3520
      %v3530 = vmul.f32 %v3512, %v3524
      %v3531 = vmul.f32 %v3513, %v3528
      %v3532 = vmul.f32 %v3508, %v3520
      %v3533 = vmul.f32 %v3509, %v3524
      %v3534 = vmul.f32 %v3510, %v3528
      %v3535 = vmul.f32 %v3505, %v3520
      %v3536 = vmul.f32 %v3506, %v3524
      %v3537 = vmul.f32 %v3507, %v3528
      %v3538 = vmul.f32 %v3502, %v3520
      %v3539 = vmul.f32 %v3503, %v3524
      %v3540 = vmul.f32 %v3504, %v3528
      %v3541 = vmul.f32 %v3499, %v3520
      %v3542 = vmul.f32 %v3500, %v3524
      %v3543 = vmul.f32 %v3501, %v3528
      %v3544 = vmul.f32 %v3496, %v3520
      %v3545 = vmul.f32 %v3497, %v3524
      %v3546 = vmul.f32 %v3498, %v3528
      %v3547 = vmul.f32 %v3493, %v3520
      %v3548 = vmul.f32 %v3494, %v3524
      %v3549 = vmul.f32 %v3495, %v3528
      %v3550 = vmul.f32 %v3490, %v3520
      %v3551 = vmul.f32 %v3491, %v3524
      %v3552 = vmul.f32 %v3492, %v3528
      %v3553 = vmul.f32 %v3487, %v3520
      %v3554 = vmul.f32 %v3488, %v3524
      %v3555 = vmul.f32 %v3489, %v3528
      %v3556 = vmul.f32 %v3484, %v3520
      %v3557 = vmul.f32 %v3485, %v3524
      %v3558 = vmul.f32 %v3486, %v3528
      %v3559 = vmul.f32 %v3481, %v3520
      %v3560 = vmul.f32 %v3482, %v3524
      %v3561 = vmul.f32 %v3483, %v3528
      %v3562 = vmul.f32 %v3478, %v3520
      %v3563 = vmul.f32 %v3479, %v3524
      %v3564 = vmul.f32 %v3480, %v3528
      %v3565 = vmul.f32 %v3475, %v3520
      %v3566 = vmul.f32 %v3476, %v3524
      %v3567 = vmul.f32 %v3477, %v3528
      %v3568 = vmul.f32 %v3472, %v3520
      %v3569 = vmul.f32 %v3473, %v3524
      %v3570 = vmul.f32 %v3474, %v3528
      %v3571 = vmul.f32 %v3469, %v3520
      %v3572 = vmul.f32 %v3470, %v3524
      %v3573 = vmul.f32 %v3471, %v3528
      %v3574 = vmul.f32 %v3466, %v3520
      %v3575 = vmul.f32 %v3467, %v3524
      %v3576 = vmul.f32 %v3468, %v3528
      %v3577 = vmul.f32 %v3463, %v3520
      %v3578 = vmul.f32 %v3464, %v3524
      %v3579 = vmul.f32 %v3465, %v3528
      %v3580 = vmul.f32 %v3460, %v3520
      %v3581 = vmul.f32 %v3461, %v3524
      %v3582 = vmul.f32 %v3462, %v3528
      %v3583 = vmul.f32 %v3457, %v3520
      %v3584 = vmul.f32 %v3458, %v3524
      %v3585 = vmul.f32 %v3459, %v3528
      %v3586 = vmul.f32 %v3454, %v3520
      %v3587 = vmul.f32 %v3455, %v3524
      %v3588 = vmul.f32 %v3456, %v3528
      %v3589 = vmul.f32 %v3451, %v3520
      %v3590 = vmul.f32 %v3452, %v3524
      %v3591 = vmul.f32 %v3453, %v3528
      %v3592 = vmul.f32 %v3448, %v3520
      %v3593 = vmul.f32 %v3449, %v3524
      %v3594 = vmul.f32 %v3450, %v3528
      %v3595 = vmul.f32 %v3445, %v3520
      %v3596 = vmul.f32 %v3446, %v3524
      %v3597 = vmul.f32 %v3447, %v3528
      %v3598 = vmul.f32 %v3442, %v3520
      %v3599 = vmul.f32 %v3443, %v3524
      %v3600 = vmul.f32 %v3444, %v3528
      %v3601 = vmul.f32 %v3439, %v3520
      %v3602 = vmul.f32 %v3440, %v3524
      %v3603 = vmul.f32 %v3441, %v3528
      %v3604 = vmul.f32 %v3436, %v3520
      %v3605 = vmul.f32 %v3437, %v3524
      %v3606 = vmul.f32 %v3438, %v3528
      %v3607 = vmul.f32 %v3433, %v3520
      %v3608 = vmul.f32 %v3434, %v3524
      %v3609 = vmul.f32 %v3435, %v3528
      %v3610 = vmul.f32 %v3430, %v3520
      %v3611 = vmul.f32 %v3431, %v3524
      %v3612 = vmul.f32 %v3432, %v3528
      %v3613 = vmul.f32 %v3427, %v3520
      %v3614 = vmul.f32 %v3428, %v3524
      %v3615 = vmul.f32 %v3429, %v3528
      %v3616 = vmul.f32 %v3424, %v3520
      %v3617 = vmul.f32 %v3425, %v3524
      %v3618 = vmul.f32 %v3426, %v3528
      %v3619 = vmul.f32 %v3421, %v3520
      %v3620 = vmul.f32 %v3422, %v3524
      %v3621 = vmul.f32 %v3423, %v3528
      %v3622 = vmul.f32 %v3514, %v3520
      %v3623 = vmul.f32 %v3515, %v3524
      %v3624 = vmul.f32 %v3516, %v3528
      %v3625 = vadd.f32 %v3228, %v3529
      %v3626 = vadd.f32 %v3229, %v3530
      %v3627 = vadd.f32 %v3230, %v3531
      %v3628 = vadd.f32 %v3231, %v3532
      %v3629 = vadd.f32 %v3232, %v3533
      %v3630 = vadd.f32 %v3233, %v3534
      %v3631 = vadd.f32 %v3234, %v3535
      %v3632 = vadd.f32 %v3235, %v3536
      %v3633 = vadd.f32 %v3236, %v3537
      %v3634 = vadd.f32 %v3237, %v3538
      %v3635 = vadd.f32 %v3238, %v3539
      %v3636 = vadd.f32 %v3239, %v3540
      %v3637 = vadd.f32 %v3240, %v3541
      %v3638 = vadd.f32 %v3241, %v3542
      %v3639 = vadd.f32 %v3242, %v3543
      %v3640 = vadd.f32 %v3243, %v3544
      %v3641 = vadd.f32 %v3244, %v3545
      %v3642 = vadd.f32 %v3245, %v3546
      %v3643 = vadd.f32 %v3246, %v3547
      %v3644 = vadd.f32 %v3247, %v3548
      %v3645 = vadd.f32 %v3248, %v3549
      %v3646 = vadd.f32 %v3249, %v3550
      %v3647 = vadd.f32 %v3250, %v3551
      %v3648 = vadd.f32 %v3251, %v3552
      %v3649 = vadd.f32 %v3252, %v3553
      %v3650 = vadd.f32 %v3253, %v3554
      %v3651 = vadd.f32 %v3254, %v3555
      %v3652 = vadd.f32 %v3255, %v3556
      %v3653 = vadd.f32 %v3256, %v3557
      %v3654 = vadd.f32 %v3257, %v3558
      %v3655 = vadd.f32 %v3258, %v3559
      %v3656 = vadd.f32 %v3259, %v3560
      %v3657 = vadd.f32 %v3260, %v3561
      %v3658 = vadd.f32 %v3261, %v3562
      %v3659 = vadd.f32 %v3262, %v3563
      %v3660 = vadd.f32 %v3263, %v3564
      %v3661 = vadd.f32 %v3264, %v3565
      %v3662 = vadd.f32 %v3265, %v3566
      %v3663 = vadd.f32 %v3266, %v3567
      %v3664 = vadd.f32 %v3267, %v3568
      %v3665 = vadd.f32 %v3268, %v3569
      %v3666 = vadd.f32 %v3269, %v3570
      %v3667 = vadd.f32 %v3270, %v3571
      %v3668 = vadd.f32 %v3271, %v3572
      %v3669 = vadd.f32 %v3272, %v3573
      %v3670 = vadd.f32 %v3273, %v3574
      %v3671 = vadd.f32 %v3274, %v3575
      %v3672 = vadd.f32 %v3275, %v3576
      %v3673 = vadd.f32 %v3276, %v3577
      %v3674 = vadd.f32 %v3277, %v3578
      %v3675 = vadd.f32 %v3278, %v3579
      %v3676 = vadd.f32 %v3279, %v3580
      %v3677 = vadd.f32 %v3280, %v3581
      %v3678 = vadd.f32 %v3281, %v3582
      %v3679 = vadd.f32 %v3282, %v3583
      %v3680 = vadd.f32 %v3283, %v3584
      %v3681 = vadd.f32 %v3284, %v3585
      %v3682 = vadd.f32 %v3285, %v3586
      %v3683 = vadd.f32 %v3286, %v3587
      %v3684 = vadd.f32 %v3287, %v3588
      %v3685 = vadd.f32 %v3288, %v3589
      %v3686 = vadd.f32 %v3289, %v3590
      %v3687 = vadd.f32 %v3290, %v3591
      %v3688 = vadd.f32 %v3291, %v3592
      %v3689 = vadd.f32 %v3292, %v3593
      %v3690 = vadd.f32 %v3293, %v3594
      %v3691 = vadd.f32 %v3294, %v3595
      %v3692 = vadd.f32 %v3295, %v3596
      %v3693 = vadd.f32 %v3296, %v3597
      %v3694 = vadd.f32 %v3297, %v3598
      %v3695 = vadd.f32 %v3298, %v3599
      %v3696 = vadd.f32 %v3299, %v3600
      %v3697 = vadd.f32 %v3300, %v3601
      %v3698 = vadd.f32 %v3301, %v3602
      %v3699 = vadd.f32 %v3302, %v3603
      %v3700 = vadd.f32 %v3303, %v3604
      %v3701 = vadd.f32 %v3304, %v3605
      %v3702 = vadd.f32 %v3305, %v3606
      %v3703 = vadd.f32 %v3306, %v3607
      %v3704 = vadd.f32 %v3307, %v3608
      %v3705 = vadd.f32 %v3308, %v3609
      %v3706 = vadd.f32 %v3309, %v3610
      %v3707 = vadd.f32 %v3310, %v3611
      %v3708 = vadd.f32 %v3311, %v3612
      %v3709 = vadd.f32 %v3312, %v3613
      %v3710 = vadd.f32 %v3313, %v3614
      %v3711 = vadd.f32 %v3314, %v3615
      %v3712 = vadd.f32 %v3315, %v3616
      %v3713 = vadd.f32 %v3316, %v3617
      %v3714 = vadd.f32 %v3317, %v3618
      %v3715 = vadd.f32 %v3318, %v3619
      %v3716 = vadd.f32 %v3319, %v3620
      %v3717 = vadd.f32 %v3320, %v3621
      %v3718 = vadd.f32 %v3321, %v3622
      %v3719 = vadd.f32 %v3322, %v3623
      %v3720 = vadd.f32 %v3323, %v3624
      %v3721 = vlaneseq
      %v3722 = vshrl.u32 %v3721, 7
      %v3723 = vsub.s32 4, %v3722
      %v3724 = vrot.slane %v829, %v3723
      %v3725 = vlaneseq
      %v3726 = vshrl.u32 %v3725, 7
      %v3727 = vsub.s32 4, %v3726
      %v3728 = vrot.slane %v830, %v3727
      %v3729 = vlaneseq
      %v3730 = vshrl.u32 %v3729, 7
      %v3731 = vsub.s32 4, %v3730
      %v3732 = vrot.slane %v831, %v3731
      %v3733 = vmul.f32 %v417, %v3724
      %v3734 = vmul.f32 %v419, %v3728
      %v3735 = vmul.f32 %v673, %v3732
      %v3736 = vmul.f32 %v423, %v3724
      %v3737 = vmul.f32 %v425, %v3728
      %v3738 = vmul.f32 %v678, %v3732
      %v3739 = vmul.f32 %v429, %v3724
      %v3740 = vmul.f32 %v431, %v3728
      %v3741 = vmul.f32 %v683, %v3732
      %v3742 = vmul.f32 %v435, %v3724
      %v3743 = vmul.f32 %v437, %v3728
      %v3744 = vmul.f32 %v688, %v3732
      %v3745 = vmul.f32 %v441, %v3724
      %v3746 = vmul.f32 %v443, %v3728
      %v3747 = vmul.f32 %v693, %v3732
      %v3748 = vmul.f32 %v447, %v3724
      %v3749 = vmul.f32 %v449, %v3728
      %v3750 = vmul.f32 %v698, %v3732
      %v3751 = vmul.f32 %v453, %v3724
      %v3752 = vmul.f32 %v455, %v3728
      %v3753 = vmul.f32 %v703, %v3732
      %v3754 = vmul.f32 %v459, %v3724
      %v3755 = vmul.f32 %v461, %v3728
      %v3756 = vmul.f32 %v708, %v3732
      %v3757 = vmul.f32 %v465, %v3724
      %v3758 = vmul.f32 %v467, %v3728
      %v3759 = vmul.f32 %v713, %v3732
      %v3760 = vmul.f32 %v471, %v3724
      %v3761 = vmul.f32 %v473, %v3728
      %v3762 = vmul.f32 %v718, %v3732
      %v3763 = vmul.f32 %v477, %v3724
      %v3764 = vmul.f32 %v479, %v3728
      %v3765 = vmul.f32 %v723, %v3732
      %v3766 = vmul.f32 %v483, %v3724
      %v3767 = vmul.f32 %v485, %v3728
      %v3768 = vmul.f32 %v728, %v3732
      %v3769 = vmul.f32 %v489, %v3724
      %v3770 = vmul.f32 %v491, %v3728
      %v3771 = vmul.f32 %v733, %v3732
      %v3772 = vmul.f32 %v495, %v3724
      %v3773 = vmul.f32 %v497, %v3728
      %v3774 = vmul.f32 %v738, %v3732
      %v3775 = vmul.f32 %v501, %v3724
      %v3776 = vmul.f32 %v503, %v3728
      %v3777 = vmul.f32 %v743, %v3732
      %v3778 = vmul.f32 %v507, %v3724
      %v3779 = vmul.f32 %v509, %v3728
      %v3780 = vmul.f32 %v748, %v3732
      %v3781 = vmul.f32 %v513, %v3724
      %v3782 = vmul.f32 %v515, %v3728
      %v3783 = vmul.f32 %v753, %v3732
      %v3784 = vmul.f32 %v519, %v3724
      %v3785 = vmul.f32 %v521, %v3728
      %v3786 = vmul.f32 %v758, %v3732
      %v3787 = vmul.f32 %v525, %v3724
      %v3788 = vmul.f32 %v527, %v3728
      %v3789 = vmul.f32 %v763, %v3732
      %v3790 = vmul.f32 %v531, %v3724
      %v3791 = vmul.f32 %v533, %v3728
      %v3792 = vmul.f32 %v768, %v3732
      %v3793 = vmul.f32 %v537, %v3724
      %v3794 = vmul.f32 %v539, %v3728
      %v3795 = vmul.f32 %v773, %v3732
      %v3796 = vmul.f32 %v543, %v3724
      %v3797 = vmul.f32 %v545, %v3728
      %v3798 = vmul.f32 %v778, %v3732
      %v3799 = vmul.f32 %v549, %v3724
      %v3800 = vmul.f32 %v551, %v3728
      %v3801 = vmul.f32 %v783, %v3732
      %v3802 = vmul.f32 %v555, %v3724
      %v3803 = vmul.f32 %v557, %v3728
      %v3804 = vmul.f32 %v788, %v3732
      %v3805 = vmul.f32 %v561, %v3724
      %v3806 = vmul.f32 %v563, %v3728
      %v3807 = vmul.f32 %v793, %v3732
      %v3808 = vmul.f32 %v567, %v3724
      %v3809 = vmul.f32 %v569, %v3728
      %v3810 = vmul.f32 %v798, %v3732
      %v3811 = vmul.f32 %v573, %v3724
      %v3812 = vmul.f32 %v575, %v3728
      %v3813 = vmul.f32 %v803, %v3732
      %v3814 = vmul.f32 %v579, %v3724
      %v3815 = vmul.f32 %v581, %v3728
      %v3816 = vmul.f32 %v808, %v3732
      %v3817 = vmul.f32 %v585, %v3724
      %v3818 = vmul.f32 %v587, %v3728
      %v3819 = vmul.f32 %v813, %v3732
      %v3820 = vmul.f32 %v591, %v3724
      %v3821 = vmul.f32 %v593, %v3728
      %v3822 = vmul.f32 %v818, %v3732
      %v3823 = vmul.f32 %v597, %v3724
      %v3824 = vmul.f32 %v599, %v3728
      %v3825 = vmul.f32 %v823, %v3732
      %v3826 = vmul.f32 %v411, %v3724
      %v3827 = vmul.f32 %v413, %v3728
      %v3828 = vmul.f32 %v668, %v3732
      %v3829 = vadd.f32 %v3625, %v3733
      %v3830 = vadd.f32 %v3626, %v3734
      %v3831 = vadd.f32 %v3627, %v3735
      %v3832 = vadd.f32 %v3628, %v3736
      %v3833 = vadd.f32 %v3629, %v3737
      %v3834 = vadd.f32 %v3630, %v3738
      %v3835 = vadd.f32 %v3631, %v3739
      %v3836 = vadd.f32 %v3632, %v3740
      %v3837 = vadd.f32 %v3633, %v3741
      %v3838 = vadd.f32 %v3634, %v3742
      %v3839 = vadd.f32 %v3635, %v3743
      %v3840 = vadd.f32 %v3636, %v3744
      %v3841 = vadd.f32 %v3637, %v3745
      %v3842 = vadd.f32 %v3638, %v3746
      %v3843 = vadd.f32 %v3639, %v3747
      %v3844 = vadd.f32 %v3640, %v3748
      %v3845 = vadd.f32 %v3641, %v3749
      %v3846 = vadd.f32 %v3642, %v3750
      %v3847 = vadd.f32 %v3643, %v3751
      %v3848 = vadd.f32 %v3644, %v3752
      %v3849 = vadd.f32 %v3645, %v3753
      %v3850 = vadd.f32 %v3646, %v3754
      %v3851 = vadd.f32 %v3647, %v3755
      %v3852 = vadd.f32 %v3648, %v3756
      %v3853 = vadd.f32 %v3649, %v3757
      %v3854 = vadd.f32 %v3650, %v3758
      %v3855 = vadd.f32 %v3651, %v3759
      %v3856 = vadd.f32 %v3652, %v3760
      %v3857 = vadd.f32 %v3653, %v3761
      %v3858 = vadd.f32 %v3654, %v3762
      %v3859 = vadd.f32 %v3655, %v3763
      %v3860 = vadd.f32 %v3656, %v3764
      %v3861 = vadd.f32 %v3657, %v3765
      %v3862 = vadd.f32 %v3658, %v3766
      %v3863 = vadd.f32 %v3659, %v3767
      %v3864 = vadd.f32 %v3660, %v3768
      %v3865 = vadd.f32 %v3661, %v3769
      %v3866 = vadd.f32 %v3662, %v3770
      %v3867 = vadd.f32 %v3663, %v3771
      %v3868 = vadd.f32 %v3664, %v3772
      %v3869 = vadd.f32 %v3665, %v3773
      %v3870 = vadd.f32 %v3666, %v3774
      %v3871 = vadd.f32 %v3667, %v3775
      %v3872 = vadd.f32 %v3668, %v3776
      %v3873 = vadd.f32 %v3669, %v3777
      %v3874 = vadd.f32 %v3670, %v3778
      %v3875 = vadd.f32 %v3671, %v3779
      %v3876 = vadd.f32 %v3672, %v3780
      %v3877 = vadd.f32 %v3673, %v3781
      %v3878 = vadd.f32 %v3674, %v3782
      %v3879 = vadd.f32 %v3675, %v3783
      %v3880 = vadd.f32 %v3676, %v3784
      %v3881 = vadd.f32 %v3677, %v3785
      %v3882 = vadd.f32 %v3678, %v3786
      %v3883 = vadd.f32 %v3679, %v3787
      %v3884 = vadd.f32 %v3680, %v3788
      %v3885 = vadd.f32 %v3681, %v3789
      %v3886 = vadd.f32 %v3682, %v3790
      %v3887 = vadd.f32 %v3683, %v3791
      %v3888 = vadd.f32 %v3684, %v3792
      %v3889 = vadd.f32 %v3685, %v3793
      %v3890 = vadd.f32 %v3686, %v3794
      %v3891 = vadd.f32 %v3687, %v3795
      %v3892 = vadd.f32 %v3688, %v3796
      %v3893 = vadd.f32 %v3689, %v3797
      %v3894 = vadd.f32 %v3690, %v3798
      %v3895 = vadd.f32 %v3691, %v3799
      %v3896 = vadd.f32 %v3692, %v3800
      %v3897 = vadd.f32 %v3693, %v3801
      %v3898 = vadd.f32 %v3694, %v3802
      %v3899 = vadd.f32 %v3695, %v3803
      %v3900 = vadd.f32 %v3696, %v3804
      %v3901 = vadd.f32 %v3697, %v3805
      %v3902 = vadd.f32 %v3698, %v3806
      %v3903 = vadd.f32 %v3699, %v3807
      %v3904 = vadd.f32 %v3700, %v3808
      %v3905 = vadd.f32 %v3701, %v3809
      %v3906 = vadd.f32 %v3702, %v3810
      %v3907 = vadd.f32 %v3703, %v3811
      %v3908 = vadd.f32 %v3704, %v3812
      %v3909 = vadd.f32 %v3705, %v3813
      %v3910 = vadd.f32 %v3706, %v3814
      %v3911 = vadd.f32 %v3707, %v3815
      %v3912 = vadd.f32 %v3708, %v3816
      %v3913 = vadd.f32 %v3709, %v3817
      %v3914 = vadd.f32 %v3710, %v3818
      %v3915 = vadd.f32 %v3711, %v3819
      %v3916 = vadd.f32 %v3712, %v3820
      %v3917 = vadd.f32 %v3713, %v3821
      %v3918 = vadd.f32 %v3714, %v3822
      %v3919 = vadd.f32 %v3715, %v3823
      %v3920 = vadd.f32 %v3716, %v3824
      %v3921 = vadd.f32 %v3717, %v3825
      %v3922 = vadd.f32 %v3718, %v3826
      %v3923 = vadd.f32 %v3719, %v3827
      %v3924 = vadd.f32 %v3720, %v3828
      %v3925 = vlaneseq
      %v3926 = vshrl.u32 %v3925, 7
      %v3927 = vsub.s32 5, %v3926
      %v3928 = vrot.slane %v829, %v3927
      %v3929 = vlaneseq
      %v3930 = vshrl.u32 %v3929, 7
      %v3931 = vsub.s32 5, %v3930
      %v3932 = vrot.slane %v830, %v3931
      %v3933 = vlaneseq
      %v3934 = vshrl.u32 %v3933, 7
      %v3935 = vsub.s32 5, %v3934
      %v3936 = vrot.slane %v831, %v3935
      %v3937 = vmul.f32 %v1126, %v3928
      %v3938 = vmul.f32 %v1127, %v3932
      %v3939 = vmul.f32 %v1128, %v3936
      %v3940 = vmul.f32 %v1123, %v3928
      %v3941 = vmul.f32 %v1124, %v3932
      %v3942 = vmul.f32 %v1125, %v3936
      %v3943 = vmul.f32 %v1120, %v3928
      %v3944 = vmul.f32 %v1121, %v3932
      %v3945 = vmul.f32 %v1122, %v3936
      %v3946 = vmul.f32 %v1117, %v3928
      %v3947 = vmul.f32 %v1118, %v3932
      %v3948 = vmul.f32 %v1119, %v3936
      %v3949 = vmul.f32 %v1114, %v3928
      %v3950 = vmul.f32 %v1115, %v3932
      %v3951 = vmul.f32 %v1116, %v3936
      %v3952 = vmul.f32 %v1111, %v3928
      %v3953 = vmul.f32 %v1112, %v3932
      %v3954 = vmul.f32 %v1113, %v3936
      %v3955 = vmul.f32 %v1108, %v3928
      %v3956 = vmul.f32 %v1109, %v3932
      %v3957 = vmul.f32 %v1110, %v3936
      %v3958 = vmul.f32 %v1105, %v3928
      %v3959 = vmul.f32 %v1106, %v3932
      %v3960 = vmul.f32 %v1107, %v3936
      %v3961 = vmul.f32 %v1102, %v3928
      %v3962 = vmul.f32 %v1103, %v3932
      %v3963 = vmul.f32 %v1104, %v3936
      %v3964 = vmul.f32 %v1099, %v3928
      %v3965 = vmul.f32 %v1100, %v3932
      %v3966 = vmul.f32 %v1101, %v3936
      %v3967 = vmul.f32 %v1096, %v3928
      %v3968 = vmul.f32 %v1097, %v3932
      %v3969 = vmul.f32 %v1098, %v3936
      %v3970 = vmul.f32 %v1093, %v3928
      %v3971 = vmul.f32 %v1094, %v3932
      %v3972 = vmul.f32 %v1095, %v3936
      %v3973 = vmul.f32 %v1090, %v3928
      %v3974 = vmul.f32 %v1091, %v3932
      %v3975 = vmul.f32 %v1092, %v3936
      %v3976 = vmul.f32 %v1087, %v3928
      %v3977 = vmul.f32 %v1088, %v3932
      %v3978 = vmul.f32 %v1089, %v3936
      %v3979 = vmul.f32 %v1084, %v3928
      %v3980 = vmul.f32 %v1085, %v3932
      %v3981 = vmul.f32 %v1086, %v3936
      %v3982 = vmul.f32 %v1081, %v3928
      %v3983 = vmul.f32 %v1082, %v3932
      %v3984 = vmul.f32 %v1083, %v3936
      %v3985 = vmul.f32 %v1078, %v3928
      %v3986 = vmul.f32 %v1079, %v3932
      %v3987 = vmul.f32 %v1080, %v3936
      %v3988 = vmul.f32 %v1075, %v3928
      %v3989 = vmul.f32 %v1076, %v3932
      %v3990 = vmul.f32 %v1077, %v3936
      %v3991 = vmul.f32 %v1072, %v3928
      %v3992 = vmul.f32 %v1073, %v3932
      %v3993 = vmul.f32 %v1074, %v3936
      %v3994 = vmul.f32 %v1069, %v3928
      %v3995 = vmul.f32 %v1070, %v3932
      %v3996 = vmul.f32 %v1071, %v3936
      %v3997 = vmul.f32 %v1066, %v3928
      %v3998 = vmul.f32 %v1067, %v3932
      %v3999 = vmul.f32 %v1068, %v3936
      %v4000 = vmul.f32 %v1063, %v3928
      %v4001 = vmul.f32 %v1064, %v3932
      %v4002 = vmul.f32 %v1065, %v3936
      %v4003 = vmul.f32 %v1060, %v3928
      %v4004 = vmul.f32 %v1061, %v3932
      %v4005 = vmul.f32 %v1062, %v3936
      %v4006 = vmul.f32 %v1057, %v3928
      %v4007 = vmul.f32 %v1058, %v3932
      %v4008 = vmul.f32 %v1059, %v3936
      %v4009 = vmul.f32 %v1054, %v3928
      %v4010 = vmul.f32 %v1055, %v3932
      %v4011 = vmul.f32 %v1056, %v3936
      %v4012 = vmul.f32 %v1051, %v3928
      %v4013 = vmul.f32 %v1052, %v3932
      %v4014 = vmul.f32 %v1053, %v3936
      %v4015 = vmul.f32 %v1048, %v3928
      %v4016 = vmul.f32 %v1049, %v3932
      %v4017 = vmul.f32 %v1050, %v3936
      %v4018 = vmul.f32 %v1045, %v3928
      %v4019 = vmul.f32 %v1046, %v3932
      %v4020 = vmul.f32 %v1047, %v3936
      %v4021 = vmul.f32 %v1042, %v3928
      %v4022 = vmul.f32 %v1043, %v3932
      %v4023 = vmul.f32 %v1044, %v3936
      %v4024 = vmul.f32 %v1039, %v3928
      %v4025 = vmul.f32 %v1040, %v3932
      %v4026 = vmul.f32 %v1041, %v3936
      %v4027 = vmul.f32 %v1132, %v3928
      %v4028 = vmul.f32 %v1133, %v3932
      %v4029 = vmul.f32 %v1134, %v3936
      %v4030 = vmul.f32 %v1129, %v3928
      %v4031 = vmul.f32 %v1130, %v3932
      %v4032 = vmul.f32 %v1131, %v3936
      %v4033 = vadd.f32 %v3829, %v3937
      %v4034 = vadd.f32 %v3830, %v3938
      %v4035 = vadd.f32 %v3831, %v3939
      %v4036 = vadd.f32 %v3832, %v3940
      %v4037 = vadd.f32 %v3833, %v3941
      %v4038 = vadd.f32 %v3834, %v3942
      %v4039 = vadd.f32 %v3835, %v3943
      %v4040 = vadd.f32 %v3836, %v3944
      %v4041 = vadd.f32 %v3837, %v3945
      %v4042 = vadd.f32 %v3838, %v3946
      %v4043 = vadd.f32 %v3839, %v3947
      %v4044 = vadd.f32 %v3840, %v3948
      %v4045 = vadd.f32 %v3841, %v3949
      %v4046 = vadd.f32 %v3842, %v3950
      %v4047 = vadd.f32 %v3843, %v3951
      %v4048 = vadd.f32 %v3844, %v3952
      %v4049 = vadd.f32 %v3845, %v3953
      %v4050 = vadd.f32 %v3846, %v3954
      %v4051 = vadd.f32 %v3847, %v3955
      %v4052 = vadd.f32 %v3848, %v3956
      %v4053 = vadd.f32 %v3849, %v3957
      %v4054 = vadd.f32 %v3850, %v3958
      %v4055 = vadd.f32 %v3851, %v3959
      %v4056 = vadd.f32 %v3852, %v3960
      %v4057 = vadd.f32 %v3853, %v3961
      %v4058 = vadd.f32 %v3854, %v3962
      %v4059 = vadd.f32 %v3855, %v3963
      %v4060 = vadd.f32 %v3856, %v3964
      %v4061 = vadd.f32 %v3857, %v3965
      %v4062 = vadd.f32 %v3858, %v3966
      %v4063 = vadd.f32 %v3859, %v3967
      %v4064 = vadd.f32 %v3860, %v3968
      %v4065 = vadd.f32 %v3861, %v3969
      %v4066 = vadd.f32 %v3862, %v3970
      %v4067 = vadd.f32 %v3863, %v3971
      %v4068 = vadd.f32 %v3864, %v3972
      %v4069 = vadd.f32 %v3865, %v3973
      %v4070 = vadd.f32 %v3866, %v3974
      %v4071 = vadd.f32 %v3867, %v3975
      %v4072 = vadd.f32 %v3868, %v3976
      %v4073 = vadd.f32 %v3869, %v3977
      %v4074 = vadd.f32 %v3870, %v3978
      %v4075 = vadd.f32 %v3871, %v3979
      %v4076 = vadd.f32 %v3872, %v3980
      %v4077 = vadd.f32 %v3873, %v3981
      %v4078 = vadd.f32 %v3874, %v3982
      %v4079 = vadd.f32 %v3875, %v3983
      %v4080 = vadd.f32 %v3876, %v3984
      %v4081 = vadd.f32 %v3877, %v3985
      %v4082 = vadd.f32 %v3878, %v3986
      %v4083 = vadd.f32 %v3879, %v3987
      %v4084 = vadd.f32 %v3880, %v3988
      %v4085 = vadd.f32 %v3881, %v3989
      %v4086 = vadd.f32 %v3882, %v3990
      %v4087 = vadd.f32 %v3883, %v3991
      %v4088 = vadd.f32 %v3884, %v3992
      %v4089 = vadd.f32 %v3885, %v3993
      %v4090 = vadd.f32 %v3886, %v3994
      %v4091 = vadd.f32 %v3887, %v3995
      %v4092 = vadd.f32 %v3888, %v3996
      %v4093 = vadd.f32 %v3889, %v3997
      %v4094 = vadd.f32 %v3890, %v3998
      %v4095 = vadd.f32 %v3891, %v3999
      %v4096 = vadd.f32 %v3892, %v4000
      %v4097 = vadd.f32 %v3893, %v4001
      %v4098 = vadd.f32 %v3894, %v4002
      %v4099 = vadd.f32 %v3895, %v4003
      %v4100 = vadd.f32 %v3896, %v4004
      %v4101 = vadd.f32 %v3897, %v4005
      %v4102 = vadd.f32 %v3898, %v4006
      %v4103 = vadd.f32 %v3899, %v4007
      %v4104 = vadd.f32 %v3900, %v4008
      %v4105 = vadd.f32 %v3901, %v4009
      %v4106 = vadd.f32 %v3902, %v4010
      %v4107 = vadd.f32 %v3903, %v4011
      %v4108 = vadd.f32 %v3904, %v4012
      %v4109 = vadd.f32 %v3905, %v4013
      %v4110 = vadd.f32 %v3906, %v4014
      %v4111 = vadd.f32 %v3907, %v4015
      %v4112 = vadd.f32 %v3908, %v4016
      %v4113 = vadd.f32 %v3909, %v4017
      %v4114 = vadd.f32 %v3910, %v4018
      %v4115 = vadd.f32 %v3911, %v4019
      %v4116 = vadd.f32 %v3912, %v4020
      %v4117 = vadd.f32 %v3913, %v4021
      %v4118 = vadd.f32 %v3914, %v4022
      %v4119 = vadd.f32 %v3915, %v4023
      %v4120 = vadd.f32 %v3916, %v4024
      %v4121 = vadd.f32 %v3917, %v4025
      %v4122 = vadd.f32 %v3918, %v4026
      %v4123 = vadd.f32 %v3919, %v4027
      %v4124 = vadd.f32 %v3920, %v4028
      %v4125 = vadd.f32 %v3921, %v4029
      %v4126 = vadd.f32 %v3922, %v4030
      %v4127 = vadd.f32 %v3923, %v4031
      %v4128 = vadd.f32 %v3924, %v4032
      %v4129 = vadd.s32 %v1037, 8
      %v4130 = vadd.s32 %v1037, 16
      %v4131 = vadd.s32 %v1037, 24
      %v4132 = vadd.s32 %v1037, 32
      %v4133 = vadd.s32 %v1037, 40
      %v4134 = vadd.s32 %v1037, 48
      %v4135 = vadd.s32 %v1037, 56
      %v4136 = vadd.s32 %v1037, 64
      %v4137 = vadd.s32 %v1037, 72
      %v4138 = vadd.s32 %v1037, 80
      %v4139 = vadd.s32 %v1037, 88
      %v4140 = vadd.s32 %v1037, 96
      %v4141 = vadd.s32 %v1037, 104
      %v4142 = vadd.s32 %v1037, 112
      %v4143 = vadd.s32 %v1037, 120
      %v4144 = vadd.s32 %v1037, 128
      %v4145 = vadd.s32 %v1037, 136
      %v4146 = vadd.s32 %v1037, 144
      %v4147 = vadd.s32 %v1037, 152
      %v4148 = vadd.s32 %v1037, 160
      %v4149 = vadd.s32 %v1037, 168
      %v4150 = vadd.s32 %v1037, 176
      %v4151 = vadd.s32 %v1037, 184
      %v4152 = vadd.s32 %v1037, 192
      %v4153 = vadd.s32 %v1037, 200
      %v4154 = vadd.s32 %v1037, 208
      %v4155 = vadd.s32 %v1037, 216
      %v4156 = vadd.s32 %v1037, 224
      %v4157 = vadd.s32 %v1037, 232
      %v4158 = vadd.s32 %v1037, 240
      %v4159 = vadd.s32 %v1037, 248
      %v4160 = vand.u32 %v1037, 31
      %v4161 = vand.u32 %v4129, 31
      %v4162 = vand.u32 %v4130, 31
      %v4163 = vand.u32 %v4131, 31
      %v4164 = vand.u32 %v4132, 31
      %v4165 = vand.u32 %v4133, 31
      %v4166 = vand.u32 %v4134, 31
      %v4167 = vand.u32 %v4135, 31
      %v4168 = vand.u32 %v4136, 31
      %v4169 = vand.u32 %v4137, 31
      %v4170 = vand.u32 %v4138, 31
      %v4171 = vand.u32 %v4139, 31
      %v4172 = vand.u32 %v4140, 31
      %v4173 = vand.u32 %v4141, 31
      %v4174 = vand.u32 %v4142, 31
      %v4175 = vand.u32 %v4143, 31
      %v4176 = vand.u32 %v4144, 31
      %v4177 = vand.u32 %v4145, 31
      %v4178 = vand.u32 %v4146, 31
      %v4179 = vand.u32 %v4147, 31
      %v4180 = vand.u32 %v4148, 31
      %v4181 = vand.u32 %v4149, 31
      %v4182 = vand.u32 %v4150, 31
      %v4183 = vand.u32 %v4151, 31
      %v4184 = vand.u32 %v4152, 31
      %v4185 = vand.u32 %v4153, 31
      %v4186 = vand.u32 %v4154, 31
      %v4187 = vand.u32 %v4155, 31
      %v4188 = vand.u32 %v4156, 31
      %v4189 = vand.u32 %v4157, 31
      %v4190 = vand.u32 %v4158, 31
      %v4191 = vand.u32 %v4159, 31
      %vm4192 = vcmp.le.s32.totalorder %v4160, 22
      %vm4193 = vcmp.le.s32.totalorder %v4161, 22
      %vm4194 = vcmp.le.s32.totalorder %v4162, 22
      %vm4195 = vcmp.le.s32.totalorder %v4163, 22
      %vm4196 = vcmp.le.s32.totalorder %v4164, 22
      %vm4197 = vcmp.le.s32.totalorder %v4165, 22
      %vm4198 = vcmp.le.s32.totalorder %v4166, 22
      %vm4199 = vcmp.le.s32.totalorder %v4167, 22
      %vm4200 = vcmp.le.s32.totalorder %v4168, 22
      %vm4201 = vcmp.le.s32.totalorder %v4169, 22
      %vm4202 = vcmp.le.s32.totalorder %v4170, 22
      %vm4203 = vcmp.le.s32.totalorder %v4171, 22
      %vm4204 = vcmp.le.s32.totalorder %v4172, 22
      %vm4205 = vcmp.le.s32.totalorder %v4173, 22
      %vm4206 = vcmp.le.s32.totalorder %v4174, 22
      %vm4207 = vcmp.le.s32.totalorder %v4175, 22
      %vm4208 = vcmp.le.s32.totalorder %v4176, 22
      %vm4209 = vcmp.le.s32.totalorder %v4177, 22
      %vm4210 = vcmp.le.s32.totalorder %v4178, 22
      %vm4211 = vcmp.le.s32.totalorder %v4179, 22
      %vm4212 = vcmp.le.s32.totalorder %v4180, 22
      %vm4213 = vcmp.le.s32.totalorder %v4181, 22
      %vm4214 = vcmp.le.s32.totalorder %v4182, 22
      %vm4215 = vcmp.le.s32.totalorder %v4183, 22
      %vm4216 = vcmp.le.s32.totalorder %v4184, 22
      %vm4217 = vcmp.le.s32.totalorder %v4185, 22
      %vm4218 = vcmp.le.s32.totalorder %v4186, 22
      %vm4219 = vcmp.le.s32.totalorder %v4187, 22
      %vm4220 = vcmp.le.s32.totalorder %v4188, 22
      %vm4221 = vcmp.le.s32.totalorder %v4189, 22
      %vm4222 = vcmp.le.s32.totalorder %v4190, 22
      %vm4223 = vcmp.le.s32.totalorder %v4191, 22
      %v4224 = vsel %vm4192, 1, 0
      %v4225 = vsel %vm4193, 1, 0
      %v4226 = vsel %vm4194, 1, 0
      %v4227 = vsel %vm4195, 1, 0
      %v4228 = vsel %vm4196, 1, 0
      %v4229 = vsel %vm4197, 1, 0
      %v4230 = vsel %vm4198, 1, 0
      %v4231 = vsel %vm4199, 1, 0
      %v4232 = vsel %vm4200, 1, 0
      %v4233 = vsel %vm4201, 1, 0
      %v4234 = vsel %vm4202, 1, 0
      %v4235 = vsel %vm4203, 1, 0
      %v4236 = vsel %vm4204, 1, 0
      %v4237 = vsel %vm4205, 1, 0
      %v4238 = vsel %vm4206, 1, 0
      %v4239 = vsel %vm4207, 1, 0
      %v4240 = vsel %vm4208, 1, 0
      %v4241 = vsel %vm4209, 1, 0
      %v4242 = vsel %vm4210, 1, 0
      %v4243 = vsel %vm4211, 1, 0
      %v4244 = vsel %vm4212, 1, 0
      %v4245 = vsel %vm4213, 1, 0
      %v4246 = vsel %vm4214, 1, 0
      %v4247 = vsel %vm4215, 1, 0
      %v4248 = vsel %vm4216, 1, 0
      %v4249 = vsel %vm4217, 1, 0
      %v4250 = vsel %vm4218, 1, 0
      %v4251 = vsel %vm4219, 1, 0
      %v4252 = vsel %vm4220, 1, 0
      %v4253 = vsel %vm4221, 1, 0
      %v4254 = vsel %vm4222, 1, 0
      %v4255 = vsel %vm4223, 1, 0
      %v4256 = vcvt.s32.f32 %v4224
      %v4257 = vcvt.s32.f32 %v4225
      %v4258 = vcvt.s32.f32 %v4226
      %v4259 = vcvt.s32.f32 %v4227
      %v4260 = vcvt.s32.f32 %v4228
      %v4261 = vcvt.s32.f32 %v4229
      %v4262 = vcvt.s32.f32 %v4230
      %v4263 = vcvt.s32.f32 %v4231
      %v4264 = vcvt.s32.f32 %v4232
      %v4265 = vcvt.s32.f32 %v4233
      %v4266 = vcvt.s32.f32 %v4234
      %v4267 = vcvt.s32.f32 %v4235
      %v4268 = vcvt.s32.f32 %v4236
      %v4269 = vcvt.s32.f32 %v4237
      %v4270 = vcvt.s32.f32 %v4238
      %v4271 = vcvt.s32.f32 %v4239
      %v4272 = vcvt.s32.f32 %v4240
      %v4273 = vcvt.s32.f32 %v4241
      %v4274 = vcvt.s32.f32 %v4242
      %v4275 = vcvt.s32.f32 %v4243
      %v4276 = vcvt.s32.f32 %v4244
      %v4277 = vcvt.s32.f32 %v4245
      %v4278 = vcvt.s32.f32 %v4246
      %v4279 = vcvt.s32.f32 %v4247
      %v4280 = vcvt.s32.f32 %v4248
      %v4281 = vcvt.s32.f32 %v4249
      %v4282 = vcvt.s32.f32 %v4250
      %v4283 = vcvt.s32.f32 %v4251
      %v4284 = vcvt.s32.f32 %v4252
      %v4285 = vcvt.s32.f32 %v4253
      %v4286 = vcvt.s32.f32 %v4254
      %v4287 = vcvt.s32.f32 %v4255
      %s4288 = scalar_lea.vmem %s3, 54
      %v4289 = vld [vmem:[%s4288] ss:$8 sm:$0x7]
      %v4291 = vlaneseq
      %v4292 = vshrl.u32 %v4291, 7
      %v4293 = vsub.s32 0, %v4292
      %v4294 = vrot.slane %v4289, %v4293
      %v4295 = vlaneseq
      %v4296 = vshrl.u32 %v4295, 7
      %v4297 = vsub.s32 1, %v4296
      %v4298 = vrot.slane %v4289, %v4297
      %v4299 = vlaneseq
      %v4300 = vshrl.u32 %v4299, 7
      %v4301 = vsub.s32 2, %v4300
      %v4302 = vrot.slane %v4289, %v4301
      %v4306 = vadd.f32 %v4033, %v4294
      %v4307 = vadd.f32 %v4034, %v4298
      %v4308 = vadd.f32 %v4035, %v4302
      %v4309 = vadd.f32 %v4036, %v4294
      %v4310 = vadd.f32 %v4037, %v4298
      %v4311 = vadd.f32 %v4038, %v4302
      %v4312 = vadd.f32 %v4039, %v4294
      %v4313 = vadd.f32 %v4040, %v4298
      %v4314 = vadd.f32 %v4041, %v4302
      %v4315 = vadd.f32 %v4042, %v4294
      %v4316 = vadd.f32 %v4043, %v4298
      %v4317 = vadd.f32 %v4044, %v4302
      %v4318 = vadd.f32 %v4045, %v4294
      %v4319 = vadd.f32 %v4046, %v4298
      %v4320 = vadd.f32 %v4047, %v4302
      %v4321 = vadd.f32 %v4048, %v4294
      %v4322 = vadd.f32 %v4049, %v4298
      %v4323 = vadd.f32 %v4050, %v4302
      %v4324 = vadd.f32 %v4051, %v4294
      %v4325 = vadd.f32 %v4052, %v4298
      %v4326 = vadd.f32 %v4053, %v4302
      %v4327 = vadd.f32 %v4054, %v4294
      %v4328 = vadd.f32 %v4055, %v4298
      %v4329 = vadd.f32 %v4056, %v4302
      %v4330 = vadd.f32 %v4057, %v4294
      %v4331 = vadd.f32 %v4058, %v4298
      %v4332 = vadd.f32 %v4059, %v4302
      %v4333 = vadd.f32 %v4060, %v4294
      %v4334 = vadd.f32 %v4061, %v4298
      %v4335 = vadd.f32 %v4062, %v4302
      %v4336 = vadd.f32 %v4063, %v4294
      %v4337 = vadd.f32 %v4064, %v4298
      %v4338 = vadd.f32 %v4065, %v4302
      %v4339 = vadd.f32 %v4066, %v4294
      %v4340 = vadd.f32 %v4067, %v4298
      %v4341 = vadd.f32 %v4068, %v4302
      %v4342 = vadd.f32 %v4069, %v4294
      %v4343 = vadd.f32 %v4070, %v4298
      %v4344 = vadd.f32 %v4071, %v4302
      %v4345 = vadd.f32 %v4072, %v4294
      %v4346 = vadd.f32 %v4073, %v4298
      %v4347 = vadd.f32 %v4074, %v4302
      %v4348 = vadd.f32 %v4075, %v4294
      %v4349 = vadd.f32 %v4076, %v4298
      %v4350 = vadd.f32 %v4077, %v4302
      %v4351 = vadd.f32 %v4078, %v4294
      %v4352 = vadd.f32 %v4079, %v4298
      %v4353 = vadd.f32 %v4080, %v4302
      %v4354 = vadd.f32 %v4081, %v4294
      %v4355 = vadd.f32 %v4082, %v4298
      %v4356 = vadd.f32 %v4083, %v4302
      %v4357 = vadd.f32 %v4084, %v4294
      %v4358 = vadd.f32 %v4085, %v4298
      %v4359 = vadd.f32 %v4086, %v4302
      %v4360 = vadd.f32 %v4087, %v4294
      %v4361 = vadd.f32 %v4088, %v4298
      %v4362 = vadd.f32 %v4089, %v4302
      %v4363 = vadd.f32 %v4090, %v4294
      %v4364 = vadd.f32 %v4091, %v4298
      %v4365 = vadd.f32 %v4092, %v4302
      %v4366 = vadd.f32 %v4093, %v4294
      %v4367 = vadd.f32 %v4094, %v4298
      %v4368 = vadd.f32 %v4095, %v4302
      %v4369 = vadd.f32 %v4096, %v4294
      %v4370 = vadd.f32 %v4097, %v4298
      %v4371 = vadd.f32 %v4098, %v4302
      %v4372 = vadd.f32 %v4099, %v4294
      %v4373 = vadd.f32 %v4100, %v4298
      %v4374 = vadd.f32 %v4101, %v4302
      %v4375 = vadd.f32 %v4102, %v4294
      %v4376 = vadd.f32 %v4103, %v4298
      %v4377 = vadd.f32 %v4104, %v4302
      %v4378 = vadd.f32 %v4105, %v4294
      %v4379 = vadd.f32 %v4106, %v4298
      %v4380 = vadd.f32 %v4107, %v4302
      %v4381 = vadd.f32 %v4108, %v4294
      %v4382 = vadd.f32 %v4109, %v4298
      %v4383 = vadd.f32 %v4110, %v4302
      %v4384 = vadd.f32 %v4111, %v4294
      %v4385 = vadd.f32 %v4112, %v4298
      %v4386 = vadd.f32 %v4113, %v4302
      %v4387 = vadd.f32 %v4114, %v4294
      %v4388 = vadd.f32 %v4115, %v4298
      %v4389 = vadd.f32 %v4116, %v4302
      %v4390 = vadd.f32 %v4117, %v4294
      %v4391 = vadd.f32 %v4118, %v4298
      %v4392 = vadd.f32 %v4119, %v4302
      %v4393 = vadd.f32 %v4120, %v4294
      %v4394 = vadd.f32 %v4121, %v4298
      %v4395 = vadd.f32 %v4122, %v4302
      %v4396 = vadd.f32 %v4123, %v4294
      %v4397 = vadd.f32 %v4124, %v4298
      %v4398 = vadd.f32 %v4125, %v4302
      %v4399 = vadd.f32 %v4126, %v4294
      %v4400 = vadd.f32 %v4127, %v4298
      %v4401 = vadd.f32 %v4128, %v4302
      %v4402 = vmax.f32 %v4306, 0.0
      %v4403 = vmax.f32 %v4307, 0.0
      %v4404 = vmax.f32 %v4308, 0.0
      %v4405 = vmax.f32 %v4309, 0.0
      %v4406 = vmax.f32 %v4310, 0.0
      %v4407 = vmax.f32 %v4311, 0.0
      %v4408 = vmax.f32 %v4312, 0.0
      %v4409 = vmax.f32 %v4313, 0.0
      %v4410 = vmax.f32 %v4314, 0.0
      %v4411 = vmax.f32 %v4315, 0.0
      %v4412 = vmax.f32 %v4316, 0.0
      %v4413 = vmax.f32 %v4317, 0.0
      %v4414 = vmax.f32 %v4318, 0.0
      %v4415 = vmax.f32 %v4319, 0.0
      %v4416 = vmax.f32 %v4320, 0.0
      %v4417 = vmax.f32 %v4321, 0.0
      %v4418 = vmax.f32 %v4322, 0.0
      %v4419 = vmax.f32 %v4323, 0.0
      %v4420 = vmax.f32 %v4324, 0.0
      %v4421 = vmax.f32 %v4325, 0.0
      %v4422 = vmax.f32 %v4326, 0.0
      %v4423 = vmax.f32 %v4327, 0.0
      %v4424 = vmax.f32 %v4328, 0.0
      %v4425 = vmax.f32 %v4329, 0.0
      %v4426 = vmax.f32 %v4330, 0.0
      %v4427 = vmax.f32 %v4331, 0.0
      %v4428 = vmax.f32 %v4332, 0.0
      %v4429 = vmax.f32 %v4333, 0.0
      %v4430 = vmax.f32 %v4334, 0.0
      %v4431 = vmax.f32 %v4335, 0.0
      %v4432 = vmax.f32 %v4336, 0.0
      %v4433 = vmax.f32 %v4337, 0.0
      %v4434 = vmax.f32 %v4338, 0.0
      %v4435 = vmax.f32 %v4339, 0.0
      %v4436 = vmax.f32 %v4340, 0.0
      %v4437 = vmax.f32 %v4341, 0.0
      %v4438 = vmax.f32 %v4342, 0.0
      %v4439 = vmax.f32 %v4343, 0.0
      %v4440 = vmax.f32 %v4344, 0.0
      %v4441 = vmax.f32 %v4345, 0.0
      %v4442 = vmax.f32 %v4346, 0.0
      %v4443 = vmax.f32 %v4347, 0.0
      %v4444 = vmax.f32 %v4348, 0.0
      %v4445 = vmax.f32 %v4349, 0.0
      %v4446 = vmax.f32 %v4350, 0.0
      %v4447 = vmax.f32 %v4351, 0.0
      %v4448 = vmax.f32 %v4352, 0.0
      %v4449 = vmax.f32 %v4353, 0.0
      %v4450 = vmax.f32 %v4354, 0.0
      %v4451 = vmax.f32 %v4355, 0.0
      %v4452 = vmax.f32 %v4356, 0.0
      %v4453 = vmax.f32 %v4357, 0.0
      %v4454 = vmax.f32 %v4358, 0.0
      %v4455 = vmax.f32 %v4359, 0.0
      %v4456 = vmax.f32 %v4360, 0.0
      %v4457 = vmax.f32 %v4361, 0.0
      %v4458 = vmax.f32 %v4362, 0.0
      %v4459 = vmax.f32 %v4363, 0.0
      %v4460 = vmax.f32 %v4364, 0.0
      %v4461 = vmax.f32 %v4365, 0.0
      %v4462 = vmax.f32 %v4366, 0.0
      %v4463 = vmax.f32 %v4367, 0.0
      %v4464 = vmax.f32 %v4368, 0.0
      %v4465 = vmax.f32 %v4369, 0.0
      %v4466 = vmax.f32 %v4370, 0.0
      %v4467 = vmax.f32 %v4371, 0.0
      %v4468 = vmax.f32 %v4372, 0.0
      %v4469 = vmax.f32 %v4373, 0.0
      %v4470 = vmax.f32 %v4374, 0.0
      %v4471 = vmax.f32 %v4375, 0.0
      %v4472 = vmax.f32 %v4376, 0.0
      %v4473 = vmax.f32 %v4377, 0.0
      %v4474 = vmax.f32 %v4378, 0.0
      %v4475 = vmax.f32 %v4379, 0.0
      %v4476 = vmax.f32 %v4380, 0.0
      %v4477 = vmax.f32 %v4381, 0.0
      %v4478 = vmax.f32 %v4382, 0.0
      %v4479 = vmax.f32 %v4383, 0.0
      %v4480 = vmax.f32 %v4384, 0.0
      %v4481 = vmax.f32 %v4385, 0.0
      %v4482 = vmax.f32 %v4386, 0.0
      %v4483 = vmax.f32 %v4387, 0.0
      %v4484 = vmax.f32 %v4388, 0.0
      %v4485 = vmax.f32 %v4389, 0.0
      %v4486 = vmax.f32 %v4390, 0.0
      %v4487 = vmax.f32 %v4391, 0.0
      %v4488 = vmax.f32 %v4392, 0.0
      %v4489 = vmax.f32 %v4393, 0.0
      %v4490 = vmax.f32 %v4394, 0.0
      %v4491 = vmax.f32 %v4395, 0.0
      %v4492 = vmax.f32 %v4396, 0.0
      %v4493 = vmax.f32 %v4397, 0.0
      %v4494 = vmax.f32 %v4398, 0.0
      %v4495 = vmax.f32 %v4399, 0.0
      %v4496 = vmax.f32 %v4400, 0.0
      %v4497 = vmax.f32 %v4401, 0.0
      %v4498 = vmul.f32 %v4402, %v4256
      %v4499 = vmul.f32 %v4403, %v4256
      %v4500 = vmul.f32 %v4404, %v4256
      %v4501 = vmul.f32 %v4405, %v4257
      %v4502 = vmul.f32 %v4406, %v4257
      %v4503 = vmul.f32 %v4407, %v4257
      %v4504 = vmul.f32 %v4408, %v4258
      %v4505 = vmul.f32 %v4409, %v4258
      %v4506 = vmul.f32 %v4410, %v4258
      %v4507 = vmul.f32 %v4411, %v4259
      %v4508 = vmul.f32 %v4412, %v4259
      %v4509 = vmul.f32 %v4413, %v4259
      %v4510 = vmul.f32 %v4414, %v4260
      %v4511 = vmul.f32 %v4415, %v4260
      %v4512 = vmul.f32 %v4416, %v4260
      %v4513 = vmul.f32 %v4417, %v4261
      %v4514 = vmul.f32 %v4418, %v4261
      %v4515 = vmul.f32 %v4419, %v4261
      %v4516 = vmul.f32 %v4420, %v4262
      %v4517 = vmul.f32 %v4421, %v4262
      %v4518 = vmul.f32 %v4422, %v4262
      %v4519 = vmul.f32 %v4423, %v4263
      %v4520 = vmul.f32 %v4424, %v4263
      %v4521 = vmul.f32 %v4425, %v4263
      %v4522 = vmul.f32 %v4426, %v4264
      %v4523 = vmul.f32 %v4427, %v4264
      %v4524 = vmul.f32 %v4428, %v4264
      %v4525 = vmul.f32 %v4429, %v4265
      %v4526 = vmul.f32 %v4430, %v4265
      %v4527 = vmul.f32 %v4431, %v4265
      %v4528 = vmul.f32 %v4432, %v4266
      %v4529 = vmul.f32 %v4433, %v4266
      %v4530 = vmul.f32 %v4434, %v4266
      %v4531 = vmul.f32 %v4435, %v4267
      %v4532 = vmul.f32 %v4436, %v4267
      %v4533 = vmul.f32 %v4437, %v4267
      %v4534 = vmul.f32 %v4438, %v4268
      %v4535 = vmul.f32 %v4439, %v4268
      %v4536 = vmul.f32 %v4440, %v4268
      %v4537 = vmul.f32 %v4441, %v4269
      %v4538 = vmul.f32 %v4442, %v4269
      %v4539 = vmul.f32 %v4443, %v4269
      %v4540 = vmul.f32 %v4444, %v4270
      %v4541 = vmul.f32 %v4445, %v4270
      %v4542 = vmul.f32 %v4446, %v4270
      %v4543 = vmul.f32 %v4447, %v4271
      %v4544 = vmul.f32 %v4448, %v4271
      %v4545 = vmul.f32 %v4449, %v4271
      %v4546 = vmul.f32 %v4450, %v4272
      %v4547 = vmul.f32 %v4451, %v4272
      %v4548 = vmul.f32 %v4452, %v4272
      %v4549 = vmul.f32 %v4453, %v4273
      %v4550 = vmul.f32 %v4454, %v4273
      %v4551 = vmul.f32 %v4455, %v4273
      %v4552 = vmul.f32 %v4456, %v4274
      %v4553 = vmul.f32 %v4457, %v4274
      %v4554 = vmul.f32 %v4458, %v4274
      %v4555 = vmul.f32 %v4459, %v4275
      %v4556 = vmul.f32 %v4460, %v4275
      %v4557 = vmul.f32 %v4461, %v4275
      %v4558 = vmul.f32 %v4462, %v4276
      %v4559 = vmul.f32 %v4463, %v4276
      %v4560 = vmul.f32 %v4464, %v4276
      %v4561 = vmul.f32 %v4465, %v4277
      %v4562 = vmul.f32 %v4466, %v4277
      %v4563 = vmul.f32 %v4467, %v4277
      %v4564 = vmul.f32 %v4468, %v4278
      %v4565 = vmul.f32 %v4469, %v4278
      %v4566 = vmul.f32 %v4470, %v4278
      %v4567 = vmul.f32 %v4471, %v4279
      %v4568 = vmul.f32 %v4472, %v4279
      %v4569 = vmul.f32 %v4473, %v4279
      %v4570 = vmul.f32 %v4474, %v4280
      %v4571 = vmul.f32 %v4475, %v4280
      %v4572 = vmul.f32 %v4476, %v4280
      %v4573 = vmul.f32 %v4477, %v4281
      %v4574 = vmul.f32 %v4478, %v4281
      %v4575 = vmul.f32 %v4479, %v4281
      %v4576 = vmul.f32 %v4480, %v4282
      %v4577 = vmul.f32 %v4481, %v4282
      %v4578 = vmul.f32 %v4482, %v4282
      %v4579 = vmul.f32 %v4483, %v4283
      %v4580 = vmul.f32 %v4484, %v4283
      %v4581 = vmul.f32 %v4485, %v4283
      %v4582 = vmul.f32 %v4486, %v4284
      %v4583 = vmul.f32 %v4487, %v4284
      %v4584 = vmul.f32 %v4488, %v4284
      %v4585 = vmul.f32 %v4489, %v4285
      %v4586 = vmul.f32 %v4490, %v4285
      %v4587 = vmul.f32 %v4491, %v4285
      %v4588 = vmul.f32 %v4492, %v4286
      %v4589 = vmul.f32 %v4493, %v4286
      %v4590 = vmul.f32 %v4494, %v4286
      %v4591 = vmul.f32 %v4495, %v4287
      %v4592 = vmul.f32 %v4496, %v4287
      %v4593 = vmul.f32 %v4497, %v4287
      %v4594 = vrot.slane %v4498, 7
      %v4595 = vrot.slane %v4499, 7
      %v4596 = vrot.slane %v4500, 7
      %v4597 = vrot.slane %v4501, 7
      %v4598 = vrot.slane %v4502, 7
      %v4599 = vrot.slane %v4503, 7
      %v4600 = vrot.slane %v4504, 7
      %v4601 = vrot.slane %v4505, 7
      %v4602 = vrot.slane %v4506, 7
      %v4603 = vrot.slane %v4507, 7
      %v4604 = vrot.slane %v4508, 7
      %v4605 = vrot.slane %v4509, 7
      %v4606 = vrot.slane %v4510, 7
      %v4607 = vrot.slane %v4511, 7
      %v4608 = vrot.slane %v4512, 7
      %v4609 = vrot.slane %v4513, 7
      %v4610 = vrot.slane %v4514, 7
      %v4611 = vrot.slane %v4515, 7
      %v4612 = vrot.slane %v4516, 7
      %v4613 = vrot.slane %v4517, 7
      %v4614 = vrot.slane %v4518, 7
      %v4615 = vrot.slane %v4519, 7
      %v4616 = vrot.slane %v4520, 7
      %v4617 = vrot.slane %v4521, 7
      %v4618 = vrot.slane %v4522, 7
      %v4619 = vrot.slane %v4523, 7
      %v4620 = vrot.slane %v4524, 7
      %v4621 = vrot.slane %v4525, 7
      %v4622 = vrot.slane %v4526, 7
      %v4623 = vrot.slane %v4527, 7
      %v4624 = vrot.slane %v4528, 7
      %v4625 = vrot.slane %v4529, 7
      %v4626 = vrot.slane %v4530, 7
      %v4627 = vrot.slane %v4531, 7
      %v4628 = vrot.slane %v4532, 7
      %v4629 = vrot.slane %v4533, 7
      %v4630 = vrot.slane %v4534, 7
      %v4631 = vrot.slane %v4535, 7
      %v4632 = vrot.slane %v4536, 7
      %v4633 = vrot.slane %v4537, 7
      %v4634 = vrot.slane %v4538, 7
      %v4635 = vrot.slane %v4539, 7
      %v4636 = vrot.slane %v4540, 7
      %v4637 = vrot.slane %v4541, 7
      %v4638 = vrot.slane %v4542, 7
      %v4639 = vrot.slane %v4543, 7
      %v4640 = vrot.slane %v4544, 7
      %v4641 = vrot.slane %v4545, 7
      %v4642 = vrot.slane %v4546, 7
      %v4643 = vrot.slane %v4547, 7
      %v4644 = vrot.slane %v4548, 7
      %v4645 = vrot.slane %v4549, 7
      %v4646 = vrot.slane %v4550, 7
      %v4647 = vrot.slane %v4551, 7
      %v4648 = vrot.slane %v4552, 7
      %v4649 = vrot.slane %v4553, 7
      %v4650 = vrot.slane %v4554, 7
      %v4651 = vrot.slane %v4555, 7
      %v4652 = vrot.slane %v4556, 7
      %v4653 = vrot.slane %v4557, 7
      %v4654 = vrot.slane %v4558, 7
      %v4655 = vrot.slane %v4559, 7
      %v4656 = vrot.slane %v4560, 7
      %v4657 = vrot.slane %v4561, 7
      %v4658 = vrot.slane %v4562, 7
      %v4659 = vrot.slane %v4563, 7
      %v4660 = vrot.slane %v4564, 7
      %v4661 = vrot.slane %v4565, 7
      %v4662 = vrot.slane %v4566, 7
      %v4663 = vrot.slane %v4567, 7
      %v4664 = vrot.slane %v4568, 7
      %v4665 = vrot.slane %v4569, 7
      %v4666 = vrot.slane %v4570, 7
      %v4667 = vrot.slane %v4571, 7
      %v4668 = vrot.slane %v4572, 7
      %v4669 = vrot.slane %v4573, 7
      %v4670 = vrot.slane %v4574, 7
      %v4671 = vrot.slane %v4575, 7
      %v4672 = vrot.slane %v4576, 7
      %v4673 = vrot.slane %v4577, 7
      %v4674 = vrot.slane %v4578, 7
      %v4675 = vrot.slane %v4579, 7
      %v4676 = vrot.slane %v4580, 7
      %v4677 = vrot.slane %v4581, 7
      %v4678 = vrot.slane %v4582, 7
      %v4679 = vrot.slane %v4583, 7
      %v4680 = vrot.slane %v4584, 7
      %v4681 = vrot.slane %v4585, 7
      %v4682 = vrot.slane %v4586, 7
      %v4683 = vrot.slane %v4587, 7
      %v4684 = vrot.slane %v4588, 7
      %v4685 = vrot.slane %v4589, 7
      %v4686 = vrot.slane %v4590, 7
      %v4687 = vrot.slane %v4591, 7
      %v4688 = vrot.slane %v4592, 7
      %v4689 = vrot.slane %v4593, 7
      %v4690 = vsel %vm3420, %v4684, %v4687
      %v4691 = vsel %vm3420, %v4685, %v4688
      %v4692 = vsel %vm3420, %v4686, %v4689
      %v4693 = vsel %vm3420, %v4681, %v4684
      %v4694 = vsel %vm3420, %v4682, %v4685
      %v4695 = vsel %vm3420, %v4683, %v4686
      %v4696 = vsel %vm3420, %v4678, %v4681
      %v4697 = vsel %vm3420, %v4679, %v4682
      %v4698 = vsel %vm3420, %v4680, %v4683
      %v4699 = vsel %vm3420, %v4675, %v4678
      %v4700 = vsel %vm3420, %v4676, %v4679
      %v4701 = vsel %vm3420, %v4677, %v4680
      %v4702 = vsel %vm3420, %v4672, %v4675
      %v4703 = vsel %vm3420, %v4673, %v4676
      %v4704 = vsel %vm3420, %v4674, %v4677
      %v4705 = vsel %vm3420, %v4669, %v4672
      %v4706 = vsel %vm3420, %v4670, %v4673
      %v4707 = vsel %vm3420, %v4671, %v4674
      %v4708 = vsel %vm3420, %v4666, %v4669
      %v4709 = vsel %vm3420, %v4667, %v4670
      %v4710 = vsel %vm3420, %v4668, %v4671
      %v4711 = vsel %vm3420, %v4663, %v4666
      %v4712 = vsel %vm3420, %v4664, %v4667
      %v4713 = vsel %vm3420, %v4665, %v4668
      %v4714 = vsel %vm3420, %v4660, %v4663
      %v4715 = vsel %vm3420, %v4661, %v4664
      %v4716 = vsel %vm3420, %v4662, %v4665
      %v4717 = vsel %vm3420, %v4657, %v4660
      %v4718 = vsel %vm3420, %v4658, %v4661
      %v4719 = vsel %vm3420, %v4659, %v4662
      %v4720 = vsel %vm3420, %v4654, %v4657
      %v4721 = vsel %vm3420, %v4655, %v4658
      %v4722 = vsel %vm3420, %v4656, %v4659
      %v4723 = vsel %vm3420, %v4651, %v4654
      %v4724 = vsel %vm3420, %v4652, %v4655
      %v4725 = vsel %vm3420, %v4653, %v4656
      %v4726 = vsel %vm3420, %v4648, %v4651
      %v4727 = vsel %vm3420, %v4649, %v4652
      %v4728 = vsel %vm3420, %v4650, %v4653
      %v4729 = vsel %vm3420, %v4645, %v4648
      %v4730 = vsel %vm3420, %v4646, %v4649
      %v4731 = vsel %vm3420, %v4647, %v4650
      %v4732 = vsel %vm3420, %v4642, %v4645
      %v4733 = vsel %vm3420, %v4643, %v4646
      %v4734 = vsel %vm3420, %v4644, %v4647
      %v4735 = vsel %vm3420, %v4639, %v4642
      %v4736 = vsel %vm3420, %v4640, %v4643
      %v4737 = vsel %vm3420, %v4641, %v4644
      %v4738 = vsel %vm3420, %v4636, %v4639
      %v4739 = vsel %vm3420, %v4637, %v4640
      %v4740 = vsel %vm3420, %v4638, %v4641
      %v4741 = vsel %vm3420, %v4633, %v4636
      %v4742 = vsel %vm3420, %v4634, %v4637
      %v4743 = vsel %vm3420, %v4635, %v4638
      %v4744 = vsel %vm3420, %v4630, %v4633
      %v4745 = vsel %vm3420, %v4631, %v4634
      %v4746 = vsel %vm3420, %v4632, %v4635
      %v4747 = vsel %vm3420, %v4627, %v4630
      %v4748 = vsel %vm3420, %v4628, %v4631
      %v4749 = vsel %vm3420, %v4629, %v4632
      %v4750 = vsel %vm3420, %v4624, %v4627
      %v4751 = vsel %vm3420, %v4625, %v4628
      %v4752 = vsel %vm3420, %v4626, %v4629
      %v4753 = vsel %vm3420, %v4621, %v4624
      %v4754 = vsel %vm3420, %v4622, %v4625
      %v4755 = vsel %vm3420, %v4623, %v4626
      %v4756 = vsel %vm3420, %v4618, %v4621
      %v4757 = vsel %vm3420, %v4619, %v4622
      %v4758 = vsel %vm3420, %v4620, %v4623
      %v4759 = vsel %vm3420, %v4615, %v4618
      %v4760 = vsel %vm3420, %v4616, %v4619
      %v4761 = vsel %vm3420, %v4617, %v4620
      %v4762 = vsel %vm3420, %v4612, %v4615
      %v4763 = vsel %vm3420, %v4613, %v4616
      %v4764 = vsel %vm3420, %v4614, %v4617
      %v4765 = vsel %vm3420, %v4609, %v4612
      %v4766 = vsel %vm3420, %v4610, %v4613
      %v4767 = vsel %vm3420, %v4611, %v4614
      %v4768 = vsel %vm3420, %v4606, %v4609
      %v4769 = vsel %vm3420, %v4607, %v4610
      %v4770 = vsel %vm3420, %v4608, %v4611
      %v4771 = vsel %vm3420, %v4603, %v4606
      %v4772 = vsel %vm3420, %v4604, %v4607
      %v4773 = vsel %vm3420, %v4605, %v4608
      %v4774 = vsel %vm3420, %v4600, %v4603
      %v4775 = vsel %vm3420, %v4601, %v4604
      %v4776 = vsel %vm3420, %v4602, %v4605
      %v4777 = vsel %vm3420, %v4597, %v4600
      %v4778 = vsel %vm3420, %v4598, %v4601
      %v4779 = vsel %vm3420, %v4599, %v4602
      %v4780 = vsel %vm3420, %v4594, %v4597
      %v4781 = vsel %vm3420, %v4595, %v4598
      %v4782 = vsel %vm3420, %v4596, %v4599
      %v4783 = vsel %vm3420, %v4687, %v4594
      %v4784 = vsel %vm3420, %v4688, %v4595
      %v4785 = vsel %vm3420, %v4689, %v4596
      %v4786 = vpack.c.bf16 %v4780, %v4783
      %v4787 = vpack.c.bf16 %v4781, %v4784
      %v4788 = vpack.c.bf16 %v4782, %v4785
      %v4789 = vpack.c.bf16 %v4774, %v4777
      %v4790 = vpack.c.bf16 %v4775, %v4778
      %v4791 = vpack.c.bf16 %v4776, %v4779
      %v4792 = vpack.c.bf16 %v4768, %v4771
      %v4793 = vpack.c.bf16 %v4769, %v4772
      %v4794 = vpack.c.bf16 %v4770, %v4773
      %v4795 = vpack.c.bf16 %v4762, %v4765
      %v4796 = vpack.c.bf16 %v4763, %v4766
      %v4797 = vpack.c.bf16 %v4764, %v4767
      %v4798 = vpack.c.bf16 %v4756, %v4759
      %v4799 = vpack.c.bf16 %v4757, %v4760
      %v4800 = vpack.c.bf16 %v4758, %v4761
      %v4801 = vpack.c.bf16 %v4750, %v4753
      %v4802 = vpack.c.bf16 %v4751, %v4754
      %v4803 = vpack.c.bf16 %v4752, %v4755
      %v4804 = vpack.c.bf16 %v4744, %v4747
      %v4805 = vpack.c.bf16 %v4745, %v4748
      %v4806 = vpack.c.bf16 %v4746, %v4749
      %v4807 = vpack.c.bf16 %v4738, %v4741
      %v4808 = vpack.c.bf16 %v4739, %v4742
      %v4809 = vpack.c.bf16 %v4740, %v4743
      %v4810 = vpack.c.bf16 %v4732, %v4735
      %v4811 = vpack.c.bf16 %v4733, %v4736
      %v4812 = vpack.c.bf16 %v4734, %v4737
      %v4813 = vpack.c.bf16 %v4726, %v4729
      %v4814 = vpack.c.bf16 %v4727, %v4730
      %v4815 = vpack.c.bf16 %v4728, %v4731
      %v4816 = vpack.c.bf16 %v4720, %v4723
      %v4817 = vpack.c.bf16 %v4721, %v4724
      %v4818 = vpack.c.bf16 %v4722, %v4725
      %v4819 = vpack.c.bf16 %v4714, %v4717
      %v4820 = vpack.c.bf16 %v4715, %v4718
      %v4821 = vpack.c.bf16 %v4716, %v4719
      %v4822 = vpack.c.bf16 %v4708, %v4711
      %v4823 = vpack.c.bf16 %v4709, %v4712
      %v4824 = vpack.c.bf16 %v4710, %v4713
      %v4825 = vpack.c.bf16 %v4702, %v4705
      %v4826 = vpack.c.bf16 %v4703, %v4706
      %v4827 = vpack.c.bf16 %v4704, %v4707
      %v4828 = vpack.c.bf16 %v4696, %v4699
      %v4829 = vpack.c.bf16 %v4697, %v4700
      %v4830 = vpack.c.bf16 %v4698, %v4701
      %v4831 = vpack.c.bf16 %v4690, %v4693
      %v4832 = vpack.c.bf16 %v4691, %v4694
      %v4833 = vpack.c.bf16 %v4692, %v4695
      %v4834 = vld [vmem:[%s1] sm:$0xf]
      %v4835 = vld [vmem:[%s1 + $0x4] sm:$0xf]
      %v4836 = vld [vmem:[%s1 + $0x8] sm:$0xf]
      %v4837 = vld [vmem:[%s1 + $0xc] sm:$0xf]
      %v4838 = vld [vmem:[%s1 + $0x10] sm:$0xf]
      %v4839 = vld [vmem:[%s1 + $0x14] sm:$0xf]
      %v4840 = vld [vmem:[%s1 + $0x18] sm:$0xf]
      %v4841 = vld [vmem:[%s1 + $0x1c] sm:$0xf]
      %v4842 = vld [vmem:[%s1 + $0x20] sm:$0xf]
      %v4843 = vld [vmem:[%s1 + $0x24] sm:$0xf]
      %v4844 = vld [vmem:[%s1 + $0x28] sm:$0xf]
      %v4845 = vld [vmem:[%s1 + $0x2c] sm:$0xf]
      %v4846 = vld [vmem:[%s1 + $0x30] sm:$0xf]
      %v4847 = vld [vmem:[%s1 + $0x34] sm:$0xf]
      %v4848 = vld [vmem:[%s1 + $0x38] sm:$0xf]
      %v4849 = vld [vmem:[%s1 + $0x3c] sm:$0xf]
      %v4850 = vld [vmem:[%s1 + $0x40] sm:$0xf]
      %v4851 = vld [vmem:[%s1 + $0x44] sm:$0xf]
      %v4852 = vld [vmem:[%s1 + $0x48] sm:$0xf]
      %v4853 = vld [vmem:[%s1 + $0x4c] sm:$0xf]
      %v4854 = vld [vmem:[%s1 + $0x50] sm:$0xf]
      %v4855 = vld [vmem:[%s1 + $0x54] sm:$0xf]
      %v4856 = vld [vmem:[%s1 + $0x58] sm:$0xf]
      %v4857 = vld [vmem:[%s1 + $0x5c] sm:$0xf]
      %v4858 = vld [vmem:[%s1 + $0x60] sm:$0xf]
      %v4859 = vld [vmem:[%s1 + $0x64] sm:$0xf]
      %v4860 = vld [vmem:[%s1 + $0x68] sm:$0xf]
      %v4861 = vld [vmem:[%s1 + $0x6c] sm:$0xf]
      %v4862 = vld [vmem:[%s1 + $0x70] sm:$0xf]
      %v4863 = vld [vmem:[%s1 + $0x74] sm:$0xf]
      %v4864 = vld [vmem:[%s1 + $0x78] sm:$0xf]
      %v4865 = vld [vmem:[%s1 + $0x7c] sm:$0xf]
      %v4866 = vld [vmem:[%s1 + $0x80] sm:$0xf]
      %v4867 = vld [vmem:[%s1 + $0x84] sm:$0xf]
      %v4868 = vld [vmem:[%s1 + $0x88] sm:$0xf]
      %v4869 = vld [vmem:[%s1 + $0x8c] sm:$0xf]
      %v4870 = vld [vmem:[%s1 + $0x90] sm:$0xf]
      %v4871 = vld [vmem:[%s1 + $0x94] sm:$0xf]
      %v4872 = vld [vmem:[%s1 + $0x98] sm:$0xf]
      %v4873 = vld [vmem:[%s1 + $0x9c] sm:$0xf]
      %v4874 = vld [vmem:[%s1 + $0xa0] sm:$0xf]
      %v4875 = vld [vmem:[%s1 + $0xa4] sm:$0xf]
      %v4876 = vld [vmem:[%s1 + $0xa8] sm:$0xf]
      %v4877 = vld [vmem:[%s1 + $0xac] sm:$0xf]
      %v4878 = vld [vmem:[%s1 + $0xb0] sm:$0xf]
      %v4879 = vld [vmem:[%s1 + $0xb4] sm:$0xf]
      %v4880 = vld [vmem:[%s1 + $0xb8] sm:$0xf]
      %v4881 = vld [vmem:[%s1 + $0xbc] sm:$0xf]
      %v4882 = vpack.c.bf16 %v4501, %v4498
      %v4883 = vpack.c.bf16 %v4502, %v4499
      %v4884 = vpack.c.bf16 %v4503, %v4500
      %v4885 = vpack.c.bf16 %v4507, %v4504
      %v4886 = vpack.c.bf16 %v4508, %v4505
      %v4887 = vpack.c.bf16 %v4509, %v4506
      %v4888 = vpack.c.bf16 %v4513, %v4510
      %v4889 = vpack.c.bf16 %v4514, %v4511
      %v4890 = vpack.c.bf16 %v4515, %v4512
      %v4891 = vpack.c.bf16 %v4519, %v4516
      %v4892 = vpack.c.bf16 %v4520, %v4517
      %v4893 = vpack.c.bf16 %v4521, %v4518
      %v4894 = vpack.c.bf16 %v4525, %v4522
      %v4895 = vpack.c.bf16 %v4526, %v4523
      %v4896 = vpack.c.bf16 %v4527, %v4524
      %v4897 = vpack.c.bf16 %v4531, %v4528
      %v4898 = vpack.c.bf16 %v4532, %v4529
      %v4899 = vpack.c.bf16 %v4533, %v4530
      %v4900 = vpack.c.bf16 %v4537, %v4534
      %v4901 = vpack.c.bf16 %v4538, %v4535
      %v4902 = vpack.c.bf16 %v4539, %v4536
      %v4903 = vpack.c.bf16 %v4543, %v4540
      %v4904 = vpack.c.bf16 %v4544, %v4541
      %v4905 = vpack.c.bf16 %v4545, %v4542
      %v4906 = vpack.c.bf16 %v4549, %v4546
      %v4907 = vpack.c.bf16 %v4550, %v4547
      %v4908 = vpack.c.bf16 %v4551, %v4548
      %v4909 = vpack.c.bf16 %v4555, %v4552
      %v4910 = vpack.c.bf16 %v4556, %v4553
      %v4911 = vpack.c.bf16 %v4557, %v4554
      %v4912 = vpack.c.bf16 %v4561, %v4558
      %v4913 = vpack.c.bf16 %v4562, %v4559
      %v4914 = vpack.c.bf16 %v4563, %v4560
      %v4915 = vpack.c.bf16 %v4567, %v4564
      %v4916 = vpack.c.bf16 %v4568, %v4565
      %v4917 = vpack.c.bf16 %v4569, %v4566
      %v4918 = vpack.c.bf16 %v4573, %v4570
      %v4919 = vpack.c.bf16 %v4574, %v4571
      %v4920 = vpack.c.bf16 %v4575, %v4572
      %v4921 = vpack.c.bf16 %v4579, %v4576
      %v4922 = vpack.c.bf16 %v4580, %v4577
      %v4923 = vpack.c.bf16 %v4581, %v4578
      %v4924 = vpack.c.bf16 %v4585, %v4582
      %v4925 = vpack.c.bf16 %v4586, %v4583
      %v4926 = vpack.c.bf16 %v4587, %v4584
      %v4927 = vpack.c.bf16 %v4591, %v4588
      %v4928 = vpack.c.bf16 %v4592, %v4589
      %v4929 = vpack.c.bf16 %v4593, %v4590
      %v4930 = vld [vmem:[%s1 + $0xc0] sm:$0xf]
      %v4931 = vld [vmem:[%s1 + $0xc4] sm:$0xf]
      %v4932 = vld [vmem:[%s1 + $0xc8] sm:$0xf]
      %v4933 = vld [vmem:[%s1 + $0xcc] sm:$0xf]
      %v4934 = vld [vmem:[%s1 + $0xd0] sm:$0xf]
      %v4935 = vld [vmem:[%s1 + $0xd4] sm:$0xf]
      %v4936 = vld [vmem:[%s1 + $0xd8] sm:$0xf]
      %v4937 = vld [vmem:[%s1 + $0xdc] sm:$0xf]
      %v4938 = vld [vmem:[%s1 + $0xe0] sm:$0xf]
      %v4939 = vld [vmem:[%s1 + $0xe4] sm:$0xf]
      %v4940 = vld [vmem:[%s1 + $0xe8] sm:$0xf]
      %v4941 = vld [vmem:[%s1 + $0xec] sm:$0xf]
      %v4942 = vld [vmem:[%s1 + $0xf0] sm:$0xf]
      %v4943 = vld [vmem:[%s1 + $0xf4] sm:$0xf]
      %v4944 = vld [vmem:[%s1 + $0xf8] sm:$0xf]
      %v4945 = vld [vmem:[%s1 + $0xfc] sm:$0xf]
      %v4946 = vld [vmem:[%s1 + $0x100] sm:$0xf]
      %v4947 = vld [vmem:[%s1 + $0x104] sm:$0xf]
      %v4948 = vld [vmem:[%s1 + $0x108] sm:$0xf]
      %v4949 = vld [vmem:[%s1 + $0x10c] sm:$0xf]
      %v4950 = vld [vmem:[%s1 + $0x110] sm:$0xf]
      %v4951 = vld [vmem:[%s1 + $0x114] sm:$0xf]
      %v4952 = vld [vmem:[%s1 + $0x118] sm:$0xf]
      %v4953 = vld [vmem:[%s1 + $0x11c] sm:$0xf]
      %v4954 = vld [vmem:[%s1 + $0x120] sm:$0xf]
      %v4955 = vld [vmem:[%s1 + $0x124] sm:$0xf]
      %v4956 = vld [vmem:[%s1 + $0x128] sm:$0xf]
      %v4957 = vld [vmem:[%s1 + $0x12c] sm:$0xf]
      %v4958 = vld [vmem:[%s1 + $0x130] sm:$0xf]
      %v4959 = vld [vmem:[%s1 + $0x134] sm:$0xf]
      %v4960 = vld [vmem:[%s1 + $0x138] sm:$0xf]
      %v4961 = vld [vmem:[%s1 + $0x13c] sm:$0xf]
      %v4962 = vld [vmem:[%s1 + $0x140] sm:$0xf]
      %v4963 = vld [vmem:[%s1 + $0x144] sm:$0xf]
      %v4964 = vld [vmem:[%s1 + $0x148] sm:$0xf]
      %v4965 = vld [vmem:[%s1 + $0x14c] sm:$0xf]
      %v4966 = vld [vmem:[%s1 + $0x150] sm:$0xf]
      %v4967 = vld [vmem:[%s1 + $0x154] sm:$0xf]
      %v4968 = vld [vmem:[%s1 + $0x158] sm:$0xf]
      %v4969 = vld [vmem:[%s1 + $0x15c] sm:$0xf]
      %v4970 = vld [vmem:[%s1 + $0x160] sm:$0xf]
      %v4971 = vld [vmem:[%s1 + $0x164] sm:$0xf]
      %v4972 = vld [vmem:[%s1 + $0x168] sm:$0xf]
      %v4973 = vld [vmem:[%s1 + $0x16c] sm:$0xf]
      %v4974 = vld [vmem:[%s1 + $0x170] sm:$0xf]
      %v4975 = vld [vmem:[%s1 + $0x174] sm:$0xf]
      %v4976 = vld [vmem:[%s1 + $0x178] sm:$0xf]
      %v4977 = vld [vmem:[%s1 + $0x17c] sm:$0xf]
      %v5026 = vunpack.c.l.b16 %v4930
      %v5027 = vunpack.c.l.b16 %v4931
      %v5028 = vunpack.c.l.b16 %v4932
      %v5029 = vunpack.c.l.b16 %v4933
      %v5030 = vunpack.c.l.b16 %v4934
      %v5031 = vunpack.c.l.b16 %v4935
      %v5032 = vunpack.c.l.b16 %v4936
      %v5033 = vunpack.c.l.b16 %v4937
      %v5034 = vunpack.c.l.b16 %v4938
      %v5035 = vunpack.c.l.b16 %v4939
      %v5036 = vunpack.c.l.b16 %v4940
      %v5037 = vunpack.c.l.b16 %v4941
      %v5038 = vunpack.c.l.b16 %v4942
      %v5039 = vunpack.c.l.b16 %v4943
      %v5040 = vunpack.c.l.b16 %v4944
      %v5041 = vunpack.c.l.b16 %v4945
      %v5042 = vunpack.c.l.b16 %v4946
      %v5043 = vunpack.c.l.b16 %v4947
      %v5044 = vunpack.c.l.b16 %v4948
      %v5045 = vunpack.c.l.b16 %v4949
      %v5046 = vunpack.c.l.b16 %v4950
      %v5047 = vunpack.c.l.b16 %v4951
      %v5048 = vunpack.c.l.b16 %v4952
      %v5049 = vunpack.c.l.b16 %v4953
      %v5050 = vunpack.c.l.b16 %v4954
      %v5051 = vunpack.c.l.b16 %v4955
      %v5052 = vunpack.c.l.b16 %v4956
      %v5053 = vunpack.c.l.b16 %v4957
      %v5054 = vunpack.c.l.b16 %v4958
      %v5055 = vunpack.c.l.b16 %v4959
      %v5056 = vunpack.c.l.b16 %v4960
      %v5057 = vunpack.c.l.b16 %v4961
      %v5058 = vunpack.c.l.b16 %v4962
      %v5059 = vunpack.c.l.b16 %v4963
      %v5060 = vunpack.c.l.b16 %v4964
      %v5061 = vunpack.c.l.b16 %v4965
      %v5062 = vunpack.c.l.b16 %v4966
      %v5063 = vunpack.c.l.b16 %v4967
      %v5064 = vunpack.c.l.b16 %v4968
      %v5065 = vunpack.c.l.b16 %v4969
      %v5066 = vunpack.c.l.b16 %v4970
      %v5067 = vunpack.c.l.b16 %v4971
      %v5068 = vunpack.c.l.b16 %v4972
      %v5069 = vunpack.c.l.b16 %v4973
      %v5070 = vunpack.c.l.b16 %v4974
      %v5071 = vunpack.c.l.b16 %v4975
      %v5072 = vunpack.c.l.b16 %v4976
      %v5073 = vunpack.c.l.b16 %v4977
      %v5074 = vpack.c.b16 %v5027, %v5026
      %v5075 = vpack.c.b16 %v5029, %v5028
      %v5076 = vpack.c.b16 %v5031, %v5030
      %v5077 = vpack.c.b16 %v5033, %v5032
      %v5078 = vpack.c.b16 %v5035, %v5034
      %v5079 = vpack.c.b16 %v5037, %v5036
      %v5080 = vpack.c.b16 %v5039, %v5038
      %v5081 = vpack.c.b16 %v5041, %v5040
      %v5082 = vpack.c.b16 %v5043, %v5042
      %v5083 = vpack.c.b16 %v5045, %v5044
      %v5084 = vpack.c.b16 %v5047, %v5046
      %v5085 = vpack.c.b16 %v5049, %v5048
      %v5086 = vpack.c.b16 %v5051, %v5050
      %v5087 = vpack.c.b16 %v5053, %v5052
      %v5088 = vpack.c.b16 %v5055, %v5054
      %v5089 = vpack.c.b16 %v5057, %v5056
      %v5090 = vpack.c.b16 %v5059, %v5058
      %v5091 = vpack.c.b16 %v5061, %v5060
      %v5092 = vpack.c.b16 %v5063, %v5062
      %v5093 = vpack.c.b16 %v5065, %v5064
      %v5094 = vpack.c.b16 %v5067, %v5066
      %v5095 = vpack.c.b16 %v5069, %v5068
      %v5096 = vpack.c.b16 %v5071, %v5070
      %v5097 = vpack.c.b16 %v5073, %v5072
      %5122 = vmatprep.subr.bf16.mxu0 0
      %5123 = vmatpush1.bf16.msra.mxu0 %v5081
      %5124 = vmatprep.subr.bf16.mxu0 0
      %5125 = vmatpush1.bf16.msra.mxu0 %v5080
      %5126 = vmatprep.subr.bf16.mxu0 0
      %5127 = vmatpush1.bf16.msra.mxu0 %v5079
      %5128 = vmatprep.subr.bf16.mxu0 0
      %5129 = vmatpush1.bf16.msra.mxu0 %v5078
      %5130 = vmatprep.subr.bf16.mxu0 0
      %5131 = vmatpush1.bf16.msra.mxu0 %v5077
      %5132 = vmatprep.subr.bf16.mxu0 0
      %5133 = vmatpush1.bf16.msra.mxu0 %v5076
      %5134 = vmatprep.subr.bf16.mxu0 0
      %5135 = vmatpush1.bf16.msra.mxu0 %v5075
      %5136 = vmatprep.subr.bf16.mxu0 0
      %5137 = vmatpush1.bf16.msra.mxu0 %v5074
      %5138 = vmatprep.subr.bf16.mxu0 0
      %5139 = vmatpush2.bf16.msra.mxu0 %v5089
      %5140 = vmatprep.subr.bf16.mxu0 0
      %5141 = vmatpush2.bf16.msra.mxu0 %v5088
      %5142 = vmatprep.subr.bf16.mxu0 0
      %5143 = vmatpush2.bf16.msra.mxu0 %v5087
      %5144 = vmatprep.subr.bf16.mxu0 0
      %5145 = vmatpush2.bf16.msra.mxu0 %v5086
      %5146 = vmatprep.subr.bf16.mxu0 0
      %5147 = vmatpush2.bf16.msra.mxu0 %v5085
      %5148 = vmatprep.subr.bf16.mxu0 0
      %5149 = vmatpush2.bf16.msra.mxu0 %v5084
      %5150 = vmatprep.subr.bf16.mxu0 0
      %5151 = vmatpush2.bf16.msra.mxu0 %v5083
      %5152 = vmatprep.subr.bf16.mxu0 0
      %5153 = vmatpush2.bf16.msra.mxu0 %v5082
      %5154 = vmatprep.mubr.bf16.mxu0 %v4883
      %5155 = vmatmul.mubr.bf16.gmra.mxu0 %v4882
      %v5156 = vpop.f32.mrf.mxu0
      %v5157 = vadd.f32 0.0, %v5156
      %v5158 = vpop.f32.mrf.mxu0
      %v5159 = vpop.f32.mrf.mxu0
      %v5160 = vadd.f32 0.0, %v5159
      %v5161 = vpop.f32.mrf.mxu0
      %5162 = vmatprep.mubr.bf16.mxu0 %v4886
      %5163 = vmatmul.mubr.bf16.gmra.mxu0 %v4885
      %v5164 = vpop.f32.mrf.mxu0
      %v5165 = vadd.f32 0.0, %v5164
      %v5166 = vpop.f32.mrf.mxu0
      %v5167 = vpop.f32.mrf.mxu0
      %v5168 = vadd.f32 0.0, %v5167
      %v5169 = vpop.f32.mrf.mxu0
      %5170 = vmatprep.mubr.bf16.mxu0 %v4889
      %5171 = vmatmul.mubr.bf16.gmra.mxu0 %v4888
      %v5172 = vpop.f32.mrf.mxu0
      %v5173 = vadd.f32 0.0, %v5172
      %v5174 = vpop.f32.mrf.mxu0
      %v5175 = vpop.f32.mrf.mxu0
      %v5176 = vadd.f32 0.0, %v5175
      %v5177 = vpop.f32.mrf.mxu0
      %5178 = vmatprep.mubr.bf16.mxu0 %v4892
      %5179 = vmatmul.mubr.bf16.gmra.mxu0 %v4891
      %v5180 = vpop.f32.mrf.mxu0
      %v5181 = vadd.f32 0.0, %v5180
      %v5182 = vpop.f32.mrf.mxu0
      %v5183 = vpop.f32.mrf.mxu0
      %v5184 = vadd.f32 0.0, %v5183
      %v5185 = vpop.f32.mrf.mxu0
      %5186 = vmatprep.mubr.bf16.mxu0 %v4895
      %5187 = vmatmul.mubr.bf16.gmra.mxu0 %v4894
      %v5188 = vpop.f32.mrf.mxu0
      %v5189 = vadd.f32 0.0, %v5188
      %v5190 = vpop.f32.mrf.mxu0
      %v5191 = vpop.f32.mrf.mxu0
      %v5192 = vadd.f32 0.0, %v5191
      %v5193 = vpop.f32.mrf.mxu0
      %5194 = vmatprep.mubr.bf16.mxu0 %v4898
      %5195 = vmatmul.mubr.bf16.gmra.mxu0 %v4897
      %v5196 = vpop.f32.mrf.mxu0
      %v5197 = vadd.f32 0.0, %v5196
      %v5198 = vpop.f32.mrf.mxu0
      %v5199 = vpop.f32.mrf.mxu0
      %v5200 = vadd.f32 0.0, %v5199
      %v5201 = vpop.f32.mrf.mxu0
      %5202 = vmatprep.mubr.bf16.mxu0 %v4901
      %5203 = vmatmul.mubr.bf16.gmra.mxu0 %v4900
      %v5204 = vpop.f32.mrf.mxu0
      %v5205 = vadd.f32 0.0, %v5204
      %v5206 = vpop.f32.mrf.mxu0
      %v5207 = vpop.f32.mrf.mxu0
      %v5208 = vadd.f32 0.0, %v5207
      %v5209 = vpop.f32.mrf.mxu0
      %5210 = vmatprep.mubr.bf16.mxu0 %v4904
      %5211 = vmatmul.mubr.bf16.gmra.mxu0 %v4903
      %v5212 = vpop.f32.mrf.mxu0
      %v5213 = vadd.f32 0.0, %v5212
      %v5214 = vpop.f32.mrf.mxu0
      %v5215 = vpop.f32.mrf.mxu0
      %v5216 = vadd.f32 0.0, %v5215
      %v5217 = vpop.f32.mrf.mxu0
      %5218 = vmatprep.mubr.bf16.mxu0 %v4907
      %5219 = vmatmul.mubr.bf16.gmra.mxu0 %v4906
      %v5220 = vpop.f32.mrf.mxu0
      %v5221 = vadd.f32 0.0, %v5220
      %v5222 = vpop.f32.mrf.mxu0
      %v5223 = vpop.f32.mrf.mxu0
      %v5224 = vadd.f32 0.0, %v5223
      %v5225 = vpop.f32.mrf.mxu0
      %5226 = vmatprep.mubr.bf16.mxu0 %v4910
      %5227 = vmatmul.mubr.bf16.gmra.mxu0 %v4909
      %v5228 = vpop.f32.mrf.mxu0
      %v5229 = vadd.f32 0.0, %v5228
      %v5230 = vpop.f32.mrf.mxu0
      %v5231 = vpop.f32.mrf.mxu0
      %v5232 = vadd.f32 0.0, %v5231
      %v5233 = vpop.f32.mrf.mxu0
      %5234 = vmatprep.mubr.bf16.mxu0 %v4913
      %5235 = vmatmul.mubr.bf16.gmra.mxu0 %v4912
      %v5236 = vpop.f32.mrf.mxu0
      %v5237 = vadd.f32 0.0, %v5236
      %v5238 = vpop.f32.mrf.mxu0
      %v5239 = vpop.f32.mrf.mxu0
      %v5240 = vadd.f32 0.0, %v5239
      %v5241 = vpop.f32.mrf.mxu0
      %5242 = vmatprep.mubr.bf16.mxu0 %v4916
      %5243 = vmatmul.mubr.bf16.gmra.mxu0 %v4915
      %v5244 = vpop.f32.mrf.mxu0
      %v5245 = vadd.f32 0.0, %v5244
      %v5246 = vpop.f32.mrf.mxu0
      %v5247 = vpop.f32.mrf.mxu0
      %v5248 = vadd.f32 0.0, %v5247
      %v5249 = vpop.f32.mrf.mxu0
      %5250 = vmatprep.mubr.bf16.mxu0 %v4919
      %5251 = vmatmul.mubr.bf16.gmra.mxu0 %v4918
      %v5252 = vpop.f32.mrf.mxu0
      %v5253 = vadd.f32 0.0, %v5252
      %v5254 = vpop.f32.mrf.mxu0
      %v5255 = vpop.f32.mrf.mxu0
      %v5256 = vadd.f32 0.0, %v5255
      %v5257 = vpop.f32.mrf.mxu0
      %5258 = vmatprep.mubr.bf16.mxu0 %v4922
      %5259 = vmatmul.mubr.bf16.gmra.mxu0 %v4921
      %v5260 = vpop.f32.mrf.mxu0
      %v5261 = vadd.f32 0.0, %v5260
      %v5262 = vpop.f32.mrf.mxu0
      %v5263 = vpop.f32.mrf.mxu0
      %v5264 = vadd.f32 0.0, %v5263
      %v5265 = vpop.f32.mrf.mxu0
      %5266 = vmatprep.mubr.bf16.mxu0 %v4925
      %5267 = vmatmul.mubr.bf16.gmra.mxu0 %v4924
      %v5268 = vpop.f32.mrf.mxu0
      %v5269 = vadd.f32 0.0, %v5268
      %v5270 = vpop.f32.mrf.mxu0
      %v5271 = vpop.f32.mrf.mxu0
      %v5272 = vadd.f32 0.0, %v5271
      %v5273 = vpop.f32.mrf.mxu0
      %5274 = vmatprep.mubr.bf16.mxu0 %v4928
      %5275 = vmatmul.mubr.bf16.gmra.mxu0 %v4927
      %v5276 = vpop.f32.mrf.mxu0
      %v5277 = vadd.f32 0.0, %v5276
      %v5278 = vpop.f32.mrf.mxu0
      %v5279 = vpop.f32.mrf.mxu0
      %v5280 = vadd.f32 0.0, %v5279
      %v5281 = vpop.f32.mrf.mxu0
      %5282 = vdwg.mxu0
      %5283 = vmatprep.subr.bf16.mxu0 0
      %5284 = vmatpush1.bf16.msra.mxu0 %v5097
      %5285 = vmatprep.subr.bf16.mxu0 0
      %5286 = vmatpush1.bf16.msra.mxu0 %v5096
      %5287 = vmatprep.subr.bf16.mxu0 0
      %5288 = vmatpush1.bf16.msra.mxu0 %v5095
      %5289 = vmatprep.subr.bf16.mxu0 0
      %5290 = vmatpush1.bf16.msra.mxu0 %v5094
      %5291 = vmatprep.subr.bf16.mxu0 0
      %5292 = vmatpush1.bf16.msra.mxu0 %v5093
      %5293 = vmatprep.subr.bf16.mxu0 0
      %5294 = vmatpush1.bf16.msra.mxu0 %v5092
      %5295 = vmatprep.subr.bf16.mxu0 0
      %5296 = vmatpush1.bf16.msra.mxu0 %v5091
      %5297 = vmatprep.subr.bf16.mxu0 0
      %5298 = vmatpush1.bf16.msra.mxu0 %v5090
      %5299 = vmatprep.subr.bf16.mxu0 0
      %5300 = vmatpush2.bf16.msra.mxu0 0
      %5301 = vmatprep.subr.bf16.mxu0 0
      %5302 = vmatpush2.bf16.msra.mxu0 0
      %5303 = vmatprep.subr.bf16.mxu0 0
      %5304 = vmatpush2.bf16.msra.mxu0 0
      %5305 = vmatprep.subr.bf16.mxu0 0
      %5306 = vmatpush2.bf16.msra.mxu0 0
      %5307 = vmatprep.subr.bf16.mxu0 0
      %5308 = vmatpush2.bf16.msra.mxu0 0
      %5309 = vmatprep.subr.bf16.mxu0 0
      %5310 = vmatpush2.bf16.msra.mxu0 0
      %5311 = vmatprep.subr.bf16.mxu0 0
      %5312 = vmatpush2.bf16.msra.mxu0 0
      %5313 = vmatprep.subr.bf16.mxu0 0
      %5314 = vmatpush2.bf16.msra.mxu0 0
      %5315 = vmatprep.mubr.bf16.mxu0 0
      %5316 = vmatmul.mubr.bf16.gmra.mxu0 %v4884
      %v5317 = vpop.f32.mrf.mxu0
      %v5318 = vadd.f32 %v5157, %v5317
      %v5319 = vpop.f32.mrf.mxu0
      %v5320 = vpop.f32.mrf.mxu0
      %v5321 = vadd.f32 %v5160, %v5320
      %v5322 = vpop.f32.mrf.mxu0
      %5323 = vmatprep.mubr.bf16.mxu0 0
      %5324 = vmatmul.mubr.bf16.gmra.mxu0 %v4887
      %v5325 = vpop.f32.mrf.mxu0
      %v5326 = vadd.f32 %v5165, %v5325
      %v5327 = vpop.f32.mrf.mxu0
      %v5328 = vpop.f32.mrf.mxu0
      %v5329 = vadd.f32 %v5168, %v5328
      %v5330 = vpop.f32.mrf.mxu0
      %5331 = vmatprep.mubr.bf16.mxu0 0
      %5332 = vmatmul.mubr.bf16.gmra.mxu0 %v4890
      %v5333 = vpop.f32.mrf.mxu0
      %v5334 = vadd.f32 %v5173, %v5333
      %v5335 = vpop.f32.mrf.mxu0
      %v5336 = vpop.f32.mrf.mxu0
      %v5337 = vadd.f32 %v5176, %v5336
      %v5338 = vpop.f32.mrf.mxu0
      %5339 = vmatprep.mubr.bf16.mxu0 0
      %5340 = vmatmul.mubr.bf16.gmra.mxu0 %v4893
      %v5341 = vpop.f32.mrf.mxu0
      %v5342 = vadd.f32 %v5181, %v5341
      %v5343 = vpop.f32.mrf.mxu0
      %v5344 = vpop.f32.mrf.mxu0
      %v5345 = vadd.f32 %v5184, %v5344
      %v5346 = vpop.f32.mrf.mxu0
      %5347 = vmatprep.mubr.bf16.mxu0 0
      %5348 = vmatmul.mubr.bf16.gmra.mxu0 %v4896
      %v5349 = vpop.f32.mrf.mxu0
      %v5350 = vadd.f32 %v5189, %v5349
      %v5351 = vpop.f32.mrf.mxu0
      %v5352 = vpop.f32.mrf.mxu0
      %v5353 = vadd.f32 %v5192, %v5352
      %v5354 = vpop.f32.mrf.mxu0
      %5355 = vmatprep.mubr.bf16.mxu0 0
      %5356 = vmatmul.mubr.bf16.gmra.mxu0 %v4899
      %v5357 = vpop.f32.mrf.mxu0
      %v5358 = vadd.f32 %v5197, %v5357
      %v5359 = vpop.f32.mrf.mxu0
      %v5360 = vpop.f32.mrf.mxu0
      %v5361 = vadd.f32 %v5200, %v5360
      %v5362 = vpop.f32.mrf.mxu0
      %5363 = vmatprep.mubr.bf16.mxu0 0
      %5364 = vmatmul.mubr.bf16.gmra.mxu0 %v4902
      %v5365 = vpop.f32.mrf.mxu0
      %v5366 = vadd.f32 %v5205, %v5365
      %v5367 = vpop.f32.mrf.mxu0
      %v5368 = vpop.f32.mrf.mxu0
      %v5369 = vadd.f32 %v5208, %v5368
      %v5370 = vpop.f32.mrf.mxu0
      %5371 = vmatprep.mubr.bf16.mxu0 0
      %5372 = vmatmul.mubr.bf16.gmra.mxu0 %v4905
      %v5373 = vpop.f32.mrf.mxu0
      %v5374 = vadd.f32 %v5213, %v5373
      %v5375 = vpop.f32.mrf.mxu0
      %v5376 = vpop.f32.mrf.mxu0
      %v5377 = vadd.f32 %v5216, %v5376
      %v5378 = vpop.f32.mrf.mxu0
      %5379 = vmatprep.mubr.bf16.mxu0 0
      %5380 = vmatmul.mubr.bf16.gmra.mxu0 %v4908
      %v5381 = vpop.f32.mrf.mxu0
      %v5382 = vadd.f32 %v5221, %v5381
      %v5383 = vpop.f32.mrf.mxu0
      %v5384 = vpop.f32.mrf.mxu0
      %v5385 = vadd.f32 %v5224, %v5384
      %v5386 = vpop.f32.mrf.mxu0
      %5387 = vmatprep.mubr.bf16.mxu0 0
      %5388 = vmatmul.mubr.bf16.gmra.mxu0 %v4911
      %v5389 = vpop.f32.mrf.mxu0
      %v5390 = vadd.f32 %v5229, %v5389
      %v5391 = vpop.f32.mrf.mxu0
      %v5392 = vpop.f32.mrf.mxu0
      %v5393 = vadd.f32 %v5232, %v5392
      %v5394 = vpop.f32.mrf.mxu0
      %5395 = vmatprep.mubr.bf16.mxu0 0
      %5396 = vmatmul.mubr.bf16.gmra.mxu0 %v4914
      %v5397 = vpop.f32.mrf.mxu0
      %v5398 = vadd.f32 %v5237, %v5397
      %v5399 = vpop.f32.mrf.mxu0
      %v5400 = vpop.f32.mrf.mxu0
      %v5401 = vadd.f32 %v5240, %v5400
      %v5402 = vpop.f32.mrf.mxu0
      %5403 = vmatprep.mubr.bf16.mxu0 0
      %5404 = vmatmul.mubr.bf16.gmra.mxu0 %v4917
      %v5405 = vpop.f32.mrf.mxu0
      %v5406 = vadd.f32 %v5245, %v5405
      %v5407 = vpop.f32.mrf.mxu0
      %v5408 = vpop.f32.mrf.mxu0
      %v5409 = vadd.f32 %v5248, %v5408
      %v5410 = vpop.f32.mrf.mxu0
      %5411 = vmatprep.mubr.bf16.mxu0 0
      %5412 = vmatmul.mubr.bf16.gmra.mxu0 %v4920
      %v5413 = vpop.f32.mrf.mxu0
      %v5414 = vadd.f32 %v5253, %v5413
      %v5415 = vpop.f32.mrf.mxu0
      %v5416 = vpop.f32.mrf.mxu0
      %v5417 = vadd.f32 %v5256, %v5416
      %v5418 = vpop.f32.mrf.mxu0
      %5419 = vmatprep.mubr.bf16.mxu0 0
      %5420 = vmatmul.mubr.bf16.gmra.mxu0 %v4923
      %v5421 = vpop.f32.mrf.mxu0
      %v5422 = vadd.f32 %v5261, %v5421
      %v5423 = vpop.f32.mrf.mxu0
      %v5424 = vpop.f32.mrf.mxu0
      %v5425 = vadd.f32 %v5264, %v5424
      %v5426 = vpop.f32.mrf.mxu0
      %5427 = vmatprep.mubr.bf16.mxu0 0
      %5428 = vmatmul.mubr.bf16.gmra.mxu0 %v4926
      %v5429 = vpop.f32.mrf.mxu0
      %v5430 = vadd.f32 %v5269, %v5429
      %v5431 = vpop.f32.mrf.mxu0
      %v5432 = vpop.f32.mrf.mxu0
      %v5433 = vadd.f32 %v5272, %v5432
      %v5434 = vpop.f32.mrf.mxu0
      %5435 = vmatprep.mubr.bf16.mxu0 0
      %5436 = vmatmul.mubr.bf16.gmra.mxu0 %v4929
      %v5437 = vpop.f32.mrf.mxu0
      %v5438 = vadd.f32 %v5277, %v5437
      %v5439 = vpop.f32.mrf.mxu0
      %v5440 = vpop.f32.mrf.mxu0
      %v5441 = vadd.f32 %v5280, %v5440
      %v5442 = vpop.f32.mrf.mxu0
      %5443 = vdwg.mxu0
      %v5492 = vunpack.c.l.b16 %v4834
      %v5493 = vunpack.c.l.b16 %v4835
      %v5494 = vunpack.c.l.b16 %v4836
      %v5495 = vunpack.c.l.b16 %v4837
      %v5496 = vunpack.c.l.b16 %v4838
      %v5497 = vunpack.c.l.b16 %v4839
      %v5498 = vunpack.c.l.b16 %v4840
      %v5499 = vunpack.c.l.b16 %v4841
      %v5500 = vunpack.c.l.b16 %v4842
      %v5501 = vunpack.c.l.b16 %v4843
      %v5502 = vunpack.c.l.b16 %v4844
      %v5503 = vunpack.c.l.b16 %v4845
      %v5504 = vunpack.c.l.b16 %v4846
      %v5505 = vunpack.c.l.b16 %v4847
      %v5506 = vunpack.c.l.b16 %v4848
      %v5507 = vunpack.c.l.b16 %v4849
      %v5508 = vunpack.c.l.b16 %v4850
      %v5509 = vunpack.c.l.b16 %v4851
      %v5510 = vunpack.c.l.b16 %v4852
      %v5511 = vunpack.c.l.b16 %v4853
      %v5512 = vunpack.c.l.b16 %v4854
      %v5513 = vunpack.c.l.b16 %v4855
      %v5514 = vunpack.c.l.b16 %v4856
      %v5515 = vunpack.c.l.b16 %v4857
      %v5516 = vunpack.c.l.b16 %v4858
      %v5517 = vunpack.c.l.b16 %v4859
      %v5518 = vunpack.c.l.b16 %v4860
      %v5519 = vunpack.c.l.b16 %v4861
      %v5520 = vunpack.c.l.b16 %v4862
      %v5521 = vunpack.c.l.b16 %v4863
      %v5522 = vunpack.c.l.b16 %v4864
      %v5523 = vunpack.c.l.b16 %v4865
      %v5524 = vunpack.c.l.b16 %v4866
      %v5525 = vunpack.c.l.b16 %v4867
      %v5526 = vunpack.c.l.b16 %v4868
      %v5527 = vunpack.c.l.b16 %v4869
      %v5528 = vunpack.c.l.b16 %v4870
      %v5529 = vunpack.c.l.b16 %v4871
      %v5530 = vunpack.c.l.b16 %v4872
      %v5531 = vunpack.c.l.b16 %v4873
      %v5532 = vunpack.c.l.b16 %v4874
      %v5533 = vunpack.c.l.b16 %v4875
      %v5534 = vunpack.c.l.b16 %v4876
      %v5535 = vunpack.c.l.b16 %v4877
      %v5536 = vunpack.c.l.b16 %v4878
      %v5537 = vunpack.c.l.b16 %v4879
      %v5538 = vunpack.c.l.b16 %v4880
      %v5539 = vunpack.c.l.b16 %v4881
      %v5540 = vpack.c.b16 %v5493, %v5492
      %v5541 = vpack.c.b16 %v5495, %v5494
      %v5542 = vpack.c.b16 %v5497, %v5496
      %v5543 = vpack.c.b16 %v5499, %v5498
      %v5544 = vpack.c.b16 %v5501, %v5500
      %v5545 = vpack.c.b16 %v5503, %v5502
      %v5546 = vpack.c.b16 %v5505, %v5504
      %v5547 = vpack.c.b16 %v5507, %v5506
      %v5548 = vpack.c.b16 %v5509, %v5508
      %v5549 = vpack.c.b16 %v5511, %v5510
      %v5550 = vpack.c.b16 %v5513, %v5512
      %v5551 = vpack.c.b16 %v5515, %v5514
      %v5552 = vpack.c.b16 %v5517, %v5516
      %v5553 = vpack.c.b16 %v5519, %v5518
      %v5554 = vpack.c.b16 %v5521, %v5520
      %v5555 = vpack.c.b16 %v5523, %v5522
      %v5556 = vpack.c.b16 %v5525, %v5524
      %v5557 = vpack.c.b16 %v5527, %v5526
      %v5558 = vpack.c.b16 %v5529, %v5528
      %v5559 = vpack.c.b16 %v5531, %v5530
      %v5560 = vpack.c.b16 %v5533, %v5532
      %v5561 = vpack.c.b16 %v5535, %v5534
      %v5562 = vpack.c.b16 %v5537, %v5536
      %v5563 = vpack.c.b16 %v5539, %v5538
      %5588 = vmatprep.subr.bf16.mxu0 0
      %5589 = vmatpush1.bf16.msra.mxu0 %v5547
      %5590 = vmatprep.subr.bf16.mxu0 0
      %5591 = vmatpush1.bf16.msra.mxu0 %v5546
      %5592 = vmatprep.subr.bf16.mxu0 0
      %5593 = vmatpush1.bf16.msra.mxu0 %v5545
      %5594 = vmatprep.subr.bf16.mxu0 0
      %5595 = vmatpush1.bf16.msra.mxu0 %v5544
      %5596 = vmatprep.subr.bf16.mxu0 0
      %5597 = vmatpush1.bf16.msra.mxu0 %v5543
      %5598 = vmatprep.subr.bf16.mxu0 0
      %5599 = vmatpush1.bf16.msra.mxu0 %v5542
      %5600 = vmatprep.subr.bf16.mxu0 0
      %5601 = vmatpush1.bf16.msra.mxu0 %v5541
      %5602 = vmatprep.subr.bf16.mxu0 0
      %5603 = vmatpush1.bf16.msra.mxu0 %v5540
      %5604 = vmatprep.subr.bf16.mxu0 0
      %5605 = vmatpush2.bf16.msra.mxu0 %v5555
      %5606 = vmatprep.subr.bf16.mxu0 0
      %5607 = vmatpush2.bf16.msra.mxu0 %v5554
      %5608 = vmatprep.subr.bf16.mxu0 0
      %5609 = vmatpush2.bf16.msra.mxu0 %v5553
      %5610 = vmatprep.subr.bf16.mxu0 0
      %5611 = vmatpush2.bf16.msra.mxu0 %v5552
      %5612 = vmatprep.subr.bf16.mxu0 0
      %5613 = vmatpush2.bf16.msra.mxu0 %v5551
      %5614 = vmatprep.subr.bf16.mxu0 0
      %5615 = vmatpush2.bf16.msra.mxu0 %v5550
      %5616 = vmatprep.subr.bf16.mxu0 0
      %5617 = vmatpush2.bf16.msra.mxu0 %v5549
      %5618 = vmatprep.subr.bf16.mxu0 0
      %5619 = vmatpush2.bf16.msra.mxu0 %v5548
      %5620 = vmatprep.mubr.bf16.mxu0 %v4787
      %5621 = vmatmul.mubr.bf16.gmra.mxu0 %v4786
      %v5622 = vpop.f32.mrf.mxu0
      %v5623 = vadd.f32 %v5318, %v5622
      %v5624 = vpop.f32.mrf.mxu0
      %v5625 = vpop.f32.mrf.mxu0
      %v5626 = vadd.f32 %v5321, %v5625
      %v5627 = vpop.f32.mrf.mxu0
      %5628 = vmatprep.mubr.bf16.mxu0 %v4790
      %5629 = vmatmul.mubr.bf16.gmra.mxu0 %v4789
      %v5630 = vpop.f32.mrf.mxu0
      %v5631 = vadd.f32 %v5326, %v5630
      %v5632 = vpop.f32.mrf.mxu0
      %v5633 = vpop.f32.mrf.mxu0
      %v5634 = vadd.f32 %v5329, %v5633
      %v5635 = vpop.f32.mrf.mxu0
      %5636 = vmatprep.mubr.bf16.mxu0 %v4793
      %5637 = vmatmul.mubr.bf16.gmra.mxu0 %v4792
      %v5638 = vpop.f32.mrf.mxu0
      %v5639 = vadd.f32 %v5334, %v5638
      %v5640 = vpop.f32.mrf.mxu0
      %v5641 = vpop.f32.mrf.mxu0
      %v5642 = vadd.f32 %v5337, %v5641
      %v5643 = vpop.f32.mrf.mxu0
      %5644 = vmatprep.mubr.bf16.mxu0 %v4796
      %5645 = vmatmul.mubr.bf16.gmra.mxu0 %v4795
      %v5646 = vpop.f32.mrf.mxu0
      %v5647 = vadd.f32 %v5342, %v5646
      %v5648 = vpop.f32.mrf.mxu0
      %v5649 = vpop.f32.mrf.mxu0
      %v5650 = vadd.f32 %v5345, %v5649
      %v5651 = vpop.f32.mrf.mxu0
      %5652 = vmatprep.mubr.bf16.mxu0 %v4799
      %5653 = vmatmul.mubr.bf16.gmra.mxu0 %v4798
      %v5654 = vpop.f32.mrf.mxu0
      %v5655 = vadd.f32 %v5350, %v5654
      %v5656 = vpop.f32.mrf.mxu0
      %v5657 = vpop.f32.mrf.mxu0
      %v5658 = vadd.f32 %v5353, %v5657
      %v5659 = vpop.f32.mrf.mxu0
      %5660 = vmatprep.mubr.bf16.mxu0 %v4802
      %5661 = vmatmul.mubr.bf16.gmra.mxu0 %v4801
      %v5662 = vpop.f32.mrf.mxu0
      %v5663 = vadd.f32 %v5358, %v5662
      %v5664 = vpop.f32.mrf.mxu0
      %v5665 = vpop.f32.mrf.mxu0
      %v5666 = vadd.f32 %v5361, %v5665
      %v5667 = vpop.f32.mrf.mxu0
      %5668 = vmatprep.mubr.bf16.mxu0 %v4805
      %5669 = vmatmul.mubr.bf16.gmra.mxu0 %v4804
      %v5670 = vpop.f32.mrf.mxu0
      %v5671 = vadd.f32 %v5366, %v5670
      %v5672 = vpop.f32.mrf.mxu0
      %v5673 = vpop.f32.mrf.mxu0
      %v5674 = vadd.f32 %v5369, %v5673
      %v5675 = vpop.f32.mrf.mxu0
      %5676 = vmatprep.mubr.bf16.mxu0 %v4808
      %5677 = vmatmul.mubr.bf16.gmra.mxu0 %v4807
      %v5678 = vpop.f32.mrf.mxu0
      %v5679 = vadd.f32 %v5374, %v5678
      %v5680 = vpop.f32.mrf.mxu0
      %v5681 = vpop.f32.mrf.mxu0
      %v5682 = vadd.f32 %v5377, %v5681
      %v5683 = vpop.f32.mrf.mxu0
      %5684 = vmatprep.mubr.bf16.mxu0 %v4811
      %5685 = vmatmul.mubr.bf16.gmra.mxu0 %v4810
      %v5686 = vpop.f32.mrf.mxu0
      %v5687 = vadd.f32 %v5382, %v5686
      %v5688 = vpop.f32.mrf.mxu0
      %v5689 = vpop.f32.mrf.mxu0
      %v5690 = vadd.f32 %v5385, %v5689
      %v5691 = vpop.f32.mrf.mxu0
      %5692 = vmatprep.mubr.bf16.mxu0 %v4814
      %5693 = vmatmul.mubr.bf16.gmra.mxu0 %v4813
      %v5694 = vpop.f32.mrf.mxu0
      %v5695 = vadd.f32 %v5390, %v5694
      %v5696 = vpop.f32.mrf.mxu0
      %v5697 = vpop.f32.mrf.mxu0
      %v5698 = vadd.f32 %v5393, %v5697
      %v5699 = vpop.f32.mrf.mxu0
      %5700 = vmatprep.mubr.bf16.mxu0 %v4817
      %5701 = vmatmul.mubr.bf16.gmra.mxu0 %v4816
      %v5702 = vpop.f32.mrf.mxu0
      %v5703 = vadd.f32 %v5398, %v5702
      %v5704 = vpop.f32.mrf.mxu0
      %v5705 = vpop.f32.mrf.mxu0
      %v5706 = vadd.f32 %v5401, %v5705
      %v5707 = vpop.f32.mrf.mxu0
      %5708 = vmatprep.mubr.bf16.mxu0 %v4820
      %5709 = vmatmul.mubr.bf16.gmra.mxu0 %v4819
      %v5710 = vpop.f32.mrf.mxu0
      %v5711 = vadd.f32 %v5406, %v5710
      %v5712 = vpop.f32.mrf.mxu0
      %v5713 = vpop.f32.mrf.mxu0
      %v5714 = vadd.f32 %v5409, %v5713
      %v5715 = vpop.f32.mrf.mxu0
      %5716 = vmatprep.mubr.bf16.mxu0 %v4823
      %5717 = vmatmul.mubr.bf16.gmra.mxu0 %v4822
      %v5718 = vpop.f32.mrf.mxu0
      %v5719 = vadd.f32 %v5414, %v5718
      %v5720 = vpop.f32.mrf.mxu0
      %v5721 = vpop.f32.mrf.mxu0
      %v5722 = vadd.f32 %v5417, %v5721
      %v5723 = vpop.f32.mrf.mxu0
      %5724 = vmatprep.mubr.bf16.mxu0 %v4826
      %5725 = vmatmul.mubr.bf16.gmra.mxu0 %v4825
      %v5726 = vpop.f32.mrf.mxu0
      %v5727 = vadd.f32 %v5422, %v5726
      %v5728 = vpop.f32.mrf.mxu0
      %v5729 = vpop.f32.mrf.mxu0
      %v5730 = vadd.f32 %v5425, %v5729
      %v5731 = vpop.f32.mrf.mxu0
      %5732 = vmatprep.mubr.bf16.mxu0 %v4829
      %5733 = vmatmul.mubr.bf16.gmra.mxu0 %v4828
      %v5734 = vpop.f32.mrf.mxu0
      %v5735 = vadd.f32 %v5430, %v5734
      %v5736 = vpop.f32.mrf.mxu0
      %v5737 = vpop.f32.mrf.mxu0
      %v5738 = vadd.f32 %v5433, %v5737
      %v5739 = vpop.f32.mrf.mxu0
      %5740 = vmatprep.mubr.bf16.mxu0 %v4832
      %5741 = vmatmul.mubr.bf16.gmra.mxu0 %v4831
      %v5742 = vpop.f32.mrf.mxu0
      %v5743 = vadd.f32 %v5438, %v5742
      %v5744 = vpop.f32.mrf.mxu0
      %v5745 = vpop.f32.mrf.mxu0
      %v5746 = vadd.f32 %v5441, %v5745
      %v5747 = vpop.f32.mrf.mxu0
      %5748 = vdwg.mxu0
      %5749 = vmatprep.subr.bf16.mxu0 0
      %5750 = vmatpush1.bf16.msra.mxu0 %v5563
      %5751 = vmatprep.subr.bf16.mxu0 0
      %5752 = vmatpush1.bf16.msra.mxu0 %v5562
      %5753 = vmatprep.subr.bf16.mxu0 0
      %5754 = vmatpush1.bf16.msra.mxu0 %v5561
      %5755 = vmatprep.subr.bf16.mxu0 0
      %5756 = vmatpush1.bf16.msra.mxu0 %v5560
      %5757 = vmatprep.subr.bf16.mxu0 0
      %5758 = vmatpush1.bf16.msra.mxu0 %v5559
      %5759 = vmatprep.subr.bf16.mxu0 0
      %5760 = vmatpush1.bf16.msra.mxu0 %v5558
      %5761 = vmatprep.subr.bf16.mxu0 0
      %5762 = vmatpush1.bf16.msra.mxu0 %v5557
      %5763 = vmatprep.subr.bf16.mxu0 0
      %5764 = vmatpush1.bf16.msra.mxu0 %v5556
      %5765 = vmatprep.subr.bf16.mxu0 0
      %5766 = vmatpush2.bf16.msra.mxu0 0
      %5767 = vmatprep.subr.bf16.mxu0 0
      %5768 = vmatpush2.bf16.msra.mxu0 0
      %5769 = vmatprep.subr.bf16.mxu0 0
      %5770 = vmatpush2.bf16.msra.mxu0 0
      %5771 = vmatprep.subr.bf16.mxu0 0
      %5772 = vmatpush2.bf16.msra.mxu0 0
      %5773 = vmatprep.subr.bf16.mxu0 0
      %5774 = vmatpush2.bf16.msra.mxu0 0
      %5775 = vmatprep.subr.bf16.mxu0 0
      %5776 = vmatpush2.bf16.msra.mxu0 0
      %5777 = vmatprep.subr.bf16.mxu0 0
      %5778 = vmatpush2.bf16.msra.mxu0 0
      %5779 = vmatprep.subr.bf16.mxu0 0
      %5780 = vmatpush2.bf16.msra.mxu0 0
      %5781 = vmatprep.mubr.bf16.mxu0 0
      %5782 = vmatmul.mubr.bf16.gmra.mxu0 %v4788
      %v5783 = vpop.f32.mrf.mxu0
      %v5784 = vadd.f32 %v5623, %v5783
      %v5785 = vpop.f32.mrf.mxu0
      %v5786 = vpop.f32.mrf.mxu0
      %v5787 = vadd.f32 %v5626, %v5786
      %v5788 = vpop.f32.mrf.mxu0
      %5789 = vmatprep.mubr.bf16.mxu0 0
      %5790 = vmatmul.mubr.bf16.gmra.mxu0 %v4791
      %v5791 = vpop.f32.mrf.mxu0
      %v5792 = vadd.f32 %v5631, %v5791
      %v5793 = vpop.f32.mrf.mxu0
      %v5794 = vpop.f32.mrf.mxu0
      %v5795 = vadd.f32 %v5634, %v5794
      %v5796 = vpop.f32.mrf.mxu0
      %5797 = vmatprep.mubr.bf16.mxu0 0
      %5798 = vmatmul.mubr.bf16.gmra.mxu0 %v4794
      %v5799 = vpop.f32.mrf.mxu0
      %v5800 = vadd.f32 %v5639, %v5799
      %v5801 = vpop.f32.mrf.mxu0
      %v5802 = vpop.f32.mrf.mxu0
      %v5803 = vadd.f32 %v5642, %v5802
      %v5804 = vpop.f32.mrf.mxu0
      %5805 = vmatprep.mubr.bf16.mxu0 0
      %5806 = vmatmul.mubr.bf16.gmra.mxu0 %v4797
      %v5807 = vpop.f32.mrf.mxu0
      %v5808 = vadd.f32 %v5647, %v5807
      %v5809 = vpop.f32.mrf.mxu0
      %v5810 = vpop.f32.mrf.mxu0
      %v5811 = vadd.f32 %v5650, %v5810
      %v5812 = vpop.f32.mrf.mxu0
      %5813 = vmatprep.mubr.bf16.mxu0 0
      %5814 = vmatmul.mubr.bf16.gmra.mxu0 %v4800
      %v5815 = vpop.f32.mrf.mxu0
      %v5816 = vadd.f32 %v5655, %v5815
      %v5817 = vpop.f32.mrf.mxu0
      %v5818 = vpop.f32.mrf.mxu0
      %v5819 = vadd.f32 %v5658, %v5818
      %v5820 = vpop.f32.mrf.mxu0
      %5821 = vmatprep.mubr.bf16.mxu0 0
      %5822 = vmatmul.mubr.bf16.gmra.mxu0 %v4803
      %v5823 = vpop.f32.mrf.mxu0
      %v5824 = vadd.f32 %v5663, %v5823
      %v5825 = vpop.f32.mrf.mxu0
      %v5826 = vpop.f32.mrf.mxu0
      %v5827 = vadd.f32 %v5666, %v5826
      %v5828 = vpop.f32.mrf.mxu0
      %5829 = vmatprep.mubr.bf16.mxu0 0
      %5830 = vmatmul.mubr.bf16.gmra.mxu0 %v4806
      %v5831 = vpop.f32.mrf.mxu0
      %v5832 = vadd.f32 %v5671, %v5831
      %v5833 = vpop.f32.mrf.mxu0
      %v5834 = vpop.f32.mrf.mxu0
      %v5835 = vadd.f32 %v5674, %v5834
      %v5836 = vpop.f32.mrf.mxu0
      %5837 = vmatprep.mubr.bf16.mxu0 0
      %5838 = vmatmul.mubr.bf16.gmra.mxu0 %v4809
      %v5839 = vpop.f32.mrf.mxu0
      %v5840 = vadd.f32 %v5679, %v5839
      %v5841 = vpop.f32.mrf.mxu0
      %v5842 = vpop.f32.mrf.mxu0
      %v5843 = vadd.f32 %v5682, %v5842
      %v5844 = vpop.f32.mrf.mxu0
      %5845 = vmatprep.mubr.bf16.mxu0 0
      %5846 = vmatmul.mubr.bf16.gmra.mxu0 %v4812
      %v5847 = vpop.f32.mrf.mxu0
      %v5848 = vadd.f32 %v5687, %v5847
      %v5849 = vpop.f32.mrf.mxu0
      %v5850 = vpop.f32.mrf.mxu0
      %v5851 = vadd.f32 %v5690, %v5850
      %v5852 = vpop.f32.mrf.mxu0
      %5853 = vmatprep.mubr.bf16.mxu0 0
      %5854 = vmatmul.mubr.bf16.gmra.mxu0 %v4815
      %v5855 = vpop.f32.mrf.mxu0
      %v5856 = vadd.f32 %v5695, %v5855
      %v5857 = vpop.f32.mrf.mxu0
      %v5858 = vpop.f32.mrf.mxu0
      %v5859 = vadd.f32 %v5698, %v5858
      %v5860 = vpop.f32.mrf.mxu0
      %5861 = vmatprep.mubr.bf16.mxu0 0
      %5862 = vmatmul.mubr.bf16.gmra.mxu0 %v4818
      %v5863 = vpop.f32.mrf.mxu0
      %v5864 = vadd.f32 %v5703, %v5863
      %v5865 = vpop.f32.mrf.mxu0
      %v5866 = vpop.f32.mrf.mxu0
      %v5867 = vadd.f32 %v5706, %v5866
      %v5868 = vpop.f32.mrf.mxu0
      %5869 = vmatprep.mubr.bf16.mxu0 0
      %5870 = vmatmul.mubr.bf16.gmra.mxu0 %v4821
      %v5871 = vpop.f32.mrf.mxu0
      %v5872 = vadd.f32 %v5711, %v5871
      %v5873 = vpop.f32.mrf.mxu0
      %v5874 = vpop.f32.mrf.mxu0
      %v5875 = vadd.f32 %v5714, %v5874
      %v5876 = vpop.f32.mrf.mxu0
      %5877 = vmatprep.mubr.bf16.mxu0 0
      %5878 = vmatmul.mubr.bf16.gmra.mxu0 %v4824
      %v5879 = vpop.f32.mrf.mxu0
      %v5880 = vadd.f32 %v5719, %v5879
      %v5881 = vpop.f32.mrf.mxu0
      %v5882 = vpop.f32.mrf.mxu0
      %v5883 = vadd.f32 %v5722, %v5882
      %v5884 = vpop.f32.mrf.mxu0
      %5885 = vmatprep.mubr.bf16.mxu0 0
      %5886 = vmatmul.mubr.bf16.gmra.mxu0 %v4827
      %v5887 = vpop.f32.mrf.mxu0
      %v5888 = vadd.f32 %v5727, %v5887
      %v5889 = vpop.f32.mrf.mxu0
      %v5890 = vpop.f32.mrf.mxu0
      %v5891 = vadd.f32 %v5730, %v5890
      %v5892 = vpop.f32.mrf.mxu0
      %5893 = vmatprep.mubr.bf16.mxu0 0
      %5894 = vmatmul.mubr.bf16.gmra.mxu0 %v4830
      %v5895 = vpop.f32.mrf.mxu0
      %v5896 = vadd.f32 %v5735, %v5895
      %v5897 = vpop.f32.mrf.mxu0
      %v5898 = vpop.f32.mrf.mxu0
      %v5899 = vadd.f32 %v5738, %v5898
      %v5900 = vpop.f32.mrf.mxu0
      %5901 = vmatprep.mubr.bf16.mxu0 0
      %5902 = vmatmul.mubr.bf16.gmra.mxu0 %v4833
      %v5903 = vpop.f32.mrf.mxu0
      %v5904 = vadd.f32 %v5743, %v5903
      %v5905 = vpop.f32.mrf.mxu0
      %v5906 = vpop.f32.mrf.mxu0
      %v5907 = vadd.f32 %v5746, %v5906
      %v5908 = vpop.f32.mrf.mxu0
      %5909 = vdwg.mxu0
      %v5910 = vrot.slane %v4498, 1
      %v5911 = vrot.slane %v4499, 1
      %v5912 = vrot.slane %v4500, 1
      %v5913 = vrot.slane %v4501, 1
      %v5914 = vrot.slane %v4502, 1
      %v5915 = vrot.slane %v4503, 1
      %v5916 = vrot.slane %v4504, 1
      %v5917 = vrot.slane %v4505, 1
      %v5918 = vrot.slane %v4506, 1
      %v5919 = vrot.slane %v4507, 1
      %v5920 = vrot.slane %v4508, 1
      %v5921 = vrot.slane %v4509, 1
      %v5922 = vrot.slane %v4510, 1
      %v5923 = vrot.slane %v4511, 1
      %v5924 = vrot.slane %v4512, 1
      %v5925 = vrot.slane %v4513, 1
      %v5926 = vrot.slane %v4514, 1
      %v5927 = vrot.slane %v4515, 1
      %v5928 = vrot.slane %v4516, 1
      %v5929 = vrot.slane %v4517, 1
      %v5930 = vrot.slane %v4518, 1
      %v5931 = vrot.slane %v4519, 1
      %v5932 = vrot.slane %v4520, 1
      %v5933 = vrot.slane %v4521, 1
      %v5934 = vrot.slane %v4522, 1
      %v5935 = vrot.slane %v4523, 1
      %v5936 = vrot.slane %v4524, 1
      %v5937 = vrot.slane %v4525, 1
      %v5938 = vrot.slane %v4526, 1
      %v5939 = vrot.slane %v4527, 1
      %v5940 = vrot.slane %v4528, 1
      %v5941 = vrot.slane %v4529, 1
      %v5942 = vrot.slane %v4530, 1
      %v5943 = vrot.slane %v4531, 1
      %v5944 = vrot.slane %v4532, 1
      %v5945 = vrot.slane %v4533, 1
      %v5946 = vrot.slane %v4534, 1
      %v5947 = vrot.slane %v4535, 1
      %v5948 = vrot.slane %v4536, 1
      %v5949 = vrot.slane %v4537, 1
      %v5950 = vrot.slane %v4538, 1
      %v5951 = vrot.slane %v4539, 1
      %v5952 = vrot.slane %v4540, 1
      %v5953 = vrot.slane %v4541, 1
      %v5954 = vrot.slane %v4542, 1
      %v5955 = vrot.slane %v4543, 1
      %v5956 = vrot.slane %v4544, 1
      %v5957 = vrot.slane %v4545, 1
      %v5958 = vrot.slane %v4546, 1
      %v5959 = vrot.slane %v4547, 1
      %v5960 = vrot.slane %v4548, 1
      %v5961 = vrot.slane %v4549, 1
      %v5962 = vrot.slane %v4550, 1
      %v5963 = vrot.slane %v4551, 1
      %v5964 = vrot.slane %v4552, 1
      %v5965 = vrot.slane %v4553, 1
      %v5966 = vrot.slane %v4554, 1
      %v5967 = vrot.slane %v4555, 1
      %v5968 = vrot.slane %v4556, 1
      %v5969 = vrot.slane %v4557, 1
      %v5970 = vrot.slane %v4558, 1
      %v5971 = vrot.slane %v4559, 1
      %v5972 = vrot.slane %v4560, 1
      %v5973 = vrot.slane %v4561, 1
      %v5974 = vrot.slane %v4562, 1
      %v5975 = vrot.slane %v4563, 1
      %v5976 = vrot.slane %v4564, 1
      %v5977 = vrot.slane %v4565, 1
      %v5978 = vrot.slane %v4566, 1
      %v5979 = vrot.slane %v4567, 1
      %v5980 = vrot.slane %v4568, 1
      %v5981 = vrot.slane %v4569, 1
      %v5982 = vrot.slane %v4570, 1
      %v5983 = vrot.slane %v4571, 1
      %v5984 = vrot.slane %v4572, 1
      %v5985 = vrot.slane %v4573, 1
      %v5986 = vrot.slane %v4574, 1
      %v5987 = vrot.slane %v4575, 1
      %v5988 = vrot.slane %v4576, 1
      %v5989 = vrot.slane %v4577, 1
      %v5990 = vrot.slane %v4578, 1
      %v5991 = vrot.slane %v4579, 1
      %v5992 = vrot.slane %v4580, 1
      %v5993 = vrot.slane %v4581, 1
      %v5994 = vrot.slane %v4582, 1
      %v5995 = vrot.slane %v4583, 1
      %v5996 = vrot.slane %v4584, 1
      %v5997 = vrot.slane %v4585, 1
      %v5998 = vrot.slane %v4586, 1
      %v5999 = vrot.slane %v4587, 1
      %v6000 = vrot.slane %v4588, 1
      %v6001 = vrot.slane %v4589, 1
      %v6002 = vrot.slane %v4590, 1
      %v6003 = vrot.slane %v4591, 1
      %v6004 = vrot.slane %v4592, 1
      %v6005 = vrot.slane %v4593, 1
      %v6006 = vsel %vm1038, %v6000, %v6003
      %v6007 = vsel %vm1038, %v6001, %v6004
      %v6008 = vsel %vm1038, %v6002, %v6005
      %v6009 = vsel %vm1038, %v5997, %v6000
      %v6010 = vsel %vm1038, %v5998, %v6001
      %v6011 = vsel %vm1038, %v5999, %v6002
      %v6012 = vsel %vm1038, %v5994, %v5997
      %v6013 = vsel %vm1038, %v5995, %v5998
      %v6014 = vsel %vm1038, %v5996, %v5999
      %v6015 = vsel %vm1038, %v5991, %v5994
      %v6016 = vsel %vm1038, %v5992, %v5995
      %v6017 = vsel %vm1038, %v5993, %v5996
      %v6018 = vsel %vm1038, %v5988, %v5991
      %v6019 = vsel %vm1038, %v5989, %v5992
      %v6020 = vsel %vm1038, %v5990, %v5993
      %v6021 = vsel %vm1038, %v5985, %v5988
      %v6022 = vsel %vm1038, %v5986, %v5989
      %v6023 = vsel %vm1038, %v5987, %v5990
      %v6024 = vsel %vm1038, %v5982, %v5985
      %v6025 = vsel %vm1038, %v5983, %v5986
      %v6026 = vsel %vm1038, %v5984, %v5987
      %v6027 = vsel %vm1038, %v5979, %v5982
      %v6028 = vsel %vm1038, %v5980, %v5983
      %v6029 = vsel %vm1038, %v5981, %v5984
      %v6030 = vsel %vm1038, %v5976, %v5979
      %v6031 = vsel %vm1038, %v5977, %v5980
      %v6032 = vsel %vm1038, %v5978, %v5981
      %v6033 = vsel %vm1038, %v5973, %v5976
      %v6034 = vsel %vm1038, %v5974, %v5977
      %v6035 = vsel %vm1038, %v5975, %v5978
      %v6036 = vsel %vm1038, %v5970, %v5973
      %v6037 = vsel %vm1038, %v5971, %v5974
      %v6038 = vsel %vm1038, %v5972, %v5975
      %v6039 = vsel %vm1038, %v5967, %v5970
      %v6040 = vsel %vm1038, %v5968, %v5971
      %v6041 = vsel %vm1038, %v5969, %v5972
      %v6042 = vsel %vm1038, %v5964, %v5967
      %v6043 = vsel %vm1038, %v5965, %v5968
      %v6044 = vsel %vm1038, %v5966, %v5969
      %v6045 = vsel %vm1038, %v5961, %v5964
      %v6046 = vsel %vm1038, %v5962, %v5965
      %v6047 = vsel %vm1038, %v5963, %v5966
      %v6048 = vsel %vm1038, %v5958, %v5961
      %v6049 = vsel %vm1038, %v5959, %v5962
      %v6050 = vsel %vm1038, %v5960, %v5963
      %v6051 = vsel %vm1038, %v5955, %v5958
      %v6052 = vsel %vm1038, %v5956, %v5959
      %v6053 = vsel %vm1038, %v5957, %v5960
      %v6054 = vsel %vm1038, %v5952, %v5955
      %v6055 = vsel %vm1038, %v5953, %v5956
      %v6056 = vsel %vm1038, %v5954, %v5957
      %v6057 = vsel %vm1038, %v5949, %v5952
      %v6058 = vsel %vm1038, %v5950, %v5953
      %v6059 = vsel %vm1038, %v5951, %v5954
      %v6060 = vsel %vm1038, %v5946, %v5949
      %v6061 = vsel %vm1038, %v5947, %v5950
      %v6062 = vsel %vm1038, %v5948, %v5951
      %v6063 = vsel %vm1038, %v5943, %v5946
      %v6064 = vsel %vm1038, %v5944, %v5947
      %v6065 = vsel %vm1038, %v5945, %v5948
      %v6066 = vsel %vm1038, %v5940, %v5943
      %v6067 = vsel %vm1038, %v5941, %v5944
      %v6068 = vsel %vm1038, %v5942, %v5945
      %v6069 = vsel %vm1038, %v5937, %v5940
      %v6070 = vsel %vm1038, %v5938, %v5941
      %v6071 = vsel %vm1038, %v5939, %v5942
      %v6072 = vsel %vm1038, %v5934, %v5937
      %v6073 = vsel %vm1038, %v5935, %v5938
      %v6074 = vsel %vm1038, %v5936, %v5939
      %v6075 = vsel %vm1038, %v5931, %v5934
      %v6076 = vsel %vm1038, %v5932, %v5935
      %v6077 = vsel %vm1038, %v5933, %v5936
      %v6078 = vsel %vm1038, %v5928, %v5931
      %v6079 = vsel %vm1038, %v5929, %v5932
      %v6080 = vsel %vm1038, %v5930, %v5933
      %v6081 = vsel %vm1038, %v5925, %v5928
      %v6082 = vsel %vm1038, %v5926, %v5929
      %v6083 = vsel %vm1038, %v5927, %v5930
      %v6084 = vsel %vm1038, %v5922, %v5925
      %v6085 = vsel %vm1038, %v5923, %v5926
      %v6086 = vsel %vm1038, %v5924, %v5927
      %v6087 = vsel %vm1038, %v5919, %v5922
      %v6088 = vsel %vm1038, %v5920, %v5923
      %v6089 = vsel %vm1038, %v5921, %v5924
      %v6090 = vsel %vm1038, %v5916, %v5919
      %v6091 = vsel %vm1038, %v5917, %v5920
      %v6092 = vsel %vm1038, %v5918, %v5921
      %v6093 = vsel %vm1038, %v5913, %v5916
      %v6094 = vsel %vm1038, %v5914, %v5917
      %v6095 = vsel %vm1038, %v5915, %v5918
      %v6096 = vsel %vm1038, %v5910, %v5913
      %v6097 = vsel %vm1038, %v5911, %v5914
      %v6098 = vsel %vm1038, %v5912, %v5915
      %v6099 = vsel %vm1038, %v6003, %v5910
      %v6100 = vsel %vm1038, %v6004, %v5911
      %v6101 = vsel %vm1038, %v6005, %v5912
      %v6102 = vpack.c.bf16 %v6093, %v6096
      %v6103 = vpack.c.bf16 %v6094, %v6097
      %v6104 = vpack.c.bf16 %v6095, %v6098
      %v6105 = vpack.c.bf16 %v6087, %v6090
      %v6106 = vpack.c.bf16 %v6088, %v6091
      %v6107 = vpack.c.bf16 %v6089, %v6092
      %v6108 = vpack.c.bf16 %v6081, %v6084
      %v6109 = vpack.c.bf16 %v6082, %v6085
      %v6110 = vpack.c.bf16 %v6083, %v6086
      %v6111 = vpack.c.bf16 %v6075, %v6078
      %v6112 = vpack.c.bf16 %v6076, %v6079
      %v6113 = vpack.c.bf16 %v6077, %v6080
      %v6114 = vpack.c.bf16 %v6069, %v6072
      %v6115 = vpack.c.bf16 %v6070, %v6073
      %v6116 = vpack.c.bf16 %v6071, %v6074
      %v6117 = vpack.c.bf16 %v6063, %v6066
      %v6118 = vpack.c.bf16 %v6064, %v6067
      %v6119 = vpack.c.bf16 %v6065, %v6068
      %v6120 = vpack.c.bf16 %v6057, %v6060
      %v6121 = vpack.c.bf16 %v6058, %v6061
      %v6122 = vpack.c.bf16 %v6059, %v6062
      %v6123 = vpack.c.bf16 %v6051, %v6054
      %v6124 = vpack.c.bf16 %v6052, %v6055
      %v6125 = vpack.c.bf16 %v6053, %v6056
      %v6126 = vpack.c.bf16 %v6045, %v6048
      %v6127 = vpack.c.bf16 %v6046, %v6049
      %v6128 = vpack.c.bf16 %v6047, %v6050
      %v6129 = vpack.c.bf16 %v6039, %v6042
      %v6130 = vpack.c.bf16 %v6040, %v6043
      %v6131 = vpack.c.bf16 %v6041, %v6044
      %v6132 = vpack.c.bf16 %v6033, %v6036
      %v6133 = vpack.c.bf16 %v6034, %v6037
      %v6134 = vpack.c.bf16 %v6035, %v6038
      %v6135 = vpack.c.bf16 %v6027, %v6030
      %v6136 = vpack.c.bf16 %v6028, %v6031
      %v6137 = vpack.c.bf16 %v6029, %v6032
      %v6138 = vpack.c.bf16 %v6021, %v6024
      %v6139 = vpack.c.bf16 %v6022, %v6025
      %v6140 = vpack.c.bf16 %v6023, %v6026
      %v6141 = vpack.c.bf16 %v6015, %v6018
      %v6142 = vpack.c.bf16 %v6016, %v6019
      %v6143 = vpack.c.bf16 %v6017, %v6020
      %v6144 = vpack.c.bf16 %v6009, %v6012
      %v6145 = vpack.c.bf16 %v6010, %v6013
      %v6146 = vpack.c.bf16 %v6011, %v6014
      %v6147 = vpack.c.bf16 %v6099, %v6006
      %v6148 = vpack.c.bf16 %v6100, %v6007
      %v6149 = vpack.c.bf16 %v6101, %v6008
      %v6150 = vld [vmem:[%s1 + $0x180] sm:$0xf]
      %v6151 = vld [vmem:[%s1 + $0x184] sm:$0xf]
      %v6152 = vld [vmem:[%s1 + $0x188] sm:$0xf]
      %v6153 = vld [vmem:[%s1 + $0x18c] sm:$0xf]
      %v6154 = vld [vmem:[%s1 + $0x190] sm:$0xf]
      %v6155 = vld [vmem:[%s1 + $0x194] sm:$0xf]
      %v6156 = vld [vmem:[%s1 + $0x198] sm:$0xf]
      %v6157 = vld [vmem:[%s1 + $0x19c] sm:$0xf]
      %v6158 = vld [vmem:[%s1 + $0x1a0] sm:$0xf]
      %v6159 = vld [vmem:[%s1 + $0x1a4] sm:$0xf]
      %v6160 = vld [vmem:[%s1 + $0x1a8] sm:$0xf]
      %v6161 = vld [vmem:[%s1 + $0x1ac] sm:$0xf]
      %v6162 = vld [vmem:[%s1 + $0x1b0] sm:$0xf]
      %v6163 = vld [vmem:[%s1 + $0x1b4] sm:$0xf]
      %v6164 = vld [vmem:[%s1 + $0x1b8] sm:$0xf]
      %v6165 = vld [vmem:[%s1 + $0x1bc] sm:$0xf]
      %v6166 = vld [vmem:[%s1 + $0x1c0] sm:$0xf]
      %v6167 = vld [vmem:[%s1 + $0x1c4] sm:$0xf]
      %v6168 = vld [vmem:[%s1 + $0x1c8] sm:$0xf]
      %v6169 = vld [vmem:[%s1 + $0x1cc] sm:$0xf]
      %v6170 = vld [vmem:[%s1 + $0x1d0] sm:$0xf]
      %v6171 = vld [vmem:[%s1 + $0x1d4] sm:$0xf]
      %v6172 = vld [vmem:[%s1 + $0x1d8] sm:$0xf]
      %v6173 = vld [vmem:[%s1 + $0x1dc] sm:$0xf]
      %v6174 = vld [vmem:[%s1 + $0x1e0] sm:$0xf]
      %v6175 = vld [vmem:[%s1 + $0x1e4] sm:$0xf]
      %v6176 = vld [vmem:[%s1 + $0x1e8] sm:$0xf]
      %v6177 = vld [vmem:[%s1 + $0x1ec] sm:$0xf]
      %v6178 = vld [vmem:[%s1 + $0x1f0] sm:$0xf]
      %v6179 = vld [vmem:[%s1 + $0x1f4] sm:$0xf]
      %v6180 = vld [vmem:[%s1 + $0x1f8] sm:$0xf]
      %v6181 = vld [vmem:[%s1 + $0x1fc] sm:$0xf]
      %v6182 = vld [vmem:[%s1 + $0x200] sm:$0xf]
      %v6183 = vld [vmem:[%s1 + $0x204] sm:$0xf]
      %v6184 = vld [vmem:[%s1 + $0x208] sm:$0xf]
      %v6185 = vld [vmem:[%s1 + $0x20c] sm:$0xf]
      %v6186 = vld [vmem:[%s1 + $0x210] sm:$0xf]
      %v6187 = vld [vmem:[%s1 + $0x214] sm:$0xf]
      %v6188 = vld [vmem:[%s1 + $0x218] sm:$0xf]
      %v6189 = vld [vmem:[%s1 + $0x21c] sm:$0xf]
      %v6190 = vld [vmem:[%s1 + $0x220] sm:$0xf]
      %v6191 = vld [vmem:[%s1 + $0x224] sm:$0xf]
      %v6192 = vld [vmem:[%s1 + $0x228] sm:$0xf]
      %v6193 = vld [vmem:[%s1 + $0x22c] sm:$0xf]
      %v6194 = vld [vmem:[%s1 + $0x230] sm:$0xf]
      %v6195 = vld [vmem:[%s1 + $0x234] sm:$0xf]
      %v6196 = vld [vmem:[%s1 + $0x238] sm:$0xf]
      %v6197 = vld [vmem:[%s1 + $0x23c] sm:$0xf]
      %v6246 = vunpack.c.l.b16 %v6150
      %v6247 = vunpack.c.l.b16 %v6151
      %v6248 = vunpack.c.l.b16 %v6152
      %v6249 = vunpack.c.l.b16 %v6153
      %v6250 = vunpack.c.l.b16 %v6154
      %v6251 = vunpack.c.l.b16 %v6155
      %v6252 = vunpack.c.l.b16 %v6156
      %v6253 = vunpack.c.l.b16 %v6157
      %v6254 = vunpack.c.l.b16 %v6158
      %v6255 = vunpack.c.l.b16 %v6159
      %v6256 = vunpack.c.l.b16 %v6160
      %v6257 = vunpack.c.l.b16 %v6161
      %v6258 = vunpack.c.l.b16 %v6162
      %v6259 = vunpack.c.l.b16 %v6163
      %v6260 = vunpack.c.l.b16 %v6164
      %v6261 = vunpack.c.l.b16 %v6165
      %v6262 = vunpack.c.l.b16 %v6166
      %v6263 = vunpack.c.l.b16 %v6167
      %v6264 = vunpack.c.l.b16 %v6168
      %v6265 = vunpack.c.l.b16 %v6169
      %v6266 = vunpack.c.l.b16 %v6170
      %v6267 = vunpack.c.l.b16 %v6171
      %v6268 = vunpack.c.l.b16 %v6172
      %v6269 = vunpack.c.l.b16 %v6173
      %v6270 = vunpack.c.l.b16 %v6174
      %v6271 = vunpack.c.l.b16 %v6175
      %v6272 = vunpack.c.l.b16 %v6176
      %v6273 = vunpack.c.l.b16 %v6177
      %v6274 = vunpack.c.l.b16 %v6178
      %v6275 = vunpack.c.l.b16 %v6179
      %v6276 = vunpack.c.l.b16 %v6180
      %v6277 = vunpack.c.l.b16 %v6181
      %v6278 = vunpack.c.l.b16 %v6182
      %v6279 = vunpack.c.l.b16 %v6183
      %v6280 = vunpack.c.l.b16 %v6184
      %v6281 = vunpack.c.l.b16 %v6185
      %v6282 = vunpack.c.l.b16 %v6186
      %v6283 = vunpack.c.l.b16 %v6187
      %v6284 = vunpack.c.l.b16 %v6188
      %v6285 = vunpack.c.l.b16 %v6189
      %v6286 = vunpack.c.l.b16 %v6190
      %v6287 = vunpack.c.l.b16 %v6191
      %v6288 = vunpack.c.l.b16 %v6192
      %v6289 = vunpack.c.l.b16 %v6193
      %v6290 = vunpack.c.l.b16 %v6194
      %v6291 = vunpack.c.l.b16 %v6195
      %v6292 = vunpack.c.l.b16 %v6196
      %v6293 = vunpack.c.l.b16 %v6197
      %v6294 = vpack.c.b16 %v6247, %v6246
      %v6295 = vpack.c.b16 %v6249, %v6248
      %v6296 = vpack.c.b16 %v6251, %v6250
      %v6297 = vpack.c.b16 %v6253, %v6252
      %v6298 = vpack.c.b16 %v6255, %v6254
      %v6299 = vpack.c.b16 %v6257, %v6256
      %v6300 = vpack.c.b16 %v6259, %v6258
      %v6301 = vpack.c.b16 %v6261, %v6260
      %v6302 = vpack.c.b16 %v6263, %v6262
      %v6303 = vpack.c.b16 %v6265, %v6264
      %v6304 = vpack.c.b16 %v6267, %v6266
      %v6305 = vpack.c.b16 %v6269, %v6268
      %v6306 = vpack.c.b16 %v6271, %v6270
      %v6307 = vpack.c.b16 %v6273, %v6272
      %v6308 = vpack.c.b16 %v6275, %v6274
      %v6309 = vpack.c.b16 %v6277, %v6276
      %v6310 = vpack.c.b16 %v6279, %v6278
      %v6311 = vpack.c.b16 %v6281, %v6280
      %v6312 = vpack.c.b16 %v6283, %v6282
      %v6313 = vpack.c.b16 %v6285, %v6284
      %v6314 = vpack.c.b16 %v6287, %v6286
      %v6315 = vpack.c.b16 %v6289, %v6288
      %v6316 = vpack.c.b16 %v6291, %v6290
      %v6317 = vpack.c.b16 %v6293, %v6292
      %6342 = vmatprep.subr.bf16.mxu0 0
      %6343 = vmatpush1.bf16.msra.mxu0 %v6301
      %6344 = vmatprep.subr.bf16.mxu0 0
      %6345 = vmatpush1.bf16.msra.mxu0 %v6300
      %6346 = vmatprep.subr.bf16.mxu0 0
      %6347 = vmatpush1.bf16.msra.mxu0 %v6299
      %6348 = vmatprep.subr.bf16.mxu0 0
      %6349 = vmatpush1.bf16.msra.mxu0 %v6298
      %6350 = vmatprep.subr.bf16.mxu0 0
      %6351 = vmatpush1.bf16.msra.mxu0 %v6297
      %6352 = vmatprep.subr.bf16.mxu0 0
      %6353 = vmatpush1.bf16.msra.mxu0 %v6296
      %6354 = vmatprep.subr.bf16.mxu0 0
      %6355 = vmatpush1.bf16.msra.mxu0 %v6295
      %6356 = vmatprep.subr.bf16.mxu0 0
      %6357 = vmatpush1.bf16.msra.mxu0 %v6294
      %6358 = vmatprep.subr.bf16.mxu0 0
      %6359 = vmatpush2.bf16.msra.mxu0 %v6309
      %6360 = vmatprep.subr.bf16.mxu0 0
      %6361 = vmatpush2.bf16.msra.mxu0 %v6308
      %6362 = vmatprep.subr.bf16.mxu0 0
      %6363 = vmatpush2.bf16.msra.mxu0 %v6307
      %6364 = vmatprep.subr.bf16.mxu0 0
      %6365 = vmatpush2.bf16.msra.mxu0 %v6306
      %6366 = vmatprep.subr.bf16.mxu0 0
      %6367 = vmatpush2.bf16.msra.mxu0 %v6305
      %6368 = vmatprep.subr.bf16.mxu0 0
      %6369 = vmatpush2.bf16.msra.mxu0 %v6304
      %6370 = vmatprep.subr.bf16.mxu0 0
      %6371 = vmatpush2.bf16.msra.mxu0 %v6303
      %6372 = vmatprep.subr.bf16.mxu0 0
      %6373 = vmatpush2.bf16.msra.mxu0 %v6302
      %6374 = vmatprep.mubr.bf16.mxu0 %v6103
      %6375 = vmatmul.mubr.bf16.gmra.mxu0 %v6102
      %v6376 = vpop.f32.mrf.mxu0
      %v6377 = vadd.f32 0.0, %v6376
      %v6378 = vpop.f32.mrf.mxu0
      %v6379 = vpop.f32.mrf.mxu0
      %v6380 = vadd.f32 0.0, %v6379
      %v6381 = vpop.f32.mrf.mxu0
      %6382 = vmatprep.mubr.bf16.mxu0 %v6106
      %6383 = vmatmul.mubr.bf16.gmra.mxu0 %v6105
      %v6384 = vpop.f32.mrf.mxu0
      %v6385 = vadd.f32 0.0, %v6384
      %v6386 = vpop.f32.mrf.mxu0
      %v6387 = vpop.f32.mrf.mxu0
      %v6388 = vadd.f32 0.0, %v6387
      %v6389 = vpop.f32.mrf.mxu0
      %6390 = vmatprep.mubr.bf16.mxu0 %v6109
      %6391 = vmatmul.mubr.bf16.gmra.mxu0 %v6108
      %v6392 = vpop.f32.mrf.mxu0
      %v6393 = vadd.f32 0.0, %v6392
      %v6394 = vpop.f32.mrf.mxu0
      %v6395 = vpop.f32.mrf.mxu0
      %v6396 = vadd.f32 0.0, %v6395
      %v6397 = vpop.f32.mrf.mxu0
      %6398 = vmatprep.mubr.bf16.mxu0 %v6112
      %6399 = vmatmul.mubr.bf16.gmra.mxu0 %v6111
      %v6400 = vpop.f32.mrf.mxu0
      %v6401 = vadd.f32 0.0, %v6400
      %v6402 = vpop.f32.mrf.mxu0
      %v6403 = vpop.f32.mrf.mxu0
      %v6404 = vadd.f32 0.0, %v6403
      %v6405 = vpop.f32.mrf.mxu0
      %6406 = vmatprep.mubr.bf16.mxu0 %v6115
      %6407 = vmatmul.mubr.bf16.gmra.mxu0 %v6114
      %v6408 = vpop.f32.mrf.mxu0
      %v6409 = vadd.f32 0.0, %v6408
      %v6410 = vpop.f32.mrf.mxu0
      %v6411 = vpop.f32.mrf.mxu0
      %v6412 = vadd.f32 0.0, %v6411
      %v6413 = vpop.f32.mrf.mxu0
      %6414 = vmatprep.mubr.bf16.mxu0 %v6118
      %6415 = vmatmul.mubr.bf16.gmra.mxu0 %v6117
      %v6416 = vpop.f32.mrf.mxu0
      %v6417 = vadd.f32 0.0, %v6416
      %v6418 = vpop.f32.mrf.mxu0
      %v6419 = vpop.f32.mrf.mxu0
      %v6420 = vadd.f32 0.0, %v6419
      %v6421 = vpop.f32.mrf.mxu0
      %6422 = vmatprep.mubr.bf16.mxu0 %v6121
      %6423 = vmatmul.mubr.bf16.gmra.mxu0 %v6120
      %v6424 = vpop.f32.mrf.mxu0
      %v6425 = vadd.f32 0.0, %v6424
      %v6426 = vpop.f32.mrf.mxu0
      %v6427 = vpop.f32.mrf.mxu0
      %v6428 = vadd.f32 0.0, %v6427
      %v6429 = vpop.f32.mrf.mxu0
      %6430 = vmatprep.mubr.bf16.mxu0 %v6124
      %6431 = vmatmul.mubr.bf16.gmra.mxu0 %v6123
      %v6432 = vpop.f32.mrf.mxu0
      %v6433 = vadd.f32 0.0, %v6432
      %v6434 = vpop.f32.mrf.mxu0
      %v6435 = vpop.f32.mrf.mxu0
      %v6436 = vadd.f32 0.0, %v6435
      %v6437 = vpop.f32.mrf.mxu0
      %6438 = vmatprep.mubr.bf16.mxu0 %v6127
      %6439 = vmatmul.mubr.bf16.gmra.mxu0 %v6126
      %v6440 = vpop.f32.mrf.mxu0
      %v6441 = vadd.f32 0.0, %v6440
      %v6442 = vpop.f32.mrf.mxu0
      %v6443 = vpop.f32.mrf.mxu0
      %v6444 = vadd.f32 0.0, %v6443
      %v6445 = vpop.f32.mrf.mxu0
      %6446 = vmatprep.mubr.bf16.mxu0 %v6130
      %6447 = vmatmul.mubr.bf16.gmra.mxu0 %v6129
      %v6448 = vpop.f32.mrf.mxu0
      %v6449 = vadd.f32 0.0, %v6448
      %v6450 = vpop.f32.mrf.mxu0
      %v6451 = vpop.f32.mrf.mxu0
      %v6452 = vadd.f32 0.0, %v6451
      %v6453 = vpop.f32.mrf.mxu0
      %6454 = vmatprep.mubr.bf16.mxu0 %v6133
      %6455 = vmatmul.mubr.bf16.gmra.mxu0 %v6132
      %v6456 = vpop.f32.mrf.mxu0
      %v6457 = vadd.f32 0.0, %v6456
      %v6458 = vpop.f32.mrf.mxu0
      %v6459 = vpop.f32.mrf.mxu0
      %v6460 = vadd.f32 0.0, %v6459
      %v6461 = vpop.f32.mrf.mxu0
      %6462 = vmatprep.mubr.bf16.mxu0 %v6136
      %6463 = vmatmul.mubr.bf16.gmra.mxu0 %v6135
      %v6464 = vpop.f32.mrf.mxu0
      %v6465 = vadd.f32 0.0, %v6464
      %v6466 = vpop.f32.mrf.mxu0
      %v6467 = vpop.f32.mrf.mxu0
      %v6468 = vadd.f32 0.0, %v6467
      %v6469 = vpop.f32.mrf.mxu0
      %6470 = vmatprep.mubr.bf16.mxu0 %v6139
      %6471 = vmatmul.mubr.bf16.gmra.mxu0 %v6138
      %v6472 = vpop.f32.mrf.mxu0
      %v6473 = vadd.f32 0.0, %v6472
      %v6474 = vpop.f32.mrf.mxu0
      %v6475 = vpop.f32.mrf.mxu0
      %v6476 = vadd.f32 0.0, %v6475
      %v6477 = vpop.f32.mrf.mxu0
      %6478 = vmatprep.mubr.bf16.mxu0 %v6142
      %6479 = vmatmul.mubr.bf16.gmra.mxu0 %v6141
      %v6480 = vpop.f32.mrf.mxu0
      %v6481 = vadd.f32 0.0, %v6480
      %v6482 = vpop.f32.mrf.mxu0
      %v6483 = vpop.f32.mrf.mxu0
      %v6484 = vadd.f32 0.0, %v6483
      %v6485 = vpop.f32.mrf.mxu0
      %6486 = vmatprep.mubr.bf16.mxu0 %v6145
      %6487 = vmatmul.mubr.bf16.gmra.mxu0 %v6144
      %v6488 = vpop.f32.mrf.mxu0
      %v6489 = vadd.f32 0.0, %v6488
      %v6490 = vpop.f32.mrf.mxu0
      %v6491 = vpop.f32.mrf.mxu0
      %v6492 = vadd.f32 0.0, %v6491
      %v6493 = vpop.f32.mrf.mxu0
      %6494 = vmatprep.mubr.bf16.mxu0 %v6148
      %6495 = vmatmul.mubr.bf16.gmra.mxu0 %v6147
      %v6496 = vpop.f32.mrf.mxu0
      %v6497 = vadd.f32 0.0, %v6496
      %v6498 = vpop.f32.mrf.mxu0
      %v6499 = vpop.f32.mrf.mxu0
      %v6500 = vadd.f32 0.0, %v6499
      %v6501 = vpop.f32.mrf.mxu0
      %6502 = vdwg.mxu0
      %6503 = vmatprep.subr.bf16.mxu0 0
      %6504 = vmatpush1.bf16.msra.mxu0 %v6317
      %6505 = vmatprep.subr.bf16.mxu0 0
      %6506 = vmatpush1.bf16.msra.mxu0 %v6316
      %6507 = vmatprep.subr.bf16.mxu0 0
      %6508 = vmatpush1.bf16.msra.mxu0 %v6315
      %6509 = vmatprep.subr.bf16.mxu0 0
      %6510 = vmatpush1.bf16.msra.mxu0 %v6314
      %6511 = vmatprep.subr.bf16.mxu0 0
      %6512 = vmatpush1.bf16.msra.mxu0 %v6313
      %6513 = vmatprep.subr.bf16.mxu0 0
      %6514 = vmatpush1.bf16.msra.mxu0 %v6312
      %6515 = vmatprep.subr.bf16.mxu0 0
      %6516 = vmatpush1.bf16.msra.mxu0 %v6311
      %6517 = vmatprep.subr.bf16.mxu0 0
      %6518 = vmatpush1.bf16.msra.mxu0 %v6310
      %6519 = vmatprep.subr.bf16.mxu0 0
      %6520 = vmatpush2.bf16.msra.mxu0 0
      %6521 = vmatprep.subr.bf16.mxu0 0
      %6522 = vmatpush2.bf16.msra.mxu0 0
      %6523 = vmatprep.subr.bf16.mxu0 0
      %6524 = vmatpush2.bf16.msra.mxu0 0
      %6525 = vmatprep.subr.bf16.mxu0 0
      %6526 = vmatpush2.bf16.msra.mxu0 0
      %6527 = vmatprep.subr.bf16.mxu0 0
      %6528 = vmatpush2.bf16.msra.mxu0 0
      %6529 = vmatprep.subr.bf16.mxu0 0
      %6530 = vmatpush2.bf16.msra.mxu0 0
      %6531 = vmatprep.subr.bf16.mxu0 0
      %6532 = vmatpush2.bf16.msra.mxu0 0
      %6533 = vmatprep.subr.bf16.mxu0 0
      %6534 = vmatpush2.bf16.msra.mxu0 0
      %6535 = vmatprep.mubr.bf16.mxu0 0
      %6536 = vmatmul.mubr.bf16.gmra.mxu0 %v6104
      %v6537 = vpop.f32.mrf.mxu0
      %v6538 = vadd.f32 %v6377, %v6537
      %v6539 = vpop.f32.mrf.mxu0
      %v6540 = vpop.f32.mrf.mxu0
      %v6541 = vadd.f32 %v6380, %v6540
      %v6542 = vpop.f32.mrf.mxu0
      %6543 = vmatprep.mubr.bf16.mxu0 0
      %6544 = vmatmul.mubr.bf16.gmra.mxu0 %v6107
      %v6545 = vpop.f32.mrf.mxu0
      %v6546 = vadd.f32 %v6385, %v6545
      %v6547 = vpop.f32.mrf.mxu0
      %v6548 = vpop.f32.mrf.mxu0
      %v6549 = vadd.f32 %v6388, %v6548
      %v6550 = vpop.f32.mrf.mxu0
      %6551 = vmatprep.mubr.bf16.mxu0 0
      %6552 = vmatmul.mubr.bf16.gmra.mxu0 %v6110
      %v6553 = vpop.f32.mrf.mxu0
      %v6554 = vadd.f32 %v6393, %v6553
      %v6555 = vpop.f32.mrf.mxu0
      %v6556 = vpop.f32.mrf.mxu0
      %v6557 = vadd.f32 %v6396, %v6556
      %v6558 = vpop.f32.mrf.mxu0
      %6559 = vmatprep.mubr.bf16.mxu0 0
      %6560 = vmatmul.mubr.bf16.gmra.mxu0 %v6113
      %v6561 = vpop.f32.mrf.mxu0
      %v6562 = vadd.f32 %v6401, %v6561
      %v6563 = vpop.f32.mrf.mxu0
      %v6564 = vpop.f32.mrf.mxu0
      %v6565 = vadd.f32 %v6404, %v6564
      %v6566 = vpop.f32.mrf.mxu0
      %6567 = vmatprep.mubr.bf16.mxu0 0
      %6568 = vmatmul.mubr.bf16.gmra.mxu0 %v6116
      %v6569 = vpop.f32.mrf.mxu0
      %v6570 = vadd.f32 %v6409, %v6569
      %v6571 = vpop.f32.mrf.mxu0
      %v6572 = vpop.f32.mrf.mxu0
      %v6573 = vadd.f32 %v6412, %v6572
      %v6574 = vpop.f32.mrf.mxu0
      %6575 = vmatprep.mubr.bf16.mxu0 0
      %6576 = vmatmul.mubr.bf16.gmra.mxu0 %v6119
      %v6577 = vpop.f32.mrf.mxu0
      %v6578 = vadd.f32 %v6417, %v6577
      %v6579 = vpop.f32.mrf.mxu0
      %v6580 = vpop.f32.mrf.mxu0
      %v6581 = vadd.f32 %v6420, %v6580
      %v6582 = vpop.f32.mrf.mxu0
      %6583 = vmatprep.mubr.bf16.mxu0 0
      %6584 = vmatmul.mubr.bf16.gmra.mxu0 %v6122
      %v6585 = vpop.f32.mrf.mxu0
      %v6586 = vadd.f32 %v6425, %v6585
      %v6587 = vpop.f32.mrf.mxu0
      %v6588 = vpop.f32.mrf.mxu0
      %v6589 = vadd.f32 %v6428, %v6588
      %v6590 = vpop.f32.mrf.mxu0
      %6591 = vmatprep.mubr.bf16.mxu0 0
      %6592 = vmatmul.mubr.bf16.gmra.mxu0 %v6125
      %v6593 = vpop.f32.mrf.mxu0
      %v6594 = vadd.f32 %v6433, %v6593
      %v6595 = vpop.f32.mrf.mxu0
      %v6596 = vpop.f32.mrf.mxu0
      %v6597 = vadd.f32 %v6436, %v6596
      %v6598 = vpop.f32.mrf.mxu0
      %6599 = vmatprep.mubr.bf16.mxu0 0
      %6600 = vmatmul.mubr.bf16.gmra.mxu0 %v6128
      %v6601 = vpop.f32.mrf.mxu0
      %v6602 = vadd.f32 %v6441, %v6601
      %v6603 = vpop.f32.mrf.mxu0
      %v6604 = vpop.f32.mrf.mxu0
      %v6605 = vadd.f32 %v6444, %v6604
      %v6606 = vpop.f32.mrf.mxu0
      %6607 = vmatprep.mubr.bf16.mxu0 0
      %6608 = vmatmul.mubr.bf16.gmra.mxu0 %v6131
      %v6609 = vpop.f32.mrf.mxu0
      %v6610 = vadd.f32 %v6449, %v6609
      %v6611 = vpop.f32.mrf.mxu0
      %v6612 = vpop.f32.mrf.mxu0
      %v6613 = vadd.f32 %v6452, %v6612
      %v6614 = vpop.f32.mrf.mxu0
      %6615 = vmatprep.mubr.bf16.mxu0 0
      %6616 = vmatmul.mubr.bf16.gmra.mxu0 %v6134
      %v6617 = vpop.f32.mrf.mxu0
      %v6618 = vadd.f32 %v6457, %v6617
      %v6619 = vpop.f32.mrf.mxu0
      %v6620 = vpop.f32.mrf.mxu0
      %v6621 = vadd.f32 %v6460, %v6620
      %v6622 = vpop.f32.mrf.mxu0
      %6623 = vmatprep.mubr.bf16.mxu0 0
      %6624 = vmatmul.mubr.bf16.gmra.mxu0 %v6137
      %v6625 = vpop.f32.mrf.mxu0
      %v6626 = vadd.f32 %v6465, %v6625
      %v6627 = vpop.f32.mrf.mxu0
      %v6628 = vpop.f32.mrf.mxu0
      %v6629 = vadd.f32 %v6468, %v6628
      %v6630 = vpop.f32.mrf.mxu0
      %6631 = vmatprep.mubr.bf16.mxu0 0
      %6632 = vmatmul.mubr.bf16.gmra.mxu0 %v6140
      %v6633 = vpop.f32.mrf.mxu0
      %v6634 = vadd.f32 %v6473, %v6633
      %v6635 = vpop.f32.mrf.mxu0
      %v6636 = vpop.f32.mrf.mxu0
      %v6637 = vadd.f32 %v6476, %v6636
      %v6638 = vpop.f32.mrf.mxu0
      %6639 = vmatprep.mubr.bf16.mxu0 0
      %6640 = vmatmul.mubr.bf16.gmra.mxu0 %v6143
      %v6641 = vpop.f32.mrf.mxu0
      %v6642 = vadd.f32 %v6481, %v6641
      %v6643 = vpop.f32.mrf.mxu0
      %v6644 = vpop.f32.mrf.mxu0
      %v6645 = vadd.f32 %v6484, %v6644
      %v6646 = vpop.f32.mrf.mxu0
      %6647 = vmatprep.mubr.bf16.mxu0 0
      %6648 = vmatmul.mubr.bf16.gmra.mxu0 %v6146
      %v6649 = vpop.f32.mrf.mxu0
      %v6650 = vadd.f32 %v6489, %v6649
      %v6651 = vpop.f32.mrf.mxu0
      %v6652 = vpop.f32.mrf.mxu0
      %v6653 = vadd.f32 %v6492, %v6652
      %v6654 = vpop.f32.mrf.mxu0
      %6655 = vmatprep.mubr.bf16.mxu0 0
      %6656 = vmatmul.mubr.bf16.gmra.mxu0 %v6149
      %v6657 = vpop.f32.mrf.mxu0
      %v6658 = vadd.f32 %v6497, %v6657
      %v6659 = vpop.f32.mrf.mxu0
      %v6660 = vpop.f32.mrf.mxu0
      %v6661 = vadd.f32 %v6500, %v6660
      %v6662 = vpop.f32.mrf.mxu0
      %6663 = vdwg.mxu0
      %v6664 = vadd.f32 %v5784, %v6538
      %v6665 = vadd.f32 %v5787, %v6541
      %v6666 = vadd.f32 %v5792, %v6546
      %v6667 = vadd.f32 %v5795, %v6549
      %v6668 = vadd.f32 %v5800, %v6554
      %v6669 = vadd.f32 %v5803, %v6557
      %v6670 = vadd.f32 %v5808, %v6562
      %v6671 = vadd.f32 %v5811, %v6565
      %v6672 = vadd.f32 %v5816, %v6570
      %v6673 = vadd.f32 %v5819, %v6573
      %v6674 = vadd.f32 %v5824, %v6578
      %v6675 = vadd.f32 %v5827, %v6581
      %v6676 = vadd.f32 %v5832, %v6586
      %v6677 = vadd.f32 %v5835, %v6589
      %v6678 = vadd.f32 %v5840, %v6594
      %v6679 = vadd.f32 %v5843, %v6597
      %v6680 = vadd.f32 %v5848, %v6602
      %v6681 = vadd.f32 %v5851, %v6605
      %v6682 = vadd.f32 %v5856, %v6610
      %v6683 = vadd.f32 %v5859, %v6613
      %v6684 = vadd.f32 %v5864, %v6618
      %v6685 = vadd.f32 %v5867, %v6621
      %v6686 = vadd.f32 %v5872, %v6626
      %v6687 = vadd.f32 %v5875, %v6629
      %v6688 = vadd.f32 %v5880, %v6634
      %v6689 = vadd.f32 %v5883, %v6637
      %v6690 = vadd.f32 %v5888, %v6642
      %v6691 = vadd.f32 %v5891, %v6645
      %v6692 = vadd.f32 %v5896, %v6650
      %v6693 = vadd.f32 %v5899, %v6653
      %v6694 = vadd.f32 %v5904, %v6658
      %v6695 = vadd.f32 %v5907, %v6661
      %v6696 = vrot.slane %v4498, 2
      %v6697 = vrot.slane %v4499, 2
      %v6698 = vrot.slane %v4500, 2
      %v6699 = vrot.slane %v4501, 2
      %v6700 = vrot.slane %v4502, 2
      %v6701 = vrot.slane %v4503, 2
      %v6702 = vrot.slane %v4504, 2
      %v6703 = vrot.slane %v4505, 2
      %v6704 = vrot.slane %v4506, 2
      %v6705 = vrot.slane %v4507, 2
      %v6706 = vrot.slane %v4508, 2
      %v6707 = vrot.slane %v4509, 2
      %v6708 = vrot.slane %v4510, 2
      %v6709 = vrot.slane %v4511, 2
      %v6710 = vrot.slane %v4512, 2
      %v6711 = vrot.slane %v4513, 2
      %v6712 = vrot.slane %v4514, 2
      %v6713 = vrot.slane %v4515, 2
      %v6714 = vrot.slane %v4516, 2
      %v6715 = vrot.slane %v4517, 2
      %v6716 = vrot.slane %v4518, 2
      %v6717 = vrot.slane %v4519, 2
      %v6718 = vrot.slane %v4520, 2
      %v6719 = vrot.slane %v4521, 2
      %v6720 = vrot.slane %v4522, 2
      %v6721 = vrot.slane %v4523, 2
      %v6722 = vrot.slane %v4524, 2
      %v6723 = vrot.slane %v4525, 2
      %v6724 = vrot.slane %v4526, 2
      %v6725 = vrot.slane %v4527, 2
      %v6726 = vrot.slane %v4528, 2
      %v6727 = vrot.slane %v4529, 2
      %v6728 = vrot.slane %v4530, 2
      %v6729 = vrot.slane %v4531, 2
      %v6730 = vrot.slane %v4532, 2
      %v6731 = vrot.slane %v4533, 2
      %v6732 = vrot.slane %v4534, 2
      %v6733 = vrot.slane %v4535, 2
      %v6734 = vrot.slane %v4536, 2
      %v6735 = vrot.slane %v4537, 2
      %v6736 = vrot.slane %v4538, 2
      %v6737 = vrot.slane %v4539, 2
      %v6738 = vrot.slane %v4540, 2
      %v6739 = vrot.slane %v4541, 2
      %v6740 = vrot.slane %v4542, 2
      %v6741 = vrot.slane %v4543, 2
      %v6742 = vrot.slane %v4544, 2
      %v6743 = vrot.slane %v4545, 2
      %v6744 = vrot.slane %v4546, 2
      %v6745 = vrot.slane %v4547, 2
      %v6746 = vrot.slane %v4548, 2
      %v6747 = vrot.slane %v4549, 2
      %v6748 = vrot.slane %v4550, 2
      %v6749 = vrot.slane %v4551, 2
      %v6750 = vrot.slane %v4552, 2
      %v6751 = vrot.slane %v4553, 2
      %v6752 = vrot.slane %v4554, 2
      %v6753 = vrot.slane %v4555, 2
      %v6754 = vrot.slane %v4556, 2
      %v6755 = vrot.slane %v4557, 2
      %v6756 = vrot.slane %v4558, 2
      %v6757 = vrot.slane %v4559, 2
      %v6758 = vrot.slane %v4560, 2
      %v6759 = vrot.slane %v4561, 2
      %v6760 = vrot.slane %v4562, 2
      %v6761 = vrot.slane %v4563, 2
      %v6762 = vrot.slane %v4564, 2
      %v6763 = vrot.slane %v4565, 2
      %v6764 = vrot.slane %v4566, 2
      %v6765 = vrot.slane %v4567, 2
      %v6766 = vrot.slane %v4568, 2
      %v6767 = vrot.slane %v4569, 2
      %v6768 = vrot.slane %v4570, 2
      %v6769 = vrot.slane %v4571, 2
      %v6770 = vrot.slane %v4572, 2
      %v6771 = vrot.slane %v4573, 2
      %v6772 = vrot.slane %v4574, 2
      %v6773 = vrot.slane %v4575, 2
      %v6774 = vrot.slane %v4576, 2
      %v6775 = vrot.slane %v4577, 2
      %v6776 = vrot.slane %v4578, 2
      %v6777 = vrot.slane %v4579, 2
      %v6778 = vrot.slane %v4580, 2
      %v6779 = vrot.slane %v4581, 2
      %v6780 = vrot.slane %v4582, 2
      %v6781 = vrot.slane %v4583, 2
      %v6782 = vrot.slane %v4584, 2
      %v6783 = vrot.slane %v4585, 2
      %v6784 = vrot.slane %v4586, 2
      %v6785 = vrot.slane %v4587, 2
      %v6786 = vrot.slane %v4588, 2
      %v6787 = vrot.slane %v4589, 2
      %v6788 = vrot.slane %v4590, 2
      %v6789 = vrot.slane %v4591, 2
      %v6790 = vrot.slane %v4592, 2
      %v6791 = vrot.slane %v4593, 2
      %v6792 = vsel %vm1435, %v6786, %v6789
      %v6793 = vsel %vm1435, %v6787, %v6790
      %v6794 = vsel %vm1435, %v6788, %v6791
      %v6795 = vsel %vm1435, %v6783, %v6786
      %v6796 = vsel %vm1435, %v6784, %v6787
      %v6797 = vsel %vm1435, %v6785, %v6788
      %v6798 = vsel %vm1435, %v6780, %v6783
      %v6799 = vsel %vm1435, %v6781, %v6784
      %v6800 = vsel %vm1435, %v6782, %v6785
      %v6801 = vsel %vm1435, %v6777, %v6780
      %v6802 = vsel %vm1435, %v6778, %v6781
      %v6803 = vsel %vm1435, %v6779, %v6782
      %v6804 = vsel %vm1435, %v6774, %v6777
      %v6805 = vsel %vm1435, %v6775, %v6778
      %v6806 = vsel %vm1435, %v6776, %v6779
      %v6807 = vsel %vm1435, %v6771, %v6774
      %v6808 = vsel %vm1435, %v6772, %v6775
      %v6809 = vsel %vm1435, %v6773, %v6776
      %v6810 = vsel %vm1435, %v6768, %v6771
      %v6811 = vsel %vm1435, %v6769, %v6772
      %v6812 = vsel %vm1435, %v6770, %v6773
      %v6813 = vsel %vm1435, %v6765, %v6768
      %v6814 = vsel %vm1435, %v6766, %v6769
      %v6815 = vsel %vm1435, %v6767, %v6770
      %v6816 = vsel %vm1435, %v6762, %v6765
      %v6817 = vsel %vm1435, %v6763, %v6766
      %v6818 = vsel %vm1435, %v6764, %v6767
      %v6819 = vsel %vm1435, %v6759, %v6762
      %v6820 = vsel %vm1435, %v6760, %v6763
      %v6821 = vsel %vm1435, %v6761, %v6764
      %v6822 = vsel %vm1435, %v6756, %v6759
      %v6823 = vsel %vm1435, %v6757, %v6760
      %v6824 = vsel %vm1435, %v6758, %v6761
      %v6825 = vsel %vm1435, %v6753, %v6756
      %v6826 = vsel %vm1435, %v6754, %v6757
      %v6827 = vsel %vm1435, %v6755, %v6758
      %v6828 = vsel %vm1435, %v6750, %v6753
      %v6829 = vsel %vm1435, %v6751, %v6754
      %v6830 = vsel %vm1435, %v6752, %v6755
      %v6831 = vsel %vm1435, %v6747, %v6750
      %v6832 = vsel %vm1435, %v6748, %v6751
      %v6833 = vsel %vm1435, %v6749, %v6752
      %v6834 = vsel %vm1435, %v6744, %v6747
      %v6835 = vsel %vm1435, %v6745, %v6748
      %v6836 = vsel %vm1435, %v6746, %v6749
      %v6837 = vsel %vm1435, %v6741, %v6744
      %v6838 = vsel %vm1435, %v6742, %v6745
      %v6839 = vsel %vm1435, %v6743, %v6746
      %v6840 = vsel %vm1435, %v6738, %v6741
      %v6841 = vsel %vm1435, %v6739, %v6742
      %v6842 = vsel %vm1435, %v6740, %v6743
      %v6843 = vsel %vm1435, %v6735, %v6738
      %v6844 = vsel %vm1435, %v6736, %v6739
      %v6845 = vsel %vm1435, %v6737, %v6740
      %v6846 = vsel %vm1435, %v6732, %v6735
      %v6847 = vsel %vm1435, %v6733, %v6736
      %v6848 = vsel %vm1435, %v6734, %v6737
      %v6849 = vsel %vm1435, %v6729, %v6732
      %v6850 = vsel %vm1435, %v6730, %v6733
      %v6851 = vsel %vm1435, %v6731, %v6734
      %v6852 = vsel %vm1435, %v6726, %v6729
      %v6853 = vsel %vm1435, %v6727, %v6730
      %v6854 = vsel %vm1435, %v6728, %v6731
      %v6855 = vsel %vm1435, %v6723, %v6726
      %v6856 = vsel %vm1435, %v6724, %v6727
      %v6857 = vsel %vm1435, %v6725, %v6728
      %v6858 = vsel %vm1435, %v6720, %v6723
      %v6859 = vsel %vm1435, %v6721, %v6724
      %v6860 = vsel %vm1435, %v6722, %v6725
      %v6861 = vsel %vm1435, %v6717, %v6720
      %v6862 = vsel %vm1435, %v6718, %v6721
      %v6863 = vsel %vm1435, %v6719, %v6722
      %v6864 = vsel %vm1435, %v6714, %v6717
      %v6865 = vsel %vm1435, %v6715, %v6718
      %v6866 = vsel %vm1435, %v6716, %v6719
      %v6867 = vsel %vm1435, %v6711, %v6714
      %v6868 = vsel %vm1435, %v6712, %v6715
      %v6869 = vsel %vm1435, %v6713, %v6716
      %v6870 = vsel %vm1435, %v6708, %v6711
      %v6871 = vsel %vm1435, %v6709, %v6712
      %v6872 = vsel %vm1435, %v6710, %v6713
      %v6873 = vsel %vm1435, %v6705, %v6708
      %v6874 = vsel %vm1435, %v6706, %v6709
      %v6875 = vsel %vm1435, %v6707, %v6710
      %v6876 = vsel %vm1435, %v6702, %v6705
      %v6877 = vsel %vm1435, %v6703, %v6706
      %v6878 = vsel %vm1435, %v6704, %v6707
      %v6879 = vsel %vm1435, %v6699, %v6702
      %v6880 = vsel %vm1435, %v6700, %v6703
      %v6881 = vsel %vm1435, %v6701, %v6704
      %v6882 = vsel %vm1435, %v6696, %v6699
      %v6883 = vsel %vm1435, %v6697, %v6700
      %v6884 = vsel %vm1435, %v6698, %v6701
      %v6885 = vsel %vm1435, %v6789, %v6696
      %v6886 = vsel %vm1435, %v6790, %v6697
      %v6887 = vsel %vm1435, %v6791, %v6698
      %v6888 = vpack.c.bf16 %v6879, %v6882
      %v6889 = vpack.c.bf16 %v6880, %v6883
      %v6890 = vpack.c.bf16 %v6881, %v6884
      %v6891 = vpack.c.bf16 %v6873, %v6876
      %v6892 = vpack.c.bf16 %v6874, %v6877
      %v6893 = vpack.c.bf16 %v6875, %v6878
      %v6894 = vpack.c.bf16 %v6867, %v6870
      %v6895 = vpack.c.bf16 %v6868, %v6871
      %v6896 = vpack.c.bf16 %v6869, %v6872
      %v6897 = vpack.c.bf16 %v6861, %v6864
      %v6898 = vpack.c.bf16 %v6862, %v6865
      %v6899 = vpack.c.bf16 %v6863, %v6866
      %v6900 = vpack.c.bf16 %v6855, %v6858
      %v6901 = vpack.c.bf16 %v6856, %v6859
      %v6902 = vpack.c.bf16 %v6857, %v6860
      %v6903 = vpack.c.bf16 %v6849, %v6852
      %v6904 = vpack.c.bf16 %v6850, %v6853
      %v6905 = vpack.c.bf16 %v6851, %v6854
      %v6906 = vpack.c.bf16 %v6843, %v6846
      %v6907 = vpack.c.bf16 %v6844, %v6847
      %v6908 = vpack.c.bf16 %v6845, %v6848
      %v6909 = vpack.c.bf16 %v6837, %v6840
      %v6910 = vpack.c.bf16 %v6838, %v6841
      %v6911 = vpack.c.bf16 %v6839, %v6842
      %v6912 = vpack.c.bf16 %v6831, %v6834
      %v6913 = vpack.c.bf16 %v6832, %v6835
      %v6914 = vpack.c.bf16 %v6833, %v6836
      %v6915 = vpack.c.bf16 %v6825, %v6828
      %v6916 = vpack.c.bf16 %v6826, %v6829
      %v6917 = vpack.c.bf16 %v6827, %v6830
      %v6918 = vpack.c.bf16 %v6819, %v6822
      %v6919 = vpack.c.bf16 %v6820, %v6823
      %v6920 = vpack.c.bf16 %v6821, %v6824
      %v6921 = vpack.c.bf16 %v6813, %v6816
      %v6922 = vpack.c.bf16 %v6814, %v6817
      %v6923 = vpack.c.bf16 %v6815, %v6818
      %v6924 = vpack.c.bf16 %v6807, %v6810
      %v6925 = vpack.c.bf16 %v6808, %v6811
      %v6926 = vpack.c.bf16 %v6809, %v6812
      %v6927 = vpack.c.bf16 %v6801, %v6804
      %v6928 = vpack.c.bf16 %v6802, %v6805
      %v6929 = vpack.c.bf16 %v6803, %v6806
      %v6930 = vpack.c.bf16 %v6795, %v6798
      %v6931 = vpack.c.bf16 %v6796, %v6799
      %v6932 = vpack.c.bf16 %v6797, %v6800
      %v6933 = vpack.c.bf16 %v6885, %v6792
      %v6934 = vpack.c.bf16 %v6886, %v6793
      %v6935 = vpack.c.bf16 %v6887, %v6794
      %v6936 = vld [vmem:[%s1 + $0x240] sm:$0xf]
      %v6937 = vld [vmem:[%s1 + $0x244] sm:$0xf]
      %v6938 = vld [vmem:[%s1 + $0x248] sm:$0xf]
      %v6939 = vld [vmem:[%s1 + $0x24c] sm:$0xf]
      %v6940 = vld [vmem:[%s1 + $0x250] sm:$0xf]
      %v6941 = vld [vmem:[%s1 + $0x254] sm:$0xf]
      %v6942 = vld [vmem:[%s1 + $0x258] sm:$0xf]
      %v6943 = vld [vmem:[%s1 + $0x25c] sm:$0xf]
      %v6944 = vld [vmem:[%s1 + $0x260] sm:$0xf]
      %v6945 = vld [vmem:[%s1 + $0x264] sm:$0xf]
      %v6946 = vld [vmem:[%s1 + $0x268] sm:$0xf]
      %v6947 = vld [vmem:[%s1 + $0x26c] sm:$0xf]
      %v6948 = vld [vmem:[%s1 + $0x270] sm:$0xf]
      %v6949 = vld [vmem:[%s1 + $0x274] sm:$0xf]
      %v6950 = vld [vmem:[%s1 + $0x278] sm:$0xf]
      %v6951 = vld [vmem:[%s1 + $0x27c] sm:$0xf]
      %v6952 = vld [vmem:[%s1 + $0x280] sm:$0xf]
      %v6953 = vld [vmem:[%s1 + $0x284] sm:$0xf]
      %v6954 = vld [vmem:[%s1 + $0x288] sm:$0xf]
      %v6955 = vld [vmem:[%s1 + $0x28c] sm:$0xf]
      %v6956 = vld [vmem:[%s1 + $0x290] sm:$0xf]
      %v6957 = vld [vmem:[%s1 + $0x294] sm:$0xf]
      %v6958 = vld [vmem:[%s1 + $0x298] sm:$0xf]
      %v6959 = vld [vmem:[%s1 + $0x29c] sm:$0xf]
      %v6960 = vld [vmem:[%s1 + $0x2a0] sm:$0xf]
      %v6961 = vld [vmem:[%s1 + $0x2a4] sm:$0xf]
      %v6962 = vld [vmem:[%s1 + $0x2a8] sm:$0xf]
      %v6963 = vld [vmem:[%s1 + $0x2ac] sm:$0xf]
      %v6964 = vld [vmem:[%s1 + $0x2b0] sm:$0xf]
      %v6965 = vld [vmem:[%s1 + $0x2b4] sm:$0xf]
      %v6966 = vld [vmem:[%s1 + $0x2b8] sm:$0xf]
      %v6967 = vld [vmem:[%s1 + $0x2bc] sm:$0xf]
      %v6968 = vld [vmem:[%s1 + $0x2c0] sm:$0xf]
      %v6969 = vld [vmem:[%s1 + $0x2c4] sm:$0xf]
      %v6970 = vld [vmem:[%s1 + $0x2c8] sm:$0xf]
      %v6971 = vld [vmem:[%s1 + $0x2cc] sm:$0xf]
      %v6972 = vld [vmem:[%s1 + $0x2d0] sm:$0xf]
      %v6973 = vld [vmem:[%s1 + $0x2d4] sm:$0xf]
      %v6974 = vld [vmem:[%s1 + $0x2d8] sm:$0xf]
      %v6975 = vld [vmem:[%s1 + $0x2dc] sm:$0xf]
      %v6976 = vld [vmem:[%s1 + $0x2e0] sm:$0xf]
      %v6977 = vld [vmem:[%s1 + $0x2e4] sm:$0xf]
      %v6978 = vld [vmem:[%s1 + $0x2e8] sm:$0xf]
      %v6979 = vld [vmem:[%s1 + $0x2ec] sm:$0xf]
      %v6980 = vld [vmem:[%s1 + $0x2f0] sm:$0xf]
      %v6981 = vld [vmem:[%s1 + $0x2f4] sm:$0xf]
      %v6982 = vld [vmem:[%s1 + $0x2f8] sm:$0xf]
      %v6983 = vld [vmem:[%s1 + $0x2fc] sm:$0xf]
      %v7032 = vunpack.c.l.b16 %v6936
      %v7033 = vunpack.c.l.b16 %v6937
      %v7034 = vunpack.c.l.b16 %v6938
      %v7035 = vunpack.c.l.b16 %v6939
      %v7036 = vunpack.c.l.b16 %v6940
      %v7037 = vunpack.c.l.b16 %v6941
      %v7038 = vunpack.c.l.b16 %v6942
      %v7039 = vunpack.c.l.b16 %v6943
      %v7040 = vunpack.c.l.b16 %v6944
      %v7041 = vunpack.c.l.b16 %v6945
      %v7042 = vunpack.c.l.b16 %v6946
      %v7043 = vunpack.c.l.b16 %v6947
      %v7044 = vunpack.c.l.b16 %v6948
      %v7045 = vunpack.c.l.b16 %v6949
      %v7046 = vunpack.c.l.b16 %v6950
      %v7047 = vunpack.c.l.b16 %v6951
      %v7048 = vunpack.c.l.b16 %v6952
      %v7049 = vunpack.c.l.b16 %v6953
      %v7050 = vunpack.c.l.b16 %v6954
      %v7051 = vunpack.c.l.b16 %v6955
      %v7052 = vunpack.c.l.b16 %v6956
      %v7053 = vunpack.c.l.b16 %v6957
      %v7054 = vunpack.c.l.b16 %v6958
      %v7055 = vunpack.c.l.b16 %v6959
      %v7056 = vunpack.c.l.b16 %v6960
      %v7057 = vunpack.c.l.b16 %v6961
      %v7058 = vunpack.c.l.b16 %v6962
      %v7059 = vunpack.c.l.b16 %v6963
      %v7060 = vunpack.c.l.b16 %v6964
      %v7061 = vunpack.c.l.b16 %v6965
      %v7062 = vunpack.c.l.b16 %v6966
      %v7063 = vunpack.c.l.b16 %v6967
      %v7064 = vunpack.c.l.b16 %v6968
      %v7065 = vunpack.c.l.b16 %v6969
      %v7066 = vunpack.c.l.b16 %v6970
      %v7067 = vunpack.c.l.b16 %v6971
      %v7068 = vunpack.c.l.b16 %v6972
      %v7069 = vunpack.c.l.b16 %v6973
      %v7070 = vunpack.c.l.b16 %v6974
      %v7071 = vunpack.c.l.b16 %v6975
      %v7072 = vunpack.c.l.b16 %v6976
      %v7073 = vunpack.c.l.b16 %v6977
      %v7074 = vunpack.c.l.b16 %v6978
      %v7075 = vunpack.c.l.b16 %v6979
      %v7076 = vunpack.c.l.b16 %v6980
      %v7077 = vunpack.c.l.b16 %v6981
      %v7078 = vunpack.c.l.b16 %v6982
      %v7079 = vunpack.c.l.b16 %v6983
      %v7080 = vpack.c.b16 %v7033, %v7032
      %v7081 = vpack.c.b16 %v7035, %v7034
      %v7082 = vpack.c.b16 %v7037, %v7036
      %v7083 = vpack.c.b16 %v7039, %v7038
      %v7084 = vpack.c.b16 %v7041, %v7040
      %v7085 = vpack.c.b16 %v7043, %v7042
      %v7086 = vpack.c.b16 %v7045, %v7044
      %v7087 = vpack.c.b16 %v7047, %v7046
      %v7088 = vpack.c.b16 %v7049, %v7048
      %v7089 = vpack.c.b16 %v7051, %v7050
      %v7090 = vpack.c.b16 %v7053, %v7052
      %v7091 = vpack.c.b16 %v7055, %v7054
      %v7092 = vpack.c.b16 %v7057, %v7056
      %v7093 = vpack.c.b16 %v7059, %v7058
      %v7094 = vpack.c.b16 %v7061, %v7060
      %v7095 = vpack.c.b16 %v7063, %v7062
      %v7096 = vpack.c.b16 %v7065, %v7064
      %v7097 = vpack.c.b16 %v7067, %v7066
      %v7098 = vpack.c.b16 %v7069, %v7068
      %v7099 = vpack.c.b16 %v7071, %v7070
      %v7100 = vpack.c.b16 %v7073, %v7072
      %v7101 = vpack.c.b16 %v7075, %v7074
      %v7102 = vpack.c.b16 %v7077, %v7076
      %v7103 = vpack.c.b16 %v7079, %v7078
      %7128 = vmatprep.subr.bf16.mxu0 0
      %7129 = vmatpush1.bf16.msra.mxu0 %v7087
      %7130 = vmatprep.subr.bf16.mxu0 0
      %7131 = vmatpush1.bf16.msra.mxu0 %v7086
      %7132 = vmatprep.subr.bf16.mxu0 0
      %7133 = vmatpush1.bf16.msra.mxu0 %v7085
      %7134 = vmatprep.subr.bf16.mxu0 0
      %7135 = vmatpush1.bf16.msra.mxu0 %v7084
      %7136 = vmatprep.subr.bf16.mxu0 0
      %7137 = vmatpush1.bf16.msra.mxu0 %v7083
      %7138 = vmatprep.subr.bf16.mxu0 0
      %7139 = vmatpush1.bf16.msra.mxu0 %v7082
      %7140 = vmatprep.subr.bf16.mxu0 0
      %7141 = vmatpush1.bf16.msra.mxu0 %v7081
      %7142 = vmatprep.subr.bf16.mxu0 0
      %7143 = vmatpush1.bf16.msra.mxu0 %v7080
      %7144 = vmatprep.subr.bf16.mxu0 0
      %7145 = vmatpush2.bf16.msra.mxu0 %v7095
      %7146 = vmatprep.subr.bf16.mxu0 0
      %7147 = vmatpush2.bf16.msra.mxu0 %v7094
      %7148 = vmatprep.subr.bf16.mxu0 0
      %7149 = vmatpush2.bf16.msra.mxu0 %v7093
      %7150 = vmatprep.subr.bf16.mxu0 0
      %7151 = vmatpush2.bf16.msra.mxu0 %v7092
      %7152 = vmatprep.subr.bf16.mxu0 0
      %7153 = vmatpush2.bf16.msra.mxu0 %v7091
      %7154 = vmatprep.subr.bf16.mxu0 0
      %7155 = vmatpush2.bf16.msra.mxu0 %v7090
      %7156 = vmatprep.subr.bf16.mxu0 0
      %7157 = vmatpush2.bf16.msra.mxu0 %v7089
      %7158 = vmatprep.subr.bf16.mxu0 0
      %7159 = vmatpush2.bf16.msra.mxu0 %v7088
      %7160 = vmatprep.mubr.bf16.mxu0 %v6889
      %7161 = vmatmul.mubr.bf16.gmra.mxu0 %v6888
      %v7162 = vpop.f32.mrf.mxu0
      %v7163 = vadd.f32 0.0, %v7162
      %v7164 = vpop.f32.mrf.mxu0
      %v7165 = vpop.f32.mrf.mxu0
      %v7166 = vadd.f32 0.0, %v7165
      %v7167 = vpop.f32.mrf.mxu0
      %7168 = vmatprep.mubr.bf16.mxu0 %v6892
      %7169 = vmatmul.mubr.bf16.gmra.mxu0 %v6891
      %v7170 = vpop.f32.mrf.mxu0
      %v7171 = vadd.f32 0.0, %v7170
      %v7172 = vpop.f32.mrf.mxu0
      %v7173 = vpop.f32.mrf.mxu0
      %v7174 = vadd.f32 0.0, %v7173
      %v7175 = vpop.f32.mrf.mxu0
      %7176 = vmatprep.mubr.bf16.mxu0 %v6895
      %7177 = vmatmul.mubr.bf16.gmra.mxu0 %v6894
      %v7178 = vpop.f32.mrf.mxu0
      %v7179 = vadd.f32 0.0, %v7178
      %v7180 = vpop.f32.mrf.mxu0
      %v7181 = vpop.f32.mrf.mxu0
      %v7182 = vadd.f32 0.0, %v7181
      %v7183 = vpop.f32.mrf.mxu0
      %7184 = vmatprep.mubr.bf16.mxu0 %v6898
      %7185 = vmatmul.mubr.bf16.gmra.mxu0 %v6897
      %v7186 = vpop.f32.mrf.mxu0
      %v7187 = vadd.f32 0.0, %v7186
      %v7188 = vpop.f32.mrf.mxu0
      %v7189 = vpop.f32.mrf.mxu0
      %v7190 = vadd.f32 0.0, %v7189
      %v7191 = vpop.f32.mrf.mxu0
      %7192 = vmatprep.mubr.bf16.mxu0 %v6901
      %7193 = vmatmul.mubr.bf16.gmra.mxu0 %v6900
      %v7194 = vpop.f32.mrf.mxu0
      %v7195 = vadd.f32 0.0, %v7194
      %v7196 = vpop.f32.mrf.mxu0
      %v7197 = vpop.f32.mrf.mxu0
      %v7198 = vadd.f32 0.0, %v7197
      %v7199 = vpop.f32.mrf.mxu0
      %7200 = vmatprep.mubr.bf16.mxu0 %v6904
      %7201 = vmatmul.mubr.bf16.gmra.mxu0 %v6903
      %v7202 = vpop.f32.mrf.mxu0
      %v7203 = vadd.f32 0.0, %v7202
      %v7204 = vpop.f32.mrf.mxu0
      %v7205 = vpop.f32.mrf.mxu0
      %v7206 = vadd.f32 0.0, %v7205
      %v7207 = vpop.f32.mrf.mxu0
      %7208 = vmatprep.mubr.bf16.mxu0 %v6907
      %7209 = vmatmul.mubr.bf16.gmra.mxu0 %v6906
      %v7210 = vpop.f32.mrf.mxu0
      %v7211 = vadd.f32 0.0, %v7210
      %v7212 = vpop.f32.mrf.mxu0
      %v7213 = vpop.f32.mrf.mxu0
      %v7214 = vadd.f32 0.0, %v7213
      %v7215 = vpop.f32.mrf.mxu0
      %7216 = vmatprep.mubr.bf16.mxu0 %v6910
      %7217 = vmatmul.mubr.bf16.gmra.mxu0 %v6909
      %v7218 = vpop.f32.mrf.mxu0
      %v7219 = vadd.f32 0.0, %v7218
      %v7220 = vpop.f32.mrf.mxu0
      %v7221 = vpop.f32.mrf.mxu0
      %v7222 = vadd.f32 0.0, %v7221
      %v7223 = vpop.f32.mrf.mxu0
      %7224 = vmatprep.mubr.bf16.mxu0 %v6913
      %7225 = vmatmul.mubr.bf16.gmra.mxu0 %v6912
      %v7226 = vpop.f32.mrf.mxu0
      %v7227 = vadd.f32 0.0, %v7226
      %v7228 = vpop.f32.mrf.mxu0
      %v7229 = vpop.f32.mrf.mxu0
      %v7230 = vadd.f32 0.0, %v7229
      %v7231 = vpop.f32.mrf.mxu0
      %7232 = vmatprep.mubr.bf16.mxu0 %v6916
      %7233 = vmatmul.mubr.bf16.gmra.mxu0 %v6915
      %v7234 = vpop.f32.mrf.mxu0
      %v7235 = vadd.f32 0.0, %v7234
      %v7236 = vpop.f32.mrf.mxu0
      %v7237 = vpop.f32.mrf.mxu0
      %v7238 = vadd.f32 0.0, %v7237
      %v7239 = vpop.f32.mrf.mxu0
      %7240 = vmatprep.mubr.bf16.mxu0 %v6919
      %7241 = vmatmul.mubr.bf16.gmra.mxu0 %v6918
      %v7242 = vpop.f32.mrf.mxu0
      %v7243 = vadd.f32 0.0, %v7242
      %v7244 = vpop.f32.mrf.mxu0
      %v7245 = vpop.f32.mrf.mxu0
      %v7246 = vadd.f32 0.0, %v7245
      %v7247 = vpop.f32.mrf.mxu0
      %7248 = vmatprep.mubr.bf16.mxu0 %v6922
      %7249 = vmatmul.mubr.bf16.gmra.mxu0 %v6921
      %v7250 = vpop.f32.mrf.mxu0
      %v7251 = vadd.f32 0.0, %v7250
      %v7252 = vpop.f32.mrf.mxu0
      %v7253 = vpop.f32.mrf.mxu0
      %v7254 = vadd.f32 0.0, %v7253
      %v7255 = vpop.f32.mrf.mxu0
      %7256 = vmatprep.mubr.bf16.mxu0 %v6925
      %7257 = vmatmul.mubr.bf16.gmra.mxu0 %v6924
      %v7258 = vpop.f32.mrf.mxu0
      %v7259 = vadd.f32 0.0, %v7258
      %v7260 = vpop.f32.mrf.mxu0
      %v7261 = vpop.f32.mrf.mxu0
      %v7262 = vadd.f32 0.0, %v7261
      %v7263 = vpop.f32.mrf.mxu0
      %7264 = vmatprep.mubr.bf16.mxu0 %v6928
      %7265 = vmatmul.mubr.bf16.gmra.mxu0 %v6927
      %v7266 = vpop.f32.mrf.mxu0
      %v7267 = vadd.f32 0.0, %v7266
      %v7268 = vpop.f32.mrf.mxu0
      %v7269 = vpop.f32.mrf.mxu0
      %v7270 = vadd.f32 0.0, %v7269
      %v7271 = vpop.f32.mrf.mxu0
      %7272 = vmatprep.mubr.bf16.mxu0 %v6931
      %7273 = vmatmul.mubr.bf16.gmra.mxu0 %v6930
      %v7274 = vpop.f32.mrf.mxu0
      %v7275 = vadd.f32 0.0, %v7274
      %v7276 = vpop.f32.mrf.mxu0
      %v7277 = vpop.f32.mrf.mxu0
      %v7278 = vadd.f32 0.0, %v7277
      %v7279 = vpop.f32.mrf.mxu0
      %7280 = vmatprep.mubr.bf16.mxu0 %v6934
      %7281 = vmatmul.mubr.bf16.gmra.mxu0 %v6933
      %v7282 = vpop.f32.mrf.mxu0
      %v7283 = vadd.f32 0.0, %v7282
      %v7284 = vpop.f32.mrf.mxu0
      %v7285 = vpop.f32.mrf.mxu0
      %v7286 = vadd.f32 0.0, %v7285
      %v7287 = vpop.f32.mrf.mxu0
      %7288 = vdwg.mxu0
      %7289 = vmatprep.subr.bf16.mxu0 0
      %7290 = vmatpush1.bf16.msra.mxu0 %v7103
      %7291 = vmatprep.subr.bf16.mxu0 0
      %7292 = vmatpush1.bf16.msra.mxu0 %v7102
      %7293 = vmatprep.subr.bf16.mxu0 0
      %7294 = vmatpush1.bf16.msra.mxu0 %v7101
      %7295 = vmatprep.subr.bf16.mxu0 0
      %7296 = vmatpush1.bf16.msra.mxu0 %v7100
      %7297 = vmatprep.subr.bf16.mxu0 0
      %7298 = vmatpush1.bf16.msra.mxu0 %v7099
      %7299 = vmatprep.subr.bf16.mxu0 0
      %7300 = vmatpush1.bf16.msra.mxu0 %v7098
      %7301 = vmatprep.subr.bf16.mxu0 0
      %7302 = vmatpush1.bf16.msra.mxu0 %v7097
      %7303 = vmatprep.subr.bf16.mxu0 0
      %7304 = vmatpush1.bf16.msra.mxu0 %v7096
      %7305 = vmatprep.subr.bf16.mxu0 0
      %7306 = vmatpush2.bf16.msra.mxu0 0
      %7307 = vmatprep.subr.bf16.mxu0 0
      %7308 = vmatpush2.bf16.msra.mxu0 0
      %7309 = vmatprep.subr.bf16.mxu0 0
      %7310 = vmatpush2.bf16.msra.mxu0 0
      %7311 = vmatprep.subr.bf16.mxu0 0
      %7312 = vmatpush2.bf16.msra.mxu0 0
      %7313 = vmatprep.subr.bf16.mxu0 0
      %7314 = vmatpush2.bf16.msra.mxu0 0
      %7315 = vmatprep.subr.bf16.mxu0 0
      %7316 = vmatpush2.bf16.msra.mxu0 0
      %7317 = vmatprep.subr.bf16.mxu0 0
      %7318 = vmatpush2.bf16.msra.mxu0 0
      %7319 = vmatprep.subr.bf16.mxu0 0
      %7320 = vmatpush2.bf16.msra.mxu0 0
      %7321 = vmatprep.mubr.bf16.mxu0 0
      %7322 = vmatmul.mubr.bf16.gmra.mxu0 %v6890
      %v7323 = vpop.f32.mrf.mxu0
      %v7324 = vadd.f32 %v7163, %v7323
      %v7325 = vpop.f32.mrf.mxu0
      %v7326 = vpop.f32.mrf.mxu0
      %v7327 = vadd.f32 %v7166, %v7326
      %v7328 = vpop.f32.mrf.mxu0
      %7329 = vmatprep.mubr.bf16.mxu0 0
      %7330 = vmatmul.mubr.bf16.gmra.mxu0 %v6893
      %v7331 = vpop.f32.mrf.mxu0
      %v7332 = vadd.f32 %v7171, %v7331
      %v7333 = vpop.f32.mrf.mxu0
      %v7334 = vpop.f32.mrf.mxu0
      %v7335 = vadd.f32 %v7174, %v7334
      %v7336 = vpop.f32.mrf.mxu0
      %7337 = vmatprep.mubr.bf16.mxu0 0
      %7338 = vmatmul.mubr.bf16.gmra.mxu0 %v6896
      %v7339 = vpop.f32.mrf.mxu0
      %v7340 = vadd.f32 %v7179, %v7339
      %v7341 = vpop.f32.mrf.mxu0
      %v7342 = vpop.f32.mrf.mxu0
      %v7343 = vadd.f32 %v7182, %v7342
      %v7344 = vpop.f32.mrf.mxu0
      %7345 = vmatprep.mubr.bf16.mxu0 0
      %7346 = vmatmul.mubr.bf16.gmra.mxu0 %v6899
      %v7347 = vpop.f32.mrf.mxu0
      %v7348 = vadd.f32 %v7187, %v7347
      %v7349 = vpop.f32.mrf.mxu0
      %v7350 = vpop.f32.mrf.mxu0
      %v7351 = vadd.f32 %v7190, %v7350
      %v7352 = vpop.f32.mrf.mxu0
      %7353 = vmatprep.mubr.bf16.mxu0 0
      %7354 = vmatmul.mubr.bf16.gmra.mxu0 %v6902
      %v7355 = vpop.f32.mrf.mxu0
      %v7356 = vadd.f32 %v7195, %v7355
      %v7357 = vpop.f32.mrf.mxu0
      %v7358 = vpop.f32.mrf.mxu0
      %v7359 = vadd.f32 %v7198, %v7358
      %v7360 = vpop.f32.mrf.mxu0
      %7361 = vmatprep.mubr.bf16.mxu0 0
      %7362 = vmatmul.mubr.bf16.gmra.mxu0 %v6905
      %v7363 = vpop.f32.mrf.mxu0
      %v7364 = vadd.f32 %v7203, %v7363
      %v7365 = vpop.f32.mrf.mxu0
      %v7366 = vpop.f32.mrf.mxu0
      %v7367 = vadd.f32 %v7206, %v7366
      %v7368 = vpop.f32.mrf.mxu0
      %7369 = vmatprep.mubr.bf16.mxu0 0
      %7370 = vmatmul.mubr.bf16.gmra.mxu0 %v6908
      %v7371 = vpop.f32.mrf.mxu0
      %v7372 = vadd.f32 %v7211, %v7371
      %v7373 = vpop.f32.mrf.mxu0
      %v7374 = vpop.f32.mrf.mxu0
      %v7375 = vadd.f32 %v7214, %v7374
      %v7376 = vpop.f32.mrf.mxu0
      %7377 = vmatprep.mubr.bf16.mxu0 0
      %7378 = vmatmul.mubr.bf16.gmra.mxu0 %v6911
      %v7379 = vpop.f32.mrf.mxu0
      %v7380 = vadd.f32 %v7219, %v7379
      %v7381 = vpop.f32.mrf.mxu0
      %v7382 = vpop.f32.mrf.mxu0
      %v7383 = vadd.f32 %v7222, %v7382
      %v7384 = vpop.f32.mrf.mxu0
      %7385 = vmatprep.mubr.bf16.mxu0 0
      %7386 = vmatmul.mubr.bf16.gmra.mxu0 %v6914
      %v7387 = vpop.f32.mrf.mxu0
      %v7388 = vadd.f32 %v7227, %v7387
      %v7389 = vpop.f32.mrf.mxu0
      %v7390 = vpop.f32.mrf.mxu0
      %v7391 = vadd.f32 %v7230, %v7390
      %v7392 = vpop.f32.mrf.mxu0
      %7393 = vmatprep.mubr.bf16.mxu0 0
      %7394 = vmatmul.mubr.bf16.gmra.mxu0 %v6917
      %v7395 = vpop.f32.mrf.mxu0
      %v7396 = vadd.f32 %v7235, %v7395
      %v7397 = vpop.f32.mrf.mxu0
      %v7398 = vpop.f32.mrf.mxu0
      %v7399 = vadd.f32 %v7238, %v7398
      %v7400 = vpop.f32.mrf.mxu0
      %7401 = vmatprep.mubr.bf16.mxu0 0
      %7402 = vmatmul.mubr.bf16.gmra.mxu0 %v6920
      %v7403 = vpop.f32.mrf.mxu0
      %v7404 = vadd.f32 %v7243, %v7403
      %v7405 = vpop.f32.mrf.mxu0
      %v7406 = vpop.f32.mrf.mxu0
      %v7407 = vadd.f32 %v7246, %v7406
      %v7408 = vpop.f32.mrf.mxu0
      %7409 = vmatprep.mubr.bf16.mxu0 0
      %7410 = vmatmul.mubr.bf16.gmra.mxu0 %v6923
      %v7411 = vpop.f32.mrf.mxu0
      %v7412 = vadd.f32 %v7251, %v7411
      %v7413 = vpop.f32.mrf.mxu0
      %v7414 = vpop.f32.mrf.mxu0
      %v7415 = vadd.f32 %v7254, %v7414
      %v7416 = vpop.f32.mrf.mxu0
      %7417 = vmatprep.mubr.bf16.mxu0 0
      %7418 = vmatmul.mubr.bf16.gmra.mxu0 %v6926
      %v7419 = vpop.f32.mrf.mxu0
      %v7420 = vadd.f32 %v7259, %v7419
      %v7421 = vpop.f32.mrf.mxu0
      %v7422 = vpop.f32.mrf.mxu0
      %v7423 = vadd.f32 %v7262, %v7422
      %v7424 = vpop.f32.mrf.mxu0
      %7425 = vmatprep.mubr.bf16.mxu0 0
      %7426 = vmatmul.mubr.bf16.gmra.mxu0 %v6929
      %v7427 = vpop.f32.mrf.mxu0
      %v7428 = vadd.f32 %v7267, %v7427
      %v7429 = vpop.f32.mrf.mxu0
      %v7430 = vpop.f32.mrf.mxu0
      %v7431 = vadd.f32 %v7270, %v7430
      %v7432 = vpop.f32.mrf.mxu0
      %7433 = vmatprep.mubr.bf16.mxu0 0
      %7434 = vmatmul.mubr.bf16.gmra.mxu0 %v6932
      %v7435 = vpop.f32.mrf.mxu0
      %v7436 = vadd.f32 %v7275, %v7435
      %v7437 = vpop.f32.mrf.mxu0
      %v7438 = vpop.f32.mrf.mxu0
      %v7439 = vadd.f32 %v7278, %v7438
      %v7440 = vpop.f32.mrf.mxu0
      %7441 = vmatprep.mubr.bf16.mxu0 0
      %7442 = vmatmul.mubr.bf16.gmra.mxu0 %v6935
      %v7443 = vpop.f32.mrf.mxu0
      %v7444 = vadd.f32 %v7283, %v7443
      %v7445 = vpop.f32.mrf.mxu0
      %v7446 = vpop.f32.mrf.mxu0
      %v7447 = vadd.f32 %v7286, %v7446
      %v7448 = vpop.f32.mrf.mxu0
      %7449 = vdwg.mxu0
      %v7450 = vadd.f32 %v6664, %v7324
      %v7451 = vadd.f32 %v6665, %v7327
      %v7452 = vadd.f32 %v6666, %v7332
      %v7453 = vadd.f32 %v6667, %v7335
      %v7454 = vadd.f32 %v6668, %v7340
      %v7455 = vadd.f32 %v6669, %v7343
      %v7456 = vadd.f32 %v6670, %v7348
      %v7457 = vadd.f32 %v6671, %v7351
      %v7458 = vadd.f32 %v6672, %v7356
      %v7459 = vadd.f32 %v6673, %v7359
      %v7460 = vadd.f32 %v6674, %v7364
      %v7461 = vadd.f32 %v6675, %v7367
      %v7462 = vadd.f32 %v6676, %v7372
      %v7463 = vadd.f32 %v6677, %v7375
      %v7464 = vadd.f32 %v6678, %v7380
      %v7465 = vadd.f32 %v6679, %v7383
      %v7466 = vadd.f32 %v6680, %v7388
      %v7467 = vadd.f32 %v6681, %v7391
      %v7468 = vadd.f32 %v6682, %v7396
      %v7469 = vadd.f32 %v6683, %v7399
      %v7470 = vadd.f32 %v6684, %v7404
      %v7471 = vadd.f32 %v6685, %v7407
      %v7472 = vadd.f32 %v6686, %v7412
      %v7473 = vadd.f32 %v6687, %v7415
      %v7474 = vadd.f32 %v6688, %v7420
      %v7475 = vadd.f32 %v6689, %v7423
      %v7476 = vadd.f32 %v6690, %v7428
      %v7477 = vadd.f32 %v6691, %v7431
      %v7478 = vadd.f32 %v6692, %v7436
      %v7479 = vadd.f32 %v6693, %v7439
      %v7480 = vadd.f32 %v6694, %v7444
      %v7481 = vadd.f32 %v6695, %v7447
      %v7482 = vrot.slane %v4498, 3
      %v7483 = vrot.slane %v4499, 3
      %v7484 = vrot.slane %v4500, 3
      %v7485 = vrot.slane %v4501, 3
      %v7486 = vrot.slane %v4502, 3
      %v7487 = vrot.slane %v4503, 3
      %v7488 = vrot.slane %v4504, 3
      %v7489 = vrot.slane %v4505, 3
      %v7490 = vrot.slane %v4506, 3
      %v7491 = vrot.slane %v4507, 3
      %v7492 = vrot.slane %v4508, 3
      %v7493 = vrot.slane %v4509, 3
      %v7494 = vrot.slane %v4510, 3
      %v7495 = vrot.slane %v4511, 3
      %v7496 = vrot.slane %v4512, 3
      %v7497 = vrot.slane %v4513, 3
      %v7498 = vrot.slane %v4514, 3
      %v7499 = vrot.slane %v4515, 3
      %v7500 = vrot.slane %v4516, 3
      %v7501 = vrot.slane %v4517, 3
      %v7502 = vrot.slane %v4518, 3
      %v7503 = vrot.slane %v4519, 3
      %v7504 = vrot.slane %v4520, 3
      %v7505 = vrot.slane %v4521, 3
      %v7506 = vrot.slane %v4522, 3
      %v7507 = vrot.slane %v4523, 3
      %v7508 = vrot.slane %v4524, 3
      %v7509 = vrot.slane %v4525, 3
      %v7510 = vrot.slane %v4526, 3
      %v7511 = vrot.slane %v4527, 3
      %v7512 = vrot.slane %v4528, 3
      %v7513 = vrot.slane %v4529, 3
      %v7514 = vrot.slane %v4530, 3
      %v7515 = vrot.slane %v4531, 3
      %v7516 = vrot.slane %v4532, 3
      %v7517 = vrot.slane %v4533, 3
      %v7518 = vrot.slane %v4534, 3
      %v7519 = vrot.slane %v4535, 3
      %v7520 = vrot.slane %v4536, 3
      %v7521 = vrot.slane %v4537, 3
      %v7522 = vrot.slane %v4538, 3
      %v7523 = vrot.slane %v4539, 3
      %v7524 = vrot.slane %v4540, 3
      %v7525 = vrot.slane %v4541, 3
      %v7526 = vrot.slane %v4542, 3
      %v7527 = vrot.slane %v4543, 3
      %v7528 = vrot.slane %v4544, 3
      %v7529 = vrot.slane %v4545, 3
      %v7530 = vrot.slane %v4546, 3
      %v7531 = vrot.slane %v4547, 3
      %v7532 = vrot.slane %v4548, 3
      %v7533 = vrot.slane %v4549, 3
      %v7534 = vrot.slane %v4550, 3
      %v7535 = vrot.slane %v4551, 3
      %v7536 = vrot.slane %v4552, 3
      %v7537 = vrot.slane %v4553, 3
      %v7538 = vrot.slane %v4554, 3
      %v7539 = vrot.slane %v4555, 3
      %v7540 = vrot.slane %v4556, 3
      %v7541 = vrot.slane %v4557, 3
      %v7542 = vrot.slane %v4558, 3
      %v7543 = vrot.slane %v4559, 3
      %v7544 = vrot.slane %v4560, 3
      %v7545 = vrot.slane %v4561, 3
      %v7546 = vrot.slane %v4562, 3
      %v7547 = vrot.slane %v4563, 3
      %v7548 = vrot.slane %v4564, 3
      %v7549 = vrot.slane %v4565, 3
      %v7550 = vrot.slane %v4566, 3
      %v7551 = vrot.slane %v4567, 3
      %v7552 = vrot.slane %v4568, 3
      %v7553 = vrot.slane %v4569, 3
      %v7554 = vrot.slane %v4570, 3
      %v7555 = vrot.slane %v4571, 3
      %v7556 = vrot.slane %v4572, 3
      %v7557 = vrot.slane %v4573, 3
      %v7558 = vrot.slane %v4574, 3
      %v7559 = vrot.slane %v4575, 3
      %v7560 = vrot.slane %v4576, 3
      %v7561 = vrot.slane %v4577, 3
      %v7562 = vrot.slane %v4578, 3
      %v7563 = vrot.slane %v4579, 3
      %v7564 = vrot.slane %v4580, 3
      %v7565 = vrot.slane %v4581, 3
      %v7566 = vrot.slane %v4582, 3
      %v7567 = vrot.slane %v4583, 3
      %v7568 = vrot.slane %v4584, 3
      %v7569 = vrot.slane %v4585, 3
      %v7570 = vrot.slane %v4586, 3
      %v7571 = vrot.slane %v4587, 3
      %v7572 = vrot.slane %v4588, 3
      %v7573 = vrot.slane %v4589, 3
      %v7574 = vrot.slane %v4590, 3
      %v7575 = vrot.slane %v4591, 3
      %v7576 = vrot.slane %v4592, 3
      %v7577 = vrot.slane %v4593, 3
      %v7578 = vsel %vm1832, %v7572, %v7575
      %v7579 = vsel %vm1832, %v7573, %v7576
      %v7580 = vsel %vm1832, %v7574, %v7577
      %v7581 = vsel %vm1832, %v7569, %v7572
      %v7582 = vsel %vm1832, %v7570, %v7573
      %v7583 = vsel %vm1832, %v7571, %v7574
      %v7584 = vsel %vm1832, %v7566, %v7569
      %v7585 = vsel %vm1832, %v7567, %v7570
      %v7586 = vsel %vm1832, %v7568, %v7571
      %v7587 = vsel %vm1832, %v7563, %v7566
      %v7588 = vsel %vm1832, %v7564, %v7567
      %v7589 = vsel %vm1832, %v7565, %v7568
      %v7590 = vsel %vm1832, %v7560, %v7563
      %v7591 = vsel %vm1832, %v7561, %v7564
      %v7592 = vsel %vm1832, %v7562, %v7565
      %v7593 = vsel %vm1832, %v7557, %v7560
      %v7594 = vsel %vm1832, %v7558, %v7561
      %v7595 = vsel %vm1832, %v7559, %v7562
      %v7596 = vsel %vm1832, %v7554, %v7557
      %v7597 = vsel %vm1832, %v7555, %v7558
      %v7598 = vsel %vm1832, %v7556, %v7559
      %v7599 = vsel %vm1832, %v7551, %v7554
      %v7600 = vsel %vm1832, %v7552, %v7555
      %v7601 = vsel %vm1832, %v7553, %v7556
      %v7602 = vsel %vm1832, %v7548, %v7551
      %v7603 = vsel %vm1832, %v7549, %v7552
      %v7604 = vsel %vm1832, %v7550, %v7553
      %v7605 = vsel %vm1832, %v7545, %v7548
      %v7606 = vsel %vm1832, %v7546, %v7549
      %v7607 = vsel %vm1832, %v7547, %v7550
      %v7608 = vsel %vm1832, %v7542, %v7545
      %v7609 = vsel %vm1832, %v7543, %v7546
      %v7610 = vsel %vm1832, %v7544, %v7547
      %v7611 = vsel %vm1832, %v7539, %v7542
      %v7612 = vsel %vm1832, %v7540, %v7543
      %v7613 = vsel %vm1832, %v7541, %v7544
      %v7614 = vsel %vm1832, %v7536, %v7539
      %v7615 = vsel %vm1832, %v7537, %v7540
      %v7616 = vsel %vm1832, %v7538, %v7541
      %v7617 = vsel %vm1832, %v7533, %v7536
      %v7618 = vsel %vm1832, %v7534, %v7537
      %v7619 = vsel %vm1832, %v7535, %v7538
      %v7620 = vsel %vm1832, %v7530, %v7533
      %v7621 = vsel %vm1832, %v7531, %v7534
      %v7622 = vsel %vm1832, %v7532, %v7535
      %v7623 = vsel %vm1832, %v7527, %v7530
      %v7624 = vsel %vm1832, %v7528, %v7531
      %v7625 = vsel %vm1832, %v7529, %v7532
      %v7626 = vsel %vm1832, %v7524, %v7527
      %v7627 = vsel %vm1832, %v7525, %v7528
      %v7628 = vsel %vm1832, %v7526, %v7529
      %v7629 = vsel %vm1832, %v7521, %v7524
      %v7630 = vsel %vm1832, %v7522, %v7525
      %v7631 = vsel %vm1832, %v7523, %v7526
      %v7632 = vsel %vm1832, %v7518, %v7521
      %v7633 = vsel %vm1832, %v7519, %v7522
      %v7634 = vsel %vm1832, %v7520, %v7523
      %v7635 = vsel %vm1832, %v7515, %v7518
      %v7636 = vsel %vm1832, %v7516, %v7519
      %v7637 = vsel %vm1832, %v7517, %v7520
      %v7638 = vsel %vm1832, %v7512, %v7515
      %v7639 = vsel %vm1832, %v7513, %v7516
      %v7640 = vsel %vm1832, %v7514, %v7517
      %v7641 = vsel %vm1832, %v7509, %v7512
      %v7642 = vsel %vm1832, %v7510, %v7513
      %v7643 = vsel %vm1832, %v7511, %v7514
      %v7644 = vsel %vm1832, %v7506, %v7509
      %v7645 = vsel %vm1832, %v7507, %v7510
      %v7646 = vsel %vm1832, %v7508, %v7511
      %v7647 = vsel %vm1832, %v7503, %v7506
      %v7648 = vsel %vm1832, %v7504, %v7507
      %v7649 = vsel %vm1832, %v7505, %v7508
      %v7650 = vsel %vm1832, %v7500, %v7503
      %v7651 = vsel %vm1832, %v7501, %v7504
      %v7652 = vsel %vm1832, %v7502, %v7505
      %v7653 = vsel %vm1832, %v7497, %v7500
      %v7654 = vsel %vm1832, %v7498, %v7501
      %v7655 = vsel %vm1832, %v7499, %v7502
      %v7656 = vsel %vm1832, %v7494, %v7497
      %v7657 = vsel %vm1832, %v7495, %v7498
      %v7658 = vsel %vm1832, %v7496, %v7499
      %v7659 = vsel %vm1832, %v7491, %v7494
      %v7660 = vsel %vm1832, %v7492, %v7495
      %v7661 = vsel %vm1832, %v7493, %v7496
      %v7662 = vsel %vm1832, %v7488, %v7491
      %v7663 = vsel %vm1832, %v7489, %v7492
      %v7664 = vsel %vm1832, %v7490, %v7493
      %v7665 = vsel %vm1832, %v7485, %v7488
      %v7666 = vsel %vm1832, %v7486, %v7489
      %v7667 = vsel %vm1832, %v7487, %v7490
      %v7668 = vsel %vm1832, %v7482, %v7485
      %v7669 = vsel %vm1832, %v7483, %v7486
      %v7670 = vsel %vm1832, %v7484, %v7487
      %v7671 = vsel %vm1832, %v7575, %v7482
      %v7672 = vsel %vm1832, %v7576, %v7483
      %v7673 = vsel %vm1832, %v7577, %v7484
      %v7674 = vpack.c.bf16 %v7665, %v7668
      %v7675 = vpack.c.bf16 %v7666, %v7669
      %v7676 = vpack.c.bf16 %v7667, %v7670
      %v7677 = vpack.c.bf16 %v7659, %v7662
      %v7678 = vpack.c.bf16 %v7660, %v7663
      %v7679 = vpack.c.bf16 %v7661, %v7664
      %v7680 = vpack.c.bf16 %v7653, %v7656
      %v7681 = vpack.c.bf16 %v7654, %v7657
      %v7682 = vpack.c.bf16 %v7655, %v7658
      %v7683 = vpack.c.bf16 %v7647, %v7650
      %v7684 = vpack.c.bf16 %v7648, %v7651
      %v7685 = vpack.c.bf16 %v7649, %v7652
      %v7686 = vpack.c.bf16 %v7641, %v7644
      %v7687 = vpack.c.bf16 %v7642, %v7645
      %v7688 = vpack.c.bf16 %v7643, %v7646
      %v7689 = vpack.c.bf16 %v7635, %v7638
      %v7690 = vpack.c.bf16 %v7636, %v7639
      %v7691 = vpack.c.bf16 %v7637, %v7640
      %v7692 = vpack.c.bf16 %v7629, %v7632
      %v7693 = vpack.c.bf16 %v7630, %v7633
      %v7694 = vpack.c.bf16 %v7631, %v7634
      %v7695 = vpack.c.bf16 %v7623, %v7626
      %v7696 = vpack.c.bf16 %v7624, %v7627
      %v7697 = vpack.c.bf16 %v7625, %v7628
      %v7698 = vpack.c.bf16 %v7617, %v7620
      %v7699 = vpack.c.bf16 %v7618, %v7621
      %v7700 = vpack.c.bf16 %v7619, %v7622
      %v7701 = vpack.c.bf16 %v7611, %v7614
      %v7702 = vpack.c.bf16 %v7612, %v7615
      %v7703 = vpack.c.bf16 %v7613, %v7616
      %v7704 = vpack.c.bf16 %v7605, %v7608
      %v7705 = vpack.c.bf16 %v7606, %v7609
      %v7706 = vpack.c.bf16 %v7607, %v7610
      %v7707 = vpack.c.bf16 %v7599, %v7602
      %v7708 = vpack.c.bf16 %v7600, %v7603
      %v7709 = vpack.c.bf16 %v7601, %v7604
      %v7710 = vpack.c.bf16 %v7593, %v7596
      %v7711 = vpack.c.bf16 %v7594, %v7597
      %v7712 = vpack.c.bf16 %v7595, %v7598
      %v7713 = vpack.c.bf16 %v7587, %v7590
      %v7714 = vpack.c.bf16 %v7588, %v7591
      %v7715 = vpack.c.bf16 %v7589, %v7592
      %v7716 = vpack.c.bf16 %v7581, %v7584
      %v7717 = vpack.c.bf16 %v7582, %v7585
      %v7718 = vpack.c.bf16 %v7583, %v7586
      %v7719 = vpack.c.bf16 %v7671, %v7578
      %v7720 = vpack.c.bf16 %v7672, %v7579
      %v7721 = vpack.c.bf16 %v7673, %v7580
      %v7722 = vld [vmem:[%s1 + $0x300] sm:$0xf]
      %v7723 = vld [vmem:[%s1 + $0x304] sm:$0xf]
      %v7724 = vld [vmem:[%s1 + $0x308] sm:$0xf]
      %v7725 = vld [vmem:[%s1 + $0x30c] sm:$0xf]
      %v7726 = vld [vmem:[%s1 + $0x310] sm:$0xf]
      %v7727 = vld [vmem:[%s1 + $0x314] sm:$0xf]
      %v7728 = vld [vmem:[%s1 + $0x318] sm:$0xf]
      %v7729 = vld [vmem:[%s1 + $0x31c] sm:$0xf]
      %v7730 = vld [vmem:[%s1 + $0x320] sm:$0xf]
      %v7731 = vld [vmem:[%s1 + $0x324] sm:$0xf]
      %v7732 = vld [vmem:[%s1 + $0x328] sm:$0xf]
      %v7733 = vld [vmem:[%s1 + $0x32c] sm:$0xf]
      %v7734 = vld [vmem:[%s1 + $0x330] sm:$0xf]
      %v7735 = vld [vmem:[%s1 + $0x334] sm:$0xf]
      %v7736 = vld [vmem:[%s1 + $0x338] sm:$0xf]
      %v7737 = vld [vmem:[%s1 + $0x33c] sm:$0xf]
      %v7738 = vld [vmem:[%s1 + $0x340] sm:$0xf]
      %v7739 = vld [vmem:[%s1 + $0x344] sm:$0xf]
      %v7740 = vld [vmem:[%s1 + $0x348] sm:$0xf]
      %v7741 = vld [vmem:[%s1 + $0x34c] sm:$0xf]
      %v7742 = vld [vmem:[%s1 + $0x350] sm:$0xf]
      %v7743 = vld [vmem:[%s1 + $0x354] sm:$0xf]
      %v7744 = vld [vmem:[%s1 + $0x358] sm:$0xf]
      %v7745 = vld [vmem:[%s1 + $0x35c] sm:$0xf]
      %v7746 = vld [vmem:[%s1 + $0x360] sm:$0xf]
      %v7747 = vld [vmem:[%s1 + $0x364] sm:$0xf]
      %v7748 = vld [vmem:[%s1 + $0x368] sm:$0xf]
      %v7749 = vld [vmem:[%s1 + $0x36c] sm:$0xf]
      %v7750 = vld [vmem:[%s1 + $0x370] sm:$0xf]
      %v7751 = vld [vmem:[%s1 + $0x374] sm:$0xf]
      %v7752 = vld [vmem:[%s1 + $0x378] sm:$0xf]
      %v7753 = vld [vmem:[%s1 + $0x37c] sm:$0xf]
      %v7754 = vld [vmem:[%s1 + $0x380] sm:$0xf]
      %v7755 = vld [vmem:[%s1 + $0x384] sm:$0xf]
      %v7756 = vld [vmem:[%s1 + $0x388] sm:$0xf]
      %v7757 = vld [vmem:[%s1 + $0x38c] sm:$0xf]
      %v7758 = vld [vmem:[%s1 + $0x390] sm:$0xf]
      %v7759 = vld [vmem:[%s1 + $0x394] sm:$0xf]
      %v7760 = vld [vmem:[%s1 + $0x398] sm:$0xf]
      %v7761 = vld [vmem:[%s1 + $0x39c] sm:$0xf]
      %v7762 = vld [vmem:[%s1 + $0x3a0] sm:$0xf]
      %v7763 = vld [vmem:[%s1 + $0x3a4] sm:$0xf]
      %v7764 = vld [vmem:[%s1 + $0x3a8] sm:$0xf]
      %v7765 = vld [vmem:[%s1 + $0x3ac] sm:$0xf]
      %v7766 = vld [vmem:[%s1 + $0x3b0] sm:$0xf]
      %v7767 = vld [vmem:[%s1 + $0x3b4] sm:$0xf]
      %v7768 = vld [vmem:[%s1 + $0x3b8] sm:$0xf]
      %v7769 = vld [vmem:[%s1 + $0x3bc] sm:$0xf]
      %v7818 = vunpack.c.l.b16 %v7722
      %v7819 = vunpack.c.l.b16 %v7723
      %v7820 = vunpack.c.l.b16 %v7724
      %v7821 = vunpack.c.l.b16 %v7725
      %v7822 = vunpack.c.l.b16 %v7726
      %v7823 = vunpack.c.l.b16 %v7727
      %v7824 = vunpack.c.l.b16 %v7728
      %v7825 = vunpack.c.l.b16 %v7729
      %v7826 = vunpack.c.l.b16 %v7730
      %v7827 = vunpack.c.l.b16 %v7731
      %v7828 = vunpack.c.l.b16 %v7732
      %v7829 = vunpack.c.l.b16 %v7733
      %v7830 = vunpack.c.l.b16 %v7734
      %v7831 = vunpack.c.l.b16 %v7735
      %v7832 = vunpack.c.l.b16 %v7736
      %v7833 = vunpack.c.l.b16 %v7737
      %v7834 = vunpack.c.l.b16 %v7738
      %v7835 = vunpack.c.l.b16 %v7739
      %v7836 = vunpack.c.l.b16 %v7740
      %v7837 = vunpack.c.l.b16 %v7741
      %v7838 = vunpack.c.l.b16 %v7742
      %v7839 = vunpack.c.l.b16 %v7743
      %v7840 = vunpack.c.l.b16 %v7744
      %v7841 = vunpack.c.l.b16 %v7745
      %v7842 = vunpack.c.l.b16 %v7746
      %v7843 = vunpack.c.l.b16 %v7747
      %v7844 = vunpack.c.l.b16 %v7748
      %v7845 = vunpack.c.l.b16 %v7749
      %v7846 = vunpack.c.l.b16 %v7750
      %v7847 = vunpack.c.l.b16 %v7751
      %v7848 = vunpack.c.l.b16 %v7752
      %v7849 = vunpack.c.l.b16 %v7753
      %v7850 = vunpack.c.l.b16 %v7754
      %v7851 = vunpack.c.l.b16 %v7755
      %v7852 = vunpack.c.l.b16 %v7756
      %v7853 = vunpack.c.l.b16 %v7757
      %v7854 = vunpack.c.l.b16 %v7758
      %v7855 = vunpack.c.l.b16 %v7759
      %v7856 = vunpack.c.l.b16 %v7760
      %v7857 = vunpack.c.l.b16 %v7761
      %v7858 = vunpack.c.l.b16 %v7762
      %v7859 = vunpack.c.l.b16 %v7763
      %v7860 = vunpack.c.l.b16 %v7764
      %v7861 = vunpack.c.l.b16 %v7765
      %v7862 = vunpack.c.l.b16 %v7766
      %v7863 = vunpack.c.l.b16 %v7767
      %v7864 = vunpack.c.l.b16 %v7768
      %v7865 = vunpack.c.l.b16 %v7769
      %v7866 = vpack.c.b16 %v7819, %v7818
      %v7867 = vpack.c.b16 %v7821, %v7820
      %v7868 = vpack.c.b16 %v7823, %v7822
      %v7869 = vpack.c.b16 %v7825, %v7824
      %v7870 = vpack.c.b16 %v7827, %v7826
      %v7871 = vpack.c.b16 %v7829, %v7828
      %v7872 = vpack.c.b16 %v7831, %v7830
      %v7873 = vpack.c.b16 %v7833, %v7832
      %v7874 = vpack.c.b16 %v7835, %v7834
      %v7875 = vpack.c.b16 %v7837, %v7836
      %v7876 = vpack.c.b16 %v7839, %v7838
      %v7877 = vpack.c.b16 %v7841, %v7840
      %v7878 = vpack.c.b16 %v7843, %v7842
      %v7879 = vpack.c.b16 %v7845, %v7844
      %v7880 = vpack.c.b16 %v7847, %v7846
      %v7881 = vpack.c.b16 %v7849, %v7848
      %v7882 = vpack.c.b16 %v7851, %v7850
      %v7883 = vpack.c.b16 %v7853, %v7852
      %v7884 = vpack.c.b16 %v7855, %v7854
      %v7885 = vpack.c.b16 %v7857, %v7856
      %v7886 = vpack.c.b16 %v7859, %v7858
      %v7887 = vpack.c.b16 %v7861, %v7860
      %v7888 = vpack.c.b16 %v7863, %v7862
      %v7889 = vpack.c.b16 %v7865, %v7864
      %7914 = vmatprep.subr.bf16.mxu0 0
      %7915 = vmatpush1.bf16.msra.mxu0 %v7873
      %7916 = vmatprep.subr.bf16.mxu0 0
      %7917 = vmatpush1.bf16.msra.mxu0 %v7872
      %7918 = vmatprep.subr.bf16.mxu0 0
      %7919 = vmatpush1.bf16.msra.mxu0 %v7871
      %7920 = vmatprep.subr.bf16.mxu0 0
      %7921 = vmatpush1.bf16.msra.mxu0 %v7870
      %7922 = vmatprep.subr.bf16.mxu0 0
      %7923 = vmatpush1.bf16.msra.mxu0 %v7869
      %7924 = vmatprep.subr.bf16.mxu0 0
      %7925 = vmatpush1.bf16.msra.mxu0 %v7868
      %7926 = vmatprep.subr.bf16.mxu0 0
      %7927 = vmatpush1.bf16.msra.mxu0 %v7867
      %7928 = vmatprep.subr.bf16.mxu0 0
      %7929 = vmatpush1.bf16.msra.mxu0 %v7866
      %7930 = vmatprep.subr.bf16.mxu0 0
      %7931 = vmatpush2.bf16.msra.mxu0 %v7881
      %7932 = vmatprep.subr.bf16.mxu0 0
      %7933 = vmatpush2.bf16.msra.mxu0 %v7880
      %7934 = vmatprep.subr.bf16.mxu0 0
      %7935 = vmatpush2.bf16.msra.mxu0 %v7879
      %7936 = vmatprep.subr.bf16.mxu0 0
      %7937 = vmatpush2.bf16.msra.mxu0 %v7878
      %7938 = vmatprep.subr.bf16.mxu0 0
      %7939 = vmatpush2.bf16.msra.mxu0 %v7877
      %7940 = vmatprep.subr.bf16.mxu0 0
      %7941 = vmatpush2.bf16.msra.mxu0 %v7876
      %7942 = vmatprep.subr.bf16.mxu0 0
      %7943 = vmatpush2.bf16.msra.mxu0 %v7875
      %7944 = vmatprep.subr.bf16.mxu0 0
      %7945 = vmatpush2.bf16.msra.mxu0 %v7874
      %7946 = vmatprep.mubr.bf16.mxu0 %v7675
      %7947 = vmatmul.mubr.bf16.gmra.mxu0 %v7674
      %v7948 = vpop.f32.mrf.mxu0
      %v7949 = vadd.f32 0.0, %v7948
      %v7950 = vpop.f32.mrf.mxu0
      %v7951 = vpop.f32.mrf.mxu0
      %v7952 = vadd.f32 0.0, %v7951
      %v7953 = vpop.f32.mrf.mxu0
      %7954 = vmatprep.mubr.bf16.mxu0 %v7678
      %7955 = vmatmul.mubr.bf16.gmra.mxu0 %v7677
      %v7956 = vpop.f32.mrf.mxu0
      %v7957 = vadd.f32 0.0, %v7956
      %v7958 = vpop.f32.mrf.mxu0
      %v7959 = vpop.f32.mrf.mxu0
      %v7960 = vadd.f32 0.0, %v7959
      %v7961 = vpop.f32.mrf.mxu0
      %7962 = vmatprep.mubr.bf16.mxu0 %v7681
      %7963 = vmatmul.mubr.bf16.gmra.mxu0 %v7680
      %v7964 = vpop.f32.mrf.mxu0
      %v7965 = vadd.f32 0.0, %v7964
      %v7966 = vpop.f32.mrf.mxu0
      %v7967 = vpop.f32.mrf.mxu0
      %v7968 = vadd.f32 0.0, %v7967
      %v7969 = vpop.f32.mrf.mxu0
      %7970 = vmatprep.mubr.bf16.mxu0 %v7684
      %7971 = vmatmul.mubr.bf16.gmra.mxu0 %v7683
      %v7972 = vpop.f32.mrf.mxu0
      %v7973 = vadd.f32 0.0, %v7972
      %v7974 = vpop.f32.mrf.mxu0
      %v7975 = vpop.f32.mrf.mxu0
      %v7976 = vadd.f32 0.0, %v7975
      %v7977 = vpop.f32.mrf.mxu0
      %7978 = vmatprep.mubr.bf16.mxu0 %v7687
      %7979 = vmatmul.mubr.bf16.gmra.mxu0 %v7686
      %v7980 = vpop.f32.mrf.mxu0
      %v7981 = vadd.f32 0.0, %v7980
      %v7982 = vpop.f32.mrf.mxu0
      %v7983 = vpop.f32.mrf.mxu0
      %v7984 = vadd.f32 0.0, %v7983
      %v7985 = vpop.f32.mrf.mxu0
      %7986 = vmatprep.mubr.bf16.mxu0 %v7690
      %7987 = vmatmul.mubr.bf16.gmra.mxu0 %v7689
      %v7988 = vpop.f32.mrf.mxu0
      %v7989 = vadd.f32 0.0, %v7988
      %v7990 = vpop.f32.mrf.mxu0
      %v7991 = vpop.f32.mrf.mxu0
      %v7992 = vadd.f32 0.0, %v7991
      %v7993 = vpop.f32.mrf.mxu0
      %7994 = vmatprep.mubr.bf16.mxu0 %v7693
      %7995 = vmatmul.mubr.bf16.gmra.mxu0 %v7692
      %v7996 = vpop.f32.mrf.mxu0
      %v7997 = vadd.f32 0.0, %v7996
      %v7998 = vpop.f32.mrf.mxu0
      %v7999 = vpop.f32.mrf.mxu0
      %v8000 = vadd.f32 0.0, %v7999
      %v8001 = vpop.f32.mrf.mxu0
      %8002 = vmatprep.mubr.bf16.mxu0 %v7696
      %8003 = vmatmul.mubr.bf16.gmra.mxu0 %v7695
      %v8004 = vpop.f32.mrf.mxu0
      %v8005 = vadd.f32 0.0, %v8004
      %v8006 = vpop.f32.mrf.mxu0
      %v8007 = vpop.f32.mrf.mxu0
      %v8008 = vadd.f32 0.0, %v8007
      %v8009 = vpop.f32.mrf.mxu0
      %8010 = vmatprep.mubr.bf16.mxu0 %v7699
      %8011 = vmatmul.mubr.bf16.gmra.mxu0 %v7698
      %v8012 = vpop.f32.mrf.mxu0
      %v8013 = vadd.f32 0.0, %v8012
      %v8014 = vpop.f32.mrf.mxu0
      %v8015 = vpop.f32.mrf.mxu0
      %v8016 = vadd.f32 0.0, %v8015
      %v8017 = vpop.f32.mrf.mxu0
      %8018 = vmatprep.mubr.bf16.mxu0 %v7702
      %8019 = vmatmul.mubr.bf16.gmra.mxu0 %v7701
      %v8020 = vpop.f32.mrf.mxu0
      %v8021 = vadd.f32 0.0, %v8020
      %v8022 = vpop.f32.mrf.mxu0
      %v8023 = vpop.f32.mrf.mxu0
      %v8024 = vadd.f32 0.0, %v8023
      %v8025 = vpop.f32.mrf.mxu0
      %8026 = vmatprep.mubr.bf16.mxu0 %v7705
      %8027 = vmatmul.mubr.bf16.gmra.mxu0 %v7704
      %v8028 = vpop.f32.mrf.mxu0
      %v8029 = vadd.f32 0.0, %v8028
      %v8030 = vpop.f32.mrf.mxu0
      %v8031 = vpop.f32.mrf.mxu0
      %v8032 = vadd.f32 0.0, %v8031
      %v8033 = vpop.f32.mrf.mxu0
      %8034 = vmatprep.mubr.bf16.mxu0 %v7708
      %8035 = vmatmul.mubr.bf16.gmra.mxu0 %v7707
      %v8036 = vpop.f32.mrf.mxu0
      %v8037 = vadd.f32 0.0, %v8036
      %v8038 = vpop.f32.mrf.mxu0
      %v8039 = vpop.f32.mrf.mxu0
      %v8040 = vadd.f32 0.0, %v8039
      %v8041 = vpop.f32.mrf.mxu0
      %8042 = vmatprep.mubr.bf16.mxu0 %v7711
      %8043 = vmatmul.mubr.bf16.gmra.mxu0 %v7710
      %v8044 = vpop.f32.mrf.mxu0
      %v8045 = vadd.f32 0.0, %v8044
      %v8046 = vpop.f32.mrf.mxu0
      %v8047 = vpop.f32.mrf.mxu0
      %v8048 = vadd.f32 0.0, %v8047
      %v8049 = vpop.f32.mrf.mxu0
      %8050 = vmatprep.mubr.bf16.mxu0 %v7714
      %8051 = vmatmul.mubr.bf16.gmra.mxu0 %v7713
      %v8052 = vpop.f32.mrf.mxu0
      %v8053 = vadd.f32 0.0, %v8052
      %v8054 = vpop.f32.mrf.mxu0
      %v8055 = vpop.f32.mrf.mxu0
      %v8056 = vadd.f32 0.0, %v8055
      %v8057 = vpop.f32.mrf.mxu0
      %8058 = vmatprep.mubr.bf16.mxu0 %v7717
      %8059 = vmatmul.mubr.bf16.gmra.mxu0 %v7716
      %v8060 = vpop.f32.mrf.mxu0
      %v8061 = vadd.f32 0.0, %v8060
      %v8062 = vpop.f32.mrf.mxu0
      %v8063 = vpop.f32.mrf.mxu0
      %v8064 = vadd.f32 0.0, %v8063
      %v8065 = vpop.f32.mrf.mxu0
      %8066 = vmatprep.mubr.bf16.mxu0 %v7720
      %8067 = vmatmul.mubr.bf16.gmra.mxu0 %v7719
      %v8068 = vpop.f32.mrf.mxu0
      %v8069 = vadd.f32 0.0, %v8068
      %v8070 = vpop.f32.mrf.mxu0
      %v8071 = vpop.f32.mrf.mxu0
      %v8072 = vadd.f32 0.0, %v8071
      %v8073 = vpop.f32.mrf.mxu0
      %8074 = vdwg.mxu0
      %8075 = vmatprep.subr.bf16.mxu0 0
      %8076 = vmatpush1.bf16.msra.mxu0 %v7889
      %8077 = vmatprep.subr.bf16.mxu0 0
      %8078 = vmatpush1.bf16.msra.mxu0 %v7888
      %8079 = vmatprep.subr.bf16.mxu0 0
      %8080 = vmatpush1.bf16.msra.mxu0 %v7887
      %8081 = vmatprep.subr.bf16.mxu0 0
      %8082 = vmatpush1.bf16.msra.mxu0 %v7886
      %8083 = vmatprep.subr.bf16.mxu0 0
      %8084 = vmatpush1.bf16.msra.mxu0 %v7885
      %8085 = vmatprep.subr.bf16.mxu0 0
      %8086 = vmatpush1.bf16.msra.mxu0 %v7884
      %8087 = vmatprep.subr.bf16.mxu0 0
      %8088 = vmatpush1.bf16.msra.mxu0 %v7883
      %8089 = vmatprep.subr.bf16.mxu0 0
      %8090 = vmatpush1.bf16.msra.mxu0 %v7882
      %8091 = vmatprep.subr.bf16.mxu0 0
      %8092 = vmatpush2.bf16.msra.mxu0 0
      %8093 = vmatprep.subr.bf16.mxu0 0
      %8094 = vmatpush2.bf16.msra.mxu0 0
      %8095 = vmatprep.subr.bf16.mxu0 0
      %8096 = vmatpush2.bf16.msra.mxu0 0
      %8097 = vmatprep.subr.bf16.mxu0 0
      %8098 = vmatpush2.bf16.msra.mxu0 0
      %8099 = vmatprep.subr.bf16.mxu0 0
      %8100 = vmatpush2.bf16.msra.mxu0 0
      %8101 = vmatprep.subr.bf16.mxu0 0
      %8102 = vmatpush2.bf16.msra.mxu0 0
      %8103 = vmatprep.subr.bf16.mxu0 0
      %8104 = vmatpush2.bf16.msra.mxu0 0
      %8105 = vmatprep.subr.bf16.mxu0 0
      %8106 = vmatpush2.bf16.msra.mxu0 0
      %8107 = vmatprep.mubr.bf16.mxu0 0
      %8108 = vmatmul.mubr.bf16.gmra.mxu0 %v7676
      %v8109 = vpop.f32.mrf.mxu0
      %v8110 = vadd.f32 %v7949, %v8109
      %v8111 = vpop.f32.mrf.mxu0
      %v8112 = vpop.f32.mrf.mxu0
      %v8113 = vadd.f32 %v7952, %v8112
      %v8114 = vpop.f32.mrf.mxu0
      %8115 = vmatprep.mubr.bf16.mxu0 0
      %8116 = vmatmul.mubr.bf16.gmra.mxu0 %v7679
      %v8117 = vpop.f32.mrf.mxu0
      %v8118 = vadd.f32 %v7957, %v8117
      %v8119 = vpop.f32.mrf.mxu0
      %v8120 = vpop.f32.mrf.mxu0
      %v8121 = vadd.f32 %v7960, %v8120
      %v8122 = vpop.f32.mrf.mxu0
      %8123 = vmatprep.mubr.bf16.mxu0 0
      %8124 = vmatmul.mubr.bf16.gmra.mxu0 %v7682
      %v8125 = vpop.f32.mrf.mxu0
      %v8126 = vadd.f32 %v7965, %v8125
      %v8127 = vpop.f32.mrf.mxu0
      %v8128 = vpop.f32.mrf.mxu0
      %v8129 = vadd.f32 %v7968, %v8128
      %v8130 = vpop.f32.mrf.mxu0
      %8131 = vmatprep.mubr.bf16.mxu0 0
      %8132 = vmatmul.mubr.bf16.gmra.mxu0 %v7685
      %v8133 = vpop.f32.mrf.mxu0
      %v8134 = vadd.f32 %v7973, %v8133
      %v8135 = vpop.f32.mrf.mxu0
      %v8136 = vpop.f32.mrf.mxu0
      %v8137 = vadd.f32 %v7976, %v8136
      %v8138 = vpop.f32.mrf.mxu0
      %8139 = vmatprep.mubr.bf16.mxu0 0
      %8140 = vmatmul.mubr.bf16.gmra.mxu0 %v7688
      %v8141 = vpop.f32.mrf.mxu0
      %v8142 = vadd.f32 %v7981, %v8141
      %v8143 = vpop.f32.mrf.mxu0
      %v8144 = vpop.f32.mrf.mxu0
      %v8145 = vadd.f32 %v7984, %v8144
      %v8146 = vpop.f32.mrf.mxu0
      %8147 = vmatprep.mubr.bf16.mxu0 0
      %8148 = vmatmul.mubr.bf16.gmra.mxu0 %v7691
      %v8149 = vpop.f32.mrf.mxu0
      %v8150 = vadd.f32 %v7989, %v8149
      %v8151 = vpop.f32.mrf.mxu0
      %v8152 = vpop.f32.mrf.mxu0
      %v8153 = vadd.f32 %v7992, %v8152
      %v8154 = vpop.f32.mrf.mxu0
      %8155 = vmatprep.mubr.bf16.mxu0 0
      %8156 = vmatmul.mubr.bf16.gmra.mxu0 %v7694
      %v8157 = vpop.f32.mrf.mxu0
      %v8158 = vadd.f32 %v7997, %v8157
      %v8159 = vpop.f32.mrf.mxu0
      %v8160 = vpop.f32.mrf.mxu0
      %v8161 = vadd.f32 %v8000, %v8160
      %v8162 = vpop.f32.mrf.mxu0
      %8163 = vmatprep.mubr.bf16.mxu0 0
      %8164 = vmatmul.mubr.bf16.gmra.mxu0 %v7697
      %v8165 = vpop.f32.mrf.mxu0
      %v8166 = vadd.f32 %v8005, %v8165
      %v8167 = vpop.f32.mrf.mxu0
      %v8168 = vpop.f32.mrf.mxu0
      %v8169 = vadd.f32 %v8008, %v8168
      %v8170 = vpop.f32.mrf.mxu0
      %8171 = vmatprep.mubr.bf16.mxu0 0
      %8172 = vmatmul.mubr.bf16.gmra.mxu0 %v7700
      %v8173 = vpop.f32.mrf.mxu0
      %v8174 = vadd.f32 %v8013, %v8173
      %v8175 = vpop.f32.mrf.mxu0
      %v8176 = vpop.f32.mrf.mxu0
      %v8177 = vadd.f32 %v8016, %v8176
      %v8178 = vpop.f32.mrf.mxu0
      %8179 = vmatprep.mubr.bf16.mxu0 0
      %8180 = vmatmul.mubr.bf16.gmra.mxu0 %v7703
      %v8181 = vpop.f32.mrf.mxu0
      %v8182 = vadd.f32 %v8021, %v8181
      %v8183 = vpop.f32.mrf.mxu0
      %v8184 = vpop.f32.mrf.mxu0
      %v8185 = vadd.f32 %v8024, %v8184
      %v8186 = vpop.f32.mrf.mxu0
      %8187 = vmatprep.mubr.bf16.mxu0 0
      %8188 = vmatmul.mubr.bf16.gmra.mxu0 %v7706
      %v8189 = vpop.f32.mrf.mxu0
      %v8190 = vadd.f32 %v8029, %v8189
      %v8191 = vpop.f32.mrf.mxu0
      %v8192 = vpop.f32.mrf.mxu0
      %v8193 = vadd.f32 %v8032, %v8192
      %v8194 = vpop.f32.mrf.mxu0
      %8195 = vmatprep.mubr.bf16.mxu0 0
      %8196 = vmatmul.mubr.bf16.gmra.mxu0 %v7709
      %v8197 = vpop.f32.mrf.mxu0
      %v8198 = vadd.f32 %v8037, %v8197
      %v8199 = vpop.f32.mrf.mxu0
      %v8200 = vpop.f32.mrf.mxu0
      %v8201 = vadd.f32 %v8040, %v8200
      %v8202 = vpop.f32.mrf.mxu0
      %8203 = vmatprep.mubr.bf16.mxu0 0
      %8204 = vmatmul.mubr.bf16.gmra.mxu0 %v7712
      %v8205 = vpop.f32.mrf.mxu0
      %v8206 = vadd.f32 %v8045, %v8205
      %v8207 = vpop.f32.mrf.mxu0
      %v8208 = vpop.f32.mrf.mxu0
      %v8209 = vadd.f32 %v8048, %v8208
      %v8210 = vpop.f32.mrf.mxu0
      %8211 = vmatprep.mubr.bf16.mxu0 0
      %8212 = vmatmul.mubr.bf16.gmra.mxu0 %v7715
      %v8213 = vpop.f32.mrf.mxu0
      %v8214 = vadd.f32 %v8053, %v8213
      %v8215 = vpop.f32.mrf.mxu0
      %v8216 = vpop.f32.mrf.mxu0
      %v8217 = vadd.f32 %v8056, %v8216
      %v8218 = vpop.f32.mrf.mxu0
      %8219 = vmatprep.mubr.bf16.mxu0 0
      %8220 = vmatmul.mubr.bf16.gmra.mxu0 %v7718
      %v8221 = vpop.f32.mrf.mxu0
      %v8222 = vadd.f32 %v8061, %v8221
      %v8223 = vpop.f32.mrf.mxu0
      %v8224 = vpop.f32.mrf.mxu0
      %v8225 = vadd.f32 %v8064, %v8224
      %v8226 = vpop.f32.mrf.mxu0
      %8227 = vmatprep.mubr.bf16.mxu0 0
      %8228 = vmatmul.mubr.bf16.gmra.mxu0 %v7721
      %v8229 = vpop.f32.mrf.mxu0
      %v8230 = vadd.f32 %v8069, %v8229
      %v8231 = vpop.f32.mrf.mxu0
      %v8232 = vpop.f32.mrf.mxu0
      %v8233 = vadd.f32 %v8072, %v8232
      %v8234 = vpop.f32.mrf.mxu0
      %8235 = vdwg.mxu0
      %v8236 = vadd.f32 %v7450, %v8110
      %v8237 = vadd.f32 %v7451, %v8113
      %v8238 = vadd.f32 %v7452, %v8118
      %v8239 = vadd.f32 %v7453, %v8121
      %v8240 = vadd.f32 %v7454, %v8126
      %v8241 = vadd.f32 %v7455, %v8129
      %v8242 = vadd.f32 %v7456, %v8134
      %v8243 = vadd.f32 %v7457, %v8137
      %v8244 = vadd.f32 %v7458, %v8142
      %v8245 = vadd.f32 %v7459, %v8145
      %v8246 = vadd.f32 %v7460, %v8150
      %v8247 = vadd.f32 %v7461, %v8153
      %v8248 = vadd.f32 %v7462, %v8158
      %v8249 = vadd.f32 %v7463, %v8161
      %v8250 = vadd.f32 %v7464, %v8166
      %v8251 = vadd.f32 %v7465, %v8169
      %v8252 = vadd.f32 %v7466, %v8174
      %v8253 = vadd.f32 %v7467, %v8177
      %v8254 = vadd.f32 %v7468, %v8182
      %v8255 = vadd.f32 %v7469, %v8185
      %v8256 = vadd.f32 %v7470, %v8190
      %v8257 = vadd.f32 %v7471, %v8193
      %v8258 = vadd.f32 %v7472, %v8198
      %v8259 = vadd.f32 %v7473, %v8201
      %v8260 = vadd.f32 %v7474, %v8206
      %v8261 = vadd.f32 %v7475, %v8209
      %v8262 = vadd.f32 %v7476, %v8214
      %v8263 = vadd.f32 %v7477, %v8217
      %v8264 = vadd.f32 %v7478, %v8222
      %v8265 = vadd.f32 %v7479, %v8225
      %v8266 = vadd.f32 %v7480, %v8230
      %v8267 = vadd.f32 %v7481, %v8233
      %v8268 = vrot.slane %v8236, 1
      %v8269 = vrot.slane %v8237, 1
      %v8270 = vrot.slane %v8238, 1
      %v8271 = vrot.slane %v8239, 1
      %v8272 = vrot.slane %v8240, 1
      %v8273 = vrot.slane %v8241, 1
      %v8274 = vrot.slane %v8242, 1
      %v8275 = vrot.slane %v8243, 1
      %v8276 = vrot.slane %v8244, 1
      %v8277 = vrot.slane %v8245, 1
      %v8278 = vrot.slane %v8246, 1
      %v8279 = vrot.slane %v8247, 1
      %v8280 = vrot.slane %v8248, 1
      %v8281 = vrot.slane %v8249, 1
      %v8282 = vrot.slane %v8250, 1
      %v8283 = vrot.slane %v8251, 1
      %v8284 = vrot.slane %v8252, 1
      %v8285 = vrot.slane %v8253, 1
      %v8286 = vrot.slane %v8254, 1
      %v8287 = vrot.slane %v8255, 1
      %v8288 = vrot.slane %v8256, 1
      %v8289 = vrot.slane %v8257, 1
      %v8290 = vrot.slane %v8258, 1
      %v8291 = vrot.slane %v8259, 1
      %v8292 = vrot.slane %v8260, 1
      %v8293 = vrot.slane %v8261, 1
      %v8294 = vrot.slane %v8262, 1
      %v8295 = vrot.slane %v8263, 1
      %v8296 = vrot.slane %v8264, 1
      %v8297 = vrot.slane %v8265, 1
      %v8298 = vrot.slane %v8266, 1
      %v8299 = vrot.slane %v8267, 1
      %v8300 = vsel %vm1038, %v8298, %v8299
      %v8301 = vsel %vm1038, %v8297, %v8298
      %v8302 = vsel %vm1038, %v8296, %v8297
      %v8303 = vsel %vm1038, %v8294, %v8295
      %v8304 = vsel %vm1038, %v8293, %v8294
      %v8305 = vsel %vm1038, %v8292, %v8293
      %v8306 = vsel %vm1038, %v8290, %v8291
      %v8307 = vsel %vm1038, %v8289, %v8290
      %v8308 = vsel %vm1038, %v8288, %v8289
      %v8309 = vsel %vm1038, %v8286, %v8287
      %v8310 = vsel %vm1038, %v8285, %v8286
      %v8311 = vsel %vm1038, %v8284, %v8285
      %v8312 = vsel %vm1038, %v8282, %v8283
      %v8313 = vsel %vm1038, %v8281, %v8282
      %v8314 = vsel %vm1038, %v8280, %v8281
      %v8315 = vsel %vm1038, %v8278, %v8279
      %v8316 = vsel %vm1038, %v8277, %v8278
      %v8317 = vsel %vm1038, %v8276, %v8277
      %v8318 = vsel %vm1038, %v8274, %v8275
      %v8319 = vsel %vm1038, %v8273, %v8274
      %v8320 = vsel %vm1038, %v8272, %v8273
      %v8321 = vsel %vm1038, %v8270, %v8271
      %v8322 = vsel %vm1038, %v8269, %v8270
      %v8323 = vsel %vm1038, %v8268, %v8269
      %v8324 = vrot.slane %v8236, 2
      %v8325 = vrot.slane %v8237, 2
      %v8326 = vrot.slane %v8238, 2
      %v8327 = vrot.slane %v8239, 2
      %v8328 = vrot.slane %v8240, 2
      %v8329 = vrot.slane %v8241, 2
      %v8330 = vrot.slane %v8242, 2
      %v8331 = vrot.slane %v8243, 2
      %v8332 = vrot.slane %v8244, 2
      %v8333 = vrot.slane %v8245, 2
      %v8334 = vrot.slane %v8246, 2
      %v8335 = vrot.slane %v8247, 2
      %v8336 = vrot.slane %v8248, 2
      %v8337 = vrot.slane %v8249, 2
      %v8338 = vrot.slane %v8250, 2
      %v8339 = vrot.slane %v8251, 2
      %v8340 = vrot.slane %v8252, 2
      %v8341 = vrot.slane %v8253, 2
      %v8342 = vrot.slane %v8254, 2
      %v8343 = vrot.slane %v8255, 2
      %v8344 = vrot.slane %v8256, 2
      %v8345 = vrot.slane %v8257, 2
      %v8346 = vrot.slane %v8258, 2
      %v8347 = vrot.slane %v8259, 2
      %v8348 = vrot.slane %v8260, 2
      %v8349 = vrot.slane %v8261, 2
      %v8350 = vrot.slane %v8262, 2
      %v8351 = vrot.slane %v8263, 2
      %v8352 = vrot.slane %v8264, 2
      %v8353 = vrot.slane %v8265, 2
      %v8354 = vrot.slane %v8266, 2
      %v8355 = vrot.slane %v8267, 2
      %v8356 = vsel %vm1435, %v8354, %v8355
      %v8357 = vsel %vm1435, %v8353, %v8354
      %v8358 = vsel %vm1435, %v8352, %v8353
      %v8359 = vsel %vm1435, %v8350, %v8351
      %v8360 = vsel %vm1435, %v8349, %v8350
      %v8361 = vsel %vm1435, %v8348, %v8349
      %v8362 = vsel %vm1435, %v8346, %v8347
      %v8363 = vsel %vm1435, %v8345, %v8346
      %v8364 = vsel %vm1435, %v8344, %v8345
      %v8365 = vsel %vm1435, %v8342, %v8343
      %v8366 = vsel %vm1435, %v8341, %v8342
      %v8367 = vsel %vm1435, %v8340, %v8341
      %v8368 = vsel %vm1435, %v8338, %v8339
      %v8369 = vsel %vm1435, %v8337, %v8338
      %v8370 = vsel %vm1435, %v8336, %v8337
      %v8371 = vsel %vm1435, %v8334, %v8335
      %v8372 = vsel %vm1435, %v8333, %v8334
      %v8373 = vsel %vm1435, %v8332, %v8333
      %v8374 = vsel %vm1435, %v8330, %v8331
      %v8375 = vsel %vm1435, %v8329, %v8330
      %v8376 = vsel %vm1435, %v8328, %v8329
      %v8377 = vsel %vm1435, %v8326, %v8327
      %v8378 = vsel %vm1435, %v8325, %v8326
      %v8379 = vsel %vm1435, %v8324, %v8325
      %v8380 = vmax.f32 %v8323, %v8379
      %v8381 = vmax.f32 %v8322, %v8378
      %v8382 = vmax.f32 %v8321, %v8377
      %v8383 = vmax.f32 %v8320, %v8376
      %v8384 = vmax.f32 %v8319, %v8375
      %v8385 = vmax.f32 %v8318, %v8374
      %v8386 = vmax.f32 %v8317, %v8373
      %v8387 = vmax.f32 %v8316, %v8372
      %v8388 = vmax.f32 %v8315, %v8371
      %v8389 = vmax.f32 %v8314, %v8370
      %v8390 = vmax.f32 %v8313, %v8369
      %v8391 = vmax.f32 %v8312, %v8368
      %v8392 = vmax.f32 %v8311, %v8367
      %v8393 = vmax.f32 %v8310, %v8366
      %v8394 = vmax.f32 %v8309, %v8365
      %v8395 = vmax.f32 %v8308, %v8364
      %v8396 = vmax.f32 %v8307, %v8363
      %v8397 = vmax.f32 %v8306, %v8362
      %v8398 = vmax.f32 %v8305, %v8361
      %v8399 = vmax.f32 %v8304, %v8360
      %v8400 = vmax.f32 %v8303, %v8359
      %v8401 = vmax.f32 %v8302, %v8358
      %v8402 = vmax.f32 %v8301, %v8357
      %v8403 = vmax.f32 %v8300, %v8356
      %v8404 = vmax.f32 %v8236, %v8380
      %v8405 = vmax.f32 %v8237, %v8381
      %v8406 = vmax.f32 %v8238, %v8382
      %v8407 = vmax.f32 %v8240, %v8383
      %v8408 = vmax.f32 %v8241, %v8384
      %v8409 = vmax.f32 %v8242, %v8385
      %v8410 = vmax.f32 %v8244, %v8386
      %v8411 = vmax.f32 %v8245, %v8387
      %v8412 = vmax.f32 %v8246, %v8388
      %v8413 = vmax.f32 %v8248, %v8389
      %v8414 = vmax.f32 %v8249, %v8390
      %v8415 = vmax.f32 %v8250, %v8391
      %v8416 = vmax.f32 %v8252, %v8392
      %v8417 = vmax.f32 %v8253, %v8393
      %v8418 = vmax.f32 %v8254, %v8394
      %v8419 = vmax.f32 %v8256, %v8395
      %v8420 = vmax.f32 %v8257, %v8396
      %v8421 = vmax.f32 %v8258, %v8397
      %v8422 = vmax.f32 %v8260, %v8398
      %v8423 = vmax.f32 %v8261, %v8399
      %v8424 = vmax.f32 %v8262, %v8400
      %v8425 = vmax.f32 %v8264, %v8401
      %v8426 = vmax.f32 %v8265, %v8402
      %v8427 = vmax.f32 %v8266, %v8403
      %v8428 = vld [vmem:[%s3 + $0x37] ss:$0 sm:$0xff]
      %v8429 = vadd.f32 %v8404, %v8428
      %v8430 = vadd.f32 %v8405, %v8428
      %v8431 = vadd.f32 %v8406, %v8428
      %v8432 = vadd.f32 %v8407, %v8428
      %v8433 = vadd.f32 %v8408, %v8428
      %v8434 = vadd.f32 %v8409, %v8428
      %v8435 = vadd.f32 %v8410, %v8428
      %v8436 = vadd.f32 %v8411, %v8428
      %v8437 = vadd.f32 %v8412, %v8428
      %v8438 = vadd.f32 %v8413, %v8428
      %v8439 = vadd.f32 %v8414, %v8428
      %v8440 = vadd.f32 %v8415, %v8428
      %v8441 = vadd.f32 %v8416, %v8428
      %v8442 = vadd.f32 %v8417, %v8428
      %v8443 = vadd.f32 %v8418, %v8428
      %v8444 = vadd.f32 %v8419, %v8428
      %v8445 = vadd.f32 %v8420, %v8428
      %v8446 = vadd.f32 %v8421, %v8428
      %v8447 = vadd.f32 %v8422, %v8428
      %v8448 = vadd.f32 %v8423, %v8428
      %v8449 = vadd.f32 %v8424, %v8428
      %v8450 = vadd.f32 %v8425, %v8428
      %v8451 = vadd.f32 %v8426, %v8428
      %v8452 = vadd.f32 %v8427, %v8428
      %v8453 = vmax.f32 %v8429, 0.0
      %v8454 = vmax.f32 %v8430, 0.0
      %v8455 = vmax.f32 %v8431, 0.0
      %v8456 = vmax.f32 %v8432, 0.0
      %v8457 = vmax.f32 %v8433, 0.0
      %v8458 = vmax.f32 %v8434, 0.0
      %v8459 = vmax.f32 %v8435, 0.0
      %v8460 = vmax.f32 %v8436, 0.0
      %v8461 = vmax.f32 %v8437, 0.0
      %v8462 = vmax.f32 %v8438, 0.0
      %v8463 = vmax.f32 %v8439, 0.0
      %v8464 = vmax.f32 %v8440, 0.0
      %v8465 = vmax.f32 %v8441, 0.0
      %v8466 = vmax.f32 %v8442, 0.0
      %v8467 = vmax.f32 %v8443, 0.0
      %v8468 = vmax.f32 %v8444, 0.0
      %v8469 = vmax.f32 %v8445, 0.0
      %v8470 = vmax.f32 %v8446, 0.0
      %v8471 = vmax.f32 %v8447, 0.0
      %v8472 = vmax.f32 %v8448, 0.0
      %v8473 = vmax.f32 %v8449, 0.0
      %v8474 = vmax.f32 %v8450, 0.0
      %v8475 = vmax.f32 %v8451, 0.0
      %v8476 = vmax.f32 %v8452, 0.0
      %v8485 = vrot.slane %v8456, 7
      %vm8486 = vcmask 1041409
      %v8487 = vsel %vm8486, %v8485, %v8453
      %v8488 = vrot.slane %v8459, 6
      %vm8489 = vcmask 1042434
      %v8490 = vsel %vm8489, %v8488, %v8487
      %v8491 = vrot.slane %v8462, 5
      %vm8492 = vcmask 1043459
      %v8493 = vsel %vm8492, %v8491, %v8490
      %v8494 = vrot.slane %v8465, 4
      %vm8495 = vcmask 1044484
      %v8496 = vsel %vm8495, %v8494, %v8493
      %v8497 = vrot.slane %v8468, 3
      %vm8498 = vcmask 1045509
      %v8499 = vsel %vm8498, %v8497, %v8496
      %v8500 = vrot.slane %v8471, 2
      %vm8501 = vcmask 1046534
      %v8502 = vsel %vm8501, %v8500, %v8499
      %v8503 = vrot.slane %v8474, 1
      %vm8504 = vcmask 1047559
      %v8505 = vsel %vm8504, %v8503, %v8502
      %v8507 = vrot.slane %v8453, 3
      %v8508 = vrot.slane %v8456, 2
      %v8509 = vsel %vm8486, %v8508, %v8507
      %v8510 = vrot.slane %v8459, 1
      %v8511 = vsel %vm8489, %v8510, %v8509
      %v8512 = vsel %vm8492, %v8462, %v8511
      %v8513 = vrot.slane %v8465, 7
      %v8514 = vsel %vm8495, %v8513, %v8512
      %v8515 = vrot.slane %v8468, 6
      %v8516 = vsel %vm8498, %v8515, %v8514
      %v8517 = vrot.slane %v8471, 5
      %v8518 = vsel %vm8501, %v8517, %v8516
      %v8519 = vrot.slane %v8474, 4
      %v8520 = vsel %vm8504, %v8519, %v8518
      %8521 = vrot.lane.b32.xlu0 %v8520, 32
      %v8522 = vpop.permute.xlu0 %8521
      %v8524 = vrot.slane %v8453, 6
      %v8525 = vrot.slane %v8456, 5
      %v8526 = vsel %vm8486, %v8525, %v8524
      %v8527 = vrot.slane %v8459, 4
      %v8528 = vsel %vm8489, %v8527, %v8526
      %v8529 = vrot.slane %v8462, 3
      %v8530 = vsel %vm8492, %v8529, %v8528
      %v8531 = vrot.slane %v8465, 2
      %v8532 = vsel %vm8495, %v8531, %v8530
      %v8533 = vrot.slane %v8468, 1
      %v8534 = vsel %vm8498, %v8533, %v8532
      %v8535 = vsel %vm8501, %v8471, %v8534
      %v8536 = vrot.slane %v8474, 7
      %v8537 = vsel %vm8504, %v8536, %v8535
      %8538 = vrot.lane.b32.xlu0 %v8537, 64
      %v8539 = vpop.permute.xlu0 %8538
      %v8549 = vrot.slane %v8454, 1
      %v8550 = vsel %vm8486, %v8457, %v8549
      %v8551 = vrot.slane %v8460, 7
      %v8552 = vsel %vm8489, %v8551, %v8550
      %v8553 = vrot.slane %v8463, 6
      %v8554 = vsel %vm8492, %v8553, %v8552
      %v8555 = vrot.slane %v8466, 5
      %v8556 = vsel %vm8495, %v8555, %v8554
      %v8557 = vrot.slane %v8469, 4
      %v8558 = vsel %vm8498, %v8557, %v8556
      %v8559 = vrot.slane %v8472, 3
      %v8560 = vsel %vm8501, %v8559, %v8558
      %v8561 = vrot.slane %v8475, 2
      %v8562 = vsel %vm8504, %v8561, %v8560
      %8563 = vrot.lane.b32.xlu0 %v8562, 96
      %v8564 = vpop.permute.xlu0 %8563
      %v8566 = vrot.slane %v8454, 4
      %v8567 = vrot.slane %v8457, 3
      %v8568 = vsel %vm8486, %v8567, %v8566
      %v8569 = vrot.slane %v8460, 2
      %v8570 = vsel %vm8489, %v8569, %v8568
      %v8571 = vrot.slane %v8463, 1
      %v8572 = vsel %vm8492, %v8571, %v8570
      %v8573 = vsel %vm8495, %v8466, %v8572
      %v8574 = vrot.slane %v8469, 7
      %v8575 = vsel %vm8498, %v8574, %v8573
      %v8576 = vrot.slane %v8472, 6
      %v8577 = vsel %vm8501, %v8576, %v8575
      %v8578 = vrot.slane %v8475, 5
      %v8579 = vsel %vm8504, %v8578, %v8577
      %v8581 = vrot.slane %v8454, 7
      %v8582 = vrot.slane %v8457, 6
      %v8583 = vsel %vm8486, %v8582, %v8581
      %v8584 = vrot.slane %v8460, 5
      %v8585 = vsel %vm8489, %v8584, %v8583
      %v8586 = vrot.slane %v8463, 4
      %v8587 = vsel %vm8492, %v8586, %v8585
      %v8588 = vrot.slane %v8466, 3
      %v8589 = vsel %vm8495, %v8588, %v8587
      %v8590 = vrot.slane %v8469, 2
      %v8591 = vsel %vm8498, %v8590, %v8589
      %v8592 = vrot.slane %v8472, 1
      %v8593 = vsel %vm8501, %v8592, %v8591
      %v8594 = vsel %vm8504, %v8475, %v8593
      %8595 = vrot.lane.b32.xlu0 %v8594, 32
      %v8596 = vpop.permute.xlu0 %8595
      %v8606 = vrot.slane %v8455, 2
      %v8607 = vrot.slane %v8458, 1
      %v8608 = vsel %vm8486, %v8607, %v8606
      %v8609 = vsel %vm8489, %v8461, %v8608
      %v8610 = vrot.slane %v8464, 7
      %v8611 = vsel %vm8492, %v8610, %v8609
      %v8612 = vrot.slane %v8467, 6
      %v8613 = vsel %vm8495, %v8612, %v8611
      %v8614 = vrot.slane %v8470, 5
      %v8615 = vsel %vm8498, %v8614, %v8613
      %v8616 = vrot.slane %v8473, 4
      %v8617 = vsel %vm8501, %v8616, %v8615
      %v8618 = vrot.slane %v8476, 3
      %v8619 = vsel %vm8504, %v8618, %v8617
      %8620 = vrot.lane.b32.xlu0 %v8619, 64
      %v8621 = vpop.permute.xlu0 %8620
      %vm8623 = vcmask 261120
      %v8624 = vsel %vm8623, %v8505, %v8522
      %vm8625 = vcmask 523264
      %v8626 = vsel %vm8625, %v8624, %v8539
      %vm8627 = vcmask 785408
      %v8628 = vsel %vm8627, %v8626, %v8564
      %v8629 = vsel %vm8623, %v8579, %v8596
      %v8630 = vsel %vm8625, %v8629, %v8621
      %v8631 = vld [vmem:[%s2] sm:$0xff]
      %v8632 = vld [vmem:[%s2 + $0x8] sm:$0xff]
      %v8633 = vld [vmem:[%s2 + $0x10] sm:$0xff]
      %v8634 = vld [vmem:[%s2 + $0x18] sm:$0xff]
      %v8635 = vld [vmem:[%s2 + $0x20] sm:$0xff]
      %v8636 = vld [vmem:[%s2 + $0x28] sm:$0xff]
      %v8637 = vld [vmem:[%s2 + $0x30] sm:$0xff]
      %v8638 = vld [vmem:[%s2 + $0x38] sm:$0xff]
      %v8639 = vld [vmem:[%s2 + $0x40] sm:$0xff]
      %v8640 = vld [vmem:[%s2 + $0x48] sm:$0xff]
      %v8641 = vld [vmem:[%s2 + $0x50] sm:$0xff]
      %v8642 = vld [vmem:[%s2 + $0x58] sm:$0xff]
      %v8643 = vld [vmem:[%s2 + $0x60] sm:$0xff]
      %v8644 = vld [vmem:[%s2 + $0x68] sm:$0xff]
      %v8645 = vld [vmem:[%s2 + $0x70] sm:$0xff]
      %v8646 = vld [vmem:[%s2 + $0x78] sm:$0xff]
      %v8647 = vld [vmem:[%s2 + $0x80] sm:$0xff]
      %v8648 = vld [vmem:[%s2 + $0x88] sm:$0xff]
      %v8649 = vld [vmem:[%s2 + $0x90] sm:$0xff]
      %v8650 = vld [vmem:[%s2 + $0x98] sm:$0xff]
      %v8651 = vld [vmem:[%s2 + $0xa0] sm:$0xff]
      %v8652 = vld [vmem:[%s2 + $0xa8] sm:$0xff]
      %v8653 = vld [vmem:[%s2 + $0xb0] sm:$0xff]
      %v8654 = vld [vmem:[%s2 + $0xb8] sm:$0xff]
      %v8655 = vld [vmem:[%s2 + $0xc0] sm:$0xff]
      %v8656 = vld [vmem:[%s2 + $0xc8] sm:$0xff]
      %v8657 = vld [vmem:[%s2 + $0xd0] sm:$0xff]
      %v8658 = vld [vmem:[%s2 + $0xd8] sm:$0xff]
      %v8659 = vld [vmem:[%s3 + $0x48] ss:$0 sm:$0xff]
      %v8661 = vsel %vm8627, %v8630, 0
      %8663 = vmatprep.subr.mxu0 0.0
      %8664 = vmatpush1.msra.mxu0 %v8646
      %8665 = vmatprep.subr.mxu0 0.0
      %8666 = vmatpush1.msra.mxu0 %v8645
      %8667 = vmatprep.subr.mxu0 0.0
      %8668 = vmatpush1.msra.mxu0 %v8644
      %8669 = vmatprep.subr.mxu0 0.0
      %8670 = vmatpush1.msra.mxu0 %v8643
      %8671 = vmatprep.subr.mxu0 0.0
      %8672 = vmatpush1.msra.mxu0 %v8642
      %8673 = vmatprep.subr.mxu0 0.0
      %8674 = vmatpush1.msra.mxu0 %v8641
      %8675 = vmatprep.subr.mxu0 0.0
      %8676 = vmatpush1.msra.mxu0 %v8640
      %8677 = vmatprep.subr.mxu0 0.0
      %8678 = vmatpush1.msra.mxu0 %v8639
      %8679 = vmatprep.subr.mxu0 0.0
      %8680 = vmatpush1.msra.mxu0 %v8638
      %8681 = vmatprep.subr.mxu0 0.0
      %8682 = vmatpush1.msra.mxu0 %v8637
      %8683 = vmatprep.subr.mxu0 0.0
      %8684 = vmatpush1.msra.mxu0 %v8636
      %8685 = vmatprep.subr.mxu0 0.0
      %8686 = vmatpush1.msra.mxu0 %v8635
      %8687 = vmatprep.subr.mxu0 0.0
      %8688 = vmatpush1.msra.mxu0 %v8634
      %8689 = vmatprep.subr.mxu0 0.0
      %8690 = vmatpush1.msra.mxu0 %v8633
      %8691 = vmatprep.subr.mxu0 0.0
      %8692 = vmatpush1.msra.mxu0 %v8632
      %8693 = vmatprep.subr.mxu0 0.0
      %8694 = vmatpush1.msra.mxu0 %v8631
      %8695 = vmatprep.subr.mxu0 0.0
      %8696 = vmatpush2.msra.mxu0 0.0
      %8697 = vmatprep.subr.mxu0 0.0
      %8698 = vmatpush2.msra.mxu0 0.0
      %8699 = vmatprep.subr.mxu0 0.0
      %8700 = vmatpush2.msra.mxu0 0.0
      %8701 = vmatprep.subr.mxu0 0.0
      %8702 = vmatpush2.msra.mxu0 0.0
      %8703 = vmatprep.subr.mxu0 0.0
      %8704 = vmatpush2.msra.mxu0 %v8658
      %8705 = vmatprep.subr.mxu0 0.0
      %8706 = vmatpush2.msra.mxu0 %v8657
      %8707 = vmatprep.subr.mxu0 0.0
      %8708 = vmatpush2.msra.mxu0 %v8656
      %8709 = vmatprep.subr.mxu0 0.0
      %8710 = vmatpush2.msra.mxu0 %v8655
      %8711 = vmatprep.subr.mxu0 0.0
      %8712 = vmatpush2.msra.mxu0 %v8654
      %8713 = vmatprep.subr.mxu0 0.0
      %8714 = vmatpush2.msra.mxu0 %v8653
      %8715 = vmatprep.subr.mxu0 0.0
      %8716 = vmatpush2.msra.mxu0 %v8652
      %8717 = vmatprep.subr.mxu0 0.0
      %8718 = vmatpush2.msra.mxu0 %v8651
      %8719 = vmatprep.subr.mxu0 0.0
      %8720 = vmatpush2.msra.mxu0 %v8650
      %8721 = vmatprep.subr.mxu0 0.0
      %8722 = vmatpush2.msra.mxu0 %v8649
      %8723 = vmatprep.subr.mxu0 0.0
      %8724 = vmatpush2.msra.mxu0 %v8648
      %8725 = vmatprep.subr.mxu0 0.0
      %8726 = vmatpush2.msra.mxu0 %v8647
      %8727 = vmatprep.mubr.f32.mxu0 %v8661
      %8728 = vmatmul.mubr.f32.gmra.mxu0 %v8628
      %v8729 = vpop.f32.mrf.mxu0
      %v8730 = vadd.f32 %v8659, %v8729
      %v8731 = vpop.f32.mrf.mxu0
      %8732 = vdwg.mxu0
      %v8733 = vmax.f32 %v8730, 0.0
      %v8734 = vld [vmem:[%s2 + $0xe0] sm:$0xff]
      %v8735 = vld [vmem:[%s2 + $0xe8] sm:$0xff]
      %v8736 = vld [vmem:[%s2 + $0xf0] sm:$0xff]
      %v8737 = vld [vmem:[%s2 + $0xf8] sm:$0xff]
      %v8738 = vld [vmem:[%s3 + $0x49] ss:$0 sm:$0xff]
      %v8740 = vsel %vm8623, %v8733, 0
      %8742 = vmatprep.subr.mxu0 0.0
      %8743 = vmatpush1.msra.mxu0 0.0
      %8744 = vmatprep.subr.mxu0 0.0
      %8745 = vmatpush1.msra.mxu0 0.0
      %8746 = vmatprep.subr.mxu0 0.0
      %8747 = vmatpush1.msra.mxu0 0.0
      %8748 = vmatprep.subr.mxu0 0.0
      %8749 = vmatpush1.msra.mxu0 0.0
      %8750 = vmatprep.subr.mxu0 0.0
      %8751 = vmatpush1.msra.mxu0 0.0
      %8752 = vmatprep.subr.mxu0 0.0
      %8753 = vmatpush1.msra.mxu0 0.0
      %8754 = vmatprep.subr.mxu0 0.0
      %8755 = vmatpush1.msra.mxu0 0.0
      %8756 = vmatprep.subr.mxu0 0.0
      %8757 = vmatpush1.msra.mxu0 0.0
      %8758 = vmatprep.subr.mxu0 0.0
      %8759 = vmatpush1.msra.mxu0 0.0
      %8760 = vmatprep.subr.mxu0 0.0
      %8761 = vmatpush1.msra.mxu0 0.0
      %8762 = vmatprep.subr.mxu0 0.0
      %8763 = vmatpush1.msra.mxu0 0.0
      %8764 = vmatprep.subr.mxu0 0.0
      %8765 = vmatpush1.msra.mxu0 0.0
      %8766 = vmatprep.subr.mxu0 0.0
      %8767 = vmatpush1.msra.mxu0 %v8737
      %8768 = vmatprep.subr.mxu0 0.0
      %8769 = vmatpush1.msra.mxu0 %v8736
      %8770 = vmatprep.subr.mxu0 0.0
      %8771 = vmatpush1.msra.mxu0 %v8735
      %8772 = vmatprep.subr.mxu0 0.0
      %8773 = vmatpush1.msra.mxu0 %v8734
      %8774 = vmatprep.subr.mxu0 0.0
      %8775 = vmatpush2.msra.mxu0 0.0
      %8776 = vmatprep.subr.mxu0 0.0
      %8777 = vmatpush2.msra.mxu0 0.0
      %8778 = vmatprep.subr.mxu0 0.0
      %8779 = vmatpush2.msra.mxu0 0.0
      %8780 = vmatprep.subr.mxu0 0.0
      %8781 = vmatpush2.msra.mxu0 0.0
      %8782 = vmatprep.subr.mxu0 0.0
      %8783 = vmatpush2.msra.mxu0 0.0
      %8784 = vmatprep.subr.mxu0 0.0
      %8785 = vmatpush2.msra.mxu0 0.0
      %8786 = vmatprep.subr.mxu0 0.0
      %8787 = vmatpush2.msra.mxu0 0.0
      %8788 = vmatprep.subr.mxu0 0.0
      %8789 = vmatpush2.msra.mxu0 0.0
      %8790 = vmatprep.subr.mxu0 0.0
      %8791 = vmatpush2.msra.mxu0 0.0
      %8792 = vmatprep.subr.mxu0 0.0
      %8793 = vmatpush2.msra.mxu0 0.0
      %8794 = vmatprep.subr.mxu0 0.0
      %8795 = vmatpush2.msra.mxu0 0.0
      %8796 = vmatprep.subr.mxu0 0.0
      %8797 = vmatpush2.msra.mxu0 0.0
      %8798 = vmatprep.subr.mxu0 0.0
      %8799 = vmatpush2.msra.mxu0 0.0
      %8800 = vmatprep.subr.mxu0 0.0
      %8801 = vmatpush2.msra.mxu0 0.0
      %8802 = vmatprep.subr.mxu0 0.0
      %8803 = vmatpush2.msra.mxu0 0.0
      %8804 = vmatprep.subr.mxu0 0.0
      %8805 = vmatpush2.msra.mxu0 0.0
      %8806 = vmatprep.mubr.f32.mxu0 0.0
      %8807 = vmatmul.mubr.f32.gmra.mxu0 %v8740
      %v8808 = vpop.f32.mrf.mxu0
      %v8809 = vadd.f32 %v8738, %v8808
      %v8810 = vpop.f32.mrf.mxu0
      %8811 = vdwg.mxu0
      %vm8812 = vcmask 31744
      %8813 = vst.msk [vmem:[%s197] sm:$0xff] %vm8812, %v8809
      %p8814 = scmp.lt.s32.totalorder %s15, 1
      %s8815 = scalar_select %p8814, %s15, 1
      %s8816 = smul.addr %s8815, 8
      %s8817 = scalar_lea.vmem %s4, %s8816
      // Predicated region
      $region37: #{cnn_forward.1} parent=35 // pred_check
        %p8818 = pneg %p122
      $region38: #{cnn_forward.1} parent=35 // pred_check_branch
        %8820 = sbr.rel (%p8818) target = $region40
      $region39: #{cnn_forward.1} parent=35 // pred_region
        _
      $region40: #{cnn_forward.1} parent=35 // pred_fallthru
        _
    $region36: #{cnn_forward.1} parent=5 // pred_fallthru
      _
    %p8821 = scmp.le.s32.totalorder 2, %s10
    // Predicated region
    $region41: #{cnn_forward.1} parent=5 // pred_check
      %p8822 = pneg %p8821
    $region42: #{cnn_forward.1} parent=5 // pred_check_branch
      %8824 = sbr.rel (%p8822) target = $region44
    $region43: #{cnn_forward.1} parent=5 // pred_region
      %s8825 = ssub.s32 %s10, 2
      // Predicated region
      $region45: #{cnn_forward.1} parent=43 // pred_check
        %p8826 = pneg %p128
      $region46: #{cnn_forward.1} parent=43 // pred_check_branch
        %8828 = sbr.rel (%p8826) target = $region48
      $region47: #{cnn_forward.1} parent=43 // pred_region
        %p8829 = scmp.lt.s32.totalorder %s16, 1
        %s8830 = scalar_select %p8829, %s16, 1
        %s8831 = smul.addr %s8830, 8
        %s8832 = scalar_lea.vmem %s4, %s8831
      $region48: #{cnn_forward.1} parent=43 // pred_fallthru
        _
    $region44: #{cnn_forward.1} parent=5 // pred_fallthru
      _
  $region6: #{cnn_forward.1} parent=0 // loop_footer
    %s14 = sadd.s32 1, %s10
  $region7: #{cnn_forward.1} parent=0 // loop_footer_branch
    %9 = sbr.rel target = $region3
  $region8: #{cnn_forward.1} parent=0 // loop_exit
    _

</llo_original>
